<compile_context>
chip_gen: v7x
topology: tpu7x:2x2x1
jax: 0.10.0
libtpu: 0.0.40
codegen_flags: <defaults>
</compile_context>

<pallas_src>
import math
from functools import partial

import numpy as np
import jax
import jax.numpy as jnp
from jax import lax
from jax.experimental import pallas as pl
from jax.experimental.pallas import tpu as pltpu

# ---------------- static module configuration (upscale_factor == 2 branch) ----
NUM_FEATURES = 8
NUM_GROUPS = 2
KSIZE, STRIDE, PADDING = 6, 2, 2
PRELU_SLOPE = 0.25          # nn.PReLU() default single shared slope (compile-time const)

BATCH = 2
LR_H = LR_W = 16                       # LR spatial size handled by the fused kernel
HP, WP = LR_H + 2, LR_W + 2            # +1 pixel zero halo on each side
S_REAL = HP * WP                       # 324 meaningful lanes per batch element
SP = ((S_REAL + 127) // 128) * 128     # 384: per-batch lane block (multiple of 128)

PHASES = [(0, 0), (0, 1), (1, 0), (1, 1)]                      # sub-pixel (row, col) phases
TAPS = [(dr, dc) for dr in (-1, 0, 1) for dc in (-1, 0, 1)]    # 3x3 stride-1 taps

# TODO(synk): the fused kernel is specialised for num_groups == 2; general G needs
#             per-idx uptran/downtran operands (their input widths differ per idx).
assert NUM_GROUPS == 2
# roll-wrap safety: the per-element tail padding must cover the largest tap shift
assert SP - S_REAL >= WP + 1

# interior mask (1 on real H x W pixels, 0 on halo + lane padding) for ONE element
_MASK_NP = np.zeros((1, SP), np.float32)
for _r in range(1, LR_H + 1):
    _MASK_NP[0, _r * WP + 1:_r * WP + 1 + LR_W] = 1.0


# ------------------------------- fused kernel --------------------------------
def fused_feedback_kernel(xin_ref, mask_ref,
                          cin_w_ref, cin_b_ref,
                          up_w_ref, up_b_ref,
                          down_w_ref, down_b_ref,
                          ut_w_ref, ut_b_ref,
                          dt_w_ref, dt_b_ref,
                          cout_w_ref, cout_b_ref,
                          out_ref):
    F = NUM_FEATURES
    L = out_ref.shape[1]                                # lanes in this block
    mask = mask_ref[...]                                # (1, L) f32

    def mm(w, x):                                       # bf16 x bf16 -> f32 accumulate
        return jnp.dot(w, x, preferred_element_type=jnp.float32)

    def act(pre, bias, masked):
        y = pre + bias                                  # bias (C,1) lane-broadcast
        y = jnp.where(y >= 0.0, y, PRELU_SLOPE * y)     # PReLU (compile-time slope)
        return y * mask if masked else y                # restore zero halo only where needed

    def up_conv(x, idx):
        # ConvTranspose2d(6,s=2,p=2) == 4 sub-pixel 3x3 convs; per-tap accumulation,
        # rolling the small (F, L) f32 input per tap (no im2col buffer).
        acc = None
        for t, (dr, dc) in enumerate(TAPS):
            d = dr * WP + dc
            src = x if d == 0 else pltpu.roll(x, (-d) % L, axis=1)
            term = mm(up_w_ref[idx, t], src.astype(jnp.bfloat16))       # (4F, L) f32
            acc = term if acc is None else acc + term
        return acc

    def down_conv(xb, idx):
        # strided 6x6 conv consuming the 4 HR phases directly; roll the (F, L)
        # matmul OUTPUT (roll commutes with the per-lane channel matmul).
        acc = None
        for t, (dr, dc) in enumerate(TAPS):
            d = dr * WP + dc
            term = mm(down_w_ref[idx, t], xb)                           # (F, L) f32
            if d != 0:
                term = pltpu.roll(term, (-d) % L, axis=1)
            acc = term if acc is None else acc + term
        return acc

    # compress_in: 1x1 conv on cat(x, last_hidden) == pure channel matmul
    xin = xin_ref[...]                                                  # (2F, L) bf16
    h = act(mm(cin_w_ref[...], xin), cin_b_ref[...], masked=True)       # (F, L), zero halo
    h_b = h.astype(jnp.bfloat16)

    # ---- group 0 ----
    ld_h0 = act(up_conv(h, 0), up_b_ref[0], masked=True)                # (4F, L), zero halo
    ld_h0_b = ld_h0.astype(jnp.bfloat16)
    ld_l1 = act(down_conv(ld_h0_b, 0), down_b_ref[0], masked=False)     # (F, L)
    ld_l1_b = ld_l1.astype(jnp.bfloat16)

    # ---- group 1 ----
    # uptran 1x1 on cat(h, ld_l1): split-weight accumulation, no sublane concat
    utw = ut_w_ref[...]
    t1 = act(mm(utw[:, :F], h_b) + mm(utw[:, F:], ld_l1_b),
             ut_b_ref[...], masked=True)                                # (F, L), zero halo
    ld_h1 = act(up_conv(t1, 1), up_b_ref[1], masked=False)              # (4F, L)
    # downtran 1x1 per phase == two block-diagonal (4F,4F) matmuls, no concat/loop
    dstack = act(mm(dt_w_ref[0], ld_h0_b) + mm(dt_w_ref[1], ld_h1.astype(jnp.bfloat16)),
                 dt_b_ref[...], masked=True)                            # (4F, L), zero halo
    ld_l2 = act(down_conv(dstack.astype(jnp.bfloat16), 1),
                down_b_ref[1], masked=False)                            # (F, L)

    # compress_out 1x1 on cat(ld_l1, ld_l2): split-weight accumulation; output is
    # cropped in the wrapper, so no mask needed.
    cw = cout_w_ref[...]
    out_ref[...] = act(mm(cw[:, :F], ld_l1_b) + mm(cw[:, F:], ld_l2.astype(jnp.bfloat16)),
                       cout_b_ref[...], masked=False)


# --------------------------- parameter init (torch layouts) -------------------
def init_params(key, F=NUM_FEATURES, G=NUM_GROUPS, k=KSIZE):
    keys = iter(jax.random.split(key, 16))

    def conv_init(kk, cout, cin, kh, kw):               # Conv2d weight: (Cout, Cin, kh, kw)
        k1, k2 = jax.random.split(kk)
        s = 1.0 / math.sqrt(cin * kh * kw)
        w = jax.random.uniform(k1, (cout, cin, kh, kw), jnp.float32, -s, s)
        b = jax.random.uniform(k2, (cout,), jnp.float32, -s, s)
        return w, b

    def deconv_init(kk, cin, cout, kh, kw):             # ConvTranspose2d: (Cin, Cout, kh, kw)
        k1, k2 = jax.random.split(kk)
        s = 1.0 / math.sqrt(cin * kh * kw)
        w = jax.random.uniform(k1, (cin, cout, kh, kw), jnp.float32, -s, s)
        b = jax.random.uniform(k2, (cout,), jnp.float32, -s, s)
        return w, b

    p = {}
    p["compress_in"] = conv_init(next(keys), F, 2 * F, 1, 1)
    p["up"] = [deconv_init(next(keys), F, F, k, k) for _ in range(G)]
    p["down"] = [conv_init(next(keys), F, F, k, k) for _ in range(G)]
    p["uptran"] = [conv_init(next(keys), F, F * (i + 1), 1, 1) for i in range(1, G)]
    p["downtran"] = [conv_init(next(keys), F, F * (i + 1), 1, 1) for i in range(1, G)]
    p["compress_out"] = conv_init(next(keys), F, G * F, 1, 1)
    return p


# --------------------- pack PyTorch-layout weights for the kernel -------------
def pack_deconv(w):   # (Cin, Cout, 6, 6) -> (9, 4*Cout, Cin); leading axis = tap, rows phase-major
    taps = []
    for (dr, dc) in TAPS:
        rows = [w[:, :, 2 * (1 - dr) + p, 2 * (1 - dc) + q].T for (p, q) in PHASES]
        taps.append(jnp.concatenate(rows, axis=0))                      # (4F, F)
    return jnp.stack(taps)                                              # (9, 4F, F)


def pack_conv6(w):    # (Cout, Cin, 6, 6) -> (9, Cout, 4*Cin); cols phase-major per tap
    taps = []
    for (dr, dc) in TAPS:
        cols = [w[:, :, 2 * (dr + 1) + p, 2 * (dc + 1) + q] for (p, q) in PHASES]
        taps.append(jnp.concatenate(cols, axis=1))                      # (F, 4F)
    return jnp.stack(taps)                                              # (9, F, 4F)


def pack_params(params):
    F, G = NUM_FEATURES, NUM_GROUPS
    bf = lambda a: a.astype(jnp.bfloat16)

    cin_w = bf(params["compress_in"][0].reshape(F, 2 * F))
    cin_b = params["compress_in"][1].reshape(F, 1)

    up_w = bf(jnp.stack([pack_deconv(w) for (w, _) in params["up"]]))           # (G, 9, 4F, F)
    up_b = jnp.stack([jnp.tile(b, 4).reshape(4 * F, 1) for (_, b) in params["up"]])
    down_w = bf(jnp.stack([pack_conv6(w) for (w, _) in params["down"]]))        # (G, 9, F, 4F)
    down_b = jnp.stack([b.reshape(F, 1) for (_, b) in params["down"]])

    ut_w = bf(params["uptran"][0][0].reshape(F, 2 * F))
    ut_b = params["uptran"][0][1].reshape(F, 1)

    dtw = params["downtran"][0][0].reshape(F, 2 * F)
    eye4 = jnp.eye(4, dtype=jnp.float32)
    dt_w = bf(jnp.stack([jnp.kron(eye4, dtw[:, :F]),          # block-diag, acts on ld_h0 phases
                         jnp.kron(eye4, dtw[:, F:])]))        # block-diag, acts on ld_h1 phases
    dt_b = jnp.tile(params["downtran"][0][1], 4).reshape(4 * F, 1)

    cout_w = bf(params["compress_out"][0].reshape(F, G * F))
    cout_b = params["compress_out"][1].reshape(F, 1)
    return (cin_w, cin_b, up_w, up_b, down_w, down_b,
            ut_w, ut_b, dt_w, dt_b, cout_w, cout_b)


# ------------------------------ pallas_call wrapper ---------------------------
def _should_fold_batch():
    """Fold batch into lanes (single grid step) on single-TensorCore chips
    (v5e/v6e); keep a 2-step 'parallel' grid on dual-TensorCore chips (v7x)."""
    try:
        kind = jax.devices()[0].device_kind.lower()
    except Exception:
        return True
    return not any(tag in kind for tag in ("v7", "7x"))


def _fused_call(xin_flat, packed, n_batch, fold_batch):
    F, G = NUM_FEATURES, NUM_GROUPS
    (cin_w, cin_b, up_w, up_b, down_w, down_b,
     ut_w, ut_b, dt_w, dt_b, cout_w, cout_b) = packed

    if fold_batch:                       # v5e / v6e: one grid step, lanes = BATCH*SP
        grid = (1,)
        lane_block = n_batch * SP
        mask = jnp.asarray(np.tile(_MASK_NP, (1, n_batch)))
    else:                                # v7x: one batch element per TensorCore
        grid = (n_batch,)
        lane_block = SP
        mask = jnp.asarray(_MASK_NP)

    def act_spec(rows):                  # activation blocked along lanes
        return pl.BlockSpec((rows, lane_block), lambda b: (0, b))

    def whole(arr):                      # whole-array (weight) block, resident every step
        n = arr.ndim
        return pl.BlockSpec(arr.shape, lambda b, _n=n: (0,) * _n)

    operands = (xin_flat, mask, cin_w, cin_b, up_w, up_b, down_w, down_b,
                ut_w, ut_b, dt_w, dt_b, cout_w, cout_b)
    in_specs = [act_spec(2 * F), whole(mask),
                whole(cin_w), whole(cin_b),
                whole(up_w), whole(up_b),
                whole(down_w), whole(down_b),
                whole(ut_w), whole(ut_b),
                whole(dt_w), whole(dt_b),
                whole(cout_w), whole(cout_b)]

    ltot = n_batch * SP
    flops = 2 * ltot * (
        F * 2 * F                                       # compress_in
        + G * 9 * (4 * F * F + F * 4 * F)               # per-tap up + down matmuls
        + (G - 1) * (2 * F * F + 2 * 4 * F * 4 * F)     # uptran split + downtran block-diag
        + 2 * F * F)                                    # compress_out split
    bytes_accessed = sum(int(np.prod(a.shape)) * a.dtype.itemsize for a in operands) \
        + 4 * F * ltot

    return pl.pallas_call(
        fused_feedback_kernel,
        out_shape=jax.ShapeDtypeStruct((F, n_batch * SP), jnp.float32),
        grid=grid,
        in_specs=in_specs,
        out_specs=act_spec(F),
        compiler_params=pltpu.CompilerParams(
            dimension_semantics=("parallel",),
            vmem_limit_bytes=32 * 1024 * 1024),
        cost_estimate=pl.CostEstimate(
            flops=int(flops), transcendentals=0, bytes_accessed=int(bytes_accessed)),
    )(*operands)


# ----------------------- NCHW <-> padded channels-x-lanes layout --------------
def _to_padded_flat(img_nchw):               # (N, C, H, W) -> (C, N*SP) with zero halo
    n, c, _, _ = img_nchw.shape
    xp = jnp.pad(img_nchw, ((0, 0), (0, 0), (1, 1), (1, 1)))
    xp = jnp.transpose(xp, (1, 0, 2, 3)).reshape(c, n, HP * WP)
    xp = jnp.pad(xp, ((0, 0), (0, 0), (0, SP - HP * WP)))
    return xp.reshape(c, n * SP)


def _from_padded_flat(flat, n_batch):        # (C, N*SP) -> (N, C, H, W)
    c = flat.shape[0]
    xp = flat.reshape(c, n_batch, SP)[:, :, :HP * WP].reshape(c, n_batch, HP, WP)
    return jnp.transpose(xp[:, :, 1:LR_H + 1, 1:LR_W + 1], (1, 0, 2, 3))


def feedback_block_pallas(x_nchw, packed, last_hidden=None, fold_batch=True):
    """Functional FeedbackBlock.forward.  last_hidden=None == should_reset branch
    (last_hidden <- x); the returned output is the new last_hidden."""
    if last_hidden is None:
        last_hidden = x_nchw
    n_batch = x_nchw.shape[0]
    xin = jnp.concatenate([x_nchw, last_hidden], axis=1).astype(jnp.float32)
    xin_flat = _to_padded_flat(xin).astype(jnp.bfloat16)
    out_flat = _fused_call(xin_flat, packed, n_batch, fold_batch)
    return _from_padded_flat(out_flat, n_batch)


# ------------------------- pure-JAX reference (lax.conv) ----------------------
def _prelu(x):
    return jnp.where(x >= 0.0, x, PRELU_SLOPE * x)


def _ref_conv(x, w, b, stride, padding):
    y = lax.conv_general_dilated(
        x, w, (stride, stride), [(padding, padding)] * 2,
        dimension_numbers=("NCHW", "OIHW", "NCHW"), precision=lax.Precision.HIGHEST)
    return y + b.reshape(1, -1, 1, 1)


def _ref_deconv(x, w, b, stride, padding, k):
    w_f = jnp.transpose(w, (1, 0, 2, 3))[:, :, ::-1, ::-1]
    pad = k - 1 - padding
    y = lax.conv_general_dilated(
        x, w_f, (1, 1), [(pad, pad)] * 2, lhs_dilation=(stride, stride),
        dimension_numbers=("NCHW", "OIHW", "NCHW"), precision=lax.Precision.HIGHEST)
    return y + b.reshape(1, -1, 1, 1)


def feedback_block_reference(x, params, last_hidden=None):
    if last_hidden is None:
        last_hidden = x
    h = _prelu(_ref_conv(jnp.concatenate([x, last_hidden], axis=1),
                         *params["compress_in"], 1, 0))
    lr, hr = [h], []
    for idx in range(NUM_GROUPS):
        t = jnp.concatenate(lr, axis=1)
        if idx > 0:
            t = _prelu(_ref_conv(t, *params["uptran"][idx - 1], 1, 0))
        u = _prelu(_ref_deconv(t, *params["up"][idx], STRIDE, PADDING, KSIZE))
        hr.append(u)
        t2 = jnp.concatenate(hr, axis=1)
        if idx > 0:
            t2 = _prelu(_ref_conv(t2, *params["downtran"][idx - 1], 1, 0))
        d = _prelu(_ref_conv(t2, *params["down"][idx], STRIDE, PADDING))
        lr.append(d)
    return _prelu(_ref_conv(jnp.concatenate(lr[1:], axis=1), *params["compress_out"], 1, 0))


# ------------------------------------ driver ----------------------------------
if __name__ == "__main__":
    key = jax.random.PRNGKey(0)
    kx, kp = jax.random.split(key)

    x = jax.random.normal(kx, (BATCH, NUM_FEATURES, LR_H, LR_W), jnp.float32)
    params = init_params(kp)
    packed = pack_params(params)
    fold = _should_fold_batch()

    fwd = jax.jit(partial(feedback_block_pallas, packed=packed, fold_batch=fold))
    out = fwd(x)
    jax.block_until_ready(out)

    assert out.shape == (BATCH, NUM_FEATURES, LR_H, LR_W), out.shape
    assert out.dtype == jnp.float32

    # correctness vs. a pure-JAX reference of the same forward pass
    ref = jax.jit(partial(feedback_block_reference, params=params))(x)
    np.testing.assert_allclose(np.asarray(out), np.asarray(ref), rtol=3e-2, atol=3e-2)

    print("KERNEL_OK")
</pallas_src>

<mosaic_0001>
module attributes {stable_mosaic.version = 11 : i64} {
  func.func @fused_feedback_kernel(%arg0: i32, %arg1: memref<16x768xbf16, #tpu.memory_space<vmem>>, %arg2: memref<1x768xf32, #tpu.memory_space<vmem>>, %arg3: memref<8x16xbf16, #tpu.memory_space<vmem>>, %arg4: memref<8x1xf32, #tpu.memory_space<vmem>>, %arg5: memref<2x9x32x8xbf16, #tpu.memory_space<vmem>>, %arg6: memref<2x32x1xf32, #tpu.memory_space<vmem>>, %arg7: memref<2x9x8x32xbf16, #tpu.memory_space<vmem>>, %arg8: memref<2x8x1xf32, #tpu.memory_space<vmem>>, %arg9: memref<8x16xbf16, #tpu.memory_space<vmem>>, %arg10: memref<8x1xf32, #tpu.memory_space<vmem>>, %arg11: memref<2x32x32xbf16, #tpu.memory_space<vmem>>, %arg12: memref<32x1xf32, #tpu.memory_space<vmem>>, %arg13: memref<8x16xbf16, #tpu.memory_space<vmem>>, %arg14: memref<8x1xf32, #tpu.memory_space<vmem>>, %arg15: memref<8x768xf32, #tpu.memory_space<vmem>>) attributes {dimension_semantics = [#tpu.dimension_semantics<parallel>], iteration_bounds = array<i64: 1>, scalar_prefetch = 0 : i64, scratch_operands = 0 : i64, tpu.core_type = #tpu.core_type<tc>, window_params = [{transform_indices = @transform_0, window_bounds = array<i64: 16, 768>}, {pipeline_mode = #tpu.pipeline_mode<synchronous>, transform_indices = @transform_1, window_bounds = array<i64: 1, 768>}, {pipeline_mode = #tpu.pipeline_mode<synchronous>, transform_indices = @transform_2, window_bounds = array<i64: 8, 16>}, {pipeline_mode = #tpu.pipeline_mode<synchronous>, transform_indices = @transform_3, window_bounds = array<i64: 8, 1>}, {pipeline_mode = #tpu.pipeline_mode<synchronous>, transform_indices = @transform_4, window_bounds = array<i64: 2, 9, 32, 8>}, {pipeline_mode = #tpu.pipeline_mode<synchronous>, transform_indices = @transform_5, window_bounds = array<i64: 2, 32, 1>}, {pipeline_mode = #tpu.pipeline_mode<synchronous>, transform_indices = @transform_6, window_bounds = array<i64: 2, 9, 8, 32>}, {pipeline_mode = #tpu.pipeline_mode<synchronous>, transform_indices = @transform_7, window_bounds = array<i64: 2, 8, 1>}, {pipeline_mode = #tpu.pipeline_mode<synchronous>, transform_indices = @transform_8, window_bounds = array<i64: 8, 16>}, {pipeline_mode = #tpu.pipeline_mode<synchronous>, transform_indices = @transform_9, window_bounds = array<i64: 8, 1>}, {pipeline_mode = #tpu.pipeline_mode<synchronous>, transform_indices = @transform_10, window_bounds = array<i64: 2, 32, 32>}, {pipeline_mode = #tpu.pipeline_mode<synchronous>, transform_indices = @transform_11, window_bounds = array<i64: 32, 1>}, {pipeline_mode = #tpu.pipeline_mode<synchronous>, transform_indices = @transform_12, window_bounds = array<i64: 8, 16>}, {pipeline_mode = #tpu.pipeline_mode<synchronous>, transform_indices = @transform_13, window_bounds = array<i64: 8, 1>}, {transform_indices = @transform_14, window_bounds = array<i64: 8, 768>}]} {
    %c0 = arith.constant 0 : index
    %c0_0 = arith.constant 0 : index
    %0 = vector.load %arg2[%c0, %c0_0] : memref<1x768xf32, #tpu.memory_space<vmem>>, vector<1x768xf32>
    %c0_1 = arith.constant 0 : index
    %c0_2 = arith.constant 0 : index
    %1 = vector.load %arg1[%c0_1, %c0_2] : memref<16x768xbf16, #tpu.memory_space<vmem>>, vector<16x768xbf16>
    %c0_3 = arith.constant 0 : index
    %c0_4 = arith.constant 0 : index
    %2 = vector.load %arg3[%c0_3, %c0_4] : memref<8x16xbf16, #tpu.memory_space<vmem>>, vector<8x16xbf16>
    %cst = arith.constant dense<0.000000e+00> : vector<8x768xf32>
    %3 = tpu.matmul %2, %1, %cst {dimension_numbers = #tpu.dot_dimension_numbers<[1], [0], [0], [1], [0, 0, 1, 1], [], []>} : vector<8x16xbf16>, vector<16x768xbf16>, vector<8x768xf32> -> vector<8x768xf32>
    %c0_5 = arith.constant 0 : index
    %c0_6 = arith.constant 0 : index
    %4 = vector.load %arg4[%c0_5, %c0_6] : memref<8x1xf32, #tpu.memory_space<vmem>>, vector<8x1xf32>
    %5 = vector.broadcast %4 : vector<8x1xf32> to vector<8x768xf32>
    %6 = arith.addf %3, %5 : vector<8x768xf32>
    %cst_7 = arith.constant 0.000000e+00 : f32
    %7 = vector.broadcast %cst_7 : f32 to vector<8x768xf32>
    %8 = arith.cmpf oge, %6, %7 : vector<8x768xf32>
    %cst_8 = arith.constant 2.500000e-01 : f32
    %9 = vector.broadcast %cst_8 : f32 to vector<8x768xf32>
    %10 = arith.mulf %9, %6 : vector<8x768xf32>
    %11 = arith.select %8, %6, %10 : vector<8x768xi1>, vector<8x768xf32>
    %12 = vector.broadcast %0 : vector<1x768xf32> to vector<8x768xf32>
    %13 = arith.mulf %11, %12 : vector<8x768xf32>
    %14 = arith.truncf %13 : vector<8x768xf32> to vector<8x768xbf16>
    %c19_i32 = arith.constant 19 : i32
    %15 = tpu.dynamic_rotate %13 by %c19_i32 dim 1 : vector<8x768xf32>, i32 -> vector<8x768xf32>
    %c0_9 = arith.constant 0 : index
    %c0_10 = arith.constant 0 : index
    %c0_11 = arith.constant 0 : index
    %c0_12 = arith.constant 0 : index
    %16 = vector.load %arg5[%c0_9, %c0_10, %c0_11, %c0_12] : memref<2x9x32x8xbf16, #tpu.memory_space<vmem>>, vector<1x1x32x8xbf16>
    %17 = vector.shape_cast %16 : vector<1x1x32x8xbf16> to vector<32x8xbf16>
    %18 = arith.truncf %15 : vector<8x768xf32> to vector<8x768xbf16>
    %cst_13 = arith.constant dense<0.000000e+00> : vector<32x768xf32>
    %19 = tpu.matmul %17, %18, %cst_13 {dimension_numbers = #tpu.dot_dimension_numbers<[1], [0], [0], [1], [0, 0, 1, 1], [], []>} : vector<32x8xbf16>, vector<8x768xbf16>, vector<32x768xf32> -> vector<32x768xf32>
    %c18_i32 = arith.constant 18 : i32
    %20 = tpu.dynamic_rotate %13 by %c18_i32 dim 1 : vector<8x768xf32>, i32 -> vector<8x768xf32>
    %c0_14 = arith.constant 0 : index
    %c1 = arith.constant 1 : index
    %c0_15 = arith.constant 0 : index
    %c0_16 = arith.constant 0 : index
    %21 = vector.load %arg5[%c0_14, %c1, %c0_15, %c0_16] : memref<2x9x32x8xbf16, #tpu.memory_space<vmem>>, vector<1x1x32x8xbf16>
    %22 = vector.shape_cast %21 : vector<1x1x32x8xbf16> to vector<32x8xbf16>
    %23 = arith.truncf %20 : vector<8x768xf32> to vector<8x768xbf16>
    %cst_17 = arith.constant dense<0.000000e+00> : vector<32x768xf32>
    %24 = tpu.matmul %22, %23, %cst_17 {dimension_numbers = #tpu.dot_dimension_numbers<[1], [0], [0], [1], [0, 0, 1, 1], [], []>} : vector<32x8xbf16>, vector<8x768xbf16>, vector<32x768xf32> -> vector<32x768xf32>
    %25 = arith.addf %19, %24 : vector<32x768xf32>
    %c17_i32 = arith.constant 17 : i32
    %26 = tpu.dynamic_rotate %13 by %c17_i32 dim 1 : vector<8x768xf32>, i32 -> vector<8x768xf32>
    %c0_18 = arith.constant 0 : index
    %c2 = arith.constant 2 : index
    %c0_19 = arith.constant 0 : index
    %c0_20 = arith.constant 0 : index
    %27 = vector.load %arg5[%c0_18, %c2, %c0_19, %c0_20] : memref<2x9x32x8xbf16, #tpu.memory_space<vmem>>, vector<1x1x32x8xbf16>
    %28 = vector.shape_cast %27 : vector<1x1x32x8xbf16> to vector<32x8xbf16>
    %29 = arith.truncf %26 : vector<8x768xf32> to vector<8x768xbf16>
    %cst_21 = arith.constant dense<0.000000e+00> : vector<32x768xf32>
    %30 = tpu.matmul %28, %29, %cst_21 {dimension_numbers = #tpu.dot_dimension_numbers<[1], [0], [0], [1], [0, 0, 1, 1], [], []>} : vector<32x8xbf16>, vector<8x768xbf16>, vector<32x768xf32> -> vector<32x768xf32>
    %31 = arith.addf %25, %30 : vector<32x768xf32>
    %c1_i32 = arith.constant 1 : i32
    %32 = tpu.dynamic_rotate %13 by %c1_i32 dim 1 : vector<8x768xf32>, i32 -> vector<8x768xf32>
    %c0_22 = arith.constant 0 : index
    %c3 = arith.constant 3 : index
    %c0_23 = arith.constant 0 : index
    %c0_24 = arith.constant 0 : index
    %33 = vector.load %arg5[%c0_22, %c3, %c0_23, %c0_24] : memref<2x9x32x8xbf16, #tpu.memory_space<vmem>>, vector<1x1x32x8xbf16>
    %34 = vector.shape_cast %33 : vector<1x1x32x8xbf16> to vector<32x8xbf16>
    %35 = arith.truncf %32 : vector<8x768xf32> to vector<8x768xbf16>
    %cst_25 = arith.constant dense<0.000000e+00> : vector<32x768xf32>
    %36 = tpu.matmul %34, %35, %cst_25 {dimension_numbers = #tpu.dot_dimension_numbers<[1], [0], [0], [1], [0, 0, 1, 1], [], []>} : vector<32x8xbf16>, vector<8x768xbf16>, vector<32x768xf32> -> vector<32x768xf32>
    %37 = arith.addf %31, %36 : vector<32x768xf32>
    %c0_26 = arith.constant 0 : index
    %c4 = arith.constant 4 : index
    %c0_27 = arith.constant 0 : index
    %c0_28 = arith.constant 0 : index
    %38 = vector.load %arg5[%c0_26, %c4, %c0_27, %c0_28] : memref<2x9x32x8xbf16, #tpu.memory_space<vmem>>, vector<1x1x32x8xbf16>
    %39 = vector.shape_cast %38 : vector<1x1x32x8xbf16> to vector<32x8xbf16>
    %40 = arith.truncf %13 : vector<8x768xf32> to vector<8x768xbf16>
    %cst_29 = arith.constant dense<0.000000e+00> : vector<32x768xf32>
    %41 = tpu.matmul %39, %40, %cst_29 {dimension_numbers = #tpu.dot_dimension_numbers<[1], [0], [0], [1], [0, 0, 1, 1], [], []>} : vector<32x8xbf16>, vector<8x768xbf16>, vector<32x768xf32> -> vector<32x768xf32>
    %42 = arith.addf %37, %41 : vector<32x768xf32>
    %c767_i32 = arith.constant 767 : i32
    %43 = tpu.dynamic_rotate %13 by %c767_i32 dim 1 : vector<8x768xf32>, i32 -> vector<8x768xf32>
    %c0_30 = arith.constant 0 : index
    %c5 = arith.constant 5 : index
    %c0_31 = arith.constant 0 : index
    %c0_32 = arith.constant 0 : index
    %44 = vector.load %arg5[%c0_30, %c5, %c0_31, %c0_32] : memref<2x9x32x8xbf16, #tpu.memory_space<vmem>>, vector<1x1x32x8xbf16>
    %45 = vector.shape_cast %44 : vector<1x1x32x8xbf16> to vector<32x8xbf16>
    %46 = arith.truncf %43 : vector<8x768xf32> to vector<8x768xbf16>
    %cst_33 = arith.constant dense<0.000000e+00> : vector<32x768xf32>
    %47 = tpu.matmul %45, %46, %cst_33 {dimension_numbers = #tpu.dot_dimension_numbers<[1], [0], [0], [1], [0, 0, 1, 1], [], []>} : vector<32x8xbf16>, vector<8x768xbf16>, vector<32x768xf32> -> vector<32x768xf32>
    %48 = arith.addf %42, %47 : vector<32x768xf32>
    %c751_i32 = arith.constant 751 : i32
    %49 = tpu.dynamic_rotate %13 by %c751_i32 dim 1 : vector<8x768xf32>, i32 -> vector<8x768xf32>
    %c0_34 = arith.constant 0 : index
    %c6 = arith.constant 6 : index
    %c0_35 = arith.constant 0 : index
    %c0_36 = arith.constant 0 : index
    %50 = vector.load %arg5[%c0_34, %c6, %c0_35, %c0_36] : memref<2x9x32x8xbf16, #tpu.memory_space<vmem>>, vector<1x1x32x8xbf16>
    %51 = vector.shape_cast %50 : vector<1x1x32x8xbf16> to vector<32x8xbf16>
    %52 = arith.truncf %49 : vector<8x768xf32> to vector<8x768xbf16>
    %cst_37 = arith.constant dense<0.000000e+00> : vector<32x768xf32>
    %53 = tpu.matmul %51, %52, %cst_37 {dimension_numbers = #tpu.dot_dimension_numbers<[1], [0], [0], [1], [0, 0, 1, 1], [], []>} : vector<32x8xbf16>, vector<8x768xbf16>, vector<32x768xf32> -> vector<32x768xf32>
    %54 = arith.addf %48, %53 : vector<32x768xf32>
    %c750_i32 = arith.constant 750 : i32
    %55 = tpu.dynamic_rotate %13 by %c750_i32 dim 1 : vector<8x768xf32>, i32 -> vector<8x768xf32>
    %c0_38 = arith.constant 0 : index
    %c7 = arith.constant 7 : index
    %c0_39 = arith.constant 0 : index
    %c0_40 = arith.constant 0 : index
    %56 = vector.load %arg5[%c0_38, %c7, %c0_39, %c0_40] : memref<2x9x32x8xbf16, #tpu.memory_space<vmem>>, vector<1x1x32x8xbf16>
    %57 = vector.shape_cast %56 : vector<1x1x32x8xbf16> to vector<32x8xbf16>
    %58 = arith.truncf %55 : vector<8x768xf32> to vector<8x768xbf16>
    %cst_41 = arith.constant dense<0.000000e+00> : vector<32x768xf32>
    %59 = tpu.matmul %57, %58, %cst_41 {dimension_numbers = #tpu.dot_dimension_numbers<[1], [0], [0], [1], [0, 0, 1, 1], [], []>} : vector<32x8xbf16>, vector<8x768xbf16>, vector<32x768xf32> -> vector<32x768xf32>
    %60 = arith.addf %54, %59 : vector<32x768xf32>
    %c749_i32 = arith.constant 749 : i32
    %61 = tpu.dynamic_rotate %13 by %c749_i32 dim 1 : vector<8x768xf32>, i32 -> vector<8x768xf32>
    %c0_42 = arith.constant 0 : index
    %c8 = arith.constant 8 : index
    %c0_43 = arith.constant 0 : index
    %c0_44 = arith.constant 0 : index
    %62 = vector.load %arg5[%c0_42, %c8, %c0_43, %c0_44] : memref<2x9x32x8xbf16, #tpu.memory_space<vmem>>, vector<1x1x32x8xbf16>
    %63 = vector.shape_cast %62 : vector<1x1x32x8xbf16> to vector<32x8xbf16>
    %64 = arith.truncf %61 : vector<8x768xf32> to vector<8x768xbf16>
    %cst_45 = arith.constant dense<0.000000e+00> : vector<32x768xf32>
    %65 = tpu.matmul %63, %64, %cst_45 {dimension_numbers = #tpu.dot_dimension_numbers<[1], [0], [0], [1], [0, 0, 1, 1], [], []>} : vector<32x8xbf16>, vector<8x768xbf16>, vector<32x768xf32> -> vector<32x768xf32>
    %66 = arith.addf %60, %65 : vector<32x768xf32>
    %c0_46 = arith.constant 0 : index
    %c0_47 = arith.constant 0 : index
    %c0_48 = arith.constant 0 : index
    %67 = vector.load %arg6[%c0_46, %c0_47, %c0_48] : memref<2x32x1xf32, #tpu.memory_space<vmem>>, vector<1x32x1xf32>
    %68 = vector.shape_cast %67 : vector<1x32x1xf32> to vector<32x1xf32>
    %69 = vector.broadcast %68 : vector<32x1xf32> to vector<32x768xf32>
    %70 = arith.addf %66, %69 : vector<32x768xf32>
    %cst_49 = arith.constant 0.000000e+00 : f32
    %71 = vector.broadcast %cst_49 : f32 to vector<32x768xf32>
    %72 = arith.cmpf oge, %70, %71 : vector<32x768xf32>
    %cst_50 = arith.constant 2.500000e-01 : f32
    %73 = vector.broadcast %cst_50 : f32 to vector<32x768xf32>
    %74 = arith.mulf %73, %70 : vector<32x768xf32>
    %75 = arith.select %72, %70, %74 : vector<32x768xi1>, vector<32x768xf32>
    %76 = vector.broadcast %0 : vector<1x768xf32> to vector<32x768xf32>
    %77 = arith.mulf %75, %76 : vector<32x768xf32>
    %78 = arith.truncf %77 : vector<32x768xf32> to vector<32x768xbf16>
    %c0_51 = arith.constant 0 : index
    %c0_52 = arith.constant 0 : index
    %c0_53 = arith.constant 0 : index
    %c0_54 = arith.constant 0 : index
    %79 = vector.load %arg7[%c0_51, %c0_52, %c0_53, %c0_54] : memref<2x9x8x32xbf16, #tpu.memory_space<vmem>>, vector<1x1x8x32xbf16>
    %80 = vector.shape_cast %79 : vector<1x1x8x32xbf16> to vector<8x32xbf16>
    %cst_55 = arith.constant dense<0.000000e+00> : vector<8x768xf32>
    %81 = tpu.matmul %80, %78, %cst_55 {dimension_numbers = #tpu.dot_dimension_numbers<[1], [0], [0], [1], [0, 0, 1, 1], [], []>} : vector<8x32xbf16>, vector<32x768xbf16>, vector<8x768xf32> -> vector<8x768xf32>
    %c19_i32_56 = arith.constant 19 : i32
    %82 = tpu.dynamic_rotate %81 by %c19_i32_56 dim 1 : vector<8x768xf32>, i32 -> vector<8x768xf32>
    %c0_57 = arith.constant 0 : index
    %c1_58 = arith.constant 1 : index
    %c0_59 = arith.constant 0 : index
    %c0_60 = arith.constant 0 : index
    %83 = vector.load %arg7[%c0_57, %c1_58, %c0_59, %c0_60] : memref<2x9x8x32xbf16, #tpu.memory_space<vmem>>, vector<1x1x8x32xbf16>
    %84 = vector.shape_cast %83 : vector<1x1x8x32xbf16> to vector<8x32xbf16>
    %cst_61 = arith.constant dense<0.000000e+00> : vector<8x768xf32>
    %85 = tpu.matmul %84, %78, %cst_61 {dimension_numbers = #tpu.dot_dimension_numbers<[1], [0], [0], [1], [0, 0, 1, 1], [], []>} : vector<8x32xbf16>, vector<32x768xbf16>, vector<8x768xf32> -> vector<8x768xf32>
    %c18_i32_62 = arith.constant 18 : i32
    %86 = tpu.dynamic_rotate %85 by %c18_i32_62 dim 1 : vector<8x768xf32>, i32 -> vector<8x768xf32>
    %87 = arith.addf %82, %86 : vector<8x768xf32>
    %c0_63 = arith.constant 0 : index
    %c2_64 = arith.constant 2 : index
    %c0_65 = arith.constant 0 : index
    %c0_66 = arith.constant 0 : index
    %88 = vector.load %arg7[%c0_63, %c2_64, %c0_65, %c0_66] : memref<2x9x8x32xbf16, #tpu.memory_space<vmem>>, vector<1x1x8x32xbf16>
    %89 = vector.shape_cast %88 : vector<1x1x8x32xbf16> to vector<8x32xbf16>
    %cst_67 = arith.constant dense<0.000000e+00> : vector<8x768xf32>
    %90 = tpu.matmul %89, %78, %cst_67 {dimension_numbers = #tpu.dot_dimension_numbers<[1], [0], [0], [1], [0, 0, 1, 1], [], []>} : vector<8x32xbf16>, vector<32x768xbf16>, vector<8x768xf32> -> vector<8x768xf32>
    %c17_i32_68 = arith.constant 17 : i32
    %91 = tpu.dynamic_rotate %90 by %c17_i32_68 dim 1 : vector<8x768xf32>, i32 -> vector<8x768xf32>
    %92 = arith.addf %87, %91 : vector<8x768xf32>
    %c0_69 = arith.constant 0 : index
    %c3_70 = arith.constant 3 : index
    %c0_71 = arith.constant 0 : index
    %c0_72 = arith.constant 0 : index
    %93 = vector.load %arg7[%c0_69, %c3_70, %c0_71, %c0_72] : memref<2x9x8x32xbf16, #tpu.memory_space<vmem>>, vector<1x1x8x32xbf16>
    %94 = vector.shape_cast %93 : vector<1x1x8x32xbf16> to vector<8x32xbf16>
    %cst_73 = arith.constant dense<0.000000e+00> : vector<8x768xf32>
    %95 = tpu.matmul %94, %78, %cst_73 {dimension_numbers = #tpu.dot_dimension_numbers<[1], [0], [0], [1], [0, 0, 1, 1], [], []>} : vector<8x32xbf16>, vector<32x768xbf16>, vector<8x768xf32> -> vector<8x768xf32>
    %c1_i32_74 = arith.constant 1 : i32
    %96 = tpu.dynamic_rotate %95 by %c1_i32_74 dim 1 : vector<8x768xf32>, i32 -> vector<8x768xf32>
    %97 = arith.addf %92, %96 : vector<8x768xf32>
    %c0_75 = arith.constant 0 : index
    %c4_76 = arith.constant 4 : index
    %c0_77 = arith.constant 0 : index
    %c0_78 = arith.constant 0 : index
    %98 = vector.load %arg7[%c0_75, %c4_76, %c0_77, %c0_78] : memref<2x9x8x32xbf16, #tpu.memory_space<vmem>>, vector<1x1x8x32xbf16>
    %99 = vector.shape_cast %98 : vector<1x1x8x32xbf16> to vector<8x32xbf16>
    %cst_79 = arith.constant dense<0.000000e+00> : vector<8x768xf32>
    %100 = tpu.matmul %99, %78, %cst_79 {dimension_numbers = #tpu.dot_dimension_numbers<[1], [0], [0], [1], [0, 0, 1, 1], [], []>} : vector<8x32xbf16>, vector<32x768xbf16>, vector<8x768xf32> -> vector<8x768xf32>
    %101 = arith.addf %97, %100 : vector<8x768xf32>
    %c0_80 = arith.constant 0 : index
    %c5_81 = arith.constant 5 : index
    %c0_82 = arith.constant 0 : index
    %c0_83 = arith.constant 0 : index
    %102 = vector.load %arg7[%c0_80, %c5_81, %c0_82, %c0_83] : memref<2x9x8x32xbf16, #tpu.memory_space<vmem>>, vector<1x1x8x32xbf16>
    %103 = vector.shape_cast %102 : vector<1x1x8x32xbf16> to vector<8x32xbf16>
    %cst_84 = arith.constant dense<0.000000e+00> : vector<8x768xf32>
    %104 = tpu.matmul %103, %78, %cst_84 {dimension_numbers = #tpu.dot_dimension_numbers<[1], [0], [0], [1], [0, 0, 1, 1], [], []>} : vector<8x32xbf16>, vector<32x768xbf16>, vector<8x768xf32> -> vector<8x768xf32>
    %c767_i32_85 = arith.constant 767 : i32
    %105 = tpu.dynamic_rotate %104 by %c767_i32_85 dim 1 : vector<8x768xf32>, i32 -> vector<8x768xf32>
    %106 = arith.addf %101, %105 : vector<8x768xf32>
    %c0_86 = arith.constant 0 : index
    %c6_87 = arith.constant 6 : index
    %c0_88 = arith.constant 0 : index
    %c0_89 = arith.constant 0 : index
    %107 = vector.load %arg7[%c0_86, %c6_87, %c0_88, %c0_89] : memref<2x9x8x32xbf16, #tpu.memory_space<vmem>>, vector<1x1x8x32xbf16>
    %108 = vector.shape_cast %107 : vector<1x1x8x32xbf16> to vector<8x32xbf16>
    %cst_90 = arith.constant dense<0.000000e+00> : vector<8x768xf32>
    %109 = tpu.matmul %108, %78, %cst_90 {dimension_numbers = #tpu.dot_dimension_numbers<[1], [0], [0], [1], [0, 0, 1, 1], [], []>} : vector<8x32xbf16>, vector<32x768xbf16>, vector<8x768xf32> -> vector<8x768xf32>
    %c751_i32_91 = arith.constant 751 : i32
    %110 = tpu.dynamic_rotate %109 by %c751_i32_91 dim 1 : vector<8x768xf32>, i32 -> vector<8x768xf32>
    %111 = arith.addf %106, %110 : vector<8x768xf32>
    %c0_92 = arith.constant 0 : index
    %c7_93 = arith.constant 7 : index
    %c0_94 = arith.constant 0 : index
    %c0_95 = arith.constant 0 : index
    %112 = vector.load %arg7[%c0_92, %c7_93, %c0_94, %c0_95] : memref<2x9x8x32xbf16, #tpu.memory_space<vmem>>, vector<1x1x8x32xbf16>
    %113 = vector.shape_cast %112 : vector<1x1x8x32xbf16> to vector<8x32xbf16>
    %cst_96 = arith.constant dense<0.000000e+00> : vector<8x768xf32>
    %114 = tpu.matmul %113, %78, %cst_96 {dimension_numbers = #tpu.dot_dimension_numbers<[1], [0], [0], [1], [0, 0, 1, 1], [], []>} : vector<8x32xbf16>, vector<32x768xbf16>, vector<8x768xf32> -> vector<8x768xf32>
    %c750_i32_97 = arith.constant 750 : i32
    %115 = tpu.dynamic_rotate %114 by %c750_i32_97 dim 1 : vector<8x768xf32>, i32 -> vector<8x768xf32>
    %116 = arith.addf %111, %115 : vector<8x768xf32>
    %c0_98 = arith.constant 0 : index
    %c8_99 = arith.constant 8 : index
    %c0_100 = arith.constant 0 : index
    %c0_101 = arith.constant 0 : index
    %117 = vector.load %arg7[%c0_98, %c8_99, %c0_100, %c0_101] : memref<2x9x8x32xbf16, #tpu.memory_space<vmem>>, vector<1x1x8x32xbf16>
    %118 = vector.shape_cast %117 : vector<1x1x8x32xbf16> to vector<8x32xbf16>
    %cst_102 = arith.constant dense<0.000000e+00> : vector<8x768xf32>
    %119 = tpu.matmul %118, %78, %cst_102 {dimension_numbers = #tpu.dot_dimension_numbers<[1], [0], [0], [1], [0, 0, 1, 1], [], []>} : vector<8x32xbf16>, vector<32x768xbf16>, vector<8x768xf32> -> vector<8x768xf32>
    %c749_i32_103 = arith.constant 749 : i32
    %120 = tpu.dynamic_rotate %119 by %c749_i32_103 dim 1 : vector<8x768xf32>, i32 -> vector<8x768xf32>
    %121 = arith.addf %116, %120 : vector<8x768xf32>
    %c0_104 = arith.constant 0 : index
    %c0_105 = arith.constant 0 : index
    %c0_106 = arith.constant 0 : index
    %122 = vector.load %arg8[%c0_104, %c0_105, %c0_106] : memref<2x8x1xf32, #tpu.memory_space<vmem>>, vector<1x8x1xf32>
    %123 = vector.shape_cast %122 : vector<1x8x1xf32> to vector<8x1xf32>
    %124 = vector.broadcast %123 : vector<8x1xf32> to vector<8x768xf32>
    %125 = arith.addf %121, %124 : vector<8x768xf32>
    %cst_107 = arith.constant 0.000000e+00 : f32
    %126 = vector.broadcast %cst_107 : f32 to vector<8x768xf32>
    %127 = arith.cmpf oge, %125, %126 : vector<8x768xf32>
    %cst_108 = arith.constant 2.500000e-01 : f32
    %128 = vector.broadcast %cst_108 : f32 to vector<8x768xf32>
    %129 = arith.mulf %128, %125 : vector<8x768xf32>
    %130 = arith.select %127, %125, %129 : vector<8x768xi1>, vector<8x768xf32>
    %131 = arith.truncf %130 : vector<8x768xf32> to vector<8x768xbf16>
    %c0_109 = arith.constant 0 : index
    %c0_110 = arith.constant 0 : index
    %132 = vector.load %arg9[%c0_109, %c0_110] : memref<8x16xbf16, #tpu.memory_space<vmem>>, vector<8x16xbf16>
    %133 = vector.extract_strided_slice %132 {offsets = [0, 0], sizes = [8, 8], strides = [1, 1]} : vector<8x16xbf16> to vector<8x8xbf16>
    %cst_111 = arith.constant dense<0.000000e+00> : vector<8x768xf32>
    %134 = tpu.matmul %133, %14, %cst_111 {dimension_numbers = #tpu.dot_dimension_numbers<[1], [0], [0], [1], [0, 0, 1, 1], [], []>} : vector<8x8xbf16>, vector<8x768xbf16>, vector<8x768xf32> -> vector<8x768xf32>
    %135 = vector.extract_strided_slice %132 {offsets = [0, 8], sizes = [8, 8], strides = [1, 1]} : vector<8x16xbf16> to vector<8x8xbf16>
    %cst_112 = arith.constant dense<0.000000e+00> : vector<8x768xf32>
    %136 = tpu.matmul %135, %131, %cst_112 {dimension_numbers = #tpu.dot_dimension_numbers<[1], [0], [0], [1], [0, 0, 1, 1], [], []>} : vector<8x8xbf16>, vector<8x768xbf16>, vector<8x768xf32> -> vector<8x768xf32>
    %137 = arith.addf %134, %136 : vector<8x768xf32>
    %c0_113 = arith.constant 0 : index
    %c0_114 = arith.constant 0 : index
    %138 = vector.load %arg10[%c0_113, %c0_114] : memref<8x1xf32, #tpu.memory_space<vmem>>, vector<8x1xf32>
    %139 = vector.broadcast %138 : vector<8x1xf32> to vector<8x768xf32>
    %140 = arith.addf %137, %139 : vector<8x768xf32>
    %cst_115 = arith.constant 0.000000e+00 : f32
    %141 = vector.broadcast %cst_115 : f32 to vector<8x768xf32>
    %142 = arith.cmpf oge, %140, %141 : vector<8x768xf32>
    %cst_116 = arith.constant 2.500000e-01 : f32
    %143 = vector.broadcast %cst_116 : f32 to vector<8x768xf32>
    %144 = arith.mulf %143, %140 : vector<8x768xf32>
    %145 = arith.select %142, %140, %144 : vector<8x768xi1>, vector<8x768xf32>
    %146 = vector.broadcast %0 : vector<1x768xf32> to vector<8x768xf32>
    %147 = arith.mulf %145, %146 : vector<8x768xf32>
    %c19_i32_117 = arith.constant 19 : i32
    %148 = tpu.dynamic_rotate %147 by %c19_i32_117 dim 1 : vector<8x768xf32>, i32 -> vector<8x768xf32>
    %c1_118 = arith.constant 1 : index
    %c0_119 = arith.constant 0 : index
    %c0_120 = arith.constant 0 : index
    %c0_121 = arith.constant 0 : index
    %149 = vector.load %arg5[%c1_118, %c0_119, %c0_120, %c0_121] : memref<2x9x32x8xbf16, #tpu.memory_space<vmem>>, vector<1x1x32x8xbf16>
    %150 = vector.shape_cast %149 : vector<1x1x32x8xbf16> to vector<32x8xbf16>
    %151 = arith.truncf %148 : vector<8x768xf32> to vector<8x768xbf16>
    %cst_122 = arith.constant dense<0.000000e+00> : vector<32x768xf32>
    %152 = tpu.matmul %150, %151, %cst_122 {dimension_numbers = #tpu.dot_dimension_numbers<[1], [0], [0], [1], [0, 0, 1, 1], [], []>} : vector<32x8xbf16>, vector<8x768xbf16>, vector<32x768xf32> -> vector<32x768xf32>
    %c18_i32_123 = arith.constant 18 : i32
    %153 = tpu.dynamic_rotate %147 by %c18_i32_123 dim 1 : vector<8x768xf32>, i32 -> vector<8x768xf32>
    %c1_124 = arith.constant 1 : index
    %c1_125 = arith.constant 1 : index
    %c0_126 = arith.constant 0 : index
    %c0_127 = arith.constant 0 : index
    %154 = vector.load %arg5[%c1_124, %c1_125, %c0_126, %c0_127] : memref<2x9x32x8xbf16, #tpu.memory_space<vmem>>, vector<1x1x32x8xbf16>
    %155 = vector.shape_cast %154 : vector<1x1x32x8xbf16> to vector<32x8xbf16>
    %156 = arith.truncf %153 : vector<8x768xf32> to vector<8x768xbf16>
    %cst_128 = arith.constant dense<0.000000e+00> : vector<32x768xf32>
    %157 = tpu.matmul %155, %156, %cst_128 {dimension_numbers = #tpu.dot_dimension_numbers<[1], [0], [0], [1], [0, 0, 1, 1], [], []>} : vector<32x8xbf16>, vector<8x768xbf16>, vector<32x768xf32> -> vector<32x768xf32>
    %158 = arith.addf %152, %157 : vector<32x768xf32>
    %c17_i32_129 = arith.constant 17 : i32
    %159 = tpu.dynamic_rotate %147 by %c17_i32_129 dim 1 : vector<8x768xf32>, i32 -> vector<8x768xf32>
    %c1_130 = arith.constant 1 : index
    %c2_131 = arith.constant 2 : index
    %c0_132 = arith.constant 0 : index
    %c0_133 = arith.constant 0 : index
    %160 = vector.load %arg5[%c1_130, %c2_131, %c0_132, %c0_133] : memref<2x9x32x8xbf16, #tpu.memory_space<vmem>>, vector<1x1x32x8xbf16>
    %161 = vector.shape_cast %160 : vector<1x1x32x8xbf16> to vector<32x8xbf16>
    %162 = arith.truncf %159 : vector<8x768xf32> to vector<8x768xbf16>
    %cst_134 = arith.constant dense<0.000000e+00> : vector<32x768xf32>
    %163 = tpu.matmul %161, %162, %cst_134 {dimension_numbers = #tpu.dot_dimension_numbers<[1], [0], [0], [1], [0, 0, 1, 1], [], []>} : vector<32x8xbf16>, vector<8x768xbf16>, vector<32x768xf32> -> vector<32x768xf32>
    %164 = arith.addf %158, %163 : vector<32x768xf32>
    %c1_i32_135 = arith.constant 1 : i32
    %165 = tpu.dynamic_rotate %147 by %c1_i32_135 dim 1 : vector<8x768xf32>, i32 -> vector<8x768xf32>
    %c1_136 = arith.constant 1 : index
    %c3_137 = arith.constant 3 : index
    %c0_138 = arith.constant 0 : index
    %c0_139 = arith.constant 0 : index
    %166 = vector.load %arg5[%c1_136, %c3_137, %c0_138, %c0_139] : memref<2x9x32x8xbf16, #tpu.memory_space<vmem>>, vector<1x1x32x8xbf16>
    %167 = vector.shape_cast %166 : vector<1x1x32x8xbf16> to vector<32x8xbf16>
    %168 = arith.truncf %165 : vector<8x768xf32> to vector<8x768xbf16>
    %cst_140 = arith.constant dense<0.000000e+00> : vector<32x768xf32>
    %169 = tpu.matmul %167, %168, %cst_140 {dimension_numbers = #tpu.dot_dimension_numbers<[1], [0], [0], [1], [0, 0, 1, 1], [], []>} : vector<32x8xbf16>, vector<8x768xbf16>, vector<32x768xf32> -> vector<32x768xf32>
    %170 = arith.addf %164, %169 : vector<32x768xf32>
    %c1_141 = arith.constant 1 : index
    %c4_142 = arith.constant 4 : index
    %c0_143 = arith.constant 0 : index
    %c0_144 = arith.constant 0 : index
    %171 = vector.load %arg5[%c1_141, %c4_142, %c0_143, %c0_144] : memref<2x9x32x8xbf16, #tpu.memory_space<vmem>>, vector<1x1x32x8xbf16>
    %172 = vector.shape_cast %171 : vector<1x1x32x8xbf16> to vector<32x8xbf16>
    %173 = arith.truncf %147 : vector<8x768xf32> to vector<8x768xbf16>
    %cst_145 = arith.constant dense<0.000000e+00> : vector<32x768xf32>
    %174 = tpu.matmul %172, %173, %cst_145 {dimension_numbers = #tpu.dot_dimension_numbers<[1], [0], [0], [1], [0, 0, 1, 1], [], []>} : vector<32x8xbf16>, vector<8x768xbf16>, vector<32x768xf32> -> vector<32x768xf32>
    %175 = arith.addf %170, %174 : vector<32x768xf32>
    %c767_i32_146 = arith.constant 767 : i32
    %176 = tpu.dynamic_rotate %147 by %c767_i32_146 dim 1 : vector<8x768xf32>, i32 -> vector<8x768xf32>
    %c1_147 = arith.constant 1 : index
    %c5_148 = arith.constant 5 : index
    %c0_149 = arith.constant 0 : index
    %c0_150 = arith.constant 0 : index
    %177 = vector.load %arg5[%c1_147, %c5_148, %c0_149, %c0_150] : memref<2x9x32x8xbf16, #tpu.memory_space<vmem>>, vector<1x1x32x8xbf16>
    %178 = vector.shape_cast %177 : vector<1x1x32x8xbf16> to vector<32x8xbf16>
    %179 = arith.truncf %176 : vector<8x768xf32> to vector<8x768xbf16>
    %cst_151 = arith.constant dense<0.000000e+00> : vector<32x768xf32>
    %180 = tpu.matmul %178, %179, %cst_151 {dimension_numbers = #tpu.dot_dimension_numbers<[1], [0], [0], [1], [0, 0, 1, 1], [], []>} : vector<32x8xbf16>, vector<8x768xbf16>, vector<32x768xf32> -> vector<32x768xf32>
    %181 = arith.addf %175, %180 : vector<32x768xf32>
    %c751_i32_152 = arith.constant 751 : i32
    %182 = tpu.dynamic_rotate %147 by %c751_i32_152 dim 1 : vector<8x768xf32>, i32 -> vector<8x768xf32>
    %c1_153 = arith.constant 1 : index
    %c6_154 = arith.constant 6 : index
    %c0_155 = arith.constant 0 : index
    %c0_156 = arith.constant 0 : index
    %183 = vector.load %arg5[%c1_153, %c6_154, %c0_155, %c0_156] : memref<2x9x32x8xbf16, #tpu.memory_space<vmem>>, vector<1x1x32x8xbf16>
    %184 = vector.shape_cast %183 : vector<1x1x32x8xbf16> to vector<32x8xbf16>
    %185 = arith.truncf %182 : vector<8x768xf32> to vector<8x768xbf16>
    %cst_157 = arith.constant dense<0.000000e+00> : vector<32x768xf32>
    %186 = tpu.matmul %184, %185, %cst_157 {dimension_numbers = #tpu.dot_dimension_numbers<[1], [0], [0], [1], [0, 0, 1, 1], [], []>} : vector<32x8xbf16>, vector<8x768xbf16>, vector<32x768xf32> -> vector<32x768xf32>
    %187 = arith.addf %181, %186 : vector<32x768xf32>
    %c750_i32_158 = arith.constant 750 : i32
    %188 = tpu.dynamic_rotate %147 by %c750_i32_158 dim 1 : vector<8x768xf32>, i32 -> vector<8x768xf32>
    %c1_159 = arith.constant 1 : index
    %c7_160 = arith.constant 7 : index
    %c0_161 = arith.constant 0 : index
    %c0_162 = arith.constant 0 : index
    %189 = vector.load %arg5[%c1_159, %c7_160, %c0_161, %c0_162] : memref<2x9x32x8xbf16, #tpu.memory_space<vmem>>, vector<1x1x32x8xbf16>
    %190 = vector.shape_cast %189 : vector<1x1x32x8xbf16> to vector<32x8xbf16>
    %191 = arith.truncf %188 : vector<8x768xf32> to vector<8x768xbf16>
    %cst_163 = arith.constant dense<0.000000e+00> : vector<32x768xf32>
    %192 = tpu.matmul %190, %191, %cst_163 {dimension_numbers = #tpu.dot_dimension_numbers<[1], [0], [0], [1], [0, 0, 1, 1], [], []>} : vector<32x8xbf16>, vector<8x768xbf16>, vector<32x768xf32> -> vector<32x768xf32>
    %193 = arith.addf %187, %192 : vector<32x768xf32>
    %c749_i32_164 = arith.constant 749 : i32
    %194 = tpu.dynamic_rotate %147 by %c749_i32_164 dim 1 : vector<8x768xf32>, i32 -> vector<8x768xf32>
    %c1_165 = arith.constant 1 : index
    %c8_166 = arith.constant 8 : index
    %c0_167 = arith.constant 0 : index
    %c0_168 = arith.constant 0 : index
    %195 = vector.load %arg5[%c1_165, %c8_166, %c0_167, %c0_168] : memref<2x9x32x8xbf16, #tpu.memory_space<vmem>>, vector<1x1x32x8xbf16>
    %196 = vector.shape_cast %195 : vector<1x1x32x8xbf16> to vector<32x8xbf16>
    %197 = arith.truncf %194 : vector<8x768xf32> to vector<8x768xbf16>
    %cst_169 = arith.constant dense<0.000000e+00> : vector<32x768xf32>
    %198 = tpu.matmul %196, %197, %cst_169 {dimension_numbers = #tpu.dot_dimension_numbers<[1], [0], [0], [1], [0, 0, 1, 1], [], []>} : vector<32x8xbf16>, vector<8x768xbf16>, vector<32x768xf32> -> vector<32x768xf32>
    %199 = arith.addf %193, %198 : vector<32x768xf32>
    %c1_170 = arith.constant 1 : index
    %c0_171 = arith.constant 0 : index
    %c0_172 = arith.constant 0 : index
    %200 = vector.load %arg6[%c1_170, %c0_171, %c0_172] : memref<2x32x1xf32, #tpu.memory_space<vmem>>, vector<1x32x1xf32>
    %201 = vector.shape_cast %200 : vector<1x32x1xf32> to vector<32x1xf32>
    %202 = vector.broadcast %201 : vector<32x1xf32> to vector<32x768xf32>
    %203 = arith.addf %199, %202 : vector<32x768xf32>
    %cst_173 = arith.constant 0.000000e+00 : f32
    %204 = vector.broadcast %cst_173 : f32 to vector<32x768xf32>
    %205 = arith.cmpf oge, %203, %204 : vector<32x768xf32>
    %cst_174 = arith.constant 2.500000e-01 : f32
    %206 = vector.broadcast %cst_174 : f32 to vector<32x768xf32>
    %207 = arith.mulf %206, %203 : vector<32x768xf32>
    %208 = arith.select %205, %203, %207 : vector<32x768xi1>, vector<32x768xf32>
    %c0_175 = arith.constant 0 : index
    %c0_176 = arith.constant 0 : index
    %c0_177 = arith.constant 0 : index
    %209 = vector.load %arg11[%c0_175, %c0_176, %c0_177] : memref<2x32x32xbf16, #tpu.memory_space<vmem>>, vector<1x32x32xbf16>
    %210 = vector.shape_cast %209 : vector<1x32x32xbf16> to vector<32x32xbf16>
    %cst_178 = arith.constant dense<0.000000e+00> : vector<32x768xf32>
    %211 = tpu.matmul %210, %78, %cst_178 {dimension_numbers = #tpu.dot_dimension_numbers<[1], [0], [0], [1], [0, 0, 1, 1], [], []>} : vector<32x32xbf16>, vector<32x768xbf16>, vector<32x768xf32> -> vector<32x768xf32>
    %c1_179 = arith.constant 1 : index
    %c0_180 = arith.constant 0 : index
    %c0_181 = arith.constant 0 : index
    %212 = vector.load %arg11[%c1_179, %c0_180, %c0_181] : memref<2x32x32xbf16, #tpu.memory_space<vmem>>, vector<1x32x32xbf16>
    %213 = vector.shape_cast %212 : vector<1x32x32xbf16> to vector<32x32xbf16>
    %214 = arith.truncf %208 : vector<32x768xf32> to vector<32x768xbf16>
    %cst_182 = arith.constant dense<0.000000e+00> : vector<32x768xf32>
    %215 = tpu.matmul %213, %214, %cst_182 {dimension_numbers = #tpu.dot_dimension_numbers<[1], [0], [0], [1], [0, 0, 1, 1], [], []>} : vector<32x32xbf16>, vector<32x768xbf16>, vector<32x768xf32> -> vector<32x768xf32>
    %216 = arith.addf %211, %215 : vector<32x768xf32>
    %c0_183 = arith.constant 0 : index
    %c0_184 = arith.constant 0 : index
    %217 = vector.load %arg12[%c0_183, %c0_184] : memref<32x1xf32, #tpu.memory_space<vmem>>, vector<32x1xf32>
    %218 = vector.broadcast %217 : vector<32x1xf32> to vector<32x768xf32>
    %219 = arith.addf %216, %218 : vector<32x768xf32>
    %cst_185 = arith.constant 0.000000e+00 : f32
    %220 = vector.broadcast %cst_185 : f32 to vector<32x768xf32>
    %221 = arith.cmpf oge, %219, %220 : vector<32x768xf32>
    %cst_186 = arith.constant 2.500000e-01 : f32
    %222 = vector.broadcast %cst_186 : f32 to vector<32x768xf32>
    %223 = arith.mulf %222, %219 : vector<32x768xf32>
    %224 = arith.select %221, %219, %223 : vector<32x768xi1>, vector<32x768xf32>
    %225 = vector.broadcast %0 : vector<1x768xf32> to vector<32x768xf32>
    %226 = arith.mulf %224, %225 : vector<32x768xf32>
    %227 = arith.truncf %226 : vector<32x768xf32> to vector<32x768xbf16>
    %c1_187 = arith.constant 1 : index
    %c0_188 = arith.constant 0 : index
    %c0_189 = arith.constant 0 : index
    %c0_190 = arith.constant 0 : index
    %228 = vector.load %arg7[%c1_187, %c0_188, %c0_189, %c0_190] : memref<2x9x8x32xbf16, #tpu.memory_space<vmem>>, vector<1x1x8x32xbf16>
    %229 = vector.shape_cast %228 : vector<1x1x8x32xbf16> to vector<8x32xbf16>
    %cst_191 = arith.constant dense<0.000000e+00> : vector<8x768xf32>
    %230 = tpu.matmul %229, %227, %cst_191 {dimension_numbers = #tpu.dot_dimension_numbers<[1], [0], [0], [1], [0, 0, 1, 1], [], []>} : vector<8x32xbf16>, vector<32x768xbf16>, vector<8x768xf32> -> vector<8x768xf32>
    %c19_i32_192 = arith.constant 19 : i32
    %231 = tpu.dynamic_rotate %230 by %c19_i32_192 dim 1 : vector<8x768xf32>, i32 -> vector<8x768xf32>
    %c1_193 = arith.constant 1 : index
    %c1_194 = arith.constant 1 : index
    %c0_195 = arith.constant 0 : index
    %c0_196 = arith.constant 0 : index
    %232 = vector.load %arg7[%c1_193, %c1_194, %c0_195, %c0_196] : memref<2x9x8x32xbf16, #tpu.memory_space<vmem>>, vector<1x1x8x32xbf16>
    %233 = vector.shape_cast %232 : vector<1x1x8x32xbf16> to vector<8x32xbf16>
    %cst_197 = arith.constant dense<0.000000e+00> : vector<8x768xf32>
    %234 = tpu.matmul %233, %227, %cst_197 {dimension_numbers = #tpu.dot_dimension_numbers<[1], [0], [0], [1], [0, 0, 1, 1], [], []>} : vector<8x32xbf16>, vector<32x768xbf16>, vector<8x768xf32> -> vector<8x768xf32>
    %c18_i32_198 = arith.constant 18 : i32
    %235 = tpu.dynamic_rotate %234 by %c18_i32_198 dim 1 : vector<8x768xf32>, i32 -> vector<8x768xf32>
    %236 = arith.addf %231, %235 : vector<8x768xf32>
    %c1_199 = arith.constant 1 : index
    %c2_200 = arith.constant 2 : index
    %c0_201 = arith.constant 0 : index
    %c0_202 = arith.constant 0 : index
    %237 = vector.load %arg7[%c1_199, %c2_200, %c0_201, %c0_202] : memref<2x9x8x32xbf16, #tpu.memory_space<vmem>>, vector<1x1x8x32xbf16>
    %238 = vector.shape_cast %237 : vector<1x1x8x32xbf16> to vector<8x32xbf16>
    %cst_203 = arith.constant dense<0.000000e+00> : vector<8x768xf32>
    %239 = tpu.matmul %238, %227, %cst_203 {dimension_numbers = #tpu.dot_dimension_numbers<[1], [0], [0], [1], [0, 0, 1, 1], [], []>} : vector<8x32xbf16>, vector<32x768xbf16>, vector<8x768xf32> -> vector<8x768xf32>
    %c17_i32_204 = arith.constant 17 : i32
    %240 = tpu.dynamic_rotate %239 by %c17_i32_204 dim 1 : vector<8x768xf32>, i32 -> vector<8x768xf32>
    %241 = arith.addf %236, %240 : vector<8x768xf32>
    %c1_205 = arith.constant 1 : index
    %c3_206 = arith.constant 3 : index
    %c0_207 = arith.constant 0 : index
    %c0_208 = arith.constant 0 : index
    %242 = vector.load %arg7[%c1_205, %c3_206, %c0_207, %c0_208] : memref<2x9x8x32xbf16, #tpu.memory_space<vmem>>, vector<1x1x8x32xbf16>
    %243 = vector.shape_cast %242 : vector<1x1x8x32xbf16> to vector<8x32xbf16>
    %cst_209 = arith.constant dense<0.000000e+00> : vector<8x768xf32>
    %244 = tpu.matmul %243, %227, %cst_209 {dimension_numbers = #tpu.dot_dimension_numbers<[1], [0], [0], [1], [0, 0, 1, 1], [], []>} : vector<8x32xbf16>, vector<32x768xbf16>, vector<8x768xf32> -> vector<8x768xf32>
    %c1_i32_210 = arith.constant 1 : i32
    %245 = tpu.dynamic_rotate %244 by %c1_i32_210 dim 1 : vector<8x768xf32>, i32 -> vector<8x768xf32>
    %246 = arith.addf %241, %245 : vector<8x768xf32>
    %c1_211 = arith.constant 1 : index
    %c4_212 = arith.constant 4 : index
    %c0_213 = arith.constant 0 : index
    %c0_214 = arith.constant 0 : index
    %247 = vector.load %arg7[%c1_211, %c4_212, %c0_213, %c0_214] : memref<2x9x8x32xbf16, #tpu.memory_space<vmem>>, vector<1x1x8x32xbf16>
    %248 = vector.shape_cast %247 : vector<1x1x8x32xbf16> to vector<8x32xbf16>
    %cst_215 = arith.constant dense<0.000000e+00> : vector<8x768xf32>
    %249 = tpu.matmul %248, %227, %cst_215 {dimension_numbers = #tpu.dot_dimension_numbers<[1], [0], [0], [1], [0, 0, 1, 1], [], []>} : vector<8x32xbf16>, vector<32x768xbf16>, vector<8x768xf32> -> vector<8x768xf32>
    %250 = arith.addf %246, %249 : vector<8x768xf32>
    %c1_216 = arith.constant 1 : index
    %c5_217 = arith.constant 5 : index
    %c0_218 = arith.constant 0 : index
    %c0_219 = arith.constant 0 : index
    %251 = vector.load %arg7[%c1_216, %c5_217, %c0_218, %c0_219] : memref<2x9x8x32xbf16, #tpu.memory_space<vmem>>, vector<1x1x8x32xbf16>
    %252 = vector.shape_cast %251 : vector<1x1x8x32xbf16> to vector<8x32xbf16>
    %cst_220 = arith.constant dense<0.000000e+00> : vector<8x768xf32>
    %253 = tpu.matmul %252, %227, %cst_220 {dimension_numbers = #tpu.dot_dimension_numbers<[1], [0], [0], [1], [0, 0, 1, 1], [], []>} : vector<8x32xbf16>, vector<32x768xbf16>, vector<8x768xf32> -> vector<8x768xf32>
    %c767_i32_221 = arith.constant 767 : i32
    %254 = tpu.dynamic_rotate %253 by %c767_i32_221 dim 1 : vector<8x768xf32>, i32 -> vector<8x768xf32>
    %255 = arith.addf %250, %254 : vector<8x768xf32>
    %c1_222 = arith.constant 1 : index
    %c6_223 = arith.constant 6 : index
    %c0_224 = arith.constant 0 : index
    %c0_225 = arith.constant 0 : index
    %256 = vector.load %arg7[%c1_222, %c6_223, %c0_224, %c0_225] : memref<2x9x8x32xbf16, #tpu.memory_space<vmem>>, vector<1x1x8x32xbf16>
    %257 = vector.shape_cast %256 : vector<1x1x8x32xbf16> to vector<8x32xbf16>
    %cst_226 = arith.constant dense<0.000000e+00> : vector<8x768xf32>
    %258 = tpu.matmul %257, %227, %cst_226 {dimension_numbers = #tpu.dot_dimension_numbers<[1], [0], [0], [1], [0, 0, 1, 1], [], []>} : vector<8x32xbf16>, vector<32x768xbf16>, vector<8x768xf32> -> vector<8x768xf32>
    %c751_i32_227 = arith.constant 751 : i32
    %259 = tpu.dynamic_rotate %258 by %c751_i32_227 dim 1 : vector<8x768xf32>, i32 -> vector<8x768xf32>
    %260 = arith.addf %255, %259 : vector<8x768xf32>
    %c1_228 = arith.constant 1 : index
    %c7_229 = arith.constant 7 : index
    %c0_230 = arith.constant 0 : index
    %c0_231 = arith.constant 0 : index
    %261 = vector.load %arg7[%c1_228, %c7_229, %c0_230, %c0_231] : memref<2x9x8x32xbf16, #tpu.memory_space<vmem>>, vector<1x1x8x32xbf16>
    %262 = vector.shape_cast %261 : vector<1x1x8x32xbf16> to vector<8x32xbf16>
    %cst_232 = arith.constant dense<0.000000e+00> : vector<8x768xf32>
    %263 = tpu.matmul %262, %227, %cst_232 {dimension_numbers = #tpu.dot_dimension_numbers<[1], [0], [0], [1], [0, 0, 1, 1], [], []>} : vector<8x32xbf16>, vector<32x768xbf16>, vector<8x768xf32> -> vector<8x768xf32>
    %c750_i32_233 = arith.constant 750 : i32
    %264 = tpu.dynamic_rotate %263 by %c750_i32_233 dim 1 : vector<8x768xf32>, i32 -> vector<8x768xf32>
    %265 = arith.addf %260, %264 : vector<8x768xf32>
    %c1_234 = arith.constant 1 : index
    %c8_235 = arith.constant 8 : index
    %c0_236 = arith.constant 0 : index
    %c0_237 = arith.constant 0 : index
    %266 = vector.load %arg7[%c1_234, %c8_235, %c0_236, %c0_237] : memref<2x9x8x32xbf16, #tpu.memory_space<vmem>>, vector<1x1x8x32xbf16>
    %267 = vector.shape_cast %266 : vector<1x1x8x32xbf16> to vector<8x32xbf16>
    %cst_238 = arith.constant dense<0.000000e+00> : vector<8x768xf32>
    %268 = tpu.matmul %267, %227, %cst_238 {dimension_numbers = #tpu.dot_dimension_numbers<[1], [0], [0], [1], [0, 0, 1, 1], [], []>} : vector<8x32xbf16>, vector<32x768xbf16>, vector<8x768xf32> -> vector<8x768xf32>
    %c749_i32_239 = arith.constant 749 : i32
    %269 = tpu.dynamic_rotate %268 by %c749_i32_239 dim 1 : vector<8x768xf32>, i32 -> vector<8x768xf32>
    %270 = arith.addf %265, %269 : vector<8x768xf32>
    %c1_240 = arith.constant 1 : index
    %c0_241 = arith.constant 0 : index
    %c0_242 = arith.constant 0 : index
    %271 = vector.load %arg8[%c1_240, %c0_241, %c0_242] : memref<2x8x1xf32, #tpu.memory_space<vmem>>, vector<1x8x1xf32>
    %272 = vector.shape_cast %271 : vector<1x8x1xf32> to vector<8x1xf32>
    %273 = vector.broadcast %272 : vector<8x1xf32> to vector<8x768xf32>
    %274 = arith.addf %270, %273 : vector<8x768xf32>
    %cst_243 = arith.constant 0.000000e+00 : f32
    %275 = vector.broadcast %cst_243 : f32 to vector<8x768xf32>
    %276 = arith.cmpf oge, %274, %275 : vector<8x768xf32>
    %cst_244 = arith.constant 2.500000e-01 : f32
    %277 = vector.broadcast %cst_244 : f32 to vector<8x768xf32>
    %278 = arith.mulf %277, %274 : vector<8x768xf32>
    %279 = arith.select %276, %274, %278 : vector<8x768xi1>, vector<8x768xf32>
    %c0_245 = arith.constant 0 : index
    %c0_246 = arith.constant 0 : index
    %280 = vector.load %arg13[%c0_245, %c0_246] : memref<8x16xbf16, #tpu.memory_space<vmem>>, vector<8x16xbf16>
    %281 = vector.extract_strided_slice %280 {offsets = [0, 0], sizes = [8, 8], strides = [1, 1]} : vector<8x16xbf16> to vector<8x8xbf16>
    %cst_247 = arith.constant dense<0.000000e+00> : vector<8x768xf32>
    %282 = tpu.matmul %281, %131, %cst_247 {dimension_numbers = #tpu.dot_dimension_numbers<[1], [0], [0], [1], [0, 0, 1, 1], [], []>} : vector<8x8xbf16>, vector<8x768xbf16>, vector<8x768xf32> -> vector<8x768xf32>
    %283 = vector.extract_strided_slice %280 {offsets = [0, 8], sizes = [8, 8], strides = [1, 1]} : vector<8x16xbf16> to vector<8x8xbf16>
    %284 = arith.truncf %279 : vector<8x768xf32> to vector<8x768xbf16>
    %cst_248 = arith.constant dense<0.000000e+00> : vector<8x768xf32>
    %285 = tpu.matmul %283, %284, %cst_248 {dimension_numbers = #tpu.dot_dimension_numbers<[1], [0], [0], [1], [0, 0, 1, 1], [], []>} : vector<8x8xbf16>, vector<8x768xbf16>, vector<8x768xf32> -> vector<8x768xf32>
    %286 = arith.addf %282, %285 : vector<8x768xf32>
    %c0_249 = arith.constant 0 : index
    %c0_250 = arith.constant 0 : index
    %287 = vector.load %arg14[%c0_249, %c0_250] : memref<8x1xf32, #tpu.memory_space<vmem>>, vector<8x1xf32>
    %288 = vector.broadcast %287 : vector<8x1xf32> to vector<8x768xf32>
    %289 = arith.addf %286, %288 : vector<8x768xf32>
    %cst_251 = arith.constant 0.000000e+00 : f32
    %290 = vector.broadcast %cst_251 : f32 to vector<8x768xf32>
    %291 = arith.cmpf oge, %289, %290 : vector<8x768xf32>
    %cst_252 = arith.constant 2.500000e-01 : f32
    %292 = vector.broadcast %cst_252 : f32 to vector<8x768xf32>
    %293 = arith.mulf %292, %289 : vector<8x768xf32>
    %294 = arith.select %291, %289, %293 : vector<8x768xi1>, vector<8x768xf32>
    %c0_253 = arith.constant 0 : index
    %c0_254 = arith.constant 0 : index
    %295 = vector.load %arg15[%c0_253, %c0_254] : memref<8x768xf32, #tpu.memory_space<vmem>>, vector<8x768xf32>
    tpu.vector_store %arg15[%c0_253, %c0_254], %294 {strides = array<i32>} : memref<8x768xf32, #tpu.memory_space<vmem>>, vector<8x768xf32>,
    return
  }
  func.func @transform_0(%arg0: i32) -> (i32, i32) {
    %c0_i32 = arith.constant 0 : i32
    %c0_i32_0 = arith.constant 0 : i32
    return %c0_i32, %arg0 : i32, i32
  }
  func.func @transform_1(%arg0: i32) -> (i32, i32) {
    %c0_i32 = arith.constant 0 : i32
    %c0_i32_0 = arith.constant 0 : i32
    %c0_i32_1 = arith.constant 0 : i32
    return %c0_i32, %c0_i32_0 : i32, i32
  }
  func.func @transform_2(%arg0: i32) -> (i32, i32) {
    %c0_i32 = arith.constant 0 : i32
    %c0_i32_0 = arith.constant 0 : i32
    %c0_i32_1 = arith.constant 0 : i32
    return %c0_i32, %c0_i32_0 : i32, i32
  }
  func.func @transform_3(%arg0: i32) -> (i32, i32) {
    %c0_i32 = arith.constant 0 : i32
    %c0_i32_0 = arith.constant 0 : i32
    %c0_i32_1 = arith.constant 0 : i32
    return %c0_i32, %c0_i32_0 : i32, i32
  }
  func.func @transform_4(%arg0: i32) -> (i32, i32, i32, i32) {
    %c0_i32 = arith.constant 0 : i32
    %c0_i32_0 = arith.constant 0 : i32
    %c0_i32_1 = arith.constant 0 : i32
    %c0_i32_2 = arith.constant 0 : i32
    %c0_i32_3 = arith.constant 0 : i32
    return %c0_i32, %c0_i32_0, %c0_i32_1, %c0_i32_2 : i32, i32, i32, i32
  }
  func.func @transform_5(%arg0: i32) -> (i32, i32, i32) {
    %c0_i32 = arith.constant 0 : i32
    %c0_i32_0 = arith.constant 0 : i32
    %c0_i32_1 = arith.constant 0 : i32
    %c0_i32_2 = arith.constant 0 : i32
    return %c0_i32, %c0_i32_0, %c0_i32_1 : i32, i32, i32
  }
  func.func @transform_6(%arg0: i32) -> (i32, i32, i32, i32) {
    %c0_i32 = arith.constant 0 : i32
    %c0_i32_0 = arith.constant 0 : i32
    %c0_i32_1 = arith.constant 0 : i32
    %c0_i32_2 = arith.constant 0 : i32
    %c0_i32_3 = arith.constant 0 : i32
    return %c0_i32, %c0_i32_0, %c0_i32_1, %c0_i32_2 : i32, i32, i32, i32
  }
  func.func @transform_7(%arg0: i32) -> (i32, i32, i32) {
    %c0_i32 = arith.constant 0 : i32
    %c0_i32_0 = arith.constant 0 : i32
    %c0_i32_1 = arith.constant 0 : i32
    %c0_i32_2 = arith.constant 0 : i32
    return %c0_i32, %c0_i32_0, %c0_i32_1 : i32, i32, i32
  }
  func.func @transform_8(%arg0: i32) -> (i32, i32) {
    %c0_i32 = arith.constant 0 : i32
    %c0_i32_0 = arith.constant 0 : i32
    %c0_i32_1 = arith.constant 0 : i32
    return %c0_i32, %c0_i32_0 : i32, i32
  }
  func.func @transform_9(%arg0: i32) -> (i32, i32) {
    %c0_i32 = arith.constant 0 : i32
    %c0_i32_0 = arith.constant 0 : i32
    %c0_i32_1 = arith.constant 0 : i32
    return %c0_i32, %c0_i32_0 : i32, i32
  }
  func.func @transform_10(%arg0: i32) -> (i32, i32, i32) {
    %c0_i32 = arith.constant 0 : i32
    %c0_i32_0 = arith.constant 0 : i32
    %c0_i32_1 = arith.constant 0 : i32
    %c0_i32_2 = arith.constant 0 : i32
    return %c0_i32, %c0_i32_0, %c0_i32_1 : i32, i32, i32
  }
  func.func @transform_11(%arg0: i32) -> (i32, i32) {
    %c0_i32 = arith.constant 0 : i32
    %c0_i32_0 = arith.constant 0 : i32
    %c0_i32_1 = arith.constant 0 : i32
    return %c0_i32, %c0_i32_0 : i32, i32
  }
  func.func @transform_12(%arg0: i32) -> (i32, i32) {
    %c0_i32 = arith.constant 0 : i32
    %c0_i32_0 = arith.constant 0 : i32
    %c0_i32_1 = arith.constant 0 : i32
    return %c0_i32, %c0_i32_0 : i32, i32
  }
  func.func @transform_13(%arg0: i32) -> (i32, i32) {
    %c0_i32 = arith.constant 0 : i32
    %c0_i32_0 = arith.constant 0 : i32
    %c0_i32_1 = arith.constant 0 : i32
    return %c0_i32, %c0_i32_0 : i32, i32
  }
  func.func @transform_14(%arg0: i32) -> (i32, i32) {
    %c0_i32 = arith.constant 0 : i32
    %c0_i32_0 = arith.constant 0 : i32
    return %c0_i32, %arg0 : i32, i32
  }
}

</mosaic_0001>

<llo_original>
// kernel: feedback_block_pallas.1
$region0: #{feedback_block_pallas.1}
  #allocation0 [shape = 'u32[]', space=smem, size = 0x4, offset = 0x4, fixed_abs, tag = 'smem constant byte address 0x4 - core index']
  #allocation1 [shape = 'u32[144,128]{1,0:T(1,128)}', space=vmem, size = 0x12000, scoped, tag = 'internal scratch']
  %s0 = inlined_call_operand.vmem [shape: bf16[16,768], index: 0, kind: input, shape index: {}]
  %s1 = inlined_call_operand.vmem [shape: f32[1,768], index: 1, kind: input, shape index: {}]
  %s2 = inlined_call_operand.vmem [shape: bf16[8,16], index: 2, kind: input, shape index: {}]
  %s3 = inlined_call_operand.vmem [shape: f32[8,1], index: 3, kind: input, shape index: {}]
  %s4 = inlined_call_operand.vmem [shape: bf16[2,9,32,8], index: 4, kind: input, shape index: {}]
  %s5 = inlined_call_operand.vmem [shape: f32[2,32,1], index: 5, kind: input, shape index: {}]
  %s6 = inlined_call_operand.vmem [shape: bf16[2,9,8,32], index: 6, kind: input, shape index: {}]
  %s7 = inlined_call_operand.vmem [shape: f32[2,8,1], index: 7, kind: input, shape index: {}]
  %s8 = inlined_call_operand.vmem [shape: bf16[8,16], index: 8, kind: input, shape index: {}]
  %s9 = inlined_call_operand.vmem [shape: f32[8,1], index: 9, kind: input, shape index: {}]
  %s10 = inlined_call_operand.vmem [shape: bf16[2,32,32], index: 10, kind: input, shape index: {}]
  %s11 = inlined_call_operand.vmem [shape: f32[32,1], index: 11, kind: input, shape index: {}]
  %s12 = inlined_call_operand.vmem [shape: bf16[8,16], index: 12, kind: input, shape index: {}]
  %s13 = inlined_call_operand.vmem [shape: f32[8,1], index: 13, kind: input, shape index: {}]
  %s14 = inlined_call_operand.vmem [shape: f32[8,768], index: 14, kind: output, shape index: {}]
  %s15 = sld [smem:[#allocation0]]
  $region66: #{feedback_block_pallas.1} parent=0
    _
  %s17 = ssub.s32 1, %s15
  %s18 = scalar_select 0, %s17, %s15
  // Predicated region
  $region2: #{feedback_block_pallas.1} parent=0 // pred_check
    _
  $region3: #{feedback_block_pallas.1} parent=0 // pred_check_branch
    %20 = sbr.rel (0) target = $region5
  $region4: #{feedback_block_pallas.1} parent=0 // pred_region
    _
  $region5: #{feedback_block_pallas.1} parent=0 // pred_fallthru
    _
  // Predicated region
  $region6: #{feedback_block_pallas.1} parent=0 // pred_check
    _
  $region7: #{feedback_block_pallas.1} parent=0 // pred_check_branch
    %22 = sbr.rel (0) target = $region9
  $region8: #{feedback_block_pallas.1} parent=0 // pred_region
    _
  $region9: #{feedback_block_pallas.1} parent=0 // pred_fallthru
    _
  // Predicated region
  $region10: #{feedback_block_pallas.1} parent=0 // pred_check
    _
  $region11: #{feedback_block_pallas.1} parent=0 // pred_check_branch
    %24 = sbr.rel (0) target = $region13
  $region12: #{feedback_block_pallas.1} parent=0 // pred_region
    _
  $region13: #{feedback_block_pallas.1} parent=0 // pred_fallthru
    _
  // Predicated region
  $region14: #{feedback_block_pallas.1} parent=0 // pred_check
    _
  $region15: #{feedback_block_pallas.1} parent=0 // pred_check_branch
    %26 = sbr.rel (0) target = $region17
  $region16: #{feedback_block_pallas.1} parent=0 // pred_region
    _
  $region17: #{feedback_block_pallas.1} parent=0 // pred_fallthru
    _
  // Predicated region
  $region18: #{feedback_block_pallas.1} parent=0 // pred_check
    _
  $region19: #{feedback_block_pallas.1} parent=0 // pred_check_branch
    %28 = sbr.rel (0) target = $region21
  $region20: #{feedback_block_pallas.1} parent=0 // pred_region
    _
  $region21: #{feedback_block_pallas.1} parent=0 // pred_fallthru
    _
  // Predicated region
  $region22: #{feedback_block_pallas.1} parent=0 // pred_check
    _
  $region23: #{feedback_block_pallas.1} parent=0 // pred_check_branch
    %30 = sbr.rel (0) target = $region25
  $region24: #{feedback_block_pallas.1} parent=0 // pred_region
    _
  $region25: #{feedback_block_pallas.1} parent=0 // pred_fallthru
    _
  // Predicated region
  $region26: #{feedback_block_pallas.1} parent=0 // pred_check
    _
  $region27: #{feedback_block_pallas.1} parent=0 // pred_check_branch
    %32 = sbr.rel (0) target = $region29
  $region28: #{feedback_block_pallas.1} parent=0 // pred_region
    _
  $region29: #{feedback_block_pallas.1} parent=0 // pred_fallthru
    _
  // Predicated region
  $region30: #{feedback_block_pallas.1} parent=0 // pred_check
    _
  $region31: #{feedback_block_pallas.1} parent=0 // pred_check_branch
    %34 = sbr.rel (0) target = $region33
  $region32: #{feedback_block_pallas.1} parent=0 // pred_region
    _
  $region33: #{feedback_block_pallas.1} parent=0 // pred_fallthru
    _
  // Predicated region
  $region34: #{feedback_block_pallas.1} parent=0 // pred_check
    _
  $region35: #{feedback_block_pallas.1} parent=0 // pred_check_branch
    %36 = sbr.rel (0) target = $region37
  $region36: #{feedback_block_pallas.1} parent=0 // pred_region
    _
  $region37: #{feedback_block_pallas.1} parent=0 // pred_fallthru
    _
  // Predicated region
  $region38: #{feedback_block_pallas.1} parent=0 // pred_check
    _
  $region39: #{feedback_block_pallas.1} parent=0 // pred_check_branch
    %38 = sbr.rel (0) target = $region41
  $region40: #{feedback_block_pallas.1} parent=0 // pred_region
    _
  $region41: #{feedback_block_pallas.1} parent=0 // pred_fallthru
    _
  // Predicated region
  $region42: #{feedback_block_pallas.1} parent=0 // pred_check
    _
  $region43: #{feedback_block_pallas.1} parent=0 // pred_check_branch
    %40 = sbr.rel (0) target = $region45
  $region44: #{feedback_block_pallas.1} parent=0 // pred_region
    _
  $region45: #{feedback_block_pallas.1} parent=0 // pred_fallthru
    _
  // Predicated region
  $region46: #{feedback_block_pallas.1} parent=0 // pred_check
    _
  $region47: #{feedback_block_pallas.1} parent=0 // pred_check_branch
    %42 = sbr.rel (0) target = $region49
  $region48: #{feedback_block_pallas.1} parent=0 // pred_region
    _
  $region49: #{feedback_block_pallas.1} parent=0 // pred_fallthru
    _
  // Predicated region
  $region50: #{feedback_block_pallas.1} parent=0 // pred_check
    _
  $region51: #{feedback_block_pallas.1} parent=0 // pred_check_branch
    %44 = sbr.rel (0) target = $region53
  $region52: #{feedback_block_pallas.1} parent=0 // pred_region
    _
  $region53: #{feedback_block_pallas.1} parent=0 // pred_fallthru
    _
  // Predicated region
  $region54: #{feedback_block_pallas.1} parent=0 // pred_check
    _
  $region55: #{feedback_block_pallas.1} parent=0 // pred_check_branch
    %46 = sbr.rel (0) target = $region57
  $region56: #{feedback_block_pallas.1} parent=0 // pred_region
    _
  $region57: #{feedback_block_pallas.1} parent=0 // pred_fallthru
    _
  %v48 = vld [vmem:[%s1] sm:$0x3f]
  %v49 = vld [vmem:[%s0] sm:$0xff]
  %v50 = vld [vmem:[%s0 + $0x8] sm:$0xff]
  %v51 = vld [vmem:[%s0 + $0x10] sm:$0xff]
  %v52 = vld [vmem:[%s0 + $0x18] sm:$0xff]
  %v53 = vld [vmem:[%s0 + $0x20] sm:$0xff]
  %v54 = vld [vmem:[%s0 + $0x28] sm:$0xff]
  %v55 = vld [vmem:[%s2] sm:$0xf]
  %v56 = vld [vmem:[%s3] sm:$0xff]
  %58 = vset.pattern.permute.xlu0 0
  %59 = vperm.xlu0 %58, %v56
  %v60 = vpop.permute.xlu0 %59
  %v68 = vunpack.c.l.b16 %v49
  %v69 = vunpack.c.h.b16 %v49
  %v70 = vunpack.c.l.b16 %v50
  %v71 = vunpack.c.h.b16 %v50
  %v72 = vunpack.c.l.b16 %v51
  %v73 = vunpack.c.h.b16 %v51
  %v74 = vunpack.c.l.b16 %v52
  %v75 = vunpack.c.h.b16 %v52
  %v76 = vunpack.c.l.b16 %v53
  %v77 = vunpack.c.h.b16 %v53
  %v78 = vunpack.c.l.b16 %v54
  %v79 = vunpack.c.h.b16 %v54
  %v80 = vpack.c.b16 %v74, %v68
  %v81 = vpack.c.b16 %v75, %v69
  %v82 = vpack.c.b16 %v76, %v70
  %v83 = vpack.c.b16 %v77, %v71
  %v84 = vpack.c.b16 %v78, %v72
  %v85 = vpack.c.b16 %v79, %v73
  %vm92 = vcmask 130048
  %v94 = vsel %vm92, %v55, 0
  %96 = vmatprep.subr.bf16.mxu0 %v81
  %97 = vmatpush1.bf16.msra.mxu0 %v80
  %98 = vmatprep.subr.bf16.mxu0 0
  %99 = vmatpush1.bf16.msra.mxu0 0
  %100 = vmatprep.subr.bf16.mxu0 0
  %101 = vmatpush1.bf16.msra.mxu0 0
  %102 = vmatprep.subr.bf16.mxu0 0
  %103 = vmatpush1.bf16.msra.mxu0 0
  %104 = vmatprep.subr.bf16.mxu0 0
  %105 = vmatpush1.bf16.msra.mxu0 0
  %106 = vmatprep.subr.bf16.mxu0 0
  %107 = vmatpush1.bf16.msra.mxu0 0
  %108 = vmatprep.subr.bf16.mxu0 0
  %109 = vmatpush1.bf16.msra.mxu0 0
  %110 = vmatprep.subr.bf16.mxu0 0
  %111 = vmatpush1.bf16.msra.mxu0 0
  %112 = vmatprep.subr.bf16.mxu0 0
  %113 = vmatpush1.bf16.msra.mxu0 0
  %114 = vmatprep.subr.bf16.mxu0 0
  %115 = vmatpush1.bf16.msra.mxu0 0
  %116 = vmatprep.subr.bf16.mxu0 0
  %117 = vmatpush1.bf16.msra.mxu0 0
  %118 = vmatprep.subr.bf16.mxu0 0
  %119 = vmatpush1.bf16.msra.mxu0 0
  %120 = vmatprep.subr.bf16.mxu0 0
  %121 = vmatpush1.bf16.msra.mxu0 0
  %122 = vmatprep.subr.bf16.mxu0 0
  %123 = vmatpush1.bf16.msra.mxu0 0
  %124 = vmatprep.subr.bf16.mxu0 0
  %125 = vmatpush1.bf16.msra.mxu0 0
  %126 = vmatprep.subr.bf16.mxu0 0
  %127 = vmatpush1.bf16.msra.mxu0 0
  %128 = vmatprep.mubr.bf16.mxu0 0
  %129 = vmatmul.mubr.bf16.gmra.mrb[0].mxu0 %v94
  %v130 = vpop.f32.mrb[0].mxu0
  %v131 = vadd.f32 %v60, %v130
  %v132 = vpop.f32.mrb[0].mxu0
  %v133 = vadd.f32 %v60, %v132
  %v134 = vpop.f32.mrb[0].mxu0
  %v135 = vpop.f32.mrb[0].mxu0
  %136 = vdwg.mxu0
  %137 = vmatprep.subr.bf16.mxu0 %v83
  %138 = vmatpush1.bf16.msra.mxu0 %v82
  %139 = vmatprep.subr.bf16.mxu0 0
  %140 = vmatpush1.bf16.msra.mxu0 0
  %141 = vmatprep.subr.bf16.mxu0 0
  %142 = vmatpush1.bf16.msra.mxu0 0
  %143 = vmatprep.subr.bf16.mxu0 0
  %144 = vmatpush1.bf16.msra.mxu0 0
  %145 = vmatprep.subr.bf16.mxu0 0
  %146 = vmatpush1.bf16.msra.mxu0 0
  %147 = vmatprep.subr.bf16.mxu0 0
  %148 = vmatpush1.bf16.msra.mxu0 0
  %149 = vmatprep.subr.bf16.mxu0 0
  %150 = vmatpush1.bf16.msra.mxu0 0
  %151 = vmatprep.subr.bf16.mxu0 0
  %152 = vmatpush1.bf16.msra.mxu0 0
  %153 = vmatprep.subr.bf16.mxu0 0
  %154 = vmatpush1.bf16.msra.mxu0 0
  %155 = vmatprep.subr.bf16.mxu0 0
  %156 = vmatpush1.bf16.msra.mxu0 0
  %157 = vmatprep.subr.bf16.mxu0 0
  %158 = vmatpush1.bf16.msra.mxu0 0
  %159 = vmatprep.subr.bf16.mxu0 0
  %160 = vmatpush1.bf16.msra.mxu0 0
  %161 = vmatprep.subr.bf16.mxu0 0
  %162 = vmatpush1.bf16.msra.mxu0 0
  %163 = vmatprep.subr.bf16.mxu0 0
  %164 = vmatpush1.bf16.msra.mxu0 0
  %165 = vmatprep.subr.bf16.mxu0 0
  %166 = vmatpush1.bf16.msra.mxu0 0
  %167 = vmatprep.subr.bf16.mxu0 0
  %168 = vmatpush1.bf16.msra.mxu0 0
  %169 = vmatprep.mubr.bf16.mxu0 0
  %170 = vmatmul.mubr.bf16.gmra.mrb[0].mxu0 %v94
  %v171 = vpop.f32.mrb[0].mxu0
  %v172 = vadd.f32 %v60, %v171
  %v173 = vpop.f32.mrb[0].mxu0
  %v174 = vadd.f32 %v60, %v173
  %v175 = vpop.f32.mrb[0].mxu0
  %v176 = vpop.f32.mrb[0].mxu0
  %177 = vdwg.mxu0
  %178 = vmatprep.subr.bf16.mxu0 %v85
  %179 = vmatpush1.bf16.msra.mxu0 %v84
  %180 = vmatprep.subr.bf16.mxu0 0
  %181 = vmatpush1.bf16.msra.mxu0 0
  %182 = vmatprep.subr.bf16.mxu0 0
  %183 = vmatpush1.bf16.msra.mxu0 0
  %184 = vmatprep.subr.bf16.mxu0 0
  %185 = vmatpush1.bf16.msra.mxu0 0
  %186 = vmatprep.subr.bf16.mxu0 0
  %187 = vmatpush1.bf16.msra.mxu0 0
  %188 = vmatprep.subr.bf16.mxu0 0
  %189 = vmatpush1.bf16.msra.mxu0 0
  %190 = vmatprep.subr.bf16.mxu0 0
  %191 = vmatpush1.bf16.msra.mxu0 0
  %192 = vmatprep.subr.bf16.mxu0 0
  %193 = vmatpush1.bf16.msra.mxu0 0
  %194 = vmatprep.subr.bf16.mxu0 0
  %195 = vmatpush1.bf16.msra.mxu0 0
  %196 = vmatprep.subr.bf16.mxu0 0
  %197 = vmatpush1.bf16.msra.mxu0 0
  %198 = vmatprep.subr.bf16.mxu0 0
  %199 = vmatpush1.bf16.msra.mxu0 0
  %200 = vmatprep.subr.bf16.mxu0 0
  %201 = vmatpush1.bf16.msra.mxu0 0
  %202 = vmatprep.subr.bf16.mxu0 0
  %203 = vmatpush1.bf16.msra.mxu0 0
  %204 = vmatprep.subr.bf16.mxu0 0
  %205 = vmatpush1.bf16.msra.mxu0 0
  %206 = vmatprep.subr.bf16.mxu0 0
  %207 = vmatpush1.bf16.msra.mxu0 0
  %208 = vmatprep.subr.bf16.mxu0 0
  %209 = vmatpush1.bf16.msra.mxu0 0
  %210 = vmatprep.mubr.bf16.mxu0 0
  %211 = vmatmul.mubr.bf16.gmra.mrb[0].mxu0 %v94
  %v212 = vpop.f32.mrb[0].mxu0
  %v213 = vadd.f32 %v60, %v212
  %v214 = vpop.f32.mrb[0].mxu0
  %v215 = vadd.f32 %v60, %v214
  %v216 = vpop.f32.mrb[0].mxu0
  %v217 = vpop.f32.mrb[0].mxu0
  %218 = vdwg.mxu0
  %vm219 = vcmp.ge.f32.partialorder %v131, 0.0
  %vm220 = vcmp.ge.f32.partialorder %v133, 0.0
  %vm221 = vcmp.ge.f32.partialorder %v172, 0.0
  %vm222 = vcmp.ge.f32.partialorder %v174, 0.0
  %vm223 = vcmp.ge.f32.partialorder %v213, 0.0
  %vm224 = vcmp.ge.f32.partialorder %v215, 0.0
  %v225 = vmul.f32 %v131, 0.25
  %v226 = vmul.f32 %v133, 0.25
  %v227 = vmul.f32 %v172, 0.25
  %v228 = vmul.f32 %v174, 0.25
  %v229 = vmul.f32 %v213, 0.25
  %v230 = vmul.f32 %v215, 0.25
  %v231 = vsel %vm219, %v131, %v225
  %v232 = vsel %vm220, %v133, %v226
  %v233 = vsel %vm221, %v172, %v227
  %v234 = vsel %vm222, %v174, %v228
  %v235 = vsel %vm223, %v213, %v229
  %v236 = vsel %vm224, %v215, %v230
  %v238 = vlaneseq
  %v239 = vshrl.u32 %v238, 7
  %v240 = vsub.s32 0, %v239
  %v241 = vrot.slane %v48, %v240
  %v242 = vlaneseq
  %v243 = vshrl.u32 %v242, 7
  %v244 = vsub.s32 1, %v243
  %v245 = vrot.slane %v48, %v244
  %v246 = vlaneseq
  %v247 = vshrl.u32 %v246, 7
  %v248 = vsub.s32 2, %v247
  %v249 = vrot.slane %v48, %v248
  %v250 = vlaneseq
  %v251 = vshrl.u32 %v250, 7
  %v252 = vsub.s32 3, %v251
  %v253 = vrot.slane %v48, %v252
  %v254 = vlaneseq
  %v255 = vshrl.u32 %v254, 7
  %v256 = vsub.s32 4, %v255
  %v257 = vrot.slane %v48, %v256
  %v258 = vlaneseq
  %v259 = vshrl.u32 %v258, 7
  %v260 = vsub.s32 5, %v259
  %v261 = vrot.slane %v48, %v260
  %v268 = vmul.f32 %v231, %v241
  %v269 = vmul.f32 %v232, %v245
  %v270 = vmul.f32 %v233, %v249
  %v271 = vmul.f32 %v234, %v253
  %v272 = vmul.f32 %v235, %v257
  %v273 = vmul.f32 %v236, %v261
  %v274 = vpack.c.bf16 %v268, %v268
  %v275 = vpack.c.bf16 %v269, %v269
  %v276 = vpack.c.bf16 %v270, %v270
  %v277 = vpack.c.bf16 %v271, %v271
  %v278 = vpack.c.bf16 %v272, %v272
  %v279 = vpack.c.bf16 %v273, %v273
  %280 = vrot.lane.b32.xlu0 %v268, 19
  %v281 = vpop.permute.xlu0 %280
  %282 = vrot.lane.b32.xlu0 %v269, 19
  %v283 = vpop.permute.xlu0 %282
  %284 = vrot.lane.b32.xlu0 %v270, 19
  %v285 = vpop.permute.xlu0 %284
  %286 = vrot.lane.b32.xlu0 %v271, 19
  %v287 = vpop.permute.xlu0 %286
  %288 = vrot.lane.b32.xlu0 %v272, 19
  %v289 = vpop.permute.xlu0 %288
  %290 = vrot.lane.b32.xlu0 %v273, 19
  %v291 = vpop.permute.xlu0 %290
  %v292 = vlaneseq
  %v293 = vand.u32 %v292, 127
  %vm294 = vcmp.lt.s32.totalorder %v293, 19
  %v295 = vsel %vm294, %v289, %v291
  %v296 = vsel %vm294, %v287, %v289
  %v297 = vsel %vm294, %v285, %v287
  %v298 = vsel %vm294, %v283, %v285
  %v299 = vsel %vm294, %v281, %v283
  %v300 = vsel %vm294, %v291, %v281
  %v301 = vld [vmem:[%s4] sm:$0xf]
  %v302 = vld [vmem:[%s4 + $0x4] sm:$0xf]
  %v303 = vld [vmem:[%s4 + $0x8] sm:$0xf]
  %v304 = vld [vmem:[%s4 + $0xc] sm:$0xf]
  %v305 = vpack.c.bf16 %v300, %v300
  %v306 = vpack.c.bf16 %v299, %v299
  %v307 = vpack.c.bf16 %v298, %v298
  %v308 = vpack.c.bf16 %v297, %v297
  %v309 = vpack.c.bf16 %v296, %v296
  %v310 = vpack.c.bf16 %v295, %v295
  %311 = vrot.lane.b32.xlu0 %v268, 18
  %v312 = vpop.permute.xlu0 %311
  %313 = vrot.lane.b32.xlu0 %v269, 18
  %v314 = vpop.permute.xlu0 %313
  %315 = vrot.lane.b32.xlu0 %v270, 18
  %v316 = vpop.permute.xlu0 %315
  %317 = vrot.lane.b32.xlu0 %v271, 18
  %v318 = vpop.permute.xlu0 %317
  %319 = vrot.lane.b32.xlu0 %v272, 18
  %v320 = vpop.permute.xlu0 %319
  %321 = vrot.lane.b32.xlu0 %v273, 18
  %v322 = vpop.permute.xlu0 %321
  %vm323 = vcmp.lt.s32.totalorder %v293, 18
  %v324 = vsel %vm323, %v320, %v322
  %v325 = vsel %vm323, %v318, %v320
  %v326 = vsel %vm323, %v316, %v318
  %v327 = vsel %vm323, %v314, %v316
  %v328 = vsel %vm323, %v312, %v314
  %v329 = vsel %vm323, %v322, %v312
  %s330 = scalar_lea.vmem %s4, 16
  %v331 = vld [vmem:[%s330] sm:$0xf]
  %v332 = vld [vmem:[%s330 + $0x4] sm:$0xf]
  %v333 = vld [vmem:[%s330 + $0x8] sm:$0xf]
  %v334 = vld [vmem:[%s330 + $0xc] sm:$0xf]
  %v335 = vpack.c.bf16 %v329, %v329
  %v336 = vpack.c.bf16 %v328, %v328
  %v337 = vpack.c.bf16 %v327, %v327
  %v338 = vpack.c.bf16 %v326, %v326
  %v339 = vpack.c.bf16 %v325, %v325
  %v340 = vpack.c.bf16 %v324, %v324
  %v345 = vunpack.c.l.b16 %v331
  %v346 = vunpack.c.l.b16 %v332
  %v347 = vunpack.c.l.b16 %v333
  %v348 = vunpack.c.l.b16 %v334
  %v349 = vpack.c.b16 %v346, %v345
  %v350 = vpack.c.b16 %v348, %v347
  %vm351 = vcmask 64512
  %v353 = vsel %vm351, %v349, 0
  %v356 = vsel %vm351, %v350, 0
  %vm358 = vcmask 1043456
  %v360 = vsel %vm358, %v335, 0
  %v363 = vsel %vm358, %v336, 0
  %v366 = vsel %vm358, %v337, 0
  %v369 = vsel %vm358, %v338, 0
  %v372 = vsel %vm358, %v339, 0
  %v375 = vsel %vm358, %v340, 0
  %377 = vmatprep.subr.bf16.mxu0 %v363
  %378 = vmatpush1.bf16.msra.mxu0 %v360
  %379 = vmatprep.subr.bf16.mxu0 0
  %380 = vmatpush1.bf16.msra.mxu0 0
  %381 = vmatprep.subr.bf16.mxu0 0
  %382 = vmatpush1.bf16.msra.mxu0 0
  %383 = vmatprep.subr.bf16.mxu0 0
  %384 = vmatpush1.bf16.msra.mxu0 0
  %385 = vmatprep.subr.bf16.mxu0 0
  %386 = vmatpush1.bf16.msra.mxu0 0
  %387 = vmatprep.subr.bf16.mxu0 0
  %388 = vmatpush1.bf16.msra.mxu0 0
  %389 = vmatprep.subr.bf16.mxu0 0
  %390 = vmatpush1.bf16.msra.mxu0 0
  %391 = vmatprep.subr.bf16.mxu0 0
  %392 = vmatpush1.bf16.msra.mxu0 0
  %393 = vmatprep.subr.bf16.mxu0 0
  %394 = vmatpush1.bf16.msra.mxu0 0
  %395 = vmatprep.subr.bf16.mxu0 0
  %396 = vmatpush1.bf16.msra.mxu0 0
  %397 = vmatprep.subr.bf16.mxu0 0
  %398 = vmatpush1.bf16.msra.mxu0 0
  %399 = vmatprep.subr.bf16.mxu0 0
  %400 = vmatpush1.bf16.msra.mxu0 0
  %401 = vmatprep.subr.bf16.mxu0 0
  %402 = vmatpush1.bf16.msra.mxu0 0
  %403 = vmatprep.subr.bf16.mxu0 0
  %404 = vmatpush1.bf16.msra.mxu0 0
  %405 = vmatprep.subr.bf16.mxu0 0
  %406 = vmatpush1.bf16.msra.mxu0 0
  %407 = vmatprep.subr.bf16.mxu0 0
  %408 = vmatpush1.bf16.msra.mxu0 0
  %409 = vmatprep.mubr.bf16.mxu0 0
  %410 = vmatmul.mubr.bf16.gmra.mrb[0].mxu0 %v353
  %v411 = vpop.f32.mrb[0].mxu0
  %v412 = vadd.f32 0.0, %v411
  %v413 = vpop.f32.mrb[0].mxu0
  %v414 = vadd.f32 0.0, %v413
  %v415 = vpop.f32.mrb[0].mxu0
  %v416 = vadd.f32 0.0, %v415
  %v417 = vpop.f32.mrb[0].mxu0
  %v418 = vadd.f32 0.0, %v417
  %419 = vmatprep.mubr.bf16.mxu0 0
  %420 = vmatmul.mubr.bf16.gmra.mrb[0].mxu0 %v356
  %v421 = vpop.f32.mrb[0].mxu0
  %v422 = vadd.f32 0.0, %v421
  %v423 = vpop.f32.mrb[0].mxu0
  %v424 = vadd.f32 0.0, %v423
  %v425 = vpop.f32.mrb[0].mxu0
  %v426 = vadd.f32 0.0, %v425
  %v427 = vpop.f32.mrb[0].mxu0
  %v428 = vadd.f32 0.0, %v427
  %429 = vdwg.mxu0
  %430 = vmatprep.subr.bf16.mxu0 %v369
  %431 = vmatpush1.bf16.msra.mxu0 %v366
  %432 = vmatprep.subr.bf16.mxu0 0
  %433 = vmatpush1.bf16.msra.mxu0 0
  %434 = vmatprep.subr.bf16.mxu0 0
  %435 = vmatpush1.bf16.msra.mxu0 0
  %436 = vmatprep.subr.bf16.mxu0 0
  %437 = vmatpush1.bf16.msra.mxu0 0
  %438 = vmatprep.subr.bf16.mxu0 0
  %439 = vmatpush1.bf16.msra.mxu0 0
  %440 = vmatprep.subr.bf16.mxu0 0
  %441 = vmatpush1.bf16.msra.mxu0 0
  %442 = vmatprep.subr.bf16.mxu0 0
  %443 = vmatpush1.bf16.msra.mxu0 0
  %444 = vmatprep.subr.bf16.mxu0 0
  %445 = vmatpush1.bf16.msra.mxu0 0
  %446 = vmatprep.subr.bf16.mxu0 0
  %447 = vmatpush1.bf16.msra.mxu0 0
  %448 = vmatprep.subr.bf16.mxu0 0
  %449 = vmatpush1.bf16.msra.mxu0 0
  %450 = vmatprep.subr.bf16.mxu0 0
  %451 = vmatpush1.bf16.msra.mxu0 0
  %452 = vmatprep.subr.bf16.mxu0 0
  %453 = vmatpush1.bf16.msra.mxu0 0
  %454 = vmatprep.subr.bf16.mxu0 0
  %455 = vmatpush1.bf16.msra.mxu0 0
  %456 = vmatprep.subr.bf16.mxu0 0
  %457 = vmatpush1.bf16.msra.mxu0 0
  %458 = vmatprep.subr.bf16.mxu0 0
  %459 = vmatpush1.bf16.msra.mxu0 0
  %460 = vmatprep.subr.bf16.mxu0 0
  %461 = vmatpush1.bf16.msra.mxu0 0
  %462 = vmatprep.mubr.bf16.mxu0 0
  %463 = vmatmul.mubr.bf16.gmra.mrb[0].mxu0 %v353
  %v464 = vpop.f32.mrb[0].mxu0
  %v465 = vadd.f32 0.0, %v464
  %v466 = vpop.f32.mrb[0].mxu0
  %v467 = vadd.f32 0.0, %v466
  %v468 = vpop.f32.mrb[0].mxu0
  %v469 = vadd.f32 0.0, %v468
  %v470 = vpop.f32.mrb[0].mxu0
  %v471 = vadd.f32 0.0, %v470
  %472 = vmatprep.mubr.bf16.mxu0 0
  %473 = vmatmul.mubr.bf16.gmra.mrb[0].mxu0 %v356
  %v474 = vpop.f32.mrb[0].mxu0
  %v475 = vadd.f32 0.0, %v474
  %v476 = vpop.f32.mrb[0].mxu0
  %v477 = vadd.f32 0.0, %v476
  %v478 = vpop.f32.mrb[0].mxu0
  %v479 = vadd.f32 0.0, %v478
  %v480 = vpop.f32.mrb[0].mxu0
  %v481 = vadd.f32 0.0, %v480
  %482 = vdwg.mxu0
  %483 = vmatprep.subr.bf16.mxu0 %v375
  %484 = vmatpush1.bf16.msra.mxu0 %v372
  %485 = vmatprep.subr.bf16.mxu0 0
  %486 = vmatpush1.bf16.msra.mxu0 0
  %487 = vmatprep.subr.bf16.mxu0 0
  %488 = vmatpush1.bf16.msra.mxu0 0
  %489 = vmatprep.subr.bf16.mxu0 0
  %490 = vmatpush1.bf16.msra.mxu0 0
  %491 = vmatprep.subr.bf16.mxu0 0
  %492 = vmatpush1.bf16.msra.mxu0 0
  %493 = vmatprep.subr.bf16.mxu0 0
  %494 = vmatpush1.bf16.msra.mxu0 0
  %495 = vmatprep.subr.bf16.mxu0 0
  %496 = vmatpush1.bf16.msra.mxu0 0
  %497 = vmatprep.subr.bf16.mxu0 0
  %498 = vmatpush1.bf16.msra.mxu0 0
  %499 = vmatprep.subr.bf16.mxu0 0
  %500 = vmatpush1.bf16.msra.mxu0 0
  %501 = vmatprep.subr.bf16.mxu0 0
  %502 = vmatpush1.bf16.msra.mxu0 0
  %503 = vmatprep.subr.bf16.mxu0 0
  %504 = vmatpush1.bf16.msra.mxu0 0
  %505 = vmatprep.subr.bf16.mxu0 0
  %506 = vmatpush1.bf16.msra.mxu0 0
  %507 = vmatprep.subr.bf16.mxu0 0
  %508 = vmatpush1.bf16.msra.mxu0 0
  %509 = vmatprep.subr.bf16.mxu0 0
  %510 = vmatpush1.bf16.msra.mxu0 0
  %511 = vmatprep.subr.bf16.mxu0 0
  %512 = vmatpush1.bf16.msra.mxu0 0
  %513 = vmatprep.subr.bf16.mxu0 0
  %514 = vmatpush1.bf16.msra.mxu0 0
  %515 = vmatprep.mubr.bf16.mxu0 0
  %516 = vmatmul.mubr.bf16.gmra.mrb[0].mxu0 %v353
  %v517 = vpop.f32.mrb[0].mxu0
  %v518 = vadd.f32 0.0, %v517
  %v519 = vpop.f32.mrb[0].mxu0
  %v520 = vadd.f32 0.0, %v519
  %v521 = vpop.f32.mrb[0].mxu0
  %v522 = vadd.f32 0.0, %v521
  %v523 = vpop.f32.mrb[0].mxu0
  %v524 = vadd.f32 0.0, %v523
  %525 = vmatprep.mubr.bf16.mxu0 0
  %526 = vmatmul.mubr.bf16.gmra.mrb[0].mxu0 %v356
  %v527 = vpop.f32.mrb[0].mxu0
  %v528 = vadd.f32 0.0, %v527
  %v529 = vpop.f32.mrb[0].mxu0
  %v530 = vadd.f32 0.0, %v529
  %v531 = vpop.f32.mrb[0].mxu0
  %v532 = vadd.f32 0.0, %v531
  %v533 = vpop.f32.mrb[0].mxu0
  %v534 = vadd.f32 0.0, %v533
  %535 = vdwg.mxu0
  %v540 = vunpack.c.l.b16 %v301
  %v541 = vunpack.c.l.b16 %v302
  %v542 = vunpack.c.l.b16 %v303
  %v543 = vunpack.c.l.b16 %v304
  %v544 = vpack.c.b16 %v541, %v540
  %v545 = vpack.c.b16 %v543, %v542
  %v547 = vsel %vm351, %v544, 0
  %v550 = vsel %vm351, %v545, 0
  %v553 = vsel %vm358, %v305, 0
  %v556 = vsel %vm358, %v306, 0
  %v559 = vsel %vm358, %v307, 0
  %v562 = vsel %vm358, %v308, 0
  %v565 = vsel %vm358, %v309, 0
  %v568 = vsel %vm358, %v310, 0
  %570 = vmatprep.subr.bf16.mxu0 %v556
  %571 = vmatpush1.bf16.msra.mxu0 %v553
  %572 = vmatprep.subr.bf16.mxu0 0
  %573 = vmatpush1.bf16.msra.mxu0 0
  %574 = vmatprep.subr.bf16.mxu0 0
  %575 = vmatpush1.bf16.msra.mxu0 0
  %576 = vmatprep.subr.bf16.mxu0 0
  %577 = vmatpush1.bf16.msra.mxu0 0
  %578 = vmatprep.subr.bf16.mxu0 0
  %579 = vmatpush1.bf16.msra.mxu0 0
  %580 = vmatprep.subr.bf16.mxu0 0
  %581 = vmatpush1.bf16.msra.mxu0 0
  %582 = vmatprep.subr.bf16.mxu0 0
  %583 = vmatpush1.bf16.msra.mxu0 0
  %584 = vmatprep.subr.bf16.mxu0 0
  %585 = vmatpush1.bf16.msra.mxu0 0
  %586 = vmatprep.subr.bf16.mxu0 0
  %587 = vmatpush1.bf16.msra.mxu0 0
  %588 = vmatprep.subr.bf16.mxu0 0
  %589 = vmatpush1.bf16.msra.mxu0 0
  %590 = vmatprep.subr.bf16.mxu0 0
  %591 = vmatpush1.bf16.msra.mxu0 0
  %592 = vmatprep.subr.bf16.mxu0 0
  %593 = vmatpush1.bf16.msra.mxu0 0
  %594 = vmatprep.subr.bf16.mxu0 0
  %595 = vmatpush1.bf16.msra.mxu0 0
  %596 = vmatprep.subr.bf16.mxu0 0
  %597 = vmatpush1.bf16.msra.mxu0 0
  %598 = vmatprep.subr.bf16.mxu0 0
  %599 = vmatpush1.bf16.msra.mxu0 0
  %600 = vmatprep.subr.bf16.mxu0 0
  %601 = vmatpush1.bf16.msra.mxu0 0
  %602 = vmatprep.mubr.bf16.mxu0 0
  %603 = vmatmul.mubr.bf16.gmra.mrb[0].mxu0 %v547
  %v604 = vpop.f32.mrb[0].mxu0
  %v605 = vadd.f32 %v412, %v604
  %v606 = vpop.f32.mrb[0].mxu0
  %v607 = vadd.f32 %v414, %v606
  %v608 = vpop.f32.mrb[0].mxu0
  %v609 = vadd.f32 %v416, %v608
  %v610 = vpop.f32.mrb[0].mxu0
  %v611 = vadd.f32 %v418, %v610
  %612 = vmatprep.mubr.bf16.mxu0 0
  %613 = vmatmul.mubr.bf16.gmra.mrb[0].mxu0 %v550
  %v614 = vpop.f32.mrb[0].mxu0
  %v615 = vadd.f32 %v422, %v614
  %v616 = vpop.f32.mrb[0].mxu0
  %v617 = vadd.f32 %v424, %v616
  %v618 = vpop.f32.mrb[0].mxu0
  %v619 = vadd.f32 %v426, %v618
  %v620 = vpop.f32.mrb[0].mxu0
  %v621 = vadd.f32 %v428, %v620
  %622 = vdwg.mxu0
  %623 = vmatprep.subr.bf16.mxu0 %v562
  %624 = vmatpush1.bf16.msra.mxu0 %v559
  %625 = vmatprep.subr.bf16.mxu0 0
  %626 = vmatpush1.bf16.msra.mxu0 0
  %627 = vmatprep.subr.bf16.mxu0 0
  %628 = vmatpush1.bf16.msra.mxu0 0
  %629 = vmatprep.subr.bf16.mxu0 0
  %630 = vmatpush1.bf16.msra.mxu0 0
  %631 = vmatprep.subr.bf16.mxu0 0
  %632 = vmatpush1.bf16.msra.mxu0 0
  %633 = vmatprep.subr.bf16.mxu0 0
  %634 = vmatpush1.bf16.msra.mxu0 0
  %635 = vmatprep.subr.bf16.mxu0 0
  %636 = vmatpush1.bf16.msra.mxu0 0
  %637 = vmatprep.subr.bf16.mxu0 0
  %638 = vmatpush1.bf16.msra.mxu0 0
  %639 = vmatprep.subr.bf16.mxu0 0
  %640 = vmatpush1.bf16.msra.mxu0 0
  %641 = vmatprep.subr.bf16.mxu0 0
  %642 = vmatpush1.bf16.msra.mxu0 0
  %643 = vmatprep.subr.bf16.mxu0 0
  %644 = vmatpush1.bf16.msra.mxu0 0
  %645 = vmatprep.subr.bf16.mxu0 0
  %646 = vmatpush1.bf16.msra.mxu0 0
  %647 = vmatprep.subr.bf16.mxu0 0
  %648 = vmatpush1.bf16.msra.mxu0 0
  %649 = vmatprep.subr.bf16.mxu0 0
  %650 = vmatpush1.bf16.msra.mxu0 0
  %651 = vmatprep.subr.bf16.mxu0 0
  %652 = vmatpush1.bf16.msra.mxu0 0
  %653 = vmatprep.subr.bf16.mxu0 0
  %654 = vmatpush1.bf16.msra.mxu0 0
  %655 = vmatprep.mubr.bf16.mxu0 0
  %656 = vmatmul.mubr.bf16.gmra.mrb[0].mxu0 %v547
  %v657 = vpop.f32.mrb[0].mxu0
  %v658 = vadd.f32 %v465, %v657
  %v659 = vpop.f32.mrb[0].mxu0
  %v660 = vadd.f32 %v467, %v659
  %v661 = vpop.f32.mrb[0].mxu0
  %v662 = vadd.f32 %v469, %v661
  %v663 = vpop.f32.mrb[0].mxu0
  %v664 = vadd.f32 %v471, %v663
  %665 = vmatprep.mubr.bf16.mxu0 0
  %666 = vmatmul.mubr.bf16.gmra.mrb[0].mxu0 %v550
  %v667 = vpop.f32.mrb[0].mxu0
  %v668 = vadd.f32 %v475, %v667
  %v669 = vpop.f32.mrb[0].mxu0
  %v670 = vadd.f32 %v477, %v669
  %v671 = vpop.f32.mrb[0].mxu0
  %v672 = vadd.f32 %v479, %v671
  %v673 = vpop.f32.mrb[0].mxu0
  %v674 = vadd.f32 %v481, %v673
  %675 = vdwg.mxu0
  %676 = vmatprep.subr.bf16.mxu0 %v568
  %677 = vmatpush1.bf16.msra.mxu0 %v565
  %678 = vmatprep.subr.bf16.mxu0 0
  %679 = vmatpush1.bf16.msra.mxu0 0
  %680 = vmatprep.subr.bf16.mxu0 0
  %681 = vmatpush1.bf16.msra.mxu0 0
  %682 = vmatprep.subr.bf16.mxu0 0
  %683 = vmatpush1.bf16.msra.mxu0 0
  %684 = vmatprep.subr.bf16.mxu0 0
  %685 = vmatpush1.bf16.msra.mxu0 0
  %686 = vmatprep.subr.bf16.mxu0 0
  %687 = vmatpush1.bf16.msra.mxu0 0
  %688 = vmatprep.subr.bf16.mxu0 0
  %689 = vmatpush1.bf16.msra.mxu0 0
  %690 = vmatprep.subr.bf16.mxu0 0
  %691 = vmatpush1.bf16.msra.mxu0 0
  %692 = vmatprep.subr.bf16.mxu0 0
  %693 = vmatpush1.bf16.msra.mxu0 0
  %694 = vmatprep.subr.bf16.mxu0 0
  %695 = vmatpush1.bf16.msra.mxu0 0
  %696 = vmatprep.subr.bf16.mxu0 0
  %697 = vmatpush1.bf16.msra.mxu0 0
  %698 = vmatprep.subr.bf16.mxu0 0
  %699 = vmatpush1.bf16.msra.mxu0 0
  %700 = vmatprep.subr.bf16.mxu0 0
  %701 = vmatpush1.bf16.msra.mxu0 0
  %702 = vmatprep.subr.bf16.mxu0 0
  %703 = vmatpush1.bf16.msra.mxu0 0
  %704 = vmatprep.subr.bf16.mxu0 0
  %705 = vmatpush1.bf16.msra.mxu0 0
  %706 = vmatprep.subr.bf16.mxu0 0
  %707 = vmatpush1.bf16.msra.mxu0 0
  %708 = vmatprep.mubr.bf16.mxu0 0
  %709 = vmatmul.mubr.bf16.gmra.mrb[0].mxu0 %v547
  %v710 = vpop.f32.mrb[0].mxu0
  %v711 = vadd.f32 %v518, %v710
  %v712 = vpop.f32.mrb[0].mxu0
  %v713 = vadd.f32 %v520, %v712
  %v714 = vpop.f32.mrb[0].mxu0
  %v715 = vadd.f32 %v522, %v714
  %v716 = vpop.f32.mrb[0].mxu0
  %v717 = vadd.f32 %v524, %v716
  %718 = vmatprep.mubr.bf16.mxu0 0
  %719 = vmatmul.mubr.bf16.gmra.mrb[0].mxu0 %v550
  %v720 = vpop.f32.mrb[0].mxu0
  %v721 = vadd.f32 %v528, %v720
  %v722 = vpop.f32.mrb[0].mxu0
  %v723 = vadd.f32 %v530, %v722
  %v724 = vpop.f32.mrb[0].mxu0
  %v725 = vadd.f32 %v532, %v724
  %v726 = vpop.f32.mrb[0].mxu0
  %v727 = vadd.f32 %v534, %v726
  %728 = vdwg.mxu0
  %729 = vrot.lane.b32.xlu0 %v268, 17
  %v730 = vpop.permute.xlu0 %729
  %731 = vrot.lane.b32.xlu0 %v269, 17
  %v732 = vpop.permute.xlu0 %731
  %733 = vrot.lane.b32.xlu0 %v270, 17
  %v734 = vpop.permute.xlu0 %733
  %735 = vrot.lane.b32.xlu0 %v271, 17
  %v736 = vpop.permute.xlu0 %735
  %737 = vrot.lane.b32.xlu0 %v272, 17
  %v738 = vpop.permute.xlu0 %737
  %739 = vrot.lane.b32.xlu0 %v273, 17
  %v740 = vpop.permute.xlu0 %739
  %vm741 = vcmp.lt.s32.totalorder %v293, 17
  %v742 = vsel %vm741, %v738, %v740
  %v743 = vsel %vm741, %v736, %v738
  %v744 = vsel %vm741, %v734, %v736
  %v745 = vsel %vm741, %v732, %v734
  %v746 = vsel %vm741, %v730, %v732
  %v747 = vsel %vm741, %v740, %v730
  %s748 = scalar_lea.vmem %s4, 32
  %v749 = vld [vmem:[%s748] sm:$0xf]
  %v750 = vld [vmem:[%s748 + $0x4] sm:$0xf]
  %v751 = vld [vmem:[%s748 + $0x8] sm:$0xf]
  %v752 = vld [vmem:[%s748 + $0xc] sm:$0xf]
  %v753 = vpack.c.bf16 %v747, %v747
  %v754 = vpack.c.bf16 %v746, %v746
  %v755 = vpack.c.bf16 %v745, %v745
  %v756 = vpack.c.bf16 %v744, %v744
  %v757 = vpack.c.bf16 %v743, %v743
  %v758 = vpack.c.bf16 %v742, %v742
  %v763 = vunpack.c.l.b16 %v749
  %v764 = vunpack.c.l.b16 %v750
  %v765 = vunpack.c.l.b16 %v751
  %v766 = vunpack.c.l.b16 %v752
  %v767 = vpack.c.b16 %v764, %v763
  %v768 = vpack.c.b16 %v766, %v765
  %v770 = vsel %vm351, %v767, 0
  %v773 = vsel %vm351, %v768, 0
  %v776 = vsel %vm358, %v753, 0
  %v779 = vsel %vm358, %v754, 0
  %v782 = vsel %vm358, %v755, 0
  %v785 = vsel %vm358, %v756, 0
  %v788 = vsel %vm358, %v757, 0
  %v791 = vsel %vm358, %v758, 0
  %793 = vmatprep.subr.bf16.mxu0 %v779
  %794 = vmatpush1.bf16.msra.mxu0 %v776
  %795 = vmatprep.subr.bf16.mxu0 0
  %796 = vmatpush1.bf16.msra.mxu0 0
  %797 = vmatprep.subr.bf16.mxu0 0
  %798 = vmatpush1.bf16.msra.mxu0 0
  %799 = vmatprep.subr.bf16.mxu0 0
  %800 = vmatpush1.bf16.msra.mxu0 0
  %801 = vmatprep.subr.bf16.mxu0 0
  %802 = vmatpush1.bf16.msra.mxu0 0
  %803 = vmatprep.subr.bf16.mxu0 0
  %804 = vmatpush1.bf16.msra.mxu0 0
  %805 = vmatprep.subr.bf16.mxu0 0
  %806 = vmatpush1.bf16.msra.mxu0 0
  %807 = vmatprep.subr.bf16.mxu0 0
  %808 = vmatpush1.bf16.msra.mxu0 0
  %809 = vmatprep.subr.bf16.mxu0 0
  %810 = vmatpush1.bf16.msra.mxu0 0
  %811 = vmatprep.subr.bf16.mxu0 0
  %812 = vmatpush1.bf16.msra.mxu0 0
  %813 = vmatprep.subr.bf16.mxu0 0
  %814 = vmatpush1.bf16.msra.mxu0 0
  %815 = vmatprep.subr.bf16.mxu0 0
  %816 = vmatpush1.bf16.msra.mxu0 0
  %817 = vmatprep.subr.bf16.mxu0 0
  %818 = vmatpush1.bf16.msra.mxu0 0
  %819 = vmatprep.subr.bf16.mxu0 0
  %820 = vmatpush1.bf16.msra.mxu0 0
  %821 = vmatprep.subr.bf16.mxu0 0
  %822 = vmatpush1.bf16.msra.mxu0 0
  %823 = vmatprep.subr.bf16.mxu0 0
  %824 = vmatpush1.bf16.msra.mxu0 0
  %825 = vmatprep.mubr.bf16.mxu0 0
  %826 = vmatmul.mubr.bf16.gmra.mrb[0].mxu0 %v770
  %v827 = vpop.f32.mrb[0].mxu0
  %v828 = vadd.f32 0.0, %v827
  %v829 = vpop.f32.mrb[0].mxu0
  %v830 = vadd.f32 0.0, %v829
  %v831 = vpop.f32.mrb[0].mxu0
  %v832 = vadd.f32 0.0, %v831
  %v833 = vpop.f32.mrb[0].mxu0
  %v834 = vadd.f32 0.0, %v833
  %835 = vmatprep.mubr.bf16.mxu0 0
  %836 = vmatmul.mubr.bf16.gmra.mrb[0].mxu0 %v773
  %v837 = vpop.f32.mrb[0].mxu0
  %v838 = vadd.f32 0.0, %v837
  %v839 = vpop.f32.mrb[0].mxu0
  %v840 = vadd.f32 0.0, %v839
  %v841 = vpop.f32.mrb[0].mxu0
  %v842 = vadd.f32 0.0, %v841
  %v843 = vpop.f32.mrb[0].mxu0
  %v844 = vadd.f32 0.0, %v843
  %845 = vdwg.mxu0
  %846 = vmatprep.subr.bf16.mxu0 %v785
  %847 = vmatpush1.bf16.msra.mxu0 %v782
  %848 = vmatprep.subr.bf16.mxu0 0
  %849 = vmatpush1.bf16.msra.mxu0 0
  %850 = vmatprep.subr.bf16.mxu0 0
  %851 = vmatpush1.bf16.msra.mxu0 0
  %852 = vmatprep.subr.bf16.mxu0 0
  %853 = vmatpush1.bf16.msra.mxu0 0
  %854 = vmatprep.subr.bf16.mxu0 0
  %855 = vmatpush1.bf16.msra.mxu0 0
  %856 = vmatprep.subr.bf16.mxu0 0
  %857 = vmatpush1.bf16.msra.mxu0 0
  %858 = vmatprep.subr.bf16.mxu0 0
  %859 = vmatpush1.bf16.msra.mxu0 0
  %860 = vmatprep.subr.bf16.mxu0 0
  %861 = vmatpush1.bf16.msra.mxu0 0
  %862 = vmatprep.subr.bf16.mxu0 0
  %863 = vmatpush1.bf16.msra.mxu0 0
  %864 = vmatprep.subr.bf16.mxu0 0
  %865 = vmatpush1.bf16.msra.mxu0 0
  %866 = vmatprep.subr.bf16.mxu0 0
  %867 = vmatpush1.bf16.msra.mxu0 0
  %868 = vmatprep.subr.bf16.mxu0 0
  %869 = vmatpush1.bf16.msra.mxu0 0
  %870 = vmatprep.subr.bf16.mxu0 0
  %871 = vmatpush1.bf16.msra.mxu0 0
  %872 = vmatprep.subr.bf16.mxu0 0
  %873 = vmatpush1.bf16.msra.mxu0 0
  %874 = vmatprep.subr.bf16.mxu0 0
  %875 = vmatpush1.bf16.msra.mxu0 0
  %876 = vmatprep.subr.bf16.mxu0 0
  %877 = vmatpush1.bf16.msra.mxu0 0
  %878 = vmatprep.mubr.bf16.mxu0 0
  %879 = vmatmul.mubr.bf16.gmra.mrb[0].mxu0 %v770
  %v880 = vpop.f32.mrb[0].mxu0
  %v881 = vadd.f32 0.0, %v880
  %v882 = vpop.f32.mrb[0].mxu0
  %v883 = vadd.f32 0.0, %v882
  %v884 = vpop.f32.mrb[0].mxu0
  %v885 = vadd.f32 0.0, %v884
  %v886 = vpop.f32.mrb[0].mxu0
  %v887 = vadd.f32 0.0, %v886
  %888 = vmatprep.mubr.bf16.mxu0 0
  %889 = vmatmul.mubr.bf16.gmra.mrb[0].mxu0 %v773
  %v890 = vpop.f32.mrb[0].mxu0
  %v891 = vadd.f32 0.0, %v890
  %v892 = vpop.f32.mrb[0].mxu0
  %v893 = vadd.f32 0.0, %v892
  %v894 = vpop.f32.mrb[0].mxu0
  %v895 = vadd.f32 0.0, %v894
  %v896 = vpop.f32.mrb[0].mxu0
  %v897 = vadd.f32 0.0, %v896
  %898 = vdwg.mxu0
  %899 = vmatprep.subr.bf16.mxu0 %v791
  %900 = vmatpush1.bf16.msra.mxu0 %v788
  %901 = vmatprep.subr.bf16.mxu0 0
  %902 = vmatpush1.bf16.msra.mxu0 0
  %903 = vmatprep.subr.bf16.mxu0 0
  %904 = vmatpush1.bf16.msra.mxu0 0
  %905 = vmatprep.subr.bf16.mxu0 0
  %906 = vmatpush1.bf16.msra.mxu0 0
  %907 = vmatprep.subr.bf16.mxu0 0
  %908 = vmatpush1.bf16.msra.mxu0 0
  %909 = vmatprep.subr.bf16.mxu0 0
  %910 = vmatpush1.bf16.msra.mxu0 0
  %911 = vmatprep.subr.bf16.mxu0 0
  %912 = vmatpush1.bf16.msra.mxu0 0
  %913 = vmatprep.subr.bf16.mxu0 0
  %914 = vmatpush1.bf16.msra.mxu0 0
  %915 = vmatprep.subr.bf16.mxu0 0
  %916 = vmatpush1.bf16.msra.mxu0 0
  %917 = vmatprep.subr.bf16.mxu0 0
  %918 = vmatpush1.bf16.msra.mxu0 0
  %919 = vmatprep.subr.bf16.mxu0 0
  %920 = vmatpush1.bf16.msra.mxu0 0
  %921 = vmatprep.subr.bf16.mxu0 0
  %922 = vmatpush1.bf16.msra.mxu0 0
  %923 = vmatprep.subr.bf16.mxu0 0
  %924 = vmatpush1.bf16.msra.mxu0 0
  %925 = vmatprep.subr.bf16.mxu0 0
  %926 = vmatpush1.bf16.msra.mxu0 0
  %927 = vmatprep.subr.bf16.mxu0 0
  %928 = vmatpush1.bf16.msra.mxu0 0
  %929 = vmatprep.subr.bf16.mxu0 0
  %930 = vmatpush1.bf16.msra.mxu0 0
  %931 = vmatprep.mubr.bf16.mxu0 0
  %932 = vmatmul.mubr.bf16.gmra.mrb[0].mxu0 %v770
  %v933 = vpop.f32.mrb[0].mxu0
  %v934 = vadd.f32 0.0, %v933
  %v935 = vpop.f32.mrb[0].mxu0
  %v936 = vadd.f32 0.0, %v935
  %v937 = vpop.f32.mrb[0].mxu0
  %v938 = vadd.f32 0.0, %v937
  %v939 = vpop.f32.mrb[0].mxu0
  %v940 = vadd.f32 0.0, %v939
  %941 = vmatprep.mubr.bf16.mxu0 0
  %942 = vmatmul.mubr.bf16.gmra.mrb[0].mxu0 %v773
  %v943 = vpop.f32.mrb[0].mxu0
  %v944 = vadd.f32 0.0, %v943
  %v945 = vpop.f32.mrb[0].mxu0
  %v946 = vadd.f32 0.0, %v945
  %v947 = vpop.f32.mrb[0].mxu0
  %v948 = vadd.f32 0.0, %v947
  %v949 = vpop.f32.mrb[0].mxu0
  %v950 = vadd.f32 0.0, %v949
  %951 = vdwg.mxu0
  %v952 = vadd.f32 %v605, %v828
  %v953 = vadd.f32 %v607, %v830
  %v954 = vadd.f32 %v658, %v881
  %v955 = vadd.f32 %v660, %v883
  %v956 = vadd.f32 %v711, %v934
  %v957 = vadd.f32 %v713, %v936
  %v958 = vadd.f32 %v609, %v832
  %v959 = vadd.f32 %v611, %v834
  %v960 = vadd.f32 %v662, %v885
  %v961 = vadd.f32 %v664, %v887
  %v962 = vadd.f32 %v715, %v938
  %v963 = vadd.f32 %v717, %v940
  %v964 = vadd.f32 %v615, %v838
  %v965 = vadd.f32 %v617, %v840
  %v966 = vadd.f32 %v668, %v891
  %v967 = vadd.f32 %v670, %v893
  %v968 = vadd.f32 %v721, %v944
  %v969 = vadd.f32 %v723, %v946
  %v970 = vadd.f32 %v619, %v842
  %v971 = vadd.f32 %v621, %v844
  %v972 = vadd.f32 %v672, %v895
  %v973 = vadd.f32 %v674, %v897
  %v974 = vadd.f32 %v725, %v948
  %v975 = vadd.f32 %v727, %v950
  %976 = vrot.lane.b32.xlu0 %v268, 1
  %v977 = vpop.permute.xlu0 %976
  %978 = vrot.lane.b32.xlu0 %v269, 1
  %v979 = vpop.permute.xlu0 %978
  %980 = vrot.lane.b32.xlu0 %v270, 1
  %v981 = vpop.permute.xlu0 %980
  %982 = vrot.lane.b32.xlu0 %v271, 1
  %v983 = vpop.permute.xlu0 %982
  %984 = vrot.lane.b32.xlu0 %v272, 1
  %v985 = vpop.permute.xlu0 %984
  %986 = vrot.lane.b32.xlu0 %v273, 1
  %v987 = vpop.permute.xlu0 %986
  %vm988 = vcmp.lt.s32.totalorder %v293, 1
  %v989 = vsel %vm988, %v985, %v987
  %v990 = vsel %vm988, %v983, %v985
  %v991 = vsel %vm988, %v981, %v983
  %v992 = vsel %vm988, %v979, %v981
  %v993 = vsel %vm988, %v977, %v979
  %v994 = vsel %vm988, %v987, %v977
  %s995 = scalar_lea.vmem %s4, 48
  %v996 = vld [vmem:[%s995] sm:$0xf]
  %v997 = vld [vmem:[%s995 + $0x4] sm:$0xf]
  %v998 = vld [vmem:[%s995 + $0x8] sm:$0xf]
  %v999 = vld [vmem:[%s995 + $0xc] sm:$0xf]
  %v1000 = vpack.c.bf16 %v994, %v994
  %v1001 = vpack.c.bf16 %v993, %v993
  %v1002 = vpack.c.bf16 %v992, %v992
  %v1003 = vpack.c.bf16 %v991, %v991
  %v1004 = vpack.c.bf16 %v990, %v990
  %v1005 = vpack.c.bf16 %v989, %v989
  %v1010 = vunpack.c.l.b16 %v996
  %v1011 = vunpack.c.l.b16 %v997
  %v1012 = vunpack.c.l.b16 %v998
  %v1013 = vunpack.c.l.b16 %v999
  %v1014 = vpack.c.b16 %v1011, %v1010
  %v1015 = vpack.c.b16 %v1013, %v1012
  %v1017 = vsel %vm351, %v1014, 0
  %v1020 = vsel %vm351, %v1015, 0
  %v1023 = vsel %vm358, %v1000, 0
  %v1026 = vsel %vm358, %v1001, 0
  %v1029 = vsel %vm358, %v1002, 0
  %v1032 = vsel %vm358, %v1003, 0
  %v1035 = vsel %vm358, %v1004, 0
  %v1038 = vsel %vm358, %v1005, 0
  %1040 = vmatprep.subr.bf16.mxu0 %v1026
  %1041 = vmatpush1.bf16.msra.mxu0 %v1023
  %1042 = vmatprep.subr.bf16.mxu0 0
  %1043 = vmatpush1.bf16.msra.mxu0 0
  %1044 = vmatprep.subr.bf16.mxu0 0
  %1045 = vmatpush1.bf16.msra.mxu0 0
  %1046 = vmatprep.subr.bf16.mxu0 0
  %1047 = vmatpush1.bf16.msra.mxu0 0
  %1048 = vmatprep.subr.bf16.mxu0 0
  %1049 = vmatpush1.bf16.msra.mxu0 0
  %1050 = vmatprep.subr.bf16.mxu0 0
  %1051 = vmatpush1.bf16.msra.mxu0 0
  %1052 = vmatprep.subr.bf16.mxu0 0
  %1053 = vmatpush1.bf16.msra.mxu0 0
  %1054 = vmatprep.subr.bf16.mxu0 0
  %1055 = vmatpush1.bf16.msra.mxu0 0
  %1056 = vmatprep.subr.bf16.mxu0 0
  %1057 = vmatpush1.bf16.msra.mxu0 0
  %1058 = vmatprep.subr.bf16.mxu0 0
  %1059 = vmatpush1.bf16.msra.mxu0 0
  %1060 = vmatprep.subr.bf16.mxu0 0
  %1061 = vmatpush1.bf16.msra.mxu0 0
  %1062 = vmatprep.subr.bf16.mxu0 0
  %1063 = vmatpush1.bf16.msra.mxu0 0
  %1064 = vmatprep.subr.bf16.mxu0 0
  %1065 = vmatpush1.bf16.msra.mxu0 0
  %1066 = vmatprep.subr.bf16.mxu0 0
  %1067 = vmatpush1.bf16.msra.mxu0 0
  %1068 = vmatprep.subr.bf16.mxu0 0
  %1069 = vmatpush1.bf16.msra.mxu0 0
  %1070 = vmatprep.subr.bf16.mxu0 0
  %1071 = vmatpush1.bf16.msra.mxu0 0
  %1072 = vmatprep.mubr.bf16.mxu0 0
  %1073 = vmatmul.mubr.bf16.gmra.mrb[0].mxu0 %v1017
  %v1074 = vpop.f32.mrb[0].mxu0
  %v1075 = vadd.f32 0.0, %v1074
  %v1076 = vpop.f32.mrb[0].mxu0
  %v1077 = vadd.f32 0.0, %v1076
  %v1078 = vpop.f32.mrb[0].mxu0
  %v1079 = vadd.f32 0.0, %v1078
  %v1080 = vpop.f32.mrb[0].mxu0
  %v1081 = vadd.f32 0.0, %v1080
  %1082 = vmatprep.mubr.bf16.mxu0 0
  %1083 = vmatmul.mubr.bf16.gmra.mrb[0].mxu0 %v1020
  %v1084 = vpop.f32.mrb[0].mxu0
  %v1085 = vadd.f32 0.0, %v1084
  %v1086 = vpop.f32.mrb[0].mxu0
  %v1087 = vadd.f32 0.0, %v1086
  %v1088 = vpop.f32.mrb[0].mxu0
  %v1089 = vadd.f32 0.0, %v1088
  %v1090 = vpop.f32.mrb[0].mxu0
  %v1091 = vadd.f32 0.0, %v1090
  %1092 = vdwg.mxu0
  %1093 = vmatprep.subr.bf16.mxu0 %v1032
  %1094 = vmatpush1.bf16.msra.mxu0 %v1029
  %1095 = vmatprep.subr.bf16.mxu0 0
  %1096 = vmatpush1.bf16.msra.mxu0 0
  %1097 = vmatprep.subr.bf16.mxu0 0
  %1098 = vmatpush1.bf16.msra.mxu0 0
  %1099 = vmatprep.subr.bf16.mxu0 0
  %1100 = vmatpush1.bf16.msra.mxu0 0
  %1101 = vmatprep.subr.bf16.mxu0 0
  %1102 = vmatpush1.bf16.msra.mxu0 0
  %1103 = vmatprep.subr.bf16.mxu0 0
  %1104 = vmatpush1.bf16.msra.mxu0 0
  %1105 = vmatprep.subr.bf16.mxu0 0
  %1106 = vmatpush1.bf16.msra.mxu0 0
  %1107 = vmatprep.subr.bf16.mxu0 0
  %1108 = vmatpush1.bf16.msra.mxu0 0
  %1109 = vmatprep.subr.bf16.mxu0 0
  %1110 = vmatpush1.bf16.msra.mxu0 0
  %1111 = vmatprep.subr.bf16.mxu0 0
  %1112 = vmatpush1.bf16.msra.mxu0 0
  %1113 = vmatprep.subr.bf16.mxu0 0
  %1114 = vmatpush1.bf16.msra.mxu0 0
  %1115 = vmatprep.subr.bf16.mxu0 0
  %1116 = vmatpush1.bf16.msra.mxu0 0
  %1117 = vmatprep.subr.bf16.mxu0 0
  %1118 = vmatpush1.bf16.msra.mxu0 0
  %1119 = vmatprep.subr.bf16.mxu0 0
  %1120 = vmatpush1.bf16.msra.mxu0 0
  %1121 = vmatprep.subr.bf16.mxu0 0
  %1122 = vmatpush1.bf16.msra.mxu0 0
  %1123 = vmatprep.subr.bf16.mxu0 0
  %1124 = vmatpush1.bf16.msra.mxu0 0
  %1125 = vmatprep.mubr.bf16.mxu0 0
  %1126 = vmatmul.mubr.bf16.gmra.mrb[0].mxu0 %v1017
  %v1127 = vpop.f32.mrb[0].mxu0
  %v1128 = vadd.f32 0.0, %v1127
  %v1129 = vpop.f32.mrb[0].mxu0
  %v1130 = vadd.f32 0.0, %v1129
  %v1131 = vpop.f32.mrb[0].mxu0
  %v1132 = vadd.f32 0.0, %v1131
  %v1133 = vpop.f32.mrb[0].mxu0
  %v1134 = vadd.f32 0.0, %v1133
  %1135 = vmatprep.mubr.bf16.mxu0 0
  %1136 = vmatmul.mubr.bf16.gmra.mrb[0].mxu0 %v1020
  %v1137 = vpop.f32.mrb[0].mxu0
  %v1138 = vadd.f32 0.0, %v1137
  %v1139 = vpop.f32.mrb[0].mxu0
  %v1140 = vadd.f32 0.0, %v1139
  %v1141 = vpop.f32.mrb[0].mxu0
  %v1142 = vadd.f32 0.0, %v1141
  %v1143 = vpop.f32.mrb[0].mxu0
  %v1144 = vadd.f32 0.0, %v1143
  %1145 = vdwg.mxu0
  %1146 = vmatprep.subr.bf16.mxu0 %v1038
  %1147 = vmatpush1.bf16.msra.mxu0 %v1035
  %1148 = vmatprep.subr.bf16.mxu0 0
  %1149 = vmatpush1.bf16.msra.mxu0 0
  %1150 = vmatprep.subr.bf16.mxu0 0
  %1151 = vmatpush1.bf16.msra.mxu0 0
  %1152 = vmatprep.subr.bf16.mxu0 0
  %1153 = vmatpush1.bf16.msra.mxu0 0
  %1154 = vmatprep.subr.bf16.mxu0 0
  %1155 = vmatpush1.bf16.msra.mxu0 0
  %1156 = vmatprep.subr.bf16.mxu0 0
  %1157 = vmatpush1.bf16.msra.mxu0 0
  %1158 = vmatprep.subr.bf16.mxu0 0
  %1159 = vmatpush1.bf16.msra.mxu0 0
  %1160 = vmatprep.subr.bf16.mxu0 0
  %1161 = vmatpush1.bf16.msra.mxu0 0
  %1162 = vmatprep.subr.bf16.mxu0 0
  %1163 = vmatpush1.bf16.msra.mxu0 0
  %1164 = vmatprep.subr.bf16.mxu0 0
  %1165 = vmatpush1.bf16.msra.mxu0 0
  %1166 = vmatprep.subr.bf16.mxu0 0
  %1167 = vmatpush1.bf16.msra.mxu0 0
  %1168 = vmatprep.subr.bf16.mxu0 0
  %1169 = vmatpush1.bf16.msra.mxu0 0
  %1170 = vmatprep.subr.bf16.mxu0 0
  %1171 = vmatpush1.bf16.msra.mxu0 0
  %1172 = vmatprep.subr.bf16.mxu0 0
  %1173 = vmatpush1.bf16.msra.mxu0 0
  %1174 = vmatprep.subr.bf16.mxu0 0
  %1175 = vmatpush1.bf16.msra.mxu0 0
  %1176 = vmatprep.subr.bf16.mxu0 0
  %1177 = vmatpush1.bf16.msra.mxu0 0
  %1178 = vmatprep.mubr.bf16.mxu0 0
  %1179 = vmatmul.mubr.bf16.gmra.mrb[0].mxu0 %v1017
  %v1180 = vpop.f32.mrb[0].mxu0
  %v1181 = vadd.f32 0.0, %v1180
  %v1182 = vpop.f32.mrb[0].mxu0
  %v1183 = vadd.f32 0.0, %v1182
  %v1184 = vpop.f32.mrb[0].mxu0
  %v1185 = vadd.f32 0.0, %v1184
  %v1186 = vpop.f32.mrb[0].mxu0
  %v1187 = vadd.f32 0.0, %v1186
  %1188 = vmatprep.mubr.bf16.mxu0 0
  %1189 = vmatmul.mubr.bf16.gmra.mrb[0].mxu0 %v1020
  %v1190 = vpop.f32.mrb[0].mxu0
  %v1191 = vadd.f32 0.0, %v1190
  %v1192 = vpop.f32.mrb[0].mxu0
  %v1193 = vadd.f32 0.0, %v1192
  %v1194 = vpop.f32.mrb[0].mxu0
  %v1195 = vadd.f32 0.0, %v1194
  %v1196 = vpop.f32.mrb[0].mxu0
  %v1197 = vadd.f32 0.0, %v1196
  %1198 = vdwg.mxu0
  %v1199 = vadd.f32 %v952, %v1075
  %v1200 = vadd.f32 %v953, %v1077
  %v1201 = vadd.f32 %v954, %v1128
  %v1202 = vadd.f32 %v955, %v1130
  %v1203 = vadd.f32 %v956, %v1181
  %v1204 = vadd.f32 %v957, %v1183
  %v1205 = vadd.f32 %v958, %v1079
  %v1206 = vadd.f32 %v959, %v1081
  %v1207 = vadd.f32 %v960, %v1132
  %v1208 = vadd.f32 %v961, %v1134
  %v1209 = vadd.f32 %v962, %v1185
  %v1210 = vadd.f32 %v963, %v1187
  %v1211 = vadd.f32 %v964, %v1085
  %v1212 = vadd.f32 %v965, %v1087
  %v1213 = vadd.f32 %v966, %v1138
  %v1214 = vadd.f32 %v967, %v1140
  %v1215 = vadd.f32 %v968, %v1191
  %v1216 = vadd.f32 %v969, %v1193
  %v1217 = vadd.f32 %v970, %v1089
  %v1218 = vadd.f32 %v971, %v1091
  %v1219 = vadd.f32 %v972, %v1142
  %v1220 = vadd.f32 %v973, %v1144
  %v1221 = vadd.f32 %v974, %v1195
  %v1222 = vadd.f32 %v975, %v1197
  %s1223 = scalar_lea.vmem %s4, 64
  %v1224 = vld [vmem:[%s1223] sm:$0xf]
  %v1225 = vld [vmem:[%s1223 + $0x4] sm:$0xf]
  %v1226 = vld [vmem:[%s1223 + $0x8] sm:$0xf]
  %v1227 = vld [vmem:[%s1223 + $0xc] sm:$0xf]
  %v1232 = vunpack.c.l.b16 %v1224
  %v1233 = vunpack.c.l.b16 %v1225
  %v1234 = vunpack.c.l.b16 %v1226
  %v1235 = vunpack.c.l.b16 %v1227
  %v1236 = vpack.c.b16 %v1233, %v1232
  %v1237 = vpack.c.b16 %v1235, %v1234
  %v1239 = vsel %vm351, %v1236, 0
  %v1242 = vsel %vm351, %v1237, 0
  %v1245 = vsel %vm358, %v274, 0
  %v1248 = vsel %vm358, %v275, 0
  %v1251 = vsel %vm358, %v276, 0
  %v1254 = vsel %vm358, %v277, 0
  %v1257 = vsel %vm358, %v278, 0
  %v1260 = vsel %vm358, %v279, 0
  %1262 = vmatprep.subr.bf16.mxu0 %v1248
  %1263 = vmatpush1.bf16.msra.mxu0 %v1245
  %1264 = vmatprep.subr.bf16.mxu0 0
  %1265 = vmatpush1.bf16.msra.mxu0 0
  %1266 = vmatprep.subr.bf16.mxu0 0
  %1267 = vmatpush1.bf16.msra.mxu0 0
  %1268 = vmatprep.subr.bf16.mxu0 0
  %1269 = vmatpush1.bf16.msra.mxu0 0
  %1270 = vmatprep.subr.bf16.mxu0 0
  %1271 = vmatpush1.bf16.msra.mxu0 0
  %1272 = vmatprep.subr.bf16.mxu0 0
  %1273 = vmatpush1.bf16.msra.mxu0 0
  %1274 = vmatprep.subr.bf16.mxu0 0
  %1275 = vmatpush1.bf16.msra.mxu0 0
  %1276 = vmatprep.subr.bf16.mxu0 0
  %1277 = vmatpush1.bf16.msra.mxu0 0
  %1278 = vmatprep.subr.bf16.mxu0 0
  %1279 = vmatpush1.bf16.msra.mxu0 0
  %1280 = vmatprep.subr.bf16.mxu0 0
  %1281 = vmatpush1.bf16.msra.mxu0 0
  %1282 = vmatprep.subr.bf16.mxu0 0
  %1283 = vmatpush1.bf16.msra.mxu0 0
  %1284 = vmatprep.subr.bf16.mxu0 0
  %1285 = vmatpush1.bf16.msra.mxu0 0
  %1286 = vmatprep.subr.bf16.mxu0 0
  %1287 = vmatpush1.bf16.msra.mxu0 0
  %1288 = vmatprep.subr.bf16.mxu0 0
  %1289 = vmatpush1.bf16.msra.mxu0 0
  %1290 = vmatprep.subr.bf16.mxu0 0
  %1291 = vmatpush1.bf16.msra.mxu0 0
  %1292 = vmatprep.subr.bf16.mxu0 0
  %1293 = vmatpush1.bf16.msra.mxu0 0
  %1294 = vmatprep.mubr.bf16.mxu0 0
  %1295 = vmatmul.mubr.bf16.gmra.mrb[0].mxu0 %v1239
  %v1296 = vpop.f32.mrb[0].mxu0
  %v1297 = vadd.f32 0.0, %v1296
  %v1298 = vpop.f32.mrb[0].mxu0
  %v1299 = vadd.f32 0.0, %v1298
  %v1300 = vpop.f32.mrb[0].mxu0
  %v1301 = vadd.f32 0.0, %v1300
  %v1302 = vpop.f32.mrb[0].mxu0
  %v1303 = vadd.f32 0.0, %v1302
  %1304 = vmatprep.mubr.bf16.mxu0 0
  %1305 = vmatmul.mubr.bf16.gmra.mrb[0].mxu0 %v1242
  %v1306 = vpop.f32.mrb[0].mxu0
  %v1307 = vadd.f32 0.0, %v1306
  %v1308 = vpop.f32.mrb[0].mxu0
  %v1309 = vadd.f32 0.0, %v1308
  %v1310 = vpop.f32.mrb[0].mxu0
  %v1311 = vadd.f32 0.0, %v1310
  %v1312 = vpop.f32.mrb[0].mxu0
  %v1313 = vadd.f32 0.0, %v1312
  %1314 = vdwg.mxu0
  %1315 = vmatprep.subr.bf16.mxu0 %v1254
  %1316 = vmatpush1.bf16.msra.mxu0 %v1251
  %1317 = vmatprep.subr.bf16.mxu0 0
  %1318 = vmatpush1.bf16.msra.mxu0 0
  %1319 = vmatprep.subr.bf16.mxu0 0
  %1320 = vmatpush1.bf16.msra.mxu0 0
  %1321 = vmatprep.subr.bf16.mxu0 0
  %1322 = vmatpush1.bf16.msra.mxu0 0
  %1323 = vmatprep.subr.bf16.mxu0 0
  %1324 = vmatpush1.bf16.msra.mxu0 0
  %1325 = vmatprep.subr.bf16.mxu0 0
  %1326 = vmatpush1.bf16.msra.mxu0 0
  %1327 = vmatprep.subr.bf16.mxu0 0
  %1328 = vmatpush1.bf16.msra.mxu0 0
  %1329 = vmatprep.subr.bf16.mxu0 0
  %1330 = vmatpush1.bf16.msra.mxu0 0
  %1331 = vmatprep.subr.bf16.mxu0 0
  %1332 = vmatpush1.bf16.msra.mxu0 0
  %1333 = vmatprep.subr.bf16.mxu0 0
  %1334 = vmatpush1.bf16.msra.mxu0 0
  %1335 = vmatprep.subr.bf16.mxu0 0
  %1336 = vmatpush1.bf16.msra.mxu0 0
  %1337 = vmatprep.subr.bf16.mxu0 0
  %1338 = vmatpush1.bf16.msra.mxu0 0
  %1339 = vmatprep.subr.bf16.mxu0 0
  %1340 = vmatpush1.bf16.msra.mxu0 0
  %1341 = vmatprep.subr.bf16.mxu0 0
  %1342 = vmatpush1.bf16.msra.mxu0 0
  %1343 = vmatprep.subr.bf16.mxu0 0
  %1344 = vmatpush1.bf16.msra.mxu0 0
  %1345 = vmatprep.subr.bf16.mxu0 0
  %1346 = vmatpush1.bf16.msra.mxu0 0
  %1347 = vmatprep.mubr.bf16.mxu0 0
  %1348 = vmatmul.mubr.bf16.gmra.mrb[0].mxu0 %v1239
  %v1349 = vpop.f32.mrb[0].mxu0
  %v1350 = vadd.f32 0.0, %v1349
  %v1351 = vpop.f32.mrb[0].mxu0
  %v1352 = vadd.f32 0.0, %v1351
  %v1353 = vpop.f32.mrb[0].mxu0
  %v1354 = vadd.f32 0.0, %v1353
  %v1355 = vpop.f32.mrb[0].mxu0
  %v1356 = vadd.f32 0.0, %v1355
  %1357 = vmatprep.mubr.bf16.mxu0 0
  %1358 = vmatmul.mubr.bf16.gmra.mrb[0].mxu0 %v1242
  %v1359 = vpop.f32.mrb[0].mxu0
  %v1360 = vadd.f32 0.0, %v1359
  %v1361 = vpop.f32.mrb[0].mxu0
  %v1362 = vadd.f32 0.0, %v1361
  %v1363 = vpop.f32.mrb[0].mxu0
  %v1364 = vadd.f32 0.0, %v1363
  %v1365 = vpop.f32.mrb[0].mxu0
  %v1366 = vadd.f32 0.0, %v1365
  %1367 = vdwg.mxu0
  %1368 = vmatprep.subr.bf16.mxu0 %v1260
  %1369 = vmatpush1.bf16.msra.mxu0 %v1257
  %1370 = vmatprep.subr.bf16.mxu0 0
  %1371 = vmatpush1.bf16.msra.mxu0 0
  %1372 = vmatprep.subr.bf16.mxu0 0
  %1373 = vmatpush1.bf16.msra.mxu0 0
  %1374 = vmatprep.subr.bf16.mxu0 0
  %1375 = vmatpush1.bf16.msra.mxu0 0
  %1376 = vmatprep.subr.bf16.mxu0 0
  %1377 = vmatpush1.bf16.msra.mxu0 0
  %1378 = vmatprep.subr.bf16.mxu0 0
  %1379 = vmatpush1.bf16.msra.mxu0 0
  %1380 = vmatprep.subr.bf16.mxu0 0
  %1381 = vmatpush1.bf16.msra.mxu0 0
  %1382 = vmatprep.subr.bf16.mxu0 0
  %1383 = vmatpush1.bf16.msra.mxu0 0
  %1384 = vmatprep.subr.bf16.mxu0 0
  %1385 = vmatpush1.bf16.msra.mxu0 0
  %1386 = vmatprep.subr.bf16.mxu0 0
  %1387 = vmatpush1.bf16.msra.mxu0 0
  %1388 = vmatprep.subr.bf16.mxu0 0
  %1389 = vmatpush1.bf16.msra.mxu0 0
  %1390 = vmatprep.subr.bf16.mxu0 0
  %1391 = vmatpush1.bf16.msra.mxu0 0
  %1392 = vmatprep.subr.bf16.mxu0 0
  %1393 = vmatpush1.bf16.msra.mxu0 0
  %1394 = vmatprep.subr.bf16.mxu0 0
  %1395 = vmatpush1.bf16.msra.mxu0 0
  %1396 = vmatprep.subr.bf16.mxu0 0
  %1397 = vmatpush1.bf16.msra.mxu0 0
  %1398 = vmatprep.subr.bf16.mxu0 0
  %1399 = vmatpush1.bf16.msra.mxu0 0
  %1400 = vmatprep.mubr.bf16.mxu0 0
  %1401 = vmatmul.mubr.bf16.gmra.mrb[0].mxu0 %v1239
  %v1402 = vpop.f32.mrb[0].mxu0
  %v1403 = vadd.f32 0.0, %v1402
  %v1404 = vpop.f32.mrb[0].mxu0
  %v1405 = vadd.f32 0.0, %v1404
  %v1406 = vpop.f32.mrb[0].mxu0
  %v1407 = vadd.f32 0.0, %v1406
  %v1408 = vpop.f32.mrb[0].mxu0
  %v1409 = vadd.f32 0.0, %v1408
  %1410 = vmatprep.mubr.bf16.mxu0 0
  %1411 = vmatmul.mubr.bf16.gmra.mrb[0].mxu0 %v1242
  %v1412 = vpop.f32.mrb[0].mxu0
  %v1413 = vadd.f32 0.0, %v1412
  %v1414 = vpop.f32.mrb[0].mxu0
  %v1415 = vadd.f32 0.0, %v1414
  %v1416 = vpop.f32.mrb[0].mxu0
  %v1417 = vadd.f32 0.0, %v1416
  %v1418 = vpop.f32.mrb[0].mxu0
  %v1419 = vadd.f32 0.0, %v1418
  %1420 = vdwg.mxu0
  %v1421 = vadd.f32 %v1199, %v1297
  %v1422 = vadd.f32 %v1200, %v1299
  %v1423 = vadd.f32 %v1201, %v1350
  %v1424 = vadd.f32 %v1202, %v1352
  %v1425 = vadd.f32 %v1203, %v1403
  %v1426 = vadd.f32 %v1204, %v1405
  %v1427 = vadd.f32 %v1205, %v1301
  %v1428 = vadd.f32 %v1206, %v1303
  %v1429 = vadd.f32 %v1207, %v1354
  %v1430 = vadd.f32 %v1208, %v1356
  %v1431 = vadd.f32 %v1209, %v1407
  %v1432 = vadd.f32 %v1210, %v1409
  %v1433 = vadd.f32 %v1211, %v1307
  %v1434 = vadd.f32 %v1212, %v1309
  %v1435 = vadd.f32 %v1213, %v1360
  %v1436 = vadd.f32 %v1214, %v1362
  %v1437 = vadd.f32 %v1215, %v1413
  %v1438 = vadd.f32 %v1216, %v1415
  %v1439 = vadd.f32 %v1217, %v1311
  %v1440 = vadd.f32 %v1218, %v1313
  %v1441 = vadd.f32 %v1219, %v1364
  %v1442 = vadd.f32 %v1220, %v1366
  %v1443 = vadd.f32 %v1221, %v1417
  %v1444 = vadd.f32 %v1222, %v1419
  %1445 = vrot.lane.b32.xlu0 %v268, 127
  %v1446 = vpop.permute.xlu0 %1445
  %1447 = vrot.lane.b32.xlu0 %v269, 127
  %v1448 = vpop.permute.xlu0 %1447
  %1449 = vrot.lane.b32.xlu0 %v270, 127
  %v1450 = vpop.permute.xlu0 %1449
  %1451 = vrot.lane.b32.xlu0 %v271, 127
  %v1452 = vpop.permute.xlu0 %1451
  %1453 = vrot.lane.b32.xlu0 %v272, 127
  %v1454 = vpop.permute.xlu0 %1453
  %1455 = vrot.lane.b32.xlu0 %v273, 127
  %v1456 = vpop.permute.xlu0 %1455
  %vm1457 = vcmp.lt.s32.totalorder %v293, 127
  %v1458 = vsel %vm1457, %v1454, %v1456
  %v1459 = vsel %vm1457, %v1452, %v1454
  %v1460 = vsel %vm1457, %v1450, %v1452
  %v1461 = vsel %vm1457, %v1448, %v1450
  %v1462 = vsel %vm1457, %v1446, %v1448
  %v1463 = vsel %vm1457, %v1456, %v1446
  %s1464 = scalar_lea.vmem %s4, 80
  %v1465 = vld [vmem:[%s1464] sm:$0xf]
  %v1466 = vld [vmem:[%s1464 + $0x4] sm:$0xf]
  %v1467 = vld [vmem:[%s1464 + $0x8] sm:$0xf]
  %v1468 = vld [vmem:[%s1464 + $0xc] sm:$0xf]
  %v1469 = vpack.c.bf16 %v1462, %v1462
  %v1470 = vpack.c.bf16 %v1461, %v1461
  %v1471 = vpack.c.bf16 %v1460, %v1460
  %v1472 = vpack.c.bf16 %v1459, %v1459
  %v1473 = vpack.c.bf16 %v1458, %v1458
  %v1474 = vpack.c.bf16 %v1463, %v1463
  %v1479 = vunpack.c.l.b16 %v1465
  %v1480 = vunpack.c.l.b16 %v1466
  %v1481 = vunpack.c.l.b16 %v1467
  %v1482 = vunpack.c.l.b16 %v1468
  %v1483 = vpack.c.b16 %v1480, %v1479
  %v1484 = vpack.c.b16 %v1482, %v1481
  %v1486 = vsel %vm351, %v1483, 0
  %v1489 = vsel %vm351, %v1484, 0
  %v1492 = vsel %vm358, %v1469, 0
  %v1495 = vsel %vm358, %v1470, 0
  %v1498 = vsel %vm358, %v1471, 0
  %v1501 = vsel %vm358, %v1472, 0
  %v1504 = vsel %vm358, %v1473, 0
  %v1507 = vsel %vm358, %v1474, 0
  %1509 = vmatprep.subr.bf16.mxu0 %v1495
  %1510 = vmatpush1.bf16.msra.mxu0 %v1492
  %1511 = vmatprep.subr.bf16.mxu0 0
  %1512 = vmatpush1.bf16.msra.mxu0 0
  %1513 = vmatprep.subr.bf16.mxu0 0
  %1514 = vmatpush1.bf16.msra.mxu0 0
  %1515 = vmatprep.subr.bf16.mxu0 0
  %1516 = vmatpush1.bf16.msra.mxu0 0
  %1517 = vmatprep.subr.bf16.mxu0 0
  %1518 = vmatpush1.bf16.msra.mxu0 0
  %1519 = vmatprep.subr.bf16.mxu0 0
  %1520 = vmatpush1.bf16.msra.mxu0 0
  %1521 = vmatprep.subr.bf16.mxu0 0
  %1522 = vmatpush1.bf16.msra.mxu0 0
  %1523 = vmatprep.subr.bf16.mxu0 0
  %1524 = vmatpush1.bf16.msra.mxu0 0
  %1525 = vmatprep.subr.bf16.mxu0 0
  %1526 = vmatpush1.bf16.msra.mxu0 0
  %1527 = vmatprep.subr.bf16.mxu0 0
  %1528 = vmatpush1.bf16.msra.mxu0 0
  %1529 = vmatprep.subr.bf16.mxu0 0
  %1530 = vmatpush1.bf16.msra.mxu0 0
  %1531 = vmatprep.subr.bf16.mxu0 0
  %1532 = vmatpush1.bf16.msra.mxu0 0
  %1533 = vmatprep.subr.bf16.mxu0 0
  %1534 = vmatpush1.bf16.msra.mxu0 0
  %1535 = vmatprep.subr.bf16.mxu0 0
  %1536 = vmatpush1.bf16.msra.mxu0 0
  %1537 = vmatprep.subr.bf16.mxu0 0
  %1538 = vmatpush1.bf16.msra.mxu0 0
  %1539 = vmatprep.subr.bf16.mxu0 0
  %1540 = vmatpush1.bf16.msra.mxu0 0
  %1541 = vmatprep.mubr.bf16.mxu0 0
  %1542 = vmatmul.mubr.bf16.gmra.mrb[0].mxu0 %v1486
  %v1543 = vpop.f32.mrb[0].mxu0
  %v1544 = vadd.f32 0.0, %v1543
  %v1545 = vpop.f32.mrb[0].mxu0
  %v1546 = vadd.f32 0.0, %v1545
  %v1547 = vpop.f32.mrb[0].mxu0
  %v1548 = vadd.f32 0.0, %v1547
  %v1549 = vpop.f32.mrb[0].mxu0
  %v1550 = vadd.f32 0.0, %v1549
  %1551 = vmatprep.mubr.bf16.mxu0 0
  %1552 = vmatmul.mubr.bf16.gmra.mrb[0].mxu0 %v1489
  %v1553 = vpop.f32.mrb[0].mxu0
  %v1554 = vadd.f32 0.0, %v1553
  %v1555 = vpop.f32.mrb[0].mxu0
  %v1556 = vadd.f32 0.0, %v1555
  %v1557 = vpop.f32.mrb[0].mxu0
  %v1558 = vadd.f32 0.0, %v1557
  %v1559 = vpop.f32.mrb[0].mxu0
  %v1560 = vadd.f32 0.0, %v1559
  %1561 = vdwg.mxu0
  %1562 = vmatprep.subr.bf16.mxu0 %v1501
  %1563 = vmatpush1.bf16.msra.mxu0 %v1498
  %1564 = vmatprep.subr.bf16.mxu0 0
  %1565 = vmatpush1.bf16.msra.mxu0 0
  %1566 = vmatprep.subr.bf16.mxu0 0
  %1567 = vmatpush1.bf16.msra.mxu0 0
  %1568 = vmatprep.subr.bf16.mxu0 0
  %1569 = vmatpush1.bf16.msra.mxu0 0
  %1570 = vmatprep.subr.bf16.mxu0 0
  %1571 = vmatpush1.bf16.msra.mxu0 0
  %1572 = vmatprep.subr.bf16.mxu0 0
  %1573 = vmatpush1.bf16.msra.mxu0 0
  %1574 = vmatprep.subr.bf16.mxu0 0
  %1575 = vmatpush1.bf16.msra.mxu0 0
  %1576 = vmatprep.subr.bf16.mxu0 0
  %1577 = vmatpush1.bf16.msra.mxu0 0
  %1578 = vmatprep.subr.bf16.mxu0 0
  %1579 = vmatpush1.bf16.msra.mxu0 0
  %1580 = vmatprep.subr.bf16.mxu0 0
  %1581 = vmatpush1.bf16.msra.mxu0 0
  %1582 = vmatprep.subr.bf16.mxu0 0
  %1583 = vmatpush1.bf16.msra.mxu0 0
  %1584 = vmatprep.subr.bf16.mxu0 0
  %1585 = vmatpush1.bf16.msra.mxu0 0
  %1586 = vmatprep.subr.bf16.mxu0 0
  %1587 = vmatpush1.bf16.msra.mxu0 0
  %1588 = vmatprep.subr.bf16.mxu0 0
  %1589 = vmatpush1.bf16.msra.mxu0 0
  %1590 = vmatprep.subr.bf16.mxu0 0
  %1591 = vmatpush1.bf16.msra.mxu0 0
  %1592 = vmatprep.subr.bf16.mxu0 0
  %1593 = vmatpush1.bf16.msra.mxu0 0
  %1594 = vmatprep.mubr.bf16.mxu0 0
  %1595 = vmatmul.mubr.bf16.gmra.mrb[0].mxu0 %v1486
  %v1596 = vpop.f32.mrb[0].mxu0
  %v1597 = vadd.f32 0.0, %v1596
  %v1598 = vpop.f32.mrb[0].mxu0
  %v1599 = vadd.f32 0.0, %v1598
  %v1600 = vpop.f32.mrb[0].mxu0
  %v1601 = vadd.f32 0.0, %v1600
  %v1602 = vpop.f32.mrb[0].mxu0
  %v1603 = vadd.f32 0.0, %v1602
  %1604 = vmatprep.mubr.bf16.mxu0 0
  %1605 = vmatmul.mubr.bf16.gmra.mrb[0].mxu0 %v1489
  %v1606 = vpop.f32.mrb[0].mxu0
  %v1607 = vadd.f32 0.0, %v1606
  %v1608 = vpop.f32.mrb[0].mxu0
  %v1609 = vadd.f32 0.0, %v1608
  %v1610 = vpop.f32.mrb[0].mxu0
  %v1611 = vadd.f32 0.0, %v1610
  %v1612 = vpop.f32.mrb[0].mxu0
  %v1613 = vadd.f32 0.0, %v1612
  %1614 = vdwg.mxu0
  %1615 = vmatprep.subr.bf16.mxu0 %v1507
  %1616 = vmatpush1.bf16.msra.mxu0 %v1504
  %1617 = vmatprep.subr.bf16.mxu0 0
  %1618 = vmatpush1.bf16.msra.mxu0 0
  %1619 = vmatprep.subr.bf16.mxu0 0
  %1620 = vmatpush1.bf16.msra.mxu0 0
  %1621 = vmatprep.subr.bf16.mxu0 0
  %1622 = vmatpush1.bf16.msra.mxu0 0
  %1623 = vmatprep.subr.bf16.mxu0 0
  %1624 = vmatpush1.bf16.msra.mxu0 0
  %1625 = vmatprep.subr.bf16.mxu0 0
  %1626 = vmatpush1.bf16.msra.mxu0 0
  %1627 = vmatprep.subr.bf16.mxu0 0
  %1628 = vmatpush1.bf16.msra.mxu0 0
  %1629 = vmatprep.subr.bf16.mxu0 0
  %1630 = vmatpush1.bf16.msra.mxu0 0
  %1631 = vmatprep.subr.bf16.mxu0 0
  %1632 = vmatpush1.bf16.msra.mxu0 0
  %1633 = vmatprep.subr.bf16.mxu0 0
  %1634 = vmatpush1.bf16.msra.mxu0 0
  %1635 = vmatprep.subr.bf16.mxu0 0
  %1636 = vmatpush1.bf16.msra.mxu0 0
  %1637 = vmatprep.subr.bf16.mxu0 0
  %1638 = vmatpush1.bf16.msra.mxu0 0
  %1639 = vmatprep.subr.bf16.mxu0 0
  %1640 = vmatpush1.bf16.msra.mxu0 0
  %1641 = vmatprep.subr.bf16.mxu0 0
  %1642 = vmatpush1.bf16.msra.mxu0 0
  %1643 = vmatprep.subr.bf16.mxu0 0
  %1644 = vmatpush1.bf16.msra.mxu0 0
  %1645 = vmatprep.subr.bf16.mxu0 0
  %1646 = vmatpush1.bf16.msra.mxu0 0
  %1647 = vmatprep.mubr.bf16.mxu0 0
  %1648 = vmatmul.mubr.bf16.gmra.mrb[0].mxu0 %v1486
  %v1649 = vpop.f32.mrb[0].mxu0
  %v1650 = vadd.f32 0.0, %v1649
  %v1651 = vpop.f32.mrb[0].mxu0
  %v1652 = vadd.f32 0.0, %v1651
  %v1653 = vpop.f32.mrb[0].mxu0
  %v1654 = vadd.f32 0.0, %v1653
  %v1655 = vpop.f32.mrb[0].mxu0
  %v1656 = vadd.f32 0.0, %v1655
  %1657 = vmatprep.mubr.bf16.mxu0 0
  %1658 = vmatmul.mubr.bf16.gmra.mrb[0].mxu0 %v1489
  %v1659 = vpop.f32.mrb[0].mxu0
  %v1660 = vadd.f32 0.0, %v1659
  %v1661 = vpop.f32.mrb[0].mxu0
  %v1662 = vadd.f32 0.0, %v1661
  %v1663 = vpop.f32.mrb[0].mxu0
  %v1664 = vadd.f32 0.0, %v1663
  %v1665 = vpop.f32.mrb[0].mxu0
  %v1666 = vadd.f32 0.0, %v1665
  %1667 = vdwg.mxu0
  %v1668 = vadd.f32 %v1421, %v1544
  %v1669 = vadd.f32 %v1422, %v1546
  %v1670 = vadd.f32 %v1423, %v1597
  %v1671 = vadd.f32 %v1424, %v1599
  %v1672 = vadd.f32 %v1425, %v1650
  %v1673 = vadd.f32 %v1426, %v1652
  %v1674 = vadd.f32 %v1427, %v1548
  %v1675 = vadd.f32 %v1428, %v1550
  %v1676 = vadd.f32 %v1429, %v1601
  %v1677 = vadd.f32 %v1430, %v1603
  %v1678 = vadd.f32 %v1431, %v1654
  %v1679 = vadd.f32 %v1432, %v1656
  %v1680 = vadd.f32 %v1433, %v1554
  %v1681 = vadd.f32 %v1434, %v1556
  %v1682 = vadd.f32 %v1435, %v1607
  %v1683 = vadd.f32 %v1436, %v1609
  %v1684 = vadd.f32 %v1437, %v1660
  %v1685 = vadd.f32 %v1438, %v1662
  %v1686 = vadd.f32 %v1439, %v1558
  %v1687 = vadd.f32 %v1440, %v1560
  %v1688 = vadd.f32 %v1441, %v1611
  %v1689 = vadd.f32 %v1442, %v1613
  %v1690 = vadd.f32 %v1443, %v1664
  %v1691 = vadd.f32 %v1444, %v1666
  %1692 = vrot.lane.b32.xlu0 %v268, 111
  %v1693 = vpop.permute.xlu0 %1692
  %1694 = vrot.lane.b32.xlu0 %v269, 111
  %v1695 = vpop.permute.xlu0 %1694
  %1696 = vrot.lane.b32.xlu0 %v270, 111
  %v1697 = vpop.permute.xlu0 %1696
  %1698 = vrot.lane.b32.xlu0 %v271, 111
  %v1699 = vpop.permute.xlu0 %1698
  %1700 = vrot.lane.b32.xlu0 %v272, 111
  %v1701 = vpop.permute.xlu0 %1700
  %1702 = vrot.lane.b32.xlu0 %v273, 111
  %v1703 = vpop.permute.xlu0 %1702
  %vm1704 = vcmp.lt.s32.totalorder %v293, 111
  %v1705 = vsel %vm1704, %v1701, %v1703
  %v1706 = vsel %vm1704, %v1699, %v1701
  %v1707 = vsel %vm1704, %v1697, %v1699
  %v1708 = vsel %vm1704, %v1695, %v1697
  %v1709 = vsel %vm1704, %v1693, %v1695
  %v1710 = vsel %vm1704, %v1703, %v1693
  %s1711 = scalar_lea.vmem %s4, 96
  %v1712 = vld [vmem:[%s1711] sm:$0xf]
  %v1713 = vld [vmem:[%s1711 + $0x4] sm:$0xf]
  %v1714 = vld [vmem:[%s1711 + $0x8] sm:$0xf]
  %v1715 = vld [vmem:[%s1711 + $0xc] sm:$0xf]
  %v1716 = vpack.c.bf16 %v1709, %v1709
  %v1717 = vpack.c.bf16 %v1708, %v1708
  %v1718 = vpack.c.bf16 %v1707, %v1707
  %v1719 = vpack.c.bf16 %v1706, %v1706
  %v1720 = vpack.c.bf16 %v1705, %v1705
  %v1721 = vpack.c.bf16 %v1710, %v1710
  %v1726 = vunpack.c.l.b16 %v1712
  %v1727 = vunpack.c.l.b16 %v1713
  %v1728 = vunpack.c.l.b16 %v1714
  %v1729 = vunpack.c.l.b16 %v1715
  %v1730 = vpack.c.b16 %v1727, %v1726
  %v1731 = vpack.c.b16 %v1729, %v1728
  %v1733 = vsel %vm351, %v1730, 0
  %v1736 = vsel %vm351, %v1731, 0
  %v1739 = vsel %vm358, %v1716, 0
  %v1742 = vsel %vm358, %v1717, 0
  %v1745 = vsel %vm358, %v1718, 0
  %v1748 = vsel %vm358, %v1719, 0
  %v1751 = vsel %vm358, %v1720, 0
  %v1754 = vsel %vm358, %v1721, 0
  %1756 = vmatprep.subr.bf16.mxu0 %v1742
  %1757 = vmatpush1.bf16.msra.mxu0 %v1739
  %1758 = vmatprep.subr.bf16.mxu0 0
  %1759 = vmatpush1.bf16.msra.mxu0 0
  %1760 = vmatprep.subr.bf16.mxu0 0
  %1761 = vmatpush1.bf16.msra.mxu0 0
  %1762 = vmatprep.subr.bf16.mxu0 0
  %1763 = vmatpush1.bf16.msra.mxu0 0
  %1764 = vmatprep.subr.bf16.mxu0 0
  %1765 = vmatpush1.bf16.msra.mxu0 0
  %1766 = vmatprep.subr.bf16.mxu0 0
  %1767 = vmatpush1.bf16.msra.mxu0 0
  %1768 = vmatprep.subr.bf16.mxu0 0
  %1769 = vmatpush1.bf16.msra.mxu0 0
  %1770 = vmatprep.subr.bf16.mxu0 0
  %1771 = vmatpush1.bf16.msra.mxu0 0
  %1772 = vmatprep.subr.bf16.mxu0 0
  %1773 = vmatpush1.bf16.msra.mxu0 0
  %1774 = vmatprep.subr.bf16.mxu0 0
  %1775 = vmatpush1.bf16.msra.mxu0 0
  %1776 = vmatprep.subr.bf16.mxu0 0
  %1777 = vmatpush1.bf16.msra.mxu0 0
  %1778 = vmatprep.subr.bf16.mxu0 0
  %1779 = vmatpush1.bf16.msra.mxu0 0
  %1780 = vmatprep.subr.bf16.mxu0 0
  %1781 = vmatpush1.bf16.msra.mxu0 0
  %1782 = vmatprep.subr.bf16.mxu0 0
  %1783 = vmatpush1.bf16.msra.mxu0 0
  %1784 = vmatprep.subr.bf16.mxu0 0
  %1785 = vmatpush1.bf16.msra.mxu0 0
  %1786 = vmatprep.subr.bf16.mxu0 0
  %1787 = vmatpush1.bf16.msra.mxu0 0
  %1788 = vmatprep.mubr.bf16.mxu0 0
  %1789 = vmatmul.mubr.bf16.gmra.mrb[0].mxu0 %v1733
  %v1790 = vpop.f32.mrb[0].mxu0
  %v1791 = vadd.f32 0.0, %v1790
  %v1792 = vpop.f32.mrb[0].mxu0
  %v1793 = vadd.f32 0.0, %v1792
  %v1794 = vpop.f32.mrb[0].mxu0
  %v1795 = vadd.f32 0.0, %v1794
  %v1796 = vpop.f32.mrb[0].mxu0
  %v1797 = vadd.f32 0.0, %v1796
  %1798 = vmatprep.mubr.bf16.mxu0 0
  %1799 = vmatmul.mubr.bf16.gmra.mrb[0].mxu0 %v1736
  %v1800 = vpop.f32.mrb[0].mxu0
  %v1801 = vadd.f32 0.0, %v1800
  %v1802 = vpop.f32.mrb[0].mxu0
  %v1803 = vadd.f32 0.0, %v1802
  %v1804 = vpop.f32.mrb[0].mxu0
  %v1805 = vadd.f32 0.0, %v1804
  %v1806 = vpop.f32.mrb[0].mxu0
  %v1807 = vadd.f32 0.0, %v1806
  %1808 = vdwg.mxu0
  %1809 = vmatprep.subr.bf16.mxu0 %v1748
  %1810 = vmatpush1.bf16.msra.mxu0 %v1745
  %1811 = vmatprep.subr.bf16.mxu0 0
  %1812 = vmatpush1.bf16.msra.mxu0 0
  %1813 = vmatprep.subr.bf16.mxu0 0
  %1814 = vmatpush1.bf16.msra.mxu0 0
  %1815 = vmatprep.subr.bf16.mxu0 0
  %1816 = vmatpush1.bf16.msra.mxu0 0
  %1817 = vmatprep.subr.bf16.mxu0 0
  %1818 = vmatpush1.bf16.msra.mxu0 0
  %1819 = vmatprep.subr.bf16.mxu0 0
  %1820 = vmatpush1.bf16.msra.mxu0 0
  %1821 = vmatprep.subr.bf16.mxu0 0
  %1822 = vmatpush1.bf16.msra.mxu0 0
  %1823 = vmatprep.subr.bf16.mxu0 0
  %1824 = vmatpush1.bf16.msra.mxu0 0
  %1825 = vmatprep.subr.bf16.mxu0 0
  %1826 = vmatpush1.bf16.msra.mxu0 0
  %1827 = vmatprep.subr.bf16.mxu0 0
  %1828 = vmatpush1.bf16.msra.mxu0 0
  %1829 = vmatprep.subr.bf16.mxu0 0
  %1830 = vmatpush1.bf16.msra.mxu0 0
  %1831 = vmatprep.subr.bf16.mxu0 0
  %1832 = vmatpush1.bf16.msra.mxu0 0
  %1833 = vmatprep.subr.bf16.mxu0 0
  %1834 = vmatpush1.bf16.msra.mxu0 0
  %1835 = vmatprep.subr.bf16.mxu0 0
  %1836 = vmatpush1.bf16.msra.mxu0 0
  %1837 = vmatprep.subr.bf16.mxu0 0
  %1838 = vmatpush1.bf16.msra.mxu0 0
  %1839 = vmatprep.subr.bf16.mxu0 0
  %1840 = vmatpush1.bf16.msra.mxu0 0
  %1841 = vmatprep.mubr.bf16.mxu0 0
  %1842 = vmatmul.mubr.bf16.gmra.mrb[0].mxu0 %v1733
  %v1843 = vpop.f32.mrb[0].mxu0
  %v1844 = vadd.f32 0.0, %v1843
  %v1845 = vpop.f32.mrb[0].mxu0
  %v1846 = vadd.f32 0.0, %v1845
  %v1847 = vpop.f32.mrb[0].mxu0
  %v1848 = vadd.f32 0.0, %v1847
  %v1849 = vpop.f32.mrb[0].mxu0
  %v1850 = vadd.f32 0.0, %v1849
  %1851 = vmatprep.mubr.bf16.mxu0 0
  %1852 = vmatmul.mubr.bf16.gmra.mrb[0].mxu0 %v1736
  %v1853 = vpop.f32.mrb[0].mxu0
  %v1854 = vadd.f32 0.0, %v1853
  %v1855 = vpop.f32.mrb[0].mxu0
  %v1856 = vadd.f32 0.0, %v1855
  %v1857 = vpop.f32.mrb[0].mxu0
  %v1858 = vadd.f32 0.0, %v1857
  %v1859 = vpop.f32.mrb[0].mxu0
  %v1860 = vadd.f32 0.0, %v1859
  %1861 = vdwg.mxu0
  %1862 = vmatprep.subr.bf16.mxu0 %v1754
  %1863 = vmatpush1.bf16.msra.mxu0 %v1751
  %1864 = vmatprep.subr.bf16.mxu0 0
  %1865 = vmatpush1.bf16.msra.mxu0 0
  %1866 = vmatprep.subr.bf16.mxu0 0
  %1867 = vmatpush1.bf16.msra.mxu0 0
  %1868 = vmatprep.subr.bf16.mxu0 0
  %1869 = vmatpush1.bf16.msra.mxu0 0
  %1870 = vmatprep.subr.bf16.mxu0 0
  %1871 = vmatpush1.bf16.msra.mxu0 0
  %1872 = vmatprep.subr.bf16.mxu0 0
  %1873 = vmatpush1.bf16.msra.mxu0 0
  %1874 = vmatprep.subr.bf16.mxu0 0
  %1875 = vmatpush1.bf16.msra.mxu0 0
  %1876 = vmatprep.subr.bf16.mxu0 0
  %1877 = vmatpush1.bf16.msra.mxu0 0
  %1878 = vmatprep.subr.bf16.mxu0 0
  %1879 = vmatpush1.bf16.msra.mxu0 0
  %1880 = vmatprep.subr.bf16.mxu0 0
  %1881 = vmatpush1.bf16.msra.mxu0 0
  %1882 = vmatprep.subr.bf16.mxu0 0
  %1883 = vmatpush1.bf16.msra.mxu0 0
  %1884 = vmatprep.subr.bf16.mxu0 0
  %1885 = vmatpush1.bf16.msra.mxu0 0
  %1886 = vmatprep.subr.bf16.mxu0 0
  %1887 = vmatpush1.bf16.msra.mxu0 0
  %1888 = vmatprep.subr.bf16.mxu0 0
  %1889 = vmatpush1.bf16.msra.mxu0 0
  %1890 = vmatprep.subr.bf16.mxu0 0
  %1891 = vmatpush1.bf16.msra.mxu0 0
  %1892 = vmatprep.subr.bf16.mxu0 0
  %1893 = vmatpush1.bf16.msra.mxu0 0
  %1894 = vmatprep.mubr.bf16.mxu0 0
  %1895 = vmatmul.mubr.bf16.gmra.mrb[0].mxu0 %v1733
  %v1896 = vpop.f32.mrb[0].mxu0
  %v1897 = vadd.f32 0.0, %v1896
  %v1898 = vpop.f32.mrb[0].mxu0
  %v1899 = vadd.f32 0.0, %v1898
  %v1900 = vpop.f32.mrb[0].mxu0
  %v1901 = vadd.f32 0.0, %v1900
  %v1902 = vpop.f32.mrb[0].mxu0
  %v1903 = vadd.f32 0.0, %v1902
  %1904 = vmatprep.mubr.bf16.mxu0 0
  %1905 = vmatmul.mubr.bf16.gmra.mrb[0].mxu0 %v1736
  %v1906 = vpop.f32.mrb[0].mxu0
  %v1907 = vadd.f32 0.0, %v1906
  %v1908 = vpop.f32.mrb[0].mxu0
  %v1909 = vadd.f32 0.0, %v1908
  %v1910 = vpop.f32.mrb[0].mxu0
  %v1911 = vadd.f32 0.0, %v1910
  %v1912 = vpop.f32.mrb[0].mxu0
  %v1913 = vadd.f32 0.0, %v1912
  %1914 = vdwg.mxu0
  %v1915 = vadd.f32 %v1668, %v1791
  %v1916 = vadd.f32 %v1669, %v1793
  %v1917 = vadd.f32 %v1670, %v1844
  %v1918 = vadd.f32 %v1671, %v1846
  %v1919 = vadd.f32 %v1672, %v1897
  %v1920 = vadd.f32 %v1673, %v1899
  %v1921 = vadd.f32 %v1674, %v1795
  %v1922 = vadd.f32 %v1675, %v1797
  %v1923 = vadd.f32 %v1676, %v1848
  %v1924 = vadd.f32 %v1677, %v1850
  %v1925 = vadd.f32 %v1678, %v1901
  %v1926 = vadd.f32 %v1679, %v1903
  %v1927 = vadd.f32 %v1680, %v1801
  %v1928 = vadd.f32 %v1681, %v1803
  %v1929 = vadd.f32 %v1682, %v1854
  %v1930 = vadd.f32 %v1683, %v1856
  %v1931 = vadd.f32 %v1684, %v1907
  %v1932 = vadd.f32 %v1685, %v1909
  %v1933 = vadd.f32 %v1686, %v1805
  %v1934 = vadd.f32 %v1687, %v1807
  %v1935 = vadd.f32 %v1688, %v1858
  %v1936 = vadd.f32 %v1689, %v1860
  %v1937 = vadd.f32 %v1690, %v1911
  %v1938 = vadd.f32 %v1691, %v1913
  %1939 = vrot.lane.b32.xlu0 %v268, 110
  %v1940 = vpop.permute.xlu0 %1939
  %1941 = vrot.lane.b32.xlu0 %v269, 110
  %v1942 = vpop.permute.xlu0 %1941
  %1943 = vrot.lane.b32.xlu0 %v270, 110
  %v1944 = vpop.permute.xlu0 %1943
  %1945 = vrot.lane.b32.xlu0 %v271, 110
  %v1946 = vpop.permute.xlu0 %1945
  %1947 = vrot.lane.b32.xlu0 %v272, 110
  %v1948 = vpop.permute.xlu0 %1947
  %1949 = vrot.lane.b32.xlu0 %v273, 110
  %v1950 = vpop.permute.xlu0 %1949
  %vm1951 = vcmp.lt.s32.totalorder %v293, 110
  %v1952 = vsel %vm1951, %v1948, %v1950
  %v1953 = vsel %vm1951, %v1946, %v1948
  %v1954 = vsel %vm1951, %v1944, %v1946
  %v1955 = vsel %vm1951, %v1942, %v1944
  %v1956 = vsel %vm1951, %v1940, %v1942
  %v1957 = vsel %vm1951, %v1950, %v1940
  %s1958 = scalar_lea.vmem %s4, 112
  %v1959 = vld [vmem:[%s1958] sm:$0xf]
  %v1960 = vld [vmem:[%s1958 + $0x4] sm:$0xf]
  %v1961 = vld [vmem:[%s1958 + $0x8] sm:$0xf]
  %v1962 = vld [vmem:[%s1958 + $0xc] sm:$0xf]
  %v1963 = vpack.c.bf16 %v1956, %v1956
  %v1964 = vpack.c.bf16 %v1955, %v1955
  %v1965 = vpack.c.bf16 %v1954, %v1954
  %v1966 = vpack.c.bf16 %v1953, %v1953
  %v1967 = vpack.c.bf16 %v1952, %v1952
  %v1968 = vpack.c.bf16 %v1957, %v1957
  %v1973 = vunpack.c.l.b16 %v1959
  %v1974 = vunpack.c.l.b16 %v1960
  %v1975 = vunpack.c.l.b16 %v1961
  %v1976 = vunpack.c.l.b16 %v1962
  %v1977 = vpack.c.b16 %v1974, %v1973
  %v1978 = vpack.c.b16 %v1976, %v1975
  %v1980 = vsel %vm351, %v1977, 0
  %v1983 = vsel %vm351, %v1978, 0
  %v1986 = vsel %vm358, %v1963, 0
  %v1989 = vsel %vm358, %v1964, 0
  %v1992 = vsel %vm358, %v1965, 0
  %v1995 = vsel %vm358, %v1966, 0
  %v1998 = vsel %vm358, %v1967, 0
  %v2001 = vsel %vm358, %v1968, 0
  %2003 = vmatprep.subr.bf16.mxu0 %v1989
  %2004 = vmatpush1.bf16.msra.mxu0 %v1986
  %2005 = vmatprep.subr.bf16.mxu0 0
  %2006 = vmatpush1.bf16.msra.mxu0 0
  %2007 = vmatprep.subr.bf16.mxu0 0
  %2008 = vmatpush1.bf16.msra.mxu0 0
  %2009 = vmatprep.subr.bf16.mxu0 0
  %2010 = vmatpush1.bf16.msra.mxu0 0
  %2011 = vmatprep.subr.bf16.mxu0 0
  %2012 = vmatpush1.bf16.msra.mxu0 0
  %2013 = vmatprep.subr.bf16.mxu0 0
  %2014 = vmatpush1.bf16.msra.mxu0 0
  %2015 = vmatprep.subr.bf16.mxu0 0
  %2016 = vmatpush1.bf16.msra.mxu0 0
  %2017 = vmatprep.subr.bf16.mxu0 0
  %2018 = vmatpush1.bf16.msra.mxu0 0
  %2019 = vmatprep.subr.bf16.mxu0 0
  %2020 = vmatpush1.bf16.msra.mxu0 0
  %2021 = vmatprep.subr.bf16.mxu0 0
  %2022 = vmatpush1.bf16.msra.mxu0 0
  %2023 = vmatprep.subr.bf16.mxu0 0
  %2024 = vmatpush1.bf16.msra.mxu0 0
  %2025 = vmatprep.subr.bf16.mxu0 0
  %2026 = vmatpush1.bf16.msra.mxu0 0
  %2027 = vmatprep.subr.bf16.mxu0 0
  %2028 = vmatpush1.bf16.msra.mxu0 0
  %2029 = vmatprep.subr.bf16.mxu0 0
  %2030 = vmatpush1.bf16.msra.mxu0 0
  %2031 = vmatprep.subr.bf16.mxu0 0
  %2032 = vmatpush1.bf16.msra.mxu0 0
  %2033 = vmatprep.subr.bf16.mxu0 0
  %2034 = vmatpush1.bf16.msra.mxu0 0
  %2035 = vmatprep.mubr.bf16.mxu0 0
  %2036 = vmatmul.mubr.bf16.gmra.mrb[0].mxu0 %v1980
  %v2037 = vpop.f32.mrb[0].mxu0
  %v2038 = vadd.f32 0.0, %v2037
  %v2039 = vpop.f32.mrb[0].mxu0
  %v2040 = vadd.f32 0.0, %v2039
  %v2041 = vpop.f32.mrb[0].mxu0
  %v2042 = vadd.f32 0.0, %v2041
  %v2043 = vpop.f32.mrb[0].mxu0
  %v2044 = vadd.f32 0.0, %v2043
  %2045 = vmatprep.mubr.bf16.mxu0 0
  %2046 = vmatmul.mubr.bf16.gmra.mrb[0].mxu0 %v1983
  %v2047 = vpop.f32.mrb[0].mxu0
  %v2048 = vadd.f32 0.0, %v2047
  %v2049 = vpop.f32.mrb[0].mxu0
  %v2050 = vadd.f32 0.0, %v2049
  %v2051 = vpop.f32.mrb[0].mxu0
  %v2052 = vadd.f32 0.0, %v2051
  %v2053 = vpop.f32.mrb[0].mxu0
  %v2054 = vadd.f32 0.0, %v2053
  %2055 = vdwg.mxu0
  %2056 = vmatprep.subr.bf16.mxu0 %v1995
  %2057 = vmatpush1.bf16.msra.mxu0 %v1992
  %2058 = vmatprep.subr.bf16.mxu0 0
  %2059 = vmatpush1.bf16.msra.mxu0 0
  %2060 = vmatprep.subr.bf16.mxu0 0
  %2061 = vmatpush1.bf16.msra.mxu0 0
  %2062 = vmatprep.subr.bf16.mxu0 0
  %2063 = vmatpush1.bf16.msra.mxu0 0
  %2064 = vmatprep.subr.bf16.mxu0 0
  %2065 = vmatpush1.bf16.msra.mxu0 0
  %2066 = vmatprep.subr.bf16.mxu0 0
  %2067 = vmatpush1.bf16.msra.mxu0 0
  %2068 = vmatprep.subr.bf16.mxu0 0
  %2069 = vmatpush1.bf16.msra.mxu0 0
  %2070 = vmatprep.subr.bf16.mxu0 0
  %2071 = vmatpush1.bf16.msra.mxu0 0
  %2072 = vmatprep.subr.bf16.mxu0 0
  %2073 = vmatpush1.bf16.msra.mxu0 0
  %2074 = vmatprep.subr.bf16.mxu0 0
  %2075 = vmatpush1.bf16.msra.mxu0 0
  %2076 = vmatprep.subr.bf16.mxu0 0
  %2077 = vmatpush1.bf16.msra.mxu0 0
  %2078 = vmatprep.subr.bf16.mxu0 0
  %2079 = vmatpush1.bf16.msra.mxu0 0
  %2080 = vmatprep.subr.bf16.mxu0 0
  %2081 = vmatpush1.bf16.msra.mxu0 0
  %2082 = vmatprep.subr.bf16.mxu0 0
  %2083 = vmatpush1.bf16.msra.mxu0 0
  %2084 = vmatprep.subr.bf16.mxu0 0
  %2085 = vmatpush1.bf16.msra.mxu0 0
  %2086 = vmatprep.subr.bf16.mxu0 0
  %2087 = vmatpush1.bf16.msra.mxu0 0
  %2088 = vmatprep.mubr.bf16.mxu0 0
  %2089 = vmatmul.mubr.bf16.gmra.mrb[0].mxu0 %v1980
  %v2090 = vpop.f32.mrb[0].mxu0
  %v2091 = vadd.f32 0.0, %v2090
  %v2092 = vpop.f32.mrb[0].mxu0
  %v2093 = vadd.f32 0.0, %v2092
  %v2094 = vpop.f32.mrb[0].mxu0
  %v2095 = vadd.f32 0.0, %v2094
  %v2096 = vpop.f32.mrb[0].mxu0
  %v2097 = vadd.f32 0.0, %v2096
  %2098 = vmatprep.mubr.bf16.mxu0 0
  %2099 = vmatmul.mubr.bf16.gmra.mrb[0].mxu0 %v1983
  %v2100 = vpop.f32.mrb[0].mxu0
  %v2101 = vadd.f32 0.0, %v2100
  %v2102 = vpop.f32.mrb[0].mxu0
  %v2103 = vadd.f32 0.0, %v2102
  %v2104 = vpop.f32.mrb[0].mxu0
  %v2105 = vadd.f32 0.0, %v2104
  %v2106 = vpop.f32.mrb[0].mxu0
  %v2107 = vadd.f32 0.0, %v2106
  %2108 = vdwg.mxu0
  %2109 = vmatprep.subr.bf16.mxu0 %v2001
  %2110 = vmatpush1.bf16.msra.mxu0 %v1998
  %2111 = vmatprep.subr.bf16.mxu0 0
  %2112 = vmatpush1.bf16.msra.mxu0 0
  %2113 = vmatprep.subr.bf16.mxu0 0
  %2114 = vmatpush1.bf16.msra.mxu0 0
  %2115 = vmatprep.subr.bf16.mxu0 0
  %2116 = vmatpush1.bf16.msra.mxu0 0
  %2117 = vmatprep.subr.bf16.mxu0 0
  %2118 = vmatpush1.bf16.msra.mxu0 0
  %2119 = vmatprep.subr.bf16.mxu0 0
  %2120 = vmatpush1.bf16.msra.mxu0 0
  %2121 = vmatprep.subr.bf16.mxu0 0
  %2122 = vmatpush1.bf16.msra.mxu0 0
  %2123 = vmatprep.subr.bf16.mxu0 0
  %2124 = vmatpush1.bf16.msra.mxu0 0
  %2125 = vmatprep.subr.bf16.mxu0 0
  %2126 = vmatpush1.bf16.msra.mxu0 0
  %2127 = vmatprep.subr.bf16.mxu0 0
  %2128 = vmatpush1.bf16.msra.mxu0 0
  %2129 = vmatprep.subr.bf16.mxu0 0
  %2130 = vmatpush1.bf16.msra.mxu0 0
  %2131 = vmatprep.subr.bf16.mxu0 0
  %2132 = vmatpush1.bf16.msra.mxu0 0
  %2133 = vmatprep.subr.bf16.mxu0 0
  %2134 = vmatpush1.bf16.msra.mxu0 0
  %2135 = vmatprep.subr.bf16.mxu0 0
  %2136 = vmatpush1.bf16.msra.mxu0 0
  %2137 = vmatprep.subr.bf16.mxu0 0
  %2138 = vmatpush1.bf16.msra.mxu0 0
  %2139 = vmatprep.subr.bf16.mxu0 0
  %2140 = vmatpush1.bf16.msra.mxu0 0
  %2141 = vmatprep.mubr.bf16.mxu0 0
  %2142 = vmatmul.mubr.bf16.gmra.mrb[0].mxu0 %v1980
  %v2143 = vpop.f32.mrb[0].mxu0
  %v2144 = vadd.f32 0.0, %v2143
  %v2145 = vpop.f32.mrb[0].mxu0
  %v2146 = vadd.f32 0.0, %v2145
  %v2147 = vpop.f32.mrb[0].mxu0
  %v2148 = vadd.f32 0.0, %v2147
  %v2149 = vpop.f32.mrb[0].mxu0
  %v2150 = vadd.f32 0.0, %v2149
  %2151 = vmatprep.mubr.bf16.mxu0 0
  %2152 = vmatmul.mubr.bf16.gmra.mrb[0].mxu0 %v1983
  %v2153 = vpop.f32.mrb[0].mxu0
  %v2154 = vadd.f32 0.0, %v2153
  %v2155 = vpop.f32.mrb[0].mxu0
  %v2156 = vadd.f32 0.0, %v2155
  %v2157 = vpop.f32.mrb[0].mxu0
  %v2158 = vadd.f32 0.0, %v2157
  %v2159 = vpop.f32.mrb[0].mxu0
  %v2160 = vadd.f32 0.0, %v2159
  %2161 = vdwg.mxu0
  %v2162 = vadd.f32 %v1915, %v2038
  %v2163 = vadd.f32 %v1916, %v2040
  %v2164 = vadd.f32 %v1917, %v2091
  %v2165 = vadd.f32 %v1918, %v2093
  %v2166 = vadd.f32 %v1919, %v2144
  %v2167 = vadd.f32 %v1920, %v2146
  %v2168 = vadd.f32 %v1921, %v2042
  %v2169 = vadd.f32 %v1922, %v2044
  %v2170 = vadd.f32 %v1923, %v2095
  %v2171 = vadd.f32 %v1924, %v2097
  %v2172 = vadd.f32 %v1925, %v2148
  %v2173 = vadd.f32 %v1926, %v2150
  %v2174 = vadd.f32 %v1927, %v2048
  %v2175 = vadd.f32 %v1928, %v2050
  %v2176 = vadd.f32 %v1929, %v2101
  %v2177 = vadd.f32 %v1930, %v2103
  %v2178 = vadd.f32 %v1931, %v2154
  %v2179 = vadd.f32 %v1932, %v2156
  %v2180 = vadd.f32 %v1933, %v2052
  %v2181 = vadd.f32 %v1934, %v2054
  %v2182 = vadd.f32 %v1935, %v2105
  %v2183 = vadd.f32 %v1936, %v2107
  %v2184 = vadd.f32 %v1937, %v2158
  %v2185 = vadd.f32 %v1938, %v2160
  %2186 = vrot.lane.b32.xlu0 %v268, 109
  %v2187 = vpop.permute.xlu0 %2186
  %2188 = vrot.lane.b32.xlu0 %v269, 109
  %v2189 = vpop.permute.xlu0 %2188
  %2190 = vrot.lane.b32.xlu0 %v270, 109
  %v2191 = vpop.permute.xlu0 %2190
  %2192 = vrot.lane.b32.xlu0 %v271, 109
  %v2193 = vpop.permute.xlu0 %2192
  %2194 = vrot.lane.b32.xlu0 %v272, 109
  %v2195 = vpop.permute.xlu0 %2194
  %2196 = vrot.lane.b32.xlu0 %v273, 109
  %v2197 = vpop.permute.xlu0 %2196
  %vm2198 = vcmp.lt.s32.totalorder %v293, 109
  %v2199 = vsel %vm2198, %v2195, %v2197
  %v2200 = vsel %vm2198, %v2193, %v2195
  %v2201 = vsel %vm2198, %v2191, %v2193
  %v2202 = vsel %vm2198, %v2189, %v2191
  %v2203 = vsel %vm2198, %v2187, %v2189
  %v2204 = vsel %vm2198, %v2197, %v2187
  %s2205 = scalar_lea.vmem %s4, 128
  %v2206 = vld [vmem:[%s2205] sm:$0xf]
  %v2207 = vld [vmem:[%s2205 + $0x4] sm:$0xf]
  %v2208 = vld [vmem:[%s2205 + $0x8] sm:$0xf]
  %v2209 = vld [vmem:[%s2205 + $0xc] sm:$0xf]
  %v2210 = vpack.c.bf16 %v2203, %v2203
  %v2211 = vpack.c.bf16 %v2202, %v2202
  %v2212 = vpack.c.bf16 %v2201, %v2201
  %v2213 = vpack.c.bf16 %v2200, %v2200
  %v2214 = vpack.c.bf16 %v2199, %v2199
  %v2215 = vpack.c.bf16 %v2204, %v2204
  %v2220 = vunpack.c.l.b16 %v2206
  %v2221 = vunpack.c.l.b16 %v2207
  %v2222 = vunpack.c.l.b16 %v2208
  %v2223 = vunpack.c.l.b16 %v2209
  %v2224 = vpack.c.b16 %v2221, %v2220
  %v2225 = vpack.c.b16 %v2223, %v2222
  %v2227 = vsel %vm351, %v2224, 0
  %v2230 = vsel %vm351, %v2225, 0
  %v2233 = vsel %vm358, %v2210, 0
  %v2236 = vsel %vm358, %v2211, 0
  %v2239 = vsel %vm358, %v2212, 0
  %v2242 = vsel %vm358, %v2213, 0
  %v2245 = vsel %vm358, %v2214, 0
  %v2248 = vsel %vm358, %v2215, 0
  %2250 = vmatprep.subr.bf16.mxu0 %v2236
  %2251 = vmatpush1.bf16.msra.mxu0 %v2233
  %2252 = vmatprep.subr.bf16.mxu0 0
  %2253 = vmatpush1.bf16.msra.mxu0 0
  %2254 = vmatprep.subr.bf16.mxu0 0
  %2255 = vmatpush1.bf16.msra.mxu0 0
  %2256 = vmatprep.subr.bf16.mxu0 0
  %2257 = vmatpush1.bf16.msra.mxu0 0
  %2258 = vmatprep.subr.bf16.mxu0 0
  %2259 = vmatpush1.bf16.msra.mxu0 0
  %2260 = vmatprep.subr.bf16.mxu0 0
  %2261 = vmatpush1.bf16.msra.mxu0 0
  %2262 = vmatprep.subr.bf16.mxu0 0
  %2263 = vmatpush1.bf16.msra.mxu0 0
  %2264 = vmatprep.subr.bf16.mxu0 0
  %2265 = vmatpush1.bf16.msra.mxu0 0
  %2266 = vmatprep.subr.bf16.mxu0 0
  %2267 = vmatpush1.bf16.msra.mxu0 0
  %2268 = vmatprep.subr.bf16.mxu0 0
  %2269 = vmatpush1.bf16.msra.mxu0 0
  %2270 = vmatprep.subr.bf16.mxu0 0
  %2271 = vmatpush1.bf16.msra.mxu0 0
  %2272 = vmatprep.subr.bf16.mxu0 0
  %2273 = vmatpush1.bf16.msra.mxu0 0
  %2274 = vmatprep.subr.bf16.mxu0 0
  %2275 = vmatpush1.bf16.msra.mxu0 0
  %2276 = vmatprep.subr.bf16.mxu0 0
  %2277 = vmatpush1.bf16.msra.mxu0 0
  %2278 = vmatprep.subr.bf16.mxu0 0
  %2279 = vmatpush1.bf16.msra.mxu0 0
  %2280 = vmatprep.subr.bf16.mxu0 0
  %2281 = vmatpush1.bf16.msra.mxu0 0
  %2282 = vmatprep.mubr.bf16.mxu0 0
  %2283 = vmatmul.mubr.bf16.gmra.mrb[0].mxu0 %v2227
  %v2284 = vpop.f32.mrb[0].mxu0
  %v2285 = vadd.f32 0.0, %v2284
  %v2286 = vpop.f32.mrb[0].mxu0
  %v2287 = vadd.f32 0.0, %v2286
  %v2288 = vpop.f32.mrb[0].mxu0
  %v2289 = vadd.f32 0.0, %v2288
  %v2290 = vpop.f32.mrb[0].mxu0
  %v2291 = vadd.f32 0.0, %v2290
  %2292 = vmatprep.mubr.bf16.mxu0 0
  %2293 = vmatmul.mubr.bf16.gmra.mrb[0].mxu0 %v2230
  %v2294 = vpop.f32.mrb[0].mxu0
  %v2295 = vadd.f32 0.0, %v2294
  %v2296 = vpop.f32.mrb[0].mxu0
  %v2297 = vadd.f32 0.0, %v2296
  %v2298 = vpop.f32.mrb[0].mxu0
  %v2299 = vadd.f32 0.0, %v2298
  %v2300 = vpop.f32.mrb[0].mxu0
  %v2301 = vadd.f32 0.0, %v2300
  %2302 = vdwg.mxu0
  %2303 = vmatprep.subr.bf16.mxu0 %v2242
  %2304 = vmatpush1.bf16.msra.mxu0 %v2239
  %2305 = vmatprep.subr.bf16.mxu0 0
  %2306 = vmatpush1.bf16.msra.mxu0 0
  %2307 = vmatprep.subr.bf16.mxu0 0
  %2308 = vmatpush1.bf16.msra.mxu0 0
  %2309 = vmatprep.subr.bf16.mxu0 0
  %2310 = vmatpush1.bf16.msra.mxu0 0
  %2311 = vmatprep.subr.bf16.mxu0 0
  %2312 = vmatpush1.bf16.msra.mxu0 0
  %2313 = vmatprep.subr.bf16.mxu0 0
  %2314 = vmatpush1.bf16.msra.mxu0 0
  %2315 = vmatprep.subr.bf16.mxu0 0
  %2316 = vmatpush1.bf16.msra.mxu0 0
  %2317 = vmatprep.subr.bf16.mxu0 0
  %2318 = vmatpush1.bf16.msra.mxu0 0
  %2319 = vmatprep.subr.bf16.mxu0 0
  %2320 = vmatpush1.bf16.msra.mxu0 0
  %2321 = vmatprep.subr.bf16.mxu0 0
  %2322 = vmatpush1.bf16.msra.mxu0 0
  %2323 = vmatprep.subr.bf16.mxu0 0
  %2324 = vmatpush1.bf16.msra.mxu0 0
  %2325 = vmatprep.subr.bf16.mxu0 0
  %2326 = vmatpush1.bf16.msra.mxu0 0
  %2327 = vmatprep.subr.bf16.mxu0 0
  %2328 = vmatpush1.bf16.msra.mxu0 0
  %2329 = vmatprep.subr.bf16.mxu0 0
  %2330 = vmatpush1.bf16.msra.mxu0 0
  %2331 = vmatprep.subr.bf16.mxu0 0
  %2332 = vmatpush1.bf16.msra.mxu0 0
  %2333 = vmatprep.subr.bf16.mxu0 0
  %2334 = vmatpush1.bf16.msra.mxu0 0
  %2335 = vmatprep.mubr.bf16.mxu0 0
  %2336 = vmatmul.mubr.bf16.gmra.mrb[0].mxu0 %v2227
  %v2337 = vpop.f32.mrb[0].mxu0
  %v2338 = vadd.f32 0.0, %v2337
  %v2339 = vpop.f32.mrb[0].mxu0
  %v2340 = vadd.f32 0.0, %v2339
  %v2341 = vpop.f32.mrb[0].mxu0
  %v2342 = vadd.f32 0.0, %v2341
  %v2343 = vpop.f32.mrb[0].mxu0
  %v2344 = vadd.f32 0.0, %v2343
  %2345 = vmatprep.mubr.bf16.mxu0 0
  %2346 = vmatmul.mubr.bf16.gmra.mrb[0].mxu0 %v2230
  %v2347 = vpop.f32.mrb[0].mxu0
  %v2348 = vadd.f32 0.0, %v2347
  %v2349 = vpop.f32.mrb[0].mxu0
  %v2350 = vadd.f32 0.0, %v2349
  %v2351 = vpop.f32.mrb[0].mxu0
  %v2352 = vadd.f32 0.0, %v2351
  %v2353 = vpop.f32.mrb[0].mxu0
  %v2354 = vadd.f32 0.0, %v2353
  %2355 = vdwg.mxu0
  %2356 = vmatprep.subr.bf16.mxu0 %v2248
  %2357 = vmatpush1.bf16.msra.mxu0 %v2245
  %2358 = vmatprep.subr.bf16.mxu0 0
  %2359 = vmatpush1.bf16.msra.mxu0 0
  %2360 = vmatprep.subr.bf16.mxu0 0
  %2361 = vmatpush1.bf16.msra.mxu0 0
  %2362 = vmatprep.subr.bf16.mxu0 0
  %2363 = vmatpush1.bf16.msra.mxu0 0
  %2364 = vmatprep.subr.bf16.mxu0 0
  %2365 = vmatpush1.bf16.msra.mxu0 0
  %2366 = vmatprep.subr.bf16.mxu0 0
  %2367 = vmatpush1.bf16.msra.mxu0 0
  %2368 = vmatprep.subr.bf16.mxu0 0
  %2369 = vmatpush1.bf16.msra.mxu0 0
  %2370 = vmatprep.subr.bf16.mxu0 0
  %2371 = vmatpush1.bf16.msra.mxu0 0
  %2372 = vmatprep.subr.bf16.mxu0 0
  %2373 = vmatpush1.bf16.msra.mxu0 0
  %2374 = vmatprep.subr.bf16.mxu0 0
  %2375 = vmatpush1.bf16.msra.mxu0 0
  %2376 = vmatprep.subr.bf16.mxu0 0
  %2377 = vmatpush1.bf16.msra.mxu0 0
  %2378 = vmatprep.subr.bf16.mxu0 0
  %2379 = vmatpush1.bf16.msra.mxu0 0
  %2380 = vmatprep.subr.bf16.mxu0 0
  %2381 = vmatpush1.bf16.msra.mxu0 0
  %2382 = vmatprep.subr.bf16.mxu0 0
  %2383 = vmatpush1.bf16.msra.mxu0 0
  %2384 = vmatprep.subr.bf16.mxu0 0
  %2385 = vmatpush1.bf16.msra.mxu0 0
  %2386 = vmatprep.subr.bf16.mxu0 0
  %2387 = vmatpush1.bf16.msra.mxu0 0
  %2388 = vmatprep.mubr.bf16.mxu0 0
  %2389 = vmatmul.mubr.bf16.gmra.mrb[0].mxu0 %v2227
  %v2390 = vpop.f32.mrb[0].mxu0
  %v2391 = vadd.f32 0.0, %v2390
  %v2392 = vpop.f32.mrb[0].mxu0
  %v2393 = vadd.f32 0.0, %v2392
  %v2394 = vpop.f32.mrb[0].mxu0
  %v2395 = vadd.f32 0.0, %v2394
  %v2396 = vpop.f32.mrb[0].mxu0
  %v2397 = vadd.f32 0.0, %v2396
  %2398 = vmatprep.mubr.bf16.mxu0 0
  %2399 = vmatmul.mubr.bf16.gmra.mrb[0].mxu0 %v2230
  %v2400 = vpop.f32.mrb[0].mxu0
  %v2401 = vadd.f32 0.0, %v2400
  %v2402 = vpop.f32.mrb[0].mxu0
  %v2403 = vadd.f32 0.0, %v2402
  %v2404 = vpop.f32.mrb[0].mxu0
  %v2405 = vadd.f32 0.0, %v2404
  %v2406 = vpop.f32.mrb[0].mxu0
  %v2407 = vadd.f32 0.0, %v2406
  %2408 = vdwg.mxu0
  %v2409 = vadd.f32 %v2162, %v2285
  %v2410 = vadd.f32 %v2163, %v2287
  %v2411 = vadd.f32 %v2164, %v2338
  %v2412 = vadd.f32 %v2165, %v2340
  %v2413 = vadd.f32 %v2166, %v2391
  %v2414 = vadd.f32 %v2167, %v2393
  %v2415 = vadd.f32 %v2168, %v2289
  %v2416 = vadd.f32 %v2169, %v2291
  %v2417 = vadd.f32 %v2170, %v2342
  %v2418 = vadd.f32 %v2171, %v2344
  %v2419 = vadd.f32 %v2172, %v2395
  %v2420 = vadd.f32 %v2173, %v2397
  %v2421 = vadd.f32 %v2174, %v2295
  %v2422 = vadd.f32 %v2175, %v2297
  %v2423 = vadd.f32 %v2176, %v2348
  %v2424 = vadd.f32 %v2177, %v2350
  %v2425 = vadd.f32 %v2178, %v2401
  %v2426 = vadd.f32 %v2179, %v2403
  %v2427 = vadd.f32 %v2180, %v2299
  %v2428 = vadd.f32 %v2181, %v2301
  %v2429 = vadd.f32 %v2182, %v2352
  %v2430 = vadd.f32 %v2183, %v2354
  %v2431 = vadd.f32 %v2184, %v2405
  %v2432 = vadd.f32 %v2185, %v2407
  %v2433 = vld [vmem:[%s5] sm:$0xff]
  %v2434 = vld [vmem:[%s5 + $0x8] sm:$0xff]
  %v2435 = vld [vmem:[%s5 + $0x10] sm:$0xff]
  %v2436 = vld [vmem:[%s5 + $0x18] sm:$0xff]
  %2438 = vset.pattern.permute.xlu0 0
  %2439 = vperm.xlu0 %2438, %v2433
  %v2440 = vpop.permute.xlu0 %2439
  %2443 = vset.pattern.permute.xlu0 0
  %2444 = vperm.xlu0 %2443, %v2434
  %v2445 = vpop.permute.xlu0 %2444
  %2448 = vset.pattern.permute.xlu0 0
  %2449 = vperm.xlu0 %2448, %v2435
  %v2450 = vpop.permute.xlu0 %2449
  %2453 = vset.pattern.permute.xlu0 0
  %2454 = vperm.xlu0 %2453, %v2436
  %v2455 = vpop.permute.xlu0 %2454
  %v2457 = vadd.f32 %v2409, %v2440
  %v2458 = vadd.f32 %v2410, %v2440
  %v2459 = vadd.f32 %v2411, %v2440
  %v2460 = vadd.f32 %v2412, %v2440
  %v2461 = vadd.f32 %v2413, %v2440
  %v2462 = vadd.f32 %v2414, %v2440
  %v2463 = vadd.f32 %v2415, %v2445
  %v2464 = vadd.f32 %v2416, %v2445
  %v2465 = vadd.f32 %v2417, %v2445
  %v2466 = vadd.f32 %v2418, %v2445
  %v2467 = vadd.f32 %v2419, %v2445
  %v2468 = vadd.f32 %v2420, %v2445
  %v2469 = vadd.f32 %v2421, %v2450
  %v2470 = vadd.f32 %v2422, %v2450
  %v2471 = vadd.f32 %v2423, %v2450
  %v2472 = vadd.f32 %v2424, %v2450
  %v2473 = vadd.f32 %v2425, %v2450
  %v2474 = vadd.f32 %v2426, %v2450
  %v2475 = vadd.f32 %v2427, %v2455
  %v2476 = vadd.f32 %v2428, %v2455
  %v2477 = vadd.f32 %v2429, %v2455
  %v2478 = vadd.f32 %v2430, %v2455
  %v2479 = vadd.f32 %v2431, %v2455
  %v2480 = vadd.f32 %v2432, %v2455
  %vm2481 = vcmp.ge.f32.partialorder %v2457, 0.0
  %vm2482 = vcmp.ge.f32.partialorder %v2458, 0.0
  %vm2483 = vcmp.ge.f32.partialorder %v2459, 0.0
  %vm2484 = vcmp.ge.f32.partialorder %v2460, 0.0
  %vm2485 = vcmp.ge.f32.partialorder %v2461, 0.0
  %vm2486 = vcmp.ge.f32.partialorder %v2462, 0.0
  %vm2487 = vcmp.ge.f32.partialorder %v2463, 0.0
  %vm2488 = vcmp.ge.f32.partialorder %v2464, 0.0
  %vm2489 = vcmp.ge.f32.partialorder %v2465, 0.0
  %vm2490 = vcmp.ge.f32.partialorder %v2466, 0.0
  %vm2491 = vcmp.ge.f32.partialorder %v2467, 0.0
  %vm2492 = vcmp.ge.f32.partialorder %v2468, 0.0
  %vm2493 = vcmp.ge.f32.partialorder %v2469, 0.0
  %vm2494 = vcmp.ge.f32.partialorder %v2470, 0.0
  %vm2495 = vcmp.ge.f32.partialorder %v2471, 0.0
  %vm2496 = vcmp.ge.f32.partialorder %v2472, 0.0
  %vm2497 = vcmp.ge.f32.partialorder %v2473, 0.0
  %vm2498 = vcmp.ge.f32.partialorder %v2474, 0.0
  %vm2499 = vcmp.ge.f32.partialorder %v2475, 0.0
  %vm2500 = vcmp.ge.f32.partialorder %v2476, 0.0
  %vm2501 = vcmp.ge.f32.partialorder %v2477, 0.0
  %vm2502 = vcmp.ge.f32.partialorder %v2478, 0.0
  %vm2503 = vcmp.ge.f32.partialorder %v2479, 0.0
  %vm2504 = vcmp.ge.f32.partialorder %v2480, 0.0
  %v2505 = vmul.f32 %v2457, 0.25
  %v2506 = vmul.f32 %v2458, 0.25
  %v2507 = vmul.f32 %v2459, 0.25
  %v2508 = vmul.f32 %v2460, 0.25
  %v2509 = vmul.f32 %v2461, 0.25
  %v2510 = vmul.f32 %v2462, 0.25
  %v2511 = vmul.f32 %v2463, 0.25
  %v2512 = vmul.f32 %v2464, 0.25
  %v2513 = vmul.f32 %v2465, 0.25
  %v2514 = vmul.f32 %v2466, 0.25
  %v2515 = vmul.f32 %v2467, 0.25
  %v2516 = vmul.f32 %v2468, 0.25
  %v2517 = vmul.f32 %v2469, 0.25
  %v2518 = vmul.f32 %v2470, 0.25
  %v2519 = vmul.f32 %v2471, 0.25
  %v2520 = vmul.f32 %v2472, 0.25
  %v2521 = vmul.f32 %v2473, 0.25
  %v2522 = vmul.f32 %v2474, 0.25
  %v2523 = vmul.f32 %v2475, 0.25
  %v2524 = vmul.f32 %v2476, 0.25
  %v2525 = vmul.f32 %v2477, 0.25
  %v2526 = vmul.f32 %v2478, 0.25
  %v2527 = vmul.f32 %v2479, 0.25
  %v2528 = vmul.f32 %v2480, 0.25
  %v2529 = vsel %vm2481, %v2457, %v2505
  %v2530 = vsel %vm2482, %v2458, %v2506
  %v2531 = vsel %vm2483, %v2459, %v2507
  %v2532 = vsel %vm2484, %v2460, %v2508
  %v2533 = vsel %vm2485, %v2461, %v2509
  %v2534 = vsel %vm2486, %v2462, %v2510
  %v2535 = vsel %vm2487, %v2463, %v2511
  %v2536 = vsel %vm2488, %v2464, %v2512
  %v2537 = vsel %vm2489, %v2465, %v2513
  %v2538 = vsel %vm2490, %v2466, %v2514
  %v2539 = vsel %vm2491, %v2467, %v2515
  %v2540 = vsel %vm2492, %v2468, %v2516
  %v2541 = vsel %vm2493, %v2469, %v2517
  %v2542 = vsel %vm2494, %v2470, %v2518
  %v2543 = vsel %vm2495, %v2471, %v2519
  %v2544 = vsel %vm2496, %v2472, %v2520
  %v2545 = vsel %vm2497, %v2473, %v2521
  %v2546 = vsel %vm2498, %v2474, %v2522
  %v2547 = vsel %vm2499, %v2475, %v2523
  %v2548 = vsel %vm2500, %v2476, %v2524
  %v2549 = vsel %vm2501, %v2477, %v2525
  %v2550 = vsel %vm2502, %v2478, %v2526
  %v2551 = vsel %vm2503, %v2479, %v2527
  %v2552 = vsel %vm2504, %v2480, %v2528
  %v2553 = vmul.f32 %v2529, %v241
  %v2554 = vmul.f32 %v2530, %v245
  %v2555 = vmul.f32 %v2531, %v249
  %v2556 = vmul.f32 %v2532, %v253
  %v2557 = vmul.f32 %v2533, %v257
  %v2558 = vmul.f32 %v2534, %v261
  %v2559 = vmul.f32 %v2535, %v241
  %v2560 = vmul.f32 %v2536, %v245
  %v2561 = vmul.f32 %v2537, %v249
  %v2562 = vmul.f32 %v2538, %v253
  %v2563 = vmul.f32 %v2539, %v257
  %v2564 = vmul.f32 %v2540, %v261
  %v2565 = vmul.f32 %v2541, %v241
  %v2566 = vmul.f32 %v2542, %v245
  %v2567 = vmul.f32 %v2543, %v249
  %v2568 = vmul.f32 %v2544, %v253
  %v2569 = vmul.f32 %v2545, %v257
  %v2570 = vmul.f32 %v2546, %v261
  %v2571 = vmul.f32 %v2547, %v241
  %v2572 = vmul.f32 %v2548, %v245
  %v2573 = vmul.f32 %v2549, %v249
  %v2574 = vmul.f32 %v2550, %v253
  %v2575 = vmul.f32 %v2551, %v257
  %v2576 = vmul.f32 %v2552, %v261
  %v2577 = vpack.c.bf16 %v2559, %v2553
  %v2578 = vpack.c.bf16 %v2560, %v2554
  %v2579 = vpack.c.bf16 %v2561, %v2555
  %v2580 = vpack.c.bf16 %v2562, %v2556
  %v2581 = vpack.c.bf16 %v2563, %v2557
  %v2582 = vpack.c.bf16 %v2564, %v2558
  %v2583 = vpack.c.bf16 %v2571, %v2565
  %v2584 = vpack.c.bf16 %v2572, %v2566
  %v2585 = vpack.c.bf16 %v2573, %v2567
  %v2586 = vpack.c.bf16 %v2574, %v2568
  %v2587 = vpack.c.bf16 %v2575, %v2569
  %v2588 = vpack.c.bf16 %v2576, %v2570
  %v2589 = vld [vmem:[%s6] sm:$0xf]
  %vm2590 = vcmask 261120
  %v2592 = vsel %vm2590, %v2589, 0
  %2594 = vmatprep.subr.bf16.mxu0 %v2578
  %2595 = vmatpush1.bf16.msra.mxu0 %v2577
  %2596 = vmatprep.subr.bf16.mxu0 %v2584
  %2597 = vmatpush1.bf16.msra.mxu0 %v2583
  %2598 = vmatprep.subr.bf16.mxu0 0
  %2599 = vmatpush1.bf16.msra.mxu0 0
  %2600 = vmatprep.subr.bf16.mxu0 0
  %2601 = vmatpush1.bf16.msra.mxu0 0
  %2602 = vmatprep.subr.bf16.mxu0 0
  %2603 = vmatpush1.bf16.msra.mxu0 0
  %2604 = vmatprep.subr.bf16.mxu0 0
  %2605 = vmatpush1.bf16.msra.mxu0 0
  %2606 = vmatprep.subr.bf16.mxu0 0
  %2607 = vmatpush1.bf16.msra.mxu0 0
  %2608 = vmatprep.subr.bf16.mxu0 0
  %2609 = vmatpush1.bf16.msra.mxu0 0
  %2610 = vmatprep.subr.bf16.mxu0 0
  %2611 = vmatpush1.bf16.msra.mxu0 0
  %2612 = vmatprep.subr.bf16.mxu0 0
  %2613 = vmatpush1.bf16.msra.mxu0 0
  %2614 = vmatprep.subr.bf16.mxu0 0
  %2615 = vmatpush1.bf16.msra.mxu0 0
  %2616 = vmatprep.subr.bf16.mxu0 0
  %2617 = vmatpush1.bf16.msra.mxu0 0
  %2618 = vmatprep.subr.bf16.mxu0 0
  %2619 = vmatpush1.bf16.msra.mxu0 0
  %2620 = vmatprep.subr.bf16.mxu0 0
  %2621 = vmatpush1.bf16.msra.mxu0 0
  %2622 = vmatprep.subr.bf16.mxu0 0
  %2623 = vmatpush1.bf16.msra.mxu0 0
  %2624 = vmatprep.subr.bf16.mxu0 0
  %2625 = vmatpush1.bf16.msra.mxu0 0
  %2626 = vmatprep.mubr.bf16.mxu0 0
  %2627 = vmatmul.mubr.bf16.gmra.mrb[0].mxu0 %v2592
  %v2628 = vpop.f32.mrb[0].mxu0
  %v2629 = vadd.f32 0.0, %v2628
  %v2630 = vpop.f32.mrb[0].mxu0
  %v2631 = vadd.f32 0.0, %v2630
  %v2632 = vpop.f32.mrb[0].mxu0
  %v2633 = vpop.f32.mrb[0].mxu0
  %2634 = vdwg.mxu0
  %2635 = vmatprep.subr.bf16.mxu0 %v2580
  %2636 = vmatpush1.bf16.msra.mxu0 %v2579
  %2637 = vmatprep.subr.bf16.mxu0 %v2586
  %2638 = vmatpush1.bf16.msra.mxu0 %v2585
  %2639 = vmatprep.subr.bf16.mxu0 0
  %2640 = vmatpush1.bf16.msra.mxu0 0
  %2641 = vmatprep.subr.bf16.mxu0 0
  %2642 = vmatpush1.bf16.msra.mxu0 0
  %2643 = vmatprep.subr.bf16.mxu0 0
  %2644 = vmatpush1.bf16.msra.mxu0 0
  %2645 = vmatprep.subr.bf16.mxu0 0
  %2646 = vmatpush1.bf16.msra.mxu0 0
  %2647 = vmatprep.subr.bf16.mxu0 0
  %2648 = vmatpush1.bf16.msra.mxu0 0
  %2649 = vmatprep.subr.bf16.mxu0 0
  %2650 = vmatpush1.bf16.msra.mxu0 0
  %2651 = vmatprep.subr.bf16.mxu0 0
  %2652 = vmatpush1.bf16.msra.mxu0 0
  %2653 = vmatprep.subr.bf16.mxu0 0
  %2654 = vmatpush1.bf16.msra.mxu0 0
  %2655 = vmatprep.subr.bf16.mxu0 0
  %2656 = vmatpush1.bf16.msra.mxu0 0
  %2657 = vmatprep.subr.bf16.mxu0 0
  %2658 = vmatpush1.bf16.msra.mxu0 0
  %2659 = vmatprep.subr.bf16.mxu0 0
  %2660 = vmatpush1.bf16.msra.mxu0 0
  %2661 = vmatprep.subr.bf16.mxu0 0
  %2662 = vmatpush1.bf16.msra.mxu0 0
  %2663 = vmatprep.subr.bf16.mxu0 0
  %2664 = vmatpush1.bf16.msra.mxu0 0
  %2665 = vmatprep.subr.bf16.mxu0 0
  %2666 = vmatpush1.bf16.msra.mxu0 0
  %2667 = vmatprep.mubr.bf16.mxu0 0
  %2668 = vmatmul.mubr.bf16.gmra.mrb[0].mxu0 %v2592
  %v2669 = vpop.f32.mrb[0].mxu0
  %v2670 = vadd.f32 0.0, %v2669
  %v2671 = vpop.f32.mrb[0].mxu0
  %v2672 = vadd.f32 0.0, %v2671
  %v2673 = vpop.f32.mrb[0].mxu0
  %v2674 = vpop.f32.mrb[0].mxu0
  %2675 = vdwg.mxu0
  %2676 = vmatprep.subr.bf16.mxu0 %v2582
  %2677 = vmatpush1.bf16.msra.mxu0 %v2581
  %2678 = vmatprep.subr.bf16.mxu0 %v2588
  %2679 = vmatpush1.bf16.msra.mxu0 %v2587
  %2680 = vmatprep.subr.bf16.mxu0 0
  %2681 = vmatpush1.bf16.msra.mxu0 0
  %2682 = vmatprep.subr.bf16.mxu0 0
  %2683 = vmatpush1.bf16.msra.mxu0 0
  %2684 = vmatprep.subr.bf16.mxu0 0
  %2685 = vmatpush1.bf16.msra.mxu0 0
  %2686 = vmatprep.subr.bf16.mxu0 0
  %2687 = vmatpush1.bf16.msra.mxu0 0
  %2688 = vmatprep.subr.bf16.mxu0 0
  %2689 = vmatpush1.bf16.msra.mxu0 0
  %2690 = vmatprep.subr.bf16.mxu0 0
  %2691 = vmatpush1.bf16.msra.mxu0 0
  %2692 = vmatprep.subr.bf16.mxu0 0
  %2693 = vmatpush1.bf16.msra.mxu0 0
  %2694 = vmatprep.subr.bf16.mxu0 0
  %2695 = vmatpush1.bf16.msra.mxu0 0
  %2696 = vmatprep.subr.bf16.mxu0 0
  %2697 = vmatpush1.bf16.msra.mxu0 0
  %2698 = vmatprep.subr.bf16.mxu0 0
  %2699 = vmatpush1.bf16.msra.mxu0 0
  %2700 = vmatprep.subr.bf16.mxu0 0
  %2701 = vmatpush1.bf16.msra.mxu0 0
  %2702 = vmatprep.subr.bf16.mxu0 0
  %2703 = vmatpush1.bf16.msra.mxu0 0
  %2704 = vmatprep.subr.bf16.mxu0 0
  %2705 = vmatpush1.bf16.msra.mxu0 0
  %2706 = vmatprep.subr.bf16.mxu0 0
  %2707 = vmatpush1.bf16.msra.mxu0 0
  %2708 = vmatprep.mubr.bf16.mxu0 0
  %2709 = vmatmul.mubr.bf16.gmra.mrb[0].mxu0 %v2592
  %v2710 = vpop.f32.mrb[0].mxu0
  %v2711 = vadd.f32 0.0, %v2710
  %v2712 = vpop.f32.mrb[0].mxu0
  %v2713 = vadd.f32 0.0, %v2712
  %v2714 = vpop.f32.mrb[0].mxu0
  %v2715 = vpop.f32.mrb[0].mxu0
  %2716 = vdwg.mxu0
  %2717 = vrot.lane.b32.xlu0 %v2629, 19
  %v2718 = vpop.permute.xlu0 %2717
  %2719 = vrot.lane.b32.xlu0 %v2631, 19
  %v2720 = vpop.permute.xlu0 %2719
  %2721 = vrot.lane.b32.xlu0 %v2670, 19
  %v2722 = vpop.permute.xlu0 %2721
  %2723 = vrot.lane.b32.xlu0 %v2672, 19
  %v2724 = vpop.permute.xlu0 %2723
  %2725 = vrot.lane.b32.xlu0 %v2711, 19
  %v2726 = vpop.permute.xlu0 %2725
  %2727 = vrot.lane.b32.xlu0 %v2713, 19
  %v2728 = vpop.permute.xlu0 %2727
  %v2729 = vsel %vm294, %v2726, %v2728
  %v2730 = vsel %vm294, %v2724, %v2726
  %v2731 = vsel %vm294, %v2722, %v2724
  %v2732 = vsel %vm294, %v2720, %v2722
  %v2733 = vsel %vm294, %v2718, %v2720
  %v2734 = vsel %vm294, %v2728, %v2718
  %s2735 = scalar_lea.vmem %s6, 4
  %v2736 = vld [vmem:[%s2735] sm:$0xf]
  %v2738 = vsel %vm2590, %v2736, 0
  %2740 = vmatprep.subr.bf16.mxu0 %v2578
  %2741 = vmatpush1.bf16.msra.mxu0 %v2577
  %2742 = vmatprep.subr.bf16.mxu0 %v2584
  %2743 = vmatpush1.bf16.msra.mxu0 %v2583
  %2744 = vmatprep.subr.bf16.mxu0 0
  %2745 = vmatpush1.bf16.msra.mxu0 0
  %2746 = vmatprep.subr.bf16.mxu0 0
  %2747 = vmatpush1.bf16.msra.mxu0 0
  %2748 = vmatprep.subr.bf16.mxu0 0
  %2749 = vmatpush1.bf16.msra.mxu0 0
  %2750 = vmatprep.subr.bf16.mxu0 0
  %2751 = vmatpush1.bf16.msra.mxu0 0
  %2752 = vmatprep.subr.bf16.mxu0 0
  %2753 = vmatpush1.bf16.msra.mxu0 0
  %2754 = vmatprep.subr.bf16.mxu0 0
  %2755 = vmatpush1.bf16.msra.mxu0 0
  %2756 = vmatprep.subr.bf16.mxu0 0
  %2757 = vmatpush1.bf16.msra.mxu0 0
  %2758 = vmatprep.subr.bf16.mxu0 0
  %2759 = vmatpush1.bf16.msra.mxu0 0
  %2760 = vmatprep.subr.bf16.mxu0 0
  %2761 = vmatpush1.bf16.msra.mxu0 0
  %2762 = vmatprep.subr.bf16.mxu0 0
  %2763 = vmatpush1.bf16.msra.mxu0 0
  %2764 = vmatprep.subr.bf16.mxu0 0
  %2765 = vmatpush1.bf16.msra.mxu0 0
  %2766 = vmatprep.subr.bf16.mxu0 0
  %2767 = vmatpush1.bf16.msra.mxu0 0
  %2768 = vmatprep.subr.bf16.mxu0 0
  %2769 = vmatpush1.bf16.msra.mxu0 0
  %2770 = vmatprep.subr.bf16.mxu0 0
  %2771 = vmatpush1.bf16.msra.mxu0 0
  %2772 = vmatprep.mubr.bf16.mxu0 0
  %2773 = vmatmul.mubr.bf16.gmra.mrb[0].mxu0 %v2738
  %v2774 = vpop.f32.mrb[0].mxu0
  %v2775 = vadd.f32 0.0, %v2774
  %v2776 = vpop.f32.mrb[0].mxu0
  %v2777 = vadd.f32 0.0, %v2776
  %v2778 = vpop.f32.mrb[0].mxu0
  %v2779 = vpop.f32.mrb[0].mxu0
  %2780 = vdwg.mxu0
  %2781 = vmatprep.subr.bf16.mxu0 %v2580
  %2782 = vmatpush1.bf16.msra.mxu0 %v2579
  %2783 = vmatprep.subr.bf16.mxu0 %v2586
  %2784 = vmatpush1.bf16.msra.mxu0 %v2585
  %2785 = vmatprep.subr.bf16.mxu0 0
  %2786 = vmatpush1.bf16.msra.mxu0 0
  %2787 = vmatprep.subr.bf16.mxu0 0
  %2788 = vmatpush1.bf16.msra.mxu0 0
  %2789 = vmatprep.subr.bf16.mxu0 0
  %2790 = vmatpush1.bf16.msra.mxu0 0
  %2791 = vmatprep.subr.bf16.mxu0 0
  %2792 = vmatpush1.bf16.msra.mxu0 0
  %2793 = vmatprep.subr.bf16.mxu0 0
  %2794 = vmatpush1.bf16.msra.mxu0 0
  %2795 = vmatprep.subr.bf16.mxu0 0
  %2796 = vmatpush1.bf16.msra.mxu0 0
  %2797 = vmatprep.subr.bf16.mxu0 0
  %2798 = vmatpush1.bf16.msra.mxu0 0
  %2799 = vmatprep.subr.bf16.mxu0 0
  %2800 = vmatpush1.bf16.msra.mxu0 0
  %2801 = vmatprep.subr.bf16.mxu0 0
  %2802 = vmatpush1.bf16.msra.mxu0 0
  %2803 = vmatprep.subr.bf16.mxu0 0
  %2804 = vmatpush1.bf16.msra.mxu0 0
  %2805 = vmatprep.subr.bf16.mxu0 0
  %2806 = vmatpush1.bf16.msra.mxu0 0
  %2807 = vmatprep.subr.bf16.mxu0 0
  %2808 = vmatpush1.bf16.msra.mxu0 0
  %2809 = vmatprep.subr.bf16.mxu0 0
  %2810 = vmatpush1.bf16.msra.mxu0 0
  %2811 = vmatprep.subr.bf16.mxu0 0
  %2812 = vmatpush1.bf16.msra.mxu0 0
  %2813 = vmatprep.mubr.bf16.mxu0 0
  %2814 = vmatmul.mubr.bf16.gmra.mrb[0].mxu0 %v2738
  %v2815 = vpop.f32.mrb[0].mxu0
  %v2816 = vadd.f32 0.0, %v2815
  %v2817 = vpop.f32.mrb[0].mxu0
  %v2818 = vadd.f32 0.0, %v2817
  %v2819 = vpop.f32.mrb[0].mxu0
  %v2820 = vpop.f32.mrb[0].mxu0
  %2821 = vdwg.mxu0
  %2822 = vmatprep.subr.bf16.mxu0 %v2582
  %2823 = vmatpush1.bf16.msra.mxu0 %v2581
  %2824 = vmatprep.subr.bf16.mxu0 %v2588
  %2825 = vmatpush1.bf16.msra.mxu0 %v2587
  %2826 = vmatprep.subr.bf16.mxu0 0
  %2827 = vmatpush1.bf16.msra.mxu0 0
  %2828 = vmatprep.subr.bf16.mxu0 0
  %2829 = vmatpush1.bf16.msra.mxu0 0
  %2830 = vmatprep.subr.bf16.mxu0 0
  %2831 = vmatpush1.bf16.msra.mxu0 0
  %2832 = vmatprep.subr.bf16.mxu0 0
  %2833 = vmatpush1.bf16.msra.mxu0 0
  %2834 = vmatprep.subr.bf16.mxu0 0
  %2835 = vmatpush1.bf16.msra.mxu0 0
  %2836 = vmatprep.subr.bf16.mxu0 0
  %2837 = vmatpush1.bf16.msra.mxu0 0
  %2838 = vmatprep.subr.bf16.mxu0 0
  %2839 = vmatpush1.bf16.msra.mxu0 0
  %2840 = vmatprep.subr.bf16.mxu0 0
  %2841 = vmatpush1.bf16.msra.mxu0 0
  %2842 = vmatprep.subr.bf16.mxu0 0
  %2843 = vmatpush1.bf16.msra.mxu0 0
  %2844 = vmatprep.subr.bf16.mxu0 0
  %2845 = vmatpush1.bf16.msra.mxu0 0
  %2846 = vmatprep.subr.bf16.mxu0 0
  %2847 = vmatpush1.bf16.msra.mxu0 0
  %2848 = vmatprep.subr.bf16.mxu0 0
  %2849 = vmatpush1.bf16.msra.mxu0 0
  %2850 = vmatprep.subr.bf16.mxu0 0
  %2851 = vmatpush1.bf16.msra.mxu0 0
  %2852 = vmatprep.subr.bf16.mxu0 0
  %2853 = vmatpush1.bf16.msra.mxu0 0
  %2854 = vmatprep.mubr.bf16.mxu0 0
  %2855 = vmatmul.mubr.bf16.gmra.mrb[0].mxu0 %v2738
  %v2856 = vpop.f32.mrb[0].mxu0
  %v2857 = vadd.f32 0.0, %v2856
  %v2858 = vpop.f32.mrb[0].mxu0
  %v2859 = vadd.f32 0.0, %v2858
  %v2860 = vpop.f32.mrb[0].mxu0
  %v2861 = vpop.f32.mrb[0].mxu0
  %2862 = vdwg.mxu0
  %2863 = vrot.lane.b32.xlu0 %v2775, 18
  %v2864 = vpop.permute.xlu0 %2863
  %2865 = vrot.lane.b32.xlu0 %v2777, 18
  %v2866 = vpop.permute.xlu0 %2865
  %2867 = vrot.lane.b32.xlu0 %v2816, 18
  %v2868 = vpop.permute.xlu0 %2867
  %2869 = vrot.lane.b32.xlu0 %v2818, 18
  %v2870 = vpop.permute.xlu0 %2869
  %2871 = vrot.lane.b32.xlu0 %v2857, 18
  %v2872 = vpop.permute.xlu0 %2871
  %2873 = vrot.lane.b32.xlu0 %v2859, 18
  %v2874 = vpop.permute.xlu0 %2873
  %v2875 = vsel %vm323, %v2872, %v2874
  %v2876 = vsel %vm323, %v2870, %v2872
  %v2877 = vsel %vm323, %v2868, %v2870
  %v2878 = vsel %vm323, %v2866, %v2868
  %v2879 = vsel %vm323, %v2864, %v2866
  %v2880 = vsel %vm323, %v2874, %v2864
  %v2881 = vadd.f32 %v2734, %v2880
  %v2882 = vadd.f32 %v2733, %v2879
  %v2883 = vadd.f32 %v2732, %v2878
  %v2884 = vadd.f32 %v2731, %v2877
  %v2885 = vadd.f32 %v2730, %v2876
  %v2886 = vadd.f32 %v2729, %v2875
  %s2887 = scalar_lea.vmem %s6, 8
  %v2888 = vld [vmem:[%s2887] sm:$0xf]
  %v2890 = vsel %vm2590, %v2888, 0
  %2892 = vmatprep.subr.bf16.mxu0 %v2578
  %2893 = vmatpush1.bf16.msra.mxu0 %v2577
  %2894 = vmatprep.subr.bf16.mxu0 %v2584
  %2895 = vmatpush1.bf16.msra.mxu0 %v2583
  %2896 = vmatprep.subr.bf16.mxu0 0
  %2897 = vmatpush1.bf16.msra.mxu0 0
  %2898 = vmatprep.subr.bf16.mxu0 0
  %2899 = vmatpush1.bf16.msra.mxu0 0
  %2900 = vmatprep.subr.bf16.mxu0 0
  %2901 = vmatpush1.bf16.msra.mxu0 0
  %2902 = vmatprep.subr.bf16.mxu0 0
  %2903 = vmatpush1.bf16.msra.mxu0 0
  %2904 = vmatprep.subr.bf16.mxu0 0
  %2905 = vmatpush1.bf16.msra.mxu0 0
  %2906 = vmatprep.subr.bf16.mxu0 0
  %2907 = vmatpush1.bf16.msra.mxu0 0
  %2908 = vmatprep.subr.bf16.mxu0 0
  %2909 = vmatpush1.bf16.msra.mxu0 0
  %2910 = vmatprep.subr.bf16.mxu0 0
  %2911 = vmatpush1.bf16.msra.mxu0 0
  %2912 = vmatprep.subr.bf16.mxu0 0
  %2913 = vmatpush1.bf16.msra.mxu0 0
  %2914 = vmatprep.subr.bf16.mxu0 0
  %2915 = vmatpush1.bf16.msra.mxu0 0
  %2916 = vmatprep.subr.bf16.mxu0 0
  %2917 = vmatpush1.bf16.msra.mxu0 0
  %2918 = vmatprep.subr.bf16.mxu0 0
  %2919 = vmatpush1.bf16.msra.mxu0 0
  %2920 = vmatprep.subr.bf16.mxu0 0
  %2921 = vmatpush1.bf16.msra.mxu0 0
  %2922 = vmatprep.subr.bf16.mxu0 0
  %2923 = vmatpush1.bf16.msra.mxu0 0
  %2924 = vmatprep.mubr.bf16.mxu0 0
  %2925 = vmatmul.mubr.bf16.gmra.mrb[0].mxu0 %v2890
  %v2926 = vpop.f32.mrb[0].mxu0
  %v2927 = vadd.f32 0.0, %v2926
  %v2928 = vpop.f32.mrb[0].mxu0
  %v2929 = vadd.f32 0.0, %v2928
  %v2930 = vpop.f32.mrb[0].mxu0
  %v2931 = vpop.f32.mrb[0].mxu0
  %2932 = vdwg.mxu0
  %2933 = vmatprep.subr.bf16.mxu0 %v2580
  %2934 = vmatpush1.bf16.msra.mxu0 %v2579
  %2935 = vmatprep.subr.bf16.mxu0 %v2586
  %2936 = vmatpush1.bf16.msra.mxu0 %v2585
  %2937 = vmatprep.subr.bf16.mxu0 0
  %2938 = vmatpush1.bf16.msra.mxu0 0
  %2939 = vmatprep.subr.bf16.mxu0 0
  %2940 = vmatpush1.bf16.msra.mxu0 0
  %2941 = vmatprep.subr.bf16.mxu0 0
  %2942 = vmatpush1.bf16.msra.mxu0 0
  %2943 = vmatprep.subr.bf16.mxu0 0
  %2944 = vmatpush1.bf16.msra.mxu0 0
  %2945 = vmatprep.subr.bf16.mxu0 0
  %2946 = vmatpush1.bf16.msra.mxu0 0
  %2947 = vmatprep.subr.bf16.mxu0 0
  %2948 = vmatpush1.bf16.msra.mxu0 0
  %2949 = vmatprep.subr.bf16.mxu0 0
  %2950 = vmatpush1.bf16.msra.mxu0 0
  %2951 = vmatprep.subr.bf16.mxu0 0
  %2952 = vmatpush1.bf16.msra.mxu0 0
  %2953 = vmatprep.subr.bf16.mxu0 0
  %2954 = vmatpush1.bf16.msra.mxu0 0
  %2955 = vmatprep.subr.bf16.mxu0 0
  %2956 = vmatpush1.bf16.msra.mxu0 0
  %2957 = vmatprep.subr.bf16.mxu0 0
  %2958 = vmatpush1.bf16.msra.mxu0 0
  %2959 = vmatprep.subr.bf16.mxu0 0
  %2960 = vmatpush1.bf16.msra.mxu0 0
  %2961 = vmatprep.subr.bf16.mxu0 0
  %2962 = vmatpush1.bf16.msra.mxu0 0
  %2963 = vmatprep.subr.bf16.mxu0 0
  %2964 = vmatpush1.bf16.msra.mxu0 0
  %2965 = vmatprep.mubr.bf16.mxu0 0
  %2966 = vmatmul.mubr.bf16.gmra.mrb[0].mxu0 %v2890
  %v2967 = vpop.f32.mrb[0].mxu0
  %v2968 = vadd.f32 0.0, %v2967
  %v2969 = vpop.f32.mrb[0].mxu0
  %v2970 = vadd.f32 0.0, %v2969
  %v2971 = vpop.f32.mrb[0].mxu0
  %v2972 = vpop.f32.mrb[0].mxu0
  %2973 = vdwg.mxu0
  %2974 = vmatprep.subr.bf16.mxu0 %v2582
  %2975 = vmatpush1.bf16.msra.mxu0 %v2581
  %2976 = vmatprep.subr.bf16.mxu0 %v2588
  %2977 = vmatpush1.bf16.msra.mxu0 %v2587
  %2978 = vmatprep.subr.bf16.mxu0 0
  %2979 = vmatpush1.bf16.msra.mxu0 0
  %2980 = vmatprep.subr.bf16.mxu0 0
  %2981 = vmatpush1.bf16.msra.mxu0 0
  %2982 = vmatprep.subr.bf16.mxu0 0
  %2983 = vmatpush1.bf16.msra.mxu0 0
  %2984 = vmatprep.subr.bf16.mxu0 0
  %2985 = vmatpush1.bf16.msra.mxu0 0
  %2986 = vmatprep.subr.bf16.mxu0 0
  %2987 = vmatpush1.bf16.msra.mxu0 0
  %2988 = vmatprep.subr.bf16.mxu0 0
  %2989 = vmatpush1.bf16.msra.mxu0 0
  %2990 = vmatprep.subr.bf16.mxu0 0
  %2991 = vmatpush1.bf16.msra.mxu0 0
  %2992 = vmatprep.subr.bf16.mxu0 0
  %2993 = vmatpush1.bf16.msra.mxu0 0
  %2994 = vmatprep.subr.bf16.mxu0 0
  %2995 = vmatpush1.bf16.msra.mxu0 0
  %2996 = vmatprep.subr.bf16.mxu0 0
  %2997 = vmatpush1.bf16.msra.mxu0 0
  %2998 = vmatprep.subr.bf16.mxu0 0
  %2999 = vmatpush1.bf16.msra.mxu0 0
  %3000 = vmatprep.subr.bf16.mxu0 0
  %3001 = vmatpush1.bf16.msra.mxu0 0
  %3002 = vmatprep.subr.bf16.mxu0 0
  %3003 = vmatpush1.bf16.msra.mxu0 0
  %3004 = vmatprep.subr.bf16.mxu0 0
  %3005 = vmatpush1.bf16.msra.mxu0 0
  %3006 = vmatprep.mubr.bf16.mxu0 0
  %3007 = vmatmul.mubr.bf16.gmra.mrb[0].mxu0 %v2890
  %v3008 = vpop.f32.mrb[0].mxu0
  %v3009 = vadd.f32 0.0, %v3008
  %v3010 = vpop.f32.mrb[0].mxu0
  %v3011 = vadd.f32 0.0, %v3010
  %v3012 = vpop.f32.mrb[0].mxu0
  %v3013 = vpop.f32.mrb[0].mxu0
  %3014 = vdwg.mxu0
  %3015 = vrot.lane.b32.xlu0 %v2927, 17
  %v3016 = vpop.permute.xlu0 %3015
  %3017 = vrot.lane.b32.xlu0 %v2929, 17
  %v3018 = vpop.permute.xlu0 %3017
  %3019 = vrot.lane.b32.xlu0 %v2968, 17
  %v3020 = vpop.permute.xlu0 %3019
  %3021 = vrot.lane.b32.xlu0 %v2970, 17
  %v3022 = vpop.permute.xlu0 %3021
  %3023 = vrot.lane.b32.xlu0 %v3009, 17
  %v3024 = vpop.permute.xlu0 %3023
  %3025 = vrot.lane.b32.xlu0 %v3011, 17
  %v3026 = vpop.permute.xlu0 %3025
  %v3027 = vsel %vm741, %v3024, %v3026
  %v3028 = vsel %vm741, %v3022, %v3024
  %v3029 = vsel %vm741, %v3020, %v3022
  %v3030 = vsel %vm741, %v3018, %v3020
  %v3031 = vsel %vm741, %v3016, %v3018
  %v3032 = vsel %vm741, %v3026, %v3016
  %v3033 = vadd.f32 %v2881, %v3032
  %v3034 = vadd.f32 %v2882, %v3031
  %v3035 = vadd.f32 %v2883, %v3030
  %v3036 = vadd.f32 %v2884, %v3029
  %v3037 = vadd.f32 %v2885, %v3028
  %v3038 = vadd.f32 %v2886, %v3027
  %s3039 = scalar_lea.vmem %s6, 12
  %v3040 = vld [vmem:[%s3039] sm:$0xf]
  %v3042 = vsel %vm2590, %v3040, 0
  %3044 = vmatprep.subr.bf16.mxu0 %v2578
  %3045 = vmatpush1.bf16.msra.mxu0 %v2577
  %3046 = vmatprep.subr.bf16.mxu0 %v2584
  %3047 = vmatpush1.bf16.msra.mxu0 %v2583
  %3048 = vmatprep.subr.bf16.mxu0 0
  %3049 = vmatpush1.bf16.msra.mxu0 0
  %3050 = vmatprep.subr.bf16.mxu0 0
  %3051 = vmatpush1.bf16.msra.mxu0 0
  %3052 = vmatprep.subr.bf16.mxu0 0
  %3053 = vmatpush1.bf16.msra.mxu0 0
  %3054 = vmatprep.subr.bf16.mxu0 0
  %3055 = vmatpush1.bf16.msra.mxu0 0
  %3056 = vmatprep.subr.bf16.mxu0 0
  %3057 = vmatpush1.bf16.msra.mxu0 0
  %3058 = vmatprep.subr.bf16.mxu0 0
  %3059 = vmatpush1.bf16.msra.mxu0 0
  %3060 = vmatprep.subr.bf16.mxu0 0
  %3061 = vmatpush1.bf16.msra.mxu0 0
  %3062 = vmatprep.subr.bf16.mxu0 0
  %3063 = vmatpush1.bf16.msra.mxu0 0
  %3064 = vmatprep.subr.bf16.mxu0 0
  %3065 = vmatpush1.bf16.msra.mxu0 0
  %3066 = vmatprep.subr.bf16.mxu0 0
  %3067 = vmatpush1.bf16.msra.mxu0 0
  %3068 = vmatprep.subr.bf16.mxu0 0
  %3069 = vmatpush1.bf16.msra.mxu0 0
  %3070 = vmatprep.subr.bf16.mxu0 0
  %3071 = vmatpush1.bf16.msra.mxu0 0
  %3072 = vmatprep.subr.bf16.mxu0 0
  %3073 = vmatpush1.bf16.msra.mxu0 0
  %3074 = vmatprep.subr.bf16.mxu0 0
  %3075 = vmatpush1.bf16.msra.mxu0 0
  %3076 = vmatprep.mubr.bf16.mxu0 0
  %3077 = vmatmul.mubr.bf16.gmra.mrb[0].mxu0 %v3042
  %v3078 = vpop.f32.mrb[0].mxu0
  %v3079 = vadd.f32 0.0, %v3078
  %v3080 = vpop.f32.mrb[0].mxu0
  %v3081 = vadd.f32 0.0, %v3080
  %v3082 = vpop.f32.mrb[0].mxu0
  %v3083 = vpop.f32.mrb[0].mxu0
  %3084 = vdwg.mxu0
  %3085 = vmatprep.subr.bf16.mxu0 %v2580
  %3086 = vmatpush1.bf16.msra.mxu0 %v2579
  %3087 = vmatprep.subr.bf16.mxu0 %v2586
  %3088 = vmatpush1.bf16.msra.mxu0 %v2585
  %3089 = vmatprep.subr.bf16.mxu0 0
  %3090 = vmatpush1.bf16.msra.mxu0 0
  %3091 = vmatprep.subr.bf16.mxu0 0
  %3092 = vmatpush1.bf16.msra.mxu0 0
  %3093 = vmatprep.subr.bf16.mxu0 0
  %3094 = vmatpush1.bf16.msra.mxu0 0
  %3095 = vmatprep.subr.bf16.mxu0 0
  %3096 = vmatpush1.bf16.msra.mxu0 0
  %3097 = vmatprep.subr.bf16.mxu0 0
  %3098 = vmatpush1.bf16.msra.mxu0 0
  %3099 = vmatprep.subr.bf16.mxu0 0
  %3100 = vmatpush1.bf16.msra.mxu0 0
  %3101 = vmatprep.subr.bf16.mxu0 0
  %3102 = vmatpush1.bf16.msra.mxu0 0
  %3103 = vmatprep.subr.bf16.mxu0 0
  %3104 = vmatpush1.bf16.msra.mxu0 0
  %3105 = vmatprep.subr.bf16.mxu0 0
  %3106 = vmatpush1.bf16.msra.mxu0 0
  %3107 = vmatprep.subr.bf16.mxu0 0
  %3108 = vmatpush1.bf16.msra.mxu0 0
  %3109 = vmatprep.subr.bf16.mxu0 0
  %3110 = vmatpush1.bf16.msra.mxu0 0
  %3111 = vmatprep.subr.bf16.mxu0 0
  %3112 = vmatpush1.bf16.msra.mxu0 0
  %3113 = vmatprep.subr.bf16.mxu0 0
  %3114 = vmatpush1.bf16.msra.mxu0 0
  %3115 = vmatprep.subr.bf16.mxu0 0
  %3116 = vmatpush1.bf16.msra.mxu0 0
  %3117 = vmatprep.mubr.bf16.mxu0 0
  %3118 = vmatmul.mubr.bf16.gmra.mrb[0].mxu0 %v3042
  %v3119 = vpop.f32.mrb[0].mxu0
  %v3120 = vadd.f32 0.0, %v3119
  %v3121 = vpop.f32.mrb[0].mxu0
  %v3122 = vadd.f32 0.0, %v3121
  %v3123 = vpop.f32.mrb[0].mxu0
  %v3124 = vpop.f32.mrb[0].mxu0
  %3125 = vdwg.mxu0
  %3126 = vmatprep.subr.bf16.mxu0 %v2582
  %3127 = vmatpush1.bf16.msra.mxu0 %v2581
  %3128 = vmatprep.subr.bf16.mxu0 %v2588
  %3129 = vmatpush1.bf16.msra.mxu0 %v2587
  %3130 = vmatprep.subr.bf16.mxu0 0
  %3131 = vmatpush1.bf16.msra.mxu0 0
  %3132 = vmatprep.subr.bf16.mxu0 0
  %3133 = vmatpush1.bf16.msra.mxu0 0
  %3134 = vmatprep.subr.bf16.mxu0 0
  %3135 = vmatpush1.bf16.msra.mxu0 0
  %3136 = vmatprep.subr.bf16.mxu0 0
  %3137 = vmatpush1.bf16.msra.mxu0 0
  %3138 = vmatprep.subr.bf16.mxu0 0
  %3139 = vmatpush1.bf16.msra.mxu0 0
  %3140 = vmatprep.subr.bf16.mxu0 0
  %3141 = vmatpush1.bf16.msra.mxu0 0
  %3142 = vmatprep.subr.bf16.mxu0 0
  %3143 = vmatpush1.bf16.msra.mxu0 0
  %3144 = vmatprep.subr.bf16.mxu0 0
  %3145 = vmatpush1.bf16.msra.mxu0 0
  %3146 = vmatprep.subr.bf16.mxu0 0
  %3147 = vmatpush1.bf16.msra.mxu0 0
  %3148 = vmatprep.subr.bf16.mxu0 0
  %3149 = vmatpush1.bf16.msra.mxu0 0
  %3150 = vmatprep.subr.bf16.mxu0 0
  %3151 = vmatpush1.bf16.msra.mxu0 0
  %3152 = vmatprep.subr.bf16.mxu0 0
  %3153 = vmatpush1.bf16.msra.mxu0 0
  %3154 = vmatprep.subr.bf16.mxu0 0
  %3155 = vmatpush1.bf16.msra.mxu0 0
  %3156 = vmatprep.subr.bf16.mxu0 0
  %3157 = vmatpush1.bf16.msra.mxu0 0
  %3158 = vmatprep.mubr.bf16.mxu0 0
  %3159 = vmatmul.mubr.bf16.gmra.mrb[0].mxu0 %v3042
  %v3160 = vpop.f32.mrb[0].mxu0
  %v3161 = vadd.f32 0.0, %v3160
  %v3162 = vpop.f32.mrb[0].mxu0
  %v3163 = vadd.f32 0.0, %v3162
  %v3164 = vpop.f32.mrb[0].mxu0
  %v3165 = vpop.f32.mrb[0].mxu0
  %3166 = vdwg.mxu0
  %3167 = vrot.lane.b32.xlu0 %v3079, 1
  %v3168 = vpop.permute.xlu0 %3167
  %3169 = vrot.lane.b32.xlu0 %v3081, 1
  %v3170 = vpop.permute.xlu0 %3169
  %3171 = vrot.lane.b32.xlu0 %v3120, 1
  %v3172 = vpop.permute.xlu0 %3171
  %3173 = vrot.lane.b32.xlu0 %v3122, 1
  %v3174 = vpop.permute.xlu0 %3173
  %3175 = vrot.lane.b32.xlu0 %v3161, 1
  %v3176 = vpop.permute.xlu0 %3175
  %3177 = vrot.lane.b32.xlu0 %v3163, 1
  %v3178 = vpop.permute.xlu0 %3177
  %v3179 = vsel %vm988, %v3176, %v3178
  %v3180 = vsel %vm988, %v3174, %v3176
  %v3181 = vsel %vm988, %v3172, %v3174
  %v3182 = vsel %vm988, %v3170, %v3172
  %v3183 = vsel %vm988, %v3168, %v3170
  %v3184 = vsel %vm988, %v3178, %v3168
  %v3185 = vadd.f32 %v3033, %v3184
  %v3186 = vadd.f32 %v3034, %v3183
  %v3187 = vadd.f32 %v3035, %v3182
  %v3188 = vadd.f32 %v3036, %v3181
  %v3189 = vadd.f32 %v3037, %v3180
  %v3190 = vadd.f32 %v3038, %v3179
  %s3191 = scalar_lea.vmem %s6, 16
  %v3192 = vld [vmem:[%s3191] sm:$0xf]
  %v3194 = vsel %vm2590, %v3192, 0
  %3196 = vmatprep.subr.bf16.mxu0 %v2578
  %3197 = vmatpush1.bf16.msra.mxu0 %v2577
  %3198 = vmatprep.subr.bf16.mxu0 %v2584
  %3199 = vmatpush1.bf16.msra.mxu0 %v2583
  %3200 = vmatprep.subr.bf16.mxu0 0
  %3201 = vmatpush1.bf16.msra.mxu0 0
  %3202 = vmatprep.subr.bf16.mxu0 0
  %3203 = vmatpush1.bf16.msra.mxu0 0
  %3204 = vmatprep.subr.bf16.mxu0 0
  %3205 = vmatpush1.bf16.msra.mxu0 0
  %3206 = vmatprep.subr.bf16.mxu0 0
  %3207 = vmatpush1.bf16.msra.mxu0 0
  %3208 = vmatprep.subr.bf16.mxu0 0
  %3209 = vmatpush1.bf16.msra.mxu0 0
  %3210 = vmatprep.subr.bf16.mxu0 0
  %3211 = vmatpush1.bf16.msra.mxu0 0
  %3212 = vmatprep.subr.bf16.mxu0 0
  %3213 = vmatpush1.bf16.msra.mxu0 0
  %3214 = vmatprep.subr.bf16.mxu0 0
  %3215 = vmatpush1.bf16.msra.mxu0 0
  %3216 = vmatprep.subr.bf16.mxu0 0
  %3217 = vmatpush1.bf16.msra.mxu0 0
  %3218 = vmatprep.subr.bf16.mxu0 0
  %3219 = vmatpush1.bf16.msra.mxu0 0
  %3220 = vmatprep.subr.bf16.mxu0 0
  %3221 = vmatpush1.bf16.msra.mxu0 0
  %3222 = vmatprep.subr.bf16.mxu0 0
  %3223 = vmatpush1.bf16.msra.mxu0 0
  %3224 = vmatprep.subr.bf16.mxu0 0
  %3225 = vmatpush1.bf16.msra.mxu0 0
  %3226 = vmatprep.subr.bf16.mxu0 0
  %3227 = vmatpush1.bf16.msra.mxu0 0
  %3228 = vmatprep.mubr.bf16.mxu0 0
  %3229 = vmatmul.mubr.bf16.gmra.mrb[0].mxu0 %v3194
  %v3230 = vpop.f32.mrb[0].mxu0
  %v3231 = vadd.f32 0.0, %v3230
  %v3232 = vpop.f32.mrb[0].mxu0
  %v3233 = vadd.f32 0.0, %v3232
  %v3234 = vpop.f32.mrb[0].mxu0
  %v3235 = vpop.f32.mrb[0].mxu0
  %3236 = vdwg.mxu0
  %3237 = vmatprep.subr.bf16.mxu0 %v2580
  %3238 = vmatpush1.bf16.msra.mxu0 %v2579
  %3239 = vmatprep.subr.bf16.mxu0 %v2586
  %3240 = vmatpush1.bf16.msra.mxu0 %v2585
  %3241 = vmatprep.subr.bf16.mxu0 0
  %3242 = vmatpush1.bf16.msra.mxu0 0
  %3243 = vmatprep.subr.bf16.mxu0 0
  %3244 = vmatpush1.bf16.msra.mxu0 0
  %3245 = vmatprep.subr.bf16.mxu0 0
  %3246 = vmatpush1.bf16.msra.mxu0 0
  %3247 = vmatprep.subr.bf16.mxu0 0
  %3248 = vmatpush1.bf16.msra.mxu0 0
  %3249 = vmatprep.subr.bf16.mxu0 0
  %3250 = vmatpush1.bf16.msra.mxu0 0
  %3251 = vmatprep.subr.bf16.mxu0 0
  %3252 = vmatpush1.bf16.msra.mxu0 0
  %3253 = vmatprep.subr.bf16.mxu0 0
  %3254 = vmatpush1.bf16.msra.mxu0 0
  %3255 = vmatprep.subr.bf16.mxu0 0
  %3256 = vmatpush1.bf16.msra.mxu0 0
  %3257 = vmatprep.subr.bf16.mxu0 0
  %3258 = vmatpush1.bf16.msra.mxu0 0
  %3259 = vmatprep.subr.bf16.mxu0 0
  %3260 = vmatpush1.bf16.msra.mxu0 0
  %3261 = vmatprep.subr.bf16.mxu0 0
  %3262 = vmatpush1.bf16.msra.mxu0 0
  %3263 = vmatprep.subr.bf16.mxu0 0
  %3264 = vmatpush1.bf16.msra.mxu0 0
  %3265 = vmatprep.subr.bf16.mxu0 0
  %3266 = vmatpush1.bf16.msra.mxu0 0
  %3267 = vmatprep.subr.bf16.mxu0 0
  %3268 = vmatpush1.bf16.msra.mxu0 0
  %3269 = vmatprep.mubr.bf16.mxu0 0
  %3270 = vmatmul.mubr.bf16.gmra.mrb[0].mxu0 %v3194
  %v3271 = vpop.f32.mrb[0].mxu0
  %v3272 = vadd.f32 0.0, %v3271
  %v3273 = vpop.f32.mrb[0].mxu0
  %v3274 = vadd.f32 0.0, %v3273
  %v3275 = vpop.f32.mrb[0].mxu0
  %v3276 = vpop.f32.mrb[0].mxu0
  %3277 = vdwg.mxu0
  %3278 = vmatprep.subr.bf16.mxu0 %v2582
  %3279 = vmatpush1.bf16.msra.mxu0 %v2581
  %3280 = vmatprep.subr.bf16.mxu0 %v2588
  %3281 = vmatpush1.bf16.msra.mxu0 %v2587
  %3282 = vmatprep.subr.bf16.mxu0 0
  %3283 = vmatpush1.bf16.msra.mxu0 0
  %3284 = vmatprep.subr.bf16.mxu0 0
  %3285 = vmatpush1.bf16.msra.mxu0 0
  %3286 = vmatprep.subr.bf16.mxu0 0
  %3287 = vmatpush1.bf16.msra.mxu0 0
  %3288 = vmatprep.subr.bf16.mxu0 0
  %3289 = vmatpush1.bf16.msra.mxu0 0
  %3290 = vmatprep.subr.bf16.mxu0 0
  %3291 = vmatpush1.bf16.msra.mxu0 0
  %3292 = vmatprep.subr.bf16.mxu0 0
  %3293 = vmatpush1.bf16.msra.mxu0 0
  %3294 = vmatprep.subr.bf16.mxu0 0
  %3295 = vmatpush1.bf16.msra.mxu0 0
  %3296 = vmatprep.subr.bf16.mxu0 0
  %3297 = vmatpush1.bf16.msra.mxu0 0
  %3298 = vmatprep.subr.bf16.mxu0 0
  %3299 = vmatpush1.bf16.msra.mxu0 0
  %3300 = vmatprep.subr.bf16.mxu0 0
  %3301 = vmatpush1.bf16.msra.mxu0 0
  %3302 = vmatprep.subr.bf16.mxu0 0
  %3303 = vmatpush1.bf16.msra.mxu0 0
  %3304 = vmatprep.subr.bf16.mxu0 0
  %3305 = vmatpush1.bf16.msra.mxu0 0
  %3306 = vmatprep.subr.bf16.mxu0 0
  %3307 = vmatpush1.bf16.msra.mxu0 0
  %3308 = vmatprep.subr.bf16.mxu0 0
  %3309 = vmatpush1.bf16.msra.mxu0 0
  %3310 = vmatprep.mubr.bf16.mxu0 0
  %3311 = vmatmul.mubr.bf16.gmra.mrb[0].mxu0 %v3194
  %v3312 = vpop.f32.mrb[0].mxu0
  %v3313 = vadd.f32 0.0, %v3312
  %v3314 = vpop.f32.mrb[0].mxu0
  %v3315 = vadd.f32 0.0, %v3314
  %v3316 = vpop.f32.mrb[0].mxu0
  %v3317 = vpop.f32.mrb[0].mxu0
  %3318 = vdwg.mxu0
  %v3319 = vadd.f32 %v3185, %v3231
  %v3320 = vadd.f32 %v3186, %v3233
  %v3321 = vadd.f32 %v3187, %v3272
  %v3322 = vadd.f32 %v3188, %v3274
  %v3323 = vadd.f32 %v3189, %v3313
  %v3324 = vadd.f32 %v3190, %v3315
  %s3325 = scalar_lea.vmem %s6, 20
  %v3326 = vld [vmem:[%s3325] sm:$0xf]
  %v3328 = vsel %vm2590, %v3326, 0
  %3330 = vmatprep.subr.bf16.mxu0 %v2578
  %3331 = vmatpush1.bf16.msra.mxu0 %v2577
  %3332 = vmatprep.subr.bf16.mxu0 %v2584
  %3333 = vmatpush1.bf16.msra.mxu0 %v2583
  %3334 = vmatprep.subr.bf16.mxu0 0
  %3335 = vmatpush1.bf16.msra.mxu0 0
  %3336 = vmatprep.subr.bf16.mxu0 0
  %3337 = vmatpush1.bf16.msra.mxu0 0
  %3338 = vmatprep.subr.bf16.mxu0 0
  %3339 = vmatpush1.bf16.msra.mxu0 0
  %3340 = vmatprep.subr.bf16.mxu0 0
  %3341 = vmatpush1.bf16.msra.mxu0 0
  %3342 = vmatprep.subr.bf16.mxu0 0
  %3343 = vmatpush1.bf16.msra.mxu0 0
  %3344 = vmatprep.subr.bf16.mxu0 0
  %3345 = vmatpush1.bf16.msra.mxu0 0
  %3346 = vmatprep.subr.bf16.mxu0 0
  %3347 = vmatpush1.bf16.msra.mxu0 0
  %3348 = vmatprep.subr.bf16.mxu0 0
  %3349 = vmatpush1.bf16.msra.mxu0 0
  %3350 = vmatprep.subr.bf16.mxu0 0
  %3351 = vmatpush1.bf16.msra.mxu0 0
  %3352 = vmatprep.subr.bf16.mxu0 0
  %3353 = vmatpush1.bf16.msra.mxu0 0
  %3354 = vmatprep.subr.bf16.mxu0 0
  %3355 = vmatpush1.bf16.msra.mxu0 0
  %3356 = vmatprep.subr.bf16.mxu0 0
  %3357 = vmatpush1.bf16.msra.mxu0 0
  %3358 = vmatprep.subr.bf16.mxu0 0
  %3359 = vmatpush1.bf16.msra.mxu0 0
  %3360 = vmatprep.subr.bf16.mxu0 0
  %3361 = vmatpush1.bf16.msra.mxu0 0
  %3362 = vmatprep.mubr.bf16.mxu0 0
  %3363 = vmatmul.mubr.bf16.gmra.mrb[0].mxu0 %v3328
  %v3364 = vpop.f32.mrb[0].mxu0
  %v3365 = vadd.f32 0.0, %v3364
  %v3366 = vpop.f32.mrb[0].mxu0
  %v3367 = vadd.f32 0.0, %v3366
  %v3368 = vpop.f32.mrb[0].mxu0
  %v3369 = vpop.f32.mrb[0].mxu0
  %3370 = vdwg.mxu0
  %3371 = vmatprep.subr.bf16.mxu0 %v2580
  %3372 = vmatpush1.bf16.msra.mxu0 %v2579
  %3373 = vmatprep.subr.bf16.mxu0 %v2586
  %3374 = vmatpush1.bf16.msra.mxu0 %v2585
  %3375 = vmatprep.subr.bf16.mxu0 0
  %3376 = vmatpush1.bf16.msra.mxu0 0
  %3377 = vmatprep.subr.bf16.mxu0 0
  %3378 = vmatpush1.bf16.msra.mxu0 0
  %3379 = vmatprep.subr.bf16.mxu0 0
  %3380 = vmatpush1.bf16.msra.mxu0 0
  %3381 = vmatprep.subr.bf16.mxu0 0
  %3382 = vmatpush1.bf16.msra.mxu0 0
  %3383 = vmatprep.subr.bf16.mxu0 0
  %3384 = vmatpush1.bf16.msra.mxu0 0
  %3385 = vmatprep.subr.bf16.mxu0 0
  %3386 = vmatpush1.bf16.msra.mxu0 0
  %3387 = vmatprep.subr.bf16.mxu0 0
  %3388 = vmatpush1.bf16.msra.mxu0 0
  %3389 = vmatprep.subr.bf16.mxu0 0
  %3390 = vmatpush1.bf16.msra.mxu0 0
  %3391 = vmatprep.subr.bf16.mxu0 0
  %3392 = vmatpush1.bf16.msra.mxu0 0
  %3393 = vmatprep.subr.bf16.mxu0 0
  %3394 = vmatpush1.bf16.msra.mxu0 0
  %3395 = vmatprep.subr.bf16.mxu0 0
  %3396 = vmatpush1.bf16.msra.mxu0 0
  %3397 = vmatprep.subr.bf16.mxu0 0
  %3398 = vmatpush1.bf16.msra.mxu0 0
  %3399 = vmatprep.subr.bf16.mxu0 0
  %3400 = vmatpush1.bf16.msra.mxu0 0
  %3401 = vmatprep.subr.bf16.mxu0 0
  %3402 = vmatpush1.bf16.msra.mxu0 0
  %3403 = vmatprep.mubr.bf16.mxu0 0
  %3404 = vmatmul.mubr.bf16.gmra.mrb[0].mxu0 %v3328
  %v3405 = vpop.f32.mrb[0].mxu0
  %v3406 = vadd.f32 0.0, %v3405
  %v3407 = vpop.f32.mrb[0].mxu0
  %v3408 = vadd.f32 0.0, %v3407
  %v3409 = vpop.f32.mrb[0].mxu0
  %v3410 = vpop.f32.mrb[0].mxu0
  %3411 = vdwg.mxu0
  %3412 = vmatprep.subr.bf16.mxu0 %v2582
  %3413 = vmatpush1.bf16.msra.mxu0 %v2581
  %3414 = vmatprep.subr.bf16.mxu0 %v2588
  %3415 = vmatpush1.bf16.msra.mxu0 %v2587
  %3416 = vmatprep.subr.bf16.mxu0 0
  %3417 = vmatpush1.bf16.msra.mxu0 0
  %3418 = vmatprep.subr.bf16.mxu0 0
  %3419 = vmatpush1.bf16.msra.mxu0 0
  %3420 = vmatprep.subr.bf16.mxu0 0
  %3421 = vmatpush1.bf16.msra.mxu0 0
  %3422 = vmatprep.subr.bf16.mxu0 0
  %3423 = vmatpush1.bf16.msra.mxu0 0
  %3424 = vmatprep.subr.bf16.mxu0 0
  %3425 = vmatpush1.bf16.msra.mxu0 0
  %3426 = vmatprep.subr.bf16.mxu0 0
  %3427 = vmatpush1.bf16.msra.mxu0 0
  %3428 = vmatprep.subr.bf16.mxu0 0
  %3429 = vmatpush1.bf16.msra.mxu0 0
  %3430 = vmatprep.subr.bf16.mxu0 0
  %3431 = vmatpush1.bf16.msra.mxu0 0
  %3432 = vmatprep.subr.bf16.mxu0 0
  %3433 = vmatpush1.bf16.msra.mxu0 0
  %3434 = vmatprep.subr.bf16.mxu0 0
  %3435 = vmatpush1.bf16.msra.mxu0 0
  %3436 = vmatprep.subr.bf16.mxu0 0
  %3437 = vmatpush1.bf16.msra.mxu0 0
  %3438 = vmatprep.subr.bf16.mxu0 0
  %3439 = vmatpush1.bf16.msra.mxu0 0
  %3440 = vmatprep.subr.bf16.mxu0 0
  %3441 = vmatpush1.bf16.msra.mxu0 0
  %3442 = vmatprep.subr.bf16.mxu0 0
  %3443 = vmatpush1.bf16.msra.mxu0 0
  %3444 = vmatprep.mubr.bf16.mxu0 0
  %3445 = vmatmul.mubr.bf16.gmra.mrb[0].mxu0 %v3328
  %v3446 = vpop.f32.mrb[0].mxu0
  %v3447 = vadd.f32 0.0, %v3446
  %v3448 = vpop.f32.mrb[0].mxu0
  %v3449 = vadd.f32 0.0, %v3448
  %v3450 = vpop.f32.mrb[0].mxu0
  %v3451 = vpop.f32.mrb[0].mxu0
  %3452 = vdwg.mxu0
  %3453 = vrot.lane.b32.xlu0 %v3365, 127
  %v3454 = vpop.permute.xlu0 %3453
  %3455 = vrot.lane.b32.xlu0 %v3367, 127
  %v3456 = vpop.permute.xlu0 %3455
  %3457 = vrot.lane.b32.xlu0 %v3406, 127
  %v3458 = vpop.permute.xlu0 %3457
  %3459 = vrot.lane.b32.xlu0 %v3408, 127
  %v3460 = vpop.permute.xlu0 %3459
  %3461 = vrot.lane.b32.xlu0 %v3447, 127
  %v3462 = vpop.permute.xlu0 %3461
  %3463 = vrot.lane.b32.xlu0 %v3449, 127
  %v3464 = vpop.permute.xlu0 %3463
  %v3465 = vsel %vm1457, %v3462, %v3464
  %v3466 = vsel %vm1457, %v3460, %v3462
  %v3467 = vsel %vm1457, %v3458, %v3460
  %v3468 = vsel %vm1457, %v3456, %v3458
  %v3469 = vsel %vm1457, %v3454, %v3456
  %v3470 = vsel %vm1457, %v3464, %v3454
  %v3471 = vadd.f32 %v3319, %v3469
  %v3472 = vadd.f32 %v3320, %v3468
  %v3473 = vadd.f32 %v3321, %v3467
  %v3474 = vadd.f32 %v3322, %v3466
  %v3475 = vadd.f32 %v3323, %v3465
  %v3476 = vadd.f32 %v3324, %v3470
  %s3477 = scalar_lea.vmem %s6, 24
  %v3478 = vld [vmem:[%s3477] sm:$0xf]
  %v3480 = vsel %vm2590, %v3478, 0
  %3482 = vmatprep.subr.bf16.mxu0 %v2578
  %3483 = vmatpush1.bf16.msra.mxu0 %v2577
  %3484 = vmatprep.subr.bf16.mxu0 %v2584
  %3485 = vmatpush1.bf16.msra.mxu0 %v2583
  %3486 = vmatprep.subr.bf16.mxu0 0
  %3487 = vmatpush1.bf16.msra.mxu0 0
  %3488 = vmatprep.subr.bf16.mxu0 0
  %3489 = vmatpush1.bf16.msra.mxu0 0
  %3490 = vmatprep.subr.bf16.mxu0 0
  %3491 = vmatpush1.bf16.msra.mxu0 0
  %3492 = vmatprep.subr.bf16.mxu0 0
  %3493 = vmatpush1.bf16.msra.mxu0 0
  %3494 = vmatprep.subr.bf16.mxu0 0
  %3495 = vmatpush1.bf16.msra.mxu0 0
  %3496 = vmatprep.subr.bf16.mxu0 0
  %3497 = vmatpush1.bf16.msra.mxu0 0
  %3498 = vmatprep.subr.bf16.mxu0 0
  %3499 = vmatpush1.bf16.msra.mxu0 0
  %3500 = vmatprep.subr.bf16.mxu0 0
  %3501 = vmatpush1.bf16.msra.mxu0 0
  %3502 = vmatprep.subr.bf16.mxu0 0
  %3503 = vmatpush1.bf16.msra.mxu0 0
  %3504 = vmatprep.subr.bf16.mxu0 0
  %3505 = vmatpush1.bf16.msra.mxu0 0
  %3506 = vmatprep.subr.bf16.mxu0 0
  %3507 = vmatpush1.bf16.msra.mxu0 0
  %3508 = vmatprep.subr.bf16.mxu0 0
  %3509 = vmatpush1.bf16.msra.mxu0 0
  %3510 = vmatprep.subr.bf16.mxu0 0
  %3511 = vmatpush1.bf16.msra.mxu0 0
  %3512 = vmatprep.subr.bf16.mxu0 0
  %3513 = vmatpush1.bf16.msra.mxu0 0
  %3514 = vmatprep.mubr.bf16.mxu0 0
  %3515 = vmatmul.mubr.bf16.gmra.mrb[0].mxu0 %v3480
  %v3516 = vpop.f32.mrb[0].mxu0
  %v3517 = vadd.f32 0.0, %v3516
  %v3518 = vpop.f32.mrb[0].mxu0
  %v3519 = vadd.f32 0.0, %v3518
  %v3520 = vpop.f32.mrb[0].mxu0
  %v3521 = vpop.f32.mrb[0].mxu0
  %3522 = vdwg.mxu0
  %3523 = vmatprep.subr.bf16.mxu0 %v2580
  %3524 = vmatpush1.bf16.msra.mxu0 %v2579
  %3525 = vmatprep.subr.bf16.mxu0 %v2586
  %3526 = vmatpush1.bf16.msra.mxu0 %v2585
  %3527 = vmatprep.subr.bf16.mxu0 0
  %3528 = vmatpush1.bf16.msra.mxu0 0
  %3529 = vmatprep.subr.bf16.mxu0 0
  %3530 = vmatpush1.bf16.msra.mxu0 0
  %3531 = vmatprep.subr.bf16.mxu0 0
  %3532 = vmatpush1.bf16.msra.mxu0 0
  %3533 = vmatprep.subr.bf16.mxu0 0
  %3534 = vmatpush1.bf16.msra.mxu0 0
  %3535 = vmatprep.subr.bf16.mxu0 0
  %3536 = vmatpush1.bf16.msra.mxu0 0
  %3537 = vmatprep.subr.bf16.mxu0 0
  %3538 = vmatpush1.bf16.msra.mxu0 0
  %3539 = vmatprep.subr.bf16.mxu0 0
  %3540 = vmatpush1.bf16.msra.mxu0 0
  %3541 = vmatprep.subr.bf16.mxu0 0
  %3542 = vmatpush1.bf16.msra.mxu0 0
  %3543 = vmatprep.subr.bf16.mxu0 0
  %3544 = vmatpush1.bf16.msra.mxu0 0
  %3545 = vmatprep.subr.bf16.mxu0 0
  %3546 = vmatpush1.bf16.msra.mxu0 0
  %3547 = vmatprep.subr.bf16.mxu0 0
  %3548 = vmatpush1.bf16.msra.mxu0 0
  %3549 = vmatprep.subr.bf16.mxu0 0
  %3550 = vmatpush1.bf16.msra.mxu0 0
  %3551 = vmatprep.subr.bf16.mxu0 0
  %3552 = vmatpush1.bf16.msra.mxu0 0
  %3553 = vmatprep.subr.bf16.mxu0 0
  %3554 = vmatpush1.bf16.msra.mxu0 0
  %3555 = vmatprep.mubr.bf16.mxu0 0
  %3556 = vmatmul.mubr.bf16.gmra.mrb[0].mxu0 %v3480
  %v3557 = vpop.f32.mrb[0].mxu0
  %v3558 = vadd.f32 0.0, %v3557
  %v3559 = vpop.f32.mrb[0].mxu0
  %v3560 = vadd.f32 0.0, %v3559
  %v3561 = vpop.f32.mrb[0].mxu0
  %v3562 = vpop.f32.mrb[0].mxu0
  %3563 = vdwg.mxu0
  %3564 = vmatprep.subr.bf16.mxu0 %v2582
  %3565 = vmatpush1.bf16.msra.mxu0 %v2581
  %3566 = vmatprep.subr.bf16.mxu0 %v2588
  %3567 = vmatpush1.bf16.msra.mxu0 %v2587
  %3568 = vmatprep.subr.bf16.mxu0 0
  %3569 = vmatpush1.bf16.msra.mxu0 0
  %3570 = vmatprep.subr.bf16.mxu0 0
  %3571 = vmatpush1.bf16.msra.mxu0 0
  %3572 = vmatprep.subr.bf16.mxu0 0
  %3573 = vmatpush1.bf16.msra.mxu0 0
  %3574 = vmatprep.subr.bf16.mxu0 0
  %3575 = vmatpush1.bf16.msra.mxu0 0
  %3576 = vmatprep.subr.bf16.mxu0 0
  %3577 = vmatpush1.bf16.msra.mxu0 0
  %3578 = vmatprep.subr.bf16.mxu0 0
  %3579 = vmatpush1.bf16.msra.mxu0 0
  %3580 = vmatprep.subr.bf16.mxu0 0
  %3581 = vmatpush1.bf16.msra.mxu0 0
  %3582 = vmatprep.subr.bf16.mxu0 0
  %3583 = vmatpush1.bf16.msra.mxu0 0
  %3584 = vmatprep.subr.bf16.mxu0 0
  %3585 = vmatpush1.bf16.msra.mxu0 0
  %3586 = vmatprep.subr.bf16.mxu0 0
  %3587 = vmatpush1.bf16.msra.mxu0 0
  %3588 = vmatprep.subr.bf16.mxu0 0
  %3589 = vmatpush1.bf16.msra.mxu0 0
  %3590 = vmatprep.subr.bf16.mxu0 0
  %3591 = vmatpush1.bf16.msra.mxu0 0
  %3592 = vmatprep.subr.bf16.mxu0 0
  %3593 = vmatpush1.bf16.msra.mxu0 0
  %3594 = vmatprep.subr.bf16.mxu0 0
  %3595 = vmatpush1.bf16.msra.mxu0 0
  %3596 = vmatprep.mubr.bf16.mxu0 0
  %3597 = vmatmul.mubr.bf16.gmra.mrb[0].mxu0 %v3480
  %v3598 = vpop.f32.mrb[0].mxu0
  %v3599 = vadd.f32 0.0, %v3598
  %v3600 = vpop.f32.mrb[0].mxu0
  %v3601 = vadd.f32 0.0, %v3600
  %v3602 = vpop.f32.mrb[0].mxu0
  %v3603 = vpop.f32.mrb[0].mxu0
  %3604 = vdwg.mxu0
  %3605 = vrot.lane.b32.xlu0 %v3517, 111
  %v3606 = vpop.permute.xlu0 %3605
  %3607 = vrot.lane.b32.xlu0 %v3519, 111
  %v3608 = vpop.permute.xlu0 %3607
  %3609 = vrot.lane.b32.xlu0 %v3558, 111
  %v3610 = vpop.permute.xlu0 %3609
  %3611 = vrot.lane.b32.xlu0 %v3560, 111
  %v3612 = vpop.permute.xlu0 %3611
  %3613 = vrot.lane.b32.xlu0 %v3599, 111
  %v3614 = vpop.permute.xlu0 %3613
  %3615 = vrot.lane.b32.xlu0 %v3601, 111
  %v3616 = vpop.permute.xlu0 %3615
  %v3617 = vsel %vm1704, %v3614, %v3616
  %v3618 = vsel %vm1704, %v3612, %v3614
  %v3619 = vsel %vm1704, %v3610, %v3612
  %v3620 = vsel %vm1704, %v3608, %v3610
  %v3621 = vsel %vm1704, %v3606, %v3608
  %v3622 = vsel %vm1704, %v3616, %v3606
  %v3623 = vadd.f32 %v3471, %v3621
  %v3624 = vadd.f32 %v3472, %v3620
  %v3625 = vadd.f32 %v3473, %v3619
  %v3626 = vadd.f32 %v3474, %v3618
  %v3627 = vadd.f32 %v3475, %v3617
  %v3628 = vadd.f32 %v3476, %v3622
  %s3629 = scalar_lea.vmem %s6, 28
  %v3630 = vld [vmem:[%s3629] sm:$0xf]
  %v3632 = vsel %vm2590, %v3630, 0
  %3634 = vmatprep.subr.bf16.mxu0 %v2578
  %3635 = vmatpush1.bf16.msra.mxu0 %v2577
  %3636 = vmatprep.subr.bf16.mxu0 %v2584
  %3637 = vmatpush1.bf16.msra.mxu0 %v2583
  %3638 = vmatprep.subr.bf16.mxu0 0
  %3639 = vmatpush1.bf16.msra.mxu0 0
  %3640 = vmatprep.subr.bf16.mxu0 0
  %3641 = vmatpush1.bf16.msra.mxu0 0
  %3642 = vmatprep.subr.bf16.mxu0 0
  %3643 = vmatpush1.bf16.msra.mxu0 0
  %3644 = vmatprep.subr.bf16.mxu0 0
  %3645 = vmatpush1.bf16.msra.mxu0 0
  %3646 = vmatprep.subr.bf16.mxu0 0
  %3647 = vmatpush1.bf16.msra.mxu0 0
  %3648 = vmatprep.subr.bf16.mxu0 0
  %3649 = vmatpush1.bf16.msra.mxu0 0
  %3650 = vmatprep.subr.bf16.mxu0 0
  %3651 = vmatpush1.bf16.msra.mxu0 0
  %3652 = vmatprep.subr.bf16.mxu0 0
  %3653 = vmatpush1.bf16.msra.mxu0 0
  %3654 = vmatprep.subr.bf16.mxu0 0
  %3655 = vmatpush1.bf16.msra.mxu0 0
  %3656 = vmatprep.subr.bf16.mxu0 0
  %3657 = vmatpush1.bf16.msra.mxu0 0
  %3658 = vmatprep.subr.bf16.mxu0 0
  %3659 = vmatpush1.bf16.msra.mxu0 0
  %3660 = vmatprep.subr.bf16.mxu0 0
  %3661 = vmatpush1.bf16.msra.mxu0 0
  %3662 = vmatprep.subr.bf16.mxu0 0
  %3663 = vmatpush1.bf16.msra.mxu0 0
  %3664 = vmatprep.subr.bf16.mxu0 0
  %3665 = vmatpush1.bf16.msra.mxu0 0
  %3666 = vmatprep.mubr.bf16.mxu0 0
  %3667 = vmatmul.mubr.bf16.gmra.mrb[0].mxu0 %v3632
  %v3668 = vpop.f32.mrb[0].mxu0
  %v3669 = vadd.f32 0.0, %v3668
  %v3670 = vpop.f32.mrb[0].mxu0
  %v3671 = vadd.f32 0.0, %v3670
  %v3672 = vpop.f32.mrb[0].mxu0
  %v3673 = vpop.f32.mrb[0].mxu0
  %3674 = vdwg.mxu0
  %3675 = vmatprep.subr.bf16.mxu0 %v2580
  %3676 = vmatpush1.bf16.msra.mxu0 %v2579
  %3677 = vmatprep.subr.bf16.mxu0 %v2586
  %3678 = vmatpush1.bf16.msra.mxu0 %v2585
  %3679 = vmatprep.subr.bf16.mxu0 0
  %3680 = vmatpush1.bf16.msra.mxu0 0
  %3681 = vmatprep.subr.bf16.mxu0 0
  %3682 = vmatpush1.bf16.msra.mxu0 0
  %3683 = vmatprep.subr.bf16.mxu0 0
  %3684 = vmatpush1.bf16.msra.mxu0 0
  %3685 = vmatprep.subr.bf16.mxu0 0
  %3686 = vmatpush1.bf16.msra.mxu0 0
  %3687 = vmatprep.subr.bf16.mxu0 0
  %3688 = vmatpush1.bf16.msra.mxu0 0
  %3689 = vmatprep.subr.bf16.mxu0 0
  %3690 = vmatpush1.bf16.msra.mxu0 0
  %3691 = vmatprep.subr.bf16.mxu0 0
  %3692 = vmatpush1.bf16.msra.mxu0 0
  %3693 = vmatprep.subr.bf16.mxu0 0
  %3694 = vmatpush1.bf16.msra.mxu0 0
  %3695 = vmatprep.subr.bf16.mxu0 0
  %3696 = vmatpush1.bf16.msra.mxu0 0
  %3697 = vmatprep.subr.bf16.mxu0 0
  %3698 = vmatpush1.bf16.msra.mxu0 0
  %3699 = vmatprep.subr.bf16.mxu0 0
  %3700 = vmatpush1.bf16.msra.mxu0 0
  %3701 = vmatprep.subr.bf16.mxu0 0
  %3702 = vmatpush1.bf16.msra.mxu0 0
  %3703 = vmatprep.subr.bf16.mxu0 0
  %3704 = vmatpush1.bf16.msra.mxu0 0
  %3705 = vmatprep.subr.bf16.mxu0 0
  %3706 = vmatpush1.bf16.msra.mxu0 0
  %3707 = vmatprep.mubr.bf16.mxu0 0
  %3708 = vmatmul.mubr.bf16.gmra.mrb[0].mxu0 %v3632
  %v3709 = vpop.f32.mrb[0].mxu0
  %v3710 = vadd.f32 0.0, %v3709
  %v3711 = vpop.f32.mrb[0].mxu0
  %v3712 = vadd.f32 0.0, %v3711
  %v3713 = vpop.f32.mrb[0].mxu0
  %v3714 = vpop.f32.mrb[0].mxu0
  %3715 = vdwg.mxu0
  %3716 = vmatprep.subr.bf16.mxu0 %v2582
  %3717 = vmatpush1.bf16.msra.mxu0 %v2581
  %3718 = vmatprep.subr.bf16.mxu0 %v2588
  %3719 = vmatpush1.bf16.msra.mxu0 %v2587
  %3720 = vmatprep.subr.bf16.mxu0 0
  %3721 = vmatpush1.bf16.msra.mxu0 0
  %3722 = vmatprep.subr.bf16.mxu0 0
  %3723 = vmatpush1.bf16.msra.mxu0 0
  %3724 = vmatprep.subr.bf16.mxu0 0
  %3725 = vmatpush1.bf16.msra.mxu0 0
  %3726 = vmatprep.subr.bf16.mxu0 0
  %3727 = vmatpush1.bf16.msra.mxu0 0
  %3728 = vmatprep.subr.bf16.mxu0 0
  %3729 = vmatpush1.bf16.msra.mxu0 0
  %3730 = vmatprep.subr.bf16.mxu0 0
  %3731 = vmatpush1.bf16.msra.mxu0 0
  %3732 = vmatprep.subr.bf16.mxu0 0
  %3733 = vmatpush1.bf16.msra.mxu0 0
  %3734 = vmatprep.subr.bf16.mxu0 0
  %3735 = vmatpush1.bf16.msra.mxu0 0
  %3736 = vmatprep.subr.bf16.mxu0 0
  %3737 = vmatpush1.bf16.msra.mxu0 0
  %3738 = vmatprep.subr.bf16.mxu0 0
  %3739 = vmatpush1.bf16.msra.mxu0 0
  %3740 = vmatprep.subr.bf16.mxu0 0
  %3741 = vmatpush1.bf16.msra.mxu0 0
  %3742 = vmatprep.subr.bf16.mxu0 0
  %3743 = vmatpush1.bf16.msra.mxu0 0
  %3744 = vmatprep.subr.bf16.mxu0 0
  %3745 = vmatpush1.bf16.msra.mxu0 0
  %3746 = vmatprep.subr.bf16.mxu0 0
  %3747 = vmatpush1.bf16.msra.mxu0 0
  %3748 = vmatprep.mubr.bf16.mxu0 0
  %3749 = vmatmul.mubr.bf16.gmra.mrb[0].mxu0 %v3632
  %v3750 = vpop.f32.mrb[0].mxu0
  %v3751 = vadd.f32 0.0, %v3750
  %v3752 = vpop.f32.mrb[0].mxu0
  %v3753 = vadd.f32 0.0, %v3752
  %v3754 = vpop.f32.mrb[0].mxu0
  %v3755 = vpop.f32.mrb[0].mxu0
  %3756 = vdwg.mxu0
  %3757 = vrot.lane.b32.xlu0 %v3669, 110
  %v3758 = vpop.permute.xlu0 %3757
  %3759 = vrot.lane.b32.xlu0 %v3671, 110
  %v3760 = vpop.permute.xlu0 %3759
  %3761 = vrot.lane.b32.xlu0 %v3710, 110
  %v3762 = vpop.permute.xlu0 %3761
  %3763 = vrot.lane.b32.xlu0 %v3712, 110
  %v3764 = vpop.permute.xlu0 %3763
  %3765 = vrot.lane.b32.xlu0 %v3751, 110
  %v3766 = vpop.permute.xlu0 %3765
  %3767 = vrot.lane.b32.xlu0 %v3753, 110
  %v3768 = vpop.permute.xlu0 %3767
  %v3769 = vsel %vm1951, %v3766, %v3768
  %v3770 = vsel %vm1951, %v3764, %v3766
  %v3771 = vsel %vm1951, %v3762, %v3764
  %v3772 = vsel %vm1951, %v3760, %v3762
  %v3773 = vsel %vm1951, %v3758, %v3760
  %v3774 = vsel %vm1951, %v3768, %v3758
  %v3775 = vadd.f32 %v3623, %v3773
  %v3776 = vadd.f32 %v3624, %v3772
  %v3777 = vadd.f32 %v3625, %v3771
  %v3778 = vadd.f32 %v3626, %v3770
  %v3779 = vadd.f32 %v3627, %v3769
  %v3780 = vadd.f32 %v3628, %v3774
  %s3781 = scalar_lea.vmem %s6, 32
  %v3782 = vld [vmem:[%s3781] sm:$0xf]
  %v3784 = vsel %vm2590, %v3782, 0
  %3786 = vmatprep.subr.bf16.mxu0 %v2578
  %3787 = vmatpush1.bf16.msra.mxu0 %v2577
  %3788 = vmatprep.subr.bf16.mxu0 %v2584
  %3789 = vmatpush1.bf16.msra.mxu0 %v2583
  %3790 = vmatprep.subr.bf16.mxu0 0
  %3791 = vmatpush1.bf16.msra.mxu0 0
  %3792 = vmatprep.subr.bf16.mxu0 0
  %3793 = vmatpush1.bf16.msra.mxu0 0
  %3794 = vmatprep.subr.bf16.mxu0 0
  %3795 = vmatpush1.bf16.msra.mxu0 0
  %3796 = vmatprep.subr.bf16.mxu0 0
  %3797 = vmatpush1.bf16.msra.mxu0 0
  %3798 = vmatprep.subr.bf16.mxu0 0
  %3799 = vmatpush1.bf16.msra.mxu0 0
  %3800 = vmatprep.subr.bf16.mxu0 0
  %3801 = vmatpush1.bf16.msra.mxu0 0
  %3802 = vmatprep.subr.bf16.mxu0 0
  %3803 = vmatpush1.bf16.msra.mxu0 0
  %3804 = vmatprep.subr.bf16.mxu0 0
  %3805 = vmatpush1.bf16.msra.mxu0 0
  %3806 = vmatprep.subr.bf16.mxu0 0
  %3807 = vmatpush1.bf16.msra.mxu0 0
  %3808 = vmatprep.subr.bf16.mxu0 0
  %3809 = vmatpush1.bf16.msra.mxu0 0
  %3810 = vmatprep.subr.bf16.mxu0 0
  %3811 = vmatpush1.bf16.msra.mxu0 0
  %3812 = vmatprep.subr.bf16.mxu0 0
  %3813 = vmatpush1.bf16.msra.mxu0 0
  %3814 = vmatprep.subr.bf16.mxu0 0
  %3815 = vmatpush1.bf16.msra.mxu0 0
  %3816 = vmatprep.subr.bf16.mxu0 0
  %3817 = vmatpush1.bf16.msra.mxu0 0
  %3818 = vmatprep.mubr.bf16.mxu0 0
  %3819 = vmatmul.mubr.bf16.gmra.mrb[0].mxu0 %v3784
  %v3820 = vpop.f32.mrb[0].mxu0
  %v3821 = vadd.f32 0.0, %v3820
  %v3822 = vpop.f32.mrb[0].mxu0
  %v3823 = vadd.f32 0.0, %v3822
  %v3824 = vpop.f32.mrb[0].mxu0
  %v3825 = vpop.f32.mrb[0].mxu0
  %3826 = vdwg.mxu0
  %3827 = vmatprep.subr.bf16.mxu0 %v2580
  %3828 = vmatpush1.bf16.msra.mxu0 %v2579
  %3829 = vmatprep.subr.bf16.mxu0 %v2586
  %3830 = vmatpush1.bf16.msra.mxu0 %v2585
  %3831 = vmatprep.subr.bf16.mxu0 0
  %3832 = vmatpush1.bf16.msra.mxu0 0
  %3833 = vmatprep.subr.bf16.mxu0 0
  %3834 = vmatpush1.bf16.msra.mxu0 0
  %3835 = vmatprep.subr.bf16.mxu0 0
  %3836 = vmatpush1.bf16.msra.mxu0 0
  %3837 = vmatprep.subr.bf16.mxu0 0
  %3838 = vmatpush1.bf16.msra.mxu0 0
  %3839 = vmatprep.subr.bf16.mxu0 0
  %3840 = vmatpush1.bf16.msra.mxu0 0
  %3841 = vmatprep.subr.bf16.mxu0 0
  %3842 = vmatpush1.bf16.msra.mxu0 0
  %3843 = vmatprep.subr.bf16.mxu0 0
  %3844 = vmatpush1.bf16.msra.mxu0 0
  %3845 = vmatprep.subr.bf16.mxu0 0
  %3846 = vmatpush1.bf16.msra.mxu0 0
  %3847 = vmatprep.subr.bf16.mxu0 0
  %3848 = vmatpush1.bf16.msra.mxu0 0
  %3849 = vmatprep.subr.bf16.mxu0 0
  %3850 = vmatpush1.bf16.msra.mxu0 0
  %3851 = vmatprep.subr.bf16.mxu0 0
  %3852 = vmatpush1.bf16.msra.mxu0 0
  %3853 = vmatprep.subr.bf16.mxu0 0
  %3854 = vmatpush1.bf16.msra.mxu0 0
  %3855 = vmatprep.subr.bf16.mxu0 0
  %3856 = vmatpush1.bf16.msra.mxu0 0
  %3857 = vmatprep.subr.bf16.mxu0 0
  %3858 = vmatpush1.bf16.msra.mxu0 0
  %3859 = vmatprep.mubr.bf16.mxu0 0
  %3860 = vmatmul.mubr.bf16.gmra.mrb[0].mxu0 %v3784
  %v3861 = vpop.f32.mrb[0].mxu0
  %v3862 = vadd.f32 0.0, %v3861
  %v3863 = vpop.f32.mrb[0].mxu0
  %v3864 = vadd.f32 0.0, %v3863
  %v3865 = vpop.f32.mrb[0].mxu0
  %v3866 = vpop.f32.mrb[0].mxu0
  %3867 = vdwg.mxu0
  %3868 = vmatprep.subr.bf16.mxu0 %v2582
  %3869 = vmatpush1.bf16.msra.mxu0 %v2581
  %3870 = vmatprep.subr.bf16.mxu0 %v2588
  %3871 = vmatpush1.bf16.msra.mxu0 %v2587
  %3872 = vmatprep.subr.bf16.mxu0 0
  %3873 = vmatpush1.bf16.msra.mxu0 0
  %3874 = vmatprep.subr.bf16.mxu0 0
  %3875 = vmatpush1.bf16.msra.mxu0 0
  %3876 = vmatprep.subr.bf16.mxu0 0
  %3877 = vmatpush1.bf16.msra.mxu0 0
  %3878 = vmatprep.subr.bf16.mxu0 0
  %3879 = vmatpush1.bf16.msra.mxu0 0
  %3880 = vmatprep.subr.bf16.mxu0 0
  %3881 = vmatpush1.bf16.msra.mxu0 0
  %3882 = vmatprep.subr.bf16.mxu0 0
  %3883 = vmatpush1.bf16.msra.mxu0 0
  %3884 = vmatprep.subr.bf16.mxu0 0
  %3885 = vmatpush1.bf16.msra.mxu0 0
  %3886 = vmatprep.subr.bf16.mxu0 0
  %3887 = vmatpush1.bf16.msra.mxu0 0
  %3888 = vmatprep.subr.bf16.mxu0 0
  %3889 = vmatpush1.bf16.msra.mxu0 0
  %3890 = vmatprep.subr.bf16.mxu0 0
  %3891 = vmatpush1.bf16.msra.mxu0 0
  %3892 = vmatprep.subr.bf16.mxu0 0
  %3893 = vmatpush1.bf16.msra.mxu0 0
  %3894 = vmatprep.subr.bf16.mxu0 0
  %3895 = vmatpush1.bf16.msra.mxu0 0
  %3896 = vmatprep.subr.bf16.mxu0 0
  %3897 = vmatpush1.bf16.msra.mxu0 0
  %3898 = vmatprep.subr.bf16.mxu0 0
  %3899 = vmatpush1.bf16.msra.mxu0 0
  %3900 = vmatprep.mubr.bf16.mxu0 0
  %3901 = vmatmul.mubr.bf16.gmra.mrb[0].mxu0 %v3784
  %v3902 = vpop.f32.mrb[0].mxu0
  %v3903 = vadd.f32 0.0, %v3902
  %v3904 = vpop.f32.mrb[0].mxu0
  %v3905 = vadd.f32 0.0, %v3904
  %v3906 = vpop.f32.mrb[0].mxu0
  %v3907 = vpop.f32.mrb[0].mxu0
  %3908 = vdwg.mxu0
  %3909 = vrot.lane.b32.xlu0 %v3821, 109
  %v3910 = vpop.permute.xlu0 %3909
  %3911 = vrot.lane.b32.xlu0 %v3823, 109
  %v3912 = vpop.permute.xlu0 %3911
  %3913 = vrot.lane.b32.xlu0 %v3862, 109
  %v3914 = vpop.permute.xlu0 %3913
  %3915 = vrot.lane.b32.xlu0 %v3864, 109
  %v3916 = vpop.permute.xlu0 %3915
  %3917 = vrot.lane.b32.xlu0 %v3903, 109
  %v3918 = vpop.permute.xlu0 %3917
  %3919 = vrot.lane.b32.xlu0 %v3905, 109
  %v3920 = vpop.permute.xlu0 %3919
  %v3921 = vsel %vm2198, %v3918, %v3920
  %v3922 = vsel %vm2198, %v3916, %v3918
  %v3923 = vsel %vm2198, %v3914, %v3916
  %v3924 = vsel %vm2198, %v3912, %v3914
  %v3925 = vsel %vm2198, %v3910, %v3912
  %v3926 = vsel %vm2198, %v3920, %v3910
  %v3927 = vadd.f32 %v3775, %v3925
  %v3928 = vadd.f32 %v3776, %v3924
  %v3929 = vadd.f32 %v3777, %v3923
  %v3930 = vadd.f32 %v3778, %v3922
  %v3931 = vadd.f32 %v3779, %v3921
  %v3932 = vadd.f32 %v3780, %v3926
  %v3933 = vld [vmem:[%s7] sm:$0xff]
  %3935 = vset.pattern.permute.xlu0 0
  %3936 = vperm.xlu0 %3935, %v3933
  %v3937 = vpop.permute.xlu0 %3936
  %v3939 = vadd.f32 %v3927, %v3937
  %v3940 = vadd.f32 %v3928, %v3937
  %v3941 = vadd.f32 %v3929, %v3937
  %v3942 = vadd.f32 %v3930, %v3937
  %v3943 = vadd.f32 %v3931, %v3937
  %v3944 = vadd.f32 %v3932, %v3937
  %vm3945 = vcmp.ge.f32.partialorder %v3939, 0.0
  %vm3946 = vcmp.ge.f32.partialorder %v3940, 0.0
  %vm3947 = vcmp.ge.f32.partialorder %v3941, 0.0
  %vm3948 = vcmp.ge.f32.partialorder %v3942, 0.0
  %vm3949 = vcmp.ge.f32.partialorder %v3943, 0.0
  %vm3950 = vcmp.ge.f32.partialorder %v3944, 0.0
  %v3951 = vmul.f32 %v3939, 0.25
  %v3952 = vmul.f32 %v3940, 0.25
  %v3953 = vmul.f32 %v3941, 0.25
  %v3954 = vmul.f32 %v3942, 0.25
  %v3955 = vmul.f32 %v3943, 0.25
  %v3956 = vmul.f32 %v3944, 0.25
  %v3957 = vsel %vm3945, %v3939, %v3951
  %v3958 = vsel %vm3946, %v3940, %v3952
  %v3959 = vsel %vm3947, %v3941, %v3953
  %v3960 = vsel %vm3948, %v3942, %v3954
  %v3961 = vsel %vm3949, %v3943, %v3955
  %v3962 = vsel %vm3950, %v3944, %v3956
  %v3963 = vpack.c.bf16 %v3957, %v3957
  %v3964 = vpack.c.bf16 %v3958, %v3958
  %v3965 = vpack.c.bf16 %v3959, %v3959
  %v3966 = vpack.c.bf16 %v3960, %v3960
  %v3967 = vpack.c.bf16 %v3961, %v3961
  %v3968 = vpack.c.bf16 %v3962, %v3962
  %v3969 = vld [vmem:[%s8] sm:$0xf]
  %v3971 = vunpack.c.l.b16 %v3969
  %v3972 = vpack.c.b16 %v3971, %v3971
  %3973 = vrot.lane.b32.xlu0 %v3972, 120
  %v3974 = vpop.permute.xlu0 %3973
  %v3976 = vsel %vm351, %v3974, 0
  %v3979 = vsel %vm358, %v3963, 0
  %v3982 = vsel %vm358, %v3964, 0
  %v3985 = vsel %vm358, %v3965, 0
  %v3988 = vsel %vm358, %v3966, 0
  %v3991 = vsel %vm358, %v3967, 0
  %v3994 = vsel %vm358, %v3968, 0
  %3996 = vmatprep.subr.bf16.mxu0 %v3982
  %3997 = vmatpush1.bf16.msra.mxu0 %v3979
  %3998 = vmatprep.subr.bf16.mxu0 0
  %3999 = vmatpush1.bf16.msra.mxu0 0
  %4000 = vmatprep.subr.bf16.mxu0 0
  %4001 = vmatpush1.bf16.msra.mxu0 0
  %4002 = vmatprep.subr.bf16.mxu0 0
  %4003 = vmatpush1.bf16.msra.mxu0 0
  %4004 = vmatprep.subr.bf16.mxu0 0
  %4005 = vmatpush1.bf16.msra.mxu0 0
  %4006 = vmatprep.subr.bf16.mxu0 0
  %4007 = vmatpush1.bf16.msra.mxu0 0
  %4008 = vmatprep.subr.bf16.mxu0 0
  %4009 = vmatpush1.bf16.msra.mxu0 0
  %4010 = vmatprep.subr.bf16.mxu0 0
  %4011 = vmatpush1.bf16.msra.mxu0 0
  %4012 = vmatprep.subr.bf16.mxu0 0
  %4013 = vmatpush1.bf16.msra.mxu0 0
  %4014 = vmatprep.subr.bf16.mxu0 0
  %4015 = vmatpush1.bf16.msra.mxu0 0
  %4016 = vmatprep.subr.bf16.mxu0 0
  %4017 = vmatpush1.bf16.msra.mxu0 0
  %4018 = vmatprep.subr.bf16.mxu0 0
  %4019 = vmatpush1.bf16.msra.mxu0 0
  %4020 = vmatprep.subr.bf16.mxu0 0
  %4021 = vmatpush1.bf16.msra.mxu0 0
  %4022 = vmatprep.subr.bf16.mxu0 0
  %4023 = vmatpush1.bf16.msra.mxu0 0
  %4024 = vmatprep.subr.bf16.mxu0 0
  %4025 = vmatpush1.bf16.msra.mxu0 0
  %4026 = vmatprep.subr.bf16.mxu0 0
  %4027 = vmatpush1.bf16.msra.mxu0 0
  %4028 = vmatprep.mubr.bf16.mxu0 0
  %4029 = vmatmul.mubr.bf16.gmra.mrb[0].mxu0 %v3976
  %v4030 = vpop.f32.mrb[0].mxu0
  %v4031 = vadd.f32 0.0, %v4030
  %v4032 = vpop.f32.mrb[0].mxu0
  %v4033 = vadd.f32 0.0, %v4032
  %v4034 = vpop.f32.mrb[0].mxu0
  %v4035 = vpop.f32.mrb[0].mxu0
  %4036 = vdwg.mxu0
  %4037 = vmatprep.subr.bf16.mxu0 %v3988
  %4038 = vmatpush1.bf16.msra.mxu0 %v3985
  %4039 = vmatprep.subr.bf16.mxu0 0
  %4040 = vmatpush1.bf16.msra.mxu0 0
  %4041 = vmatprep.subr.bf16.mxu0 0
  %4042 = vmatpush1.bf16.msra.mxu0 0
  %4043 = vmatprep.subr.bf16.mxu0 0
  %4044 = vmatpush1.bf16.msra.mxu0 0
  %4045 = vmatprep.subr.bf16.mxu0 0
  %4046 = vmatpush1.bf16.msra.mxu0 0
  %4047 = vmatprep.subr.bf16.mxu0 0
  %4048 = vmatpush1.bf16.msra.mxu0 0
  %4049 = vmatprep.subr.bf16.mxu0 0
  %4050 = vmatpush1.bf16.msra.mxu0 0
  %4051 = vmatprep.subr.bf16.mxu0 0
  %4052 = vmatpush1.bf16.msra.mxu0 0
  %4053 = vmatprep.subr.bf16.mxu0 0
  %4054 = vmatpush1.bf16.msra.mxu0 0
  %4055 = vmatprep.subr.bf16.mxu0 0
  %4056 = vmatpush1.bf16.msra.mxu0 0
  %4057 = vmatprep.subr.bf16.mxu0 0
  %4058 = vmatpush1.bf16.msra.mxu0 0
  %4059 = vmatprep.subr.bf16.mxu0 0
  %4060 = vmatpush1.bf16.msra.mxu0 0
  %4061 = vmatprep.subr.bf16.mxu0 0
  %4062 = vmatpush1.bf16.msra.mxu0 0
  %4063 = vmatprep.subr.bf16.mxu0 0
  %4064 = vmatpush1.bf16.msra.mxu0 0
  %4065 = vmatprep.subr.bf16.mxu0 0
  %4066 = vmatpush1.bf16.msra.mxu0 0
  %4067 = vmatprep.subr.bf16.mxu0 0
  %4068 = vmatpush1.bf16.msra.mxu0 0
  %4069 = vmatprep.mubr.bf16.mxu0 0
  %4070 = vmatmul.mubr.bf16.gmra.mrb[0].mxu0 %v3976
  %v4071 = vpop.f32.mrb[0].mxu0
  %v4072 = vadd.f32 0.0, %v4071
  %v4073 = vpop.f32.mrb[0].mxu0
  %v4074 = vadd.f32 0.0, %v4073
  %v4075 = vpop.f32.mrb[0].mxu0
  %v4076 = vpop.f32.mrb[0].mxu0
  %4077 = vdwg.mxu0
  %4078 = vmatprep.subr.bf16.mxu0 %v3994
  %4079 = vmatpush1.bf16.msra.mxu0 %v3991
  %4080 = vmatprep.subr.bf16.mxu0 0
  %4081 = vmatpush1.bf16.msra.mxu0 0
  %4082 = vmatprep.subr.bf16.mxu0 0
  %4083 = vmatpush1.bf16.msra.mxu0 0
  %4084 = vmatprep.subr.bf16.mxu0 0
  %4085 = vmatpush1.bf16.msra.mxu0 0
  %4086 = vmatprep.subr.bf16.mxu0 0
  %4087 = vmatpush1.bf16.msra.mxu0 0
  %4088 = vmatprep.subr.bf16.mxu0 0
  %4089 = vmatpush1.bf16.msra.mxu0 0
  %4090 = vmatprep.subr.bf16.mxu0 0
  %4091 = vmatpush1.bf16.msra.mxu0 0
  %4092 = vmatprep.subr.bf16.mxu0 0
  %4093 = vmatpush1.bf16.msra.mxu0 0
  %4094 = vmatprep.subr.bf16.mxu0 0
  %4095 = vmatpush1.bf16.msra.mxu0 0
  %4096 = vmatprep.subr.bf16.mxu0 0
  %4097 = vmatpush1.bf16.msra.mxu0 0
  %4098 = vmatprep.subr.bf16.mxu0 0
  %4099 = vmatpush1.bf16.msra.mxu0 0
  %4100 = vmatprep.subr.bf16.mxu0 0
  %4101 = vmatpush1.bf16.msra.mxu0 0
  %4102 = vmatprep.subr.bf16.mxu0 0
  %4103 = vmatpush1.bf16.msra.mxu0 0
  %4104 = vmatprep.subr.bf16.mxu0 0
  %4105 = vmatpush1.bf16.msra.mxu0 0
  %4106 = vmatprep.subr.bf16.mxu0 0
  %4107 = vmatpush1.bf16.msra.mxu0 0
  %4108 = vmatprep.subr.bf16.mxu0 0
  %4109 = vmatpush1.bf16.msra.mxu0 0
  %4110 = vmatprep.mubr.bf16.mxu0 0
  %4111 = vmatmul.mubr.bf16.gmra.mrb[0].mxu0 %v3976
  %v4112 = vpop.f32.mrb[0].mxu0
  %v4113 = vadd.f32 0.0, %v4112
  %v4114 = vpop.f32.mrb[0].mxu0
  %v4115 = vadd.f32 0.0, %v4114
  %v4116 = vpop.f32.mrb[0].mxu0
  %v4117 = vpop.f32.mrb[0].mxu0
  %4118 = vdwg.mxu0
  %v4120 = vsel %vm351, %v3969, 0
  %4122 = vmatprep.subr.bf16.mxu0 %v1248
  %4123 = vmatpush1.bf16.msra.mxu0 %v1245
  %4124 = vmatprep.subr.bf16.mxu0 0
  %4125 = vmatpush1.bf16.msra.mxu0 0
  %4126 = vmatprep.subr.bf16.mxu0 0
  %4127 = vmatpush1.bf16.msra.mxu0 0
  %4128 = vmatprep.subr.bf16.mxu0 0
  %4129 = vmatpush1.bf16.msra.mxu0 0
  %4130 = vmatprep.subr.bf16.mxu0 0
  %4131 = vmatpush1.bf16.msra.mxu0 0
  %4132 = vmatprep.subr.bf16.mxu0 0
  %4133 = vmatpush1.bf16.msra.mxu0 0
  %4134 = vmatprep.subr.bf16.mxu0 0
  %4135 = vmatpush1.bf16.msra.mxu0 0
  %4136 = vmatprep.subr.bf16.mxu0 0
  %4137 = vmatpush1.bf16.msra.mxu0 0
  %4138 = vmatprep.subr.bf16.mxu0 0
  %4139 = vmatpush1.bf16.msra.mxu0 0
  %4140 = vmatprep.subr.bf16.mxu0 0
  %4141 = vmatpush1.bf16.msra.mxu0 0
  %4142 = vmatprep.subr.bf16.mxu0 0
  %4143 = vmatpush1.bf16.msra.mxu0 0
  %4144 = vmatprep.subr.bf16.mxu0 0
  %4145 = vmatpush1.bf16.msra.mxu0 0
  %4146 = vmatprep.subr.bf16.mxu0 0
  %4147 = vmatpush1.bf16.msra.mxu0 0
  %4148 = vmatprep.subr.bf16.mxu0 0
  %4149 = vmatpush1.bf16.msra.mxu0 0
  %4150 = vmatprep.subr.bf16.mxu0 0
  %4151 = vmatpush1.bf16.msra.mxu0 0
  %4152 = vmatprep.subr.bf16.mxu0 0
  %4153 = vmatpush1.bf16.msra.mxu0 0
  %4154 = vmatprep.mubr.bf16.mxu0 0
  %4155 = vmatmul.mubr.bf16.gmra.mrb[0].mxu0 %v4120
  %v4156 = vpop.f32.mrb[0].mxu0
  %v4157 = vadd.f32 %v4031, %v4156
  %v4158 = vpop.f32.mrb[0].mxu0
  %v4159 = vadd.f32 %v4033, %v4158
  %v4160 = vpop.f32.mrb[0].mxu0
  %v4161 = vpop.f32.mrb[0].mxu0
  %4162 = vdwg.mxu0
  %4163 = vmatprep.subr.bf16.mxu0 %v1254
  %4164 = vmatpush1.bf16.msra.mxu0 %v1251
  %4165 = vmatprep.subr.bf16.mxu0 0
  %4166 = vmatpush1.bf16.msra.mxu0 0
  %4167 = vmatprep.subr.bf16.mxu0 0
  %4168 = vmatpush1.bf16.msra.mxu0 0
  %4169 = vmatprep.subr.bf16.mxu0 0
  %4170 = vmatpush1.bf16.msra.mxu0 0
  %4171 = vmatprep.subr.bf16.mxu0 0
  %4172 = vmatpush1.bf16.msra.mxu0 0
  %4173 = vmatprep.subr.bf16.mxu0 0
  %4174 = vmatpush1.bf16.msra.mxu0 0
  %4175 = vmatprep.subr.bf16.mxu0 0
  %4176 = vmatpush1.bf16.msra.mxu0 0
  %4177 = vmatprep.subr.bf16.mxu0 0
  %4178 = vmatpush1.bf16.msra.mxu0 0
  %4179 = vmatprep.subr.bf16.mxu0 0
  %4180 = vmatpush1.bf16.msra.mxu0 0
  %4181 = vmatprep.subr.bf16.mxu0 0
  %4182 = vmatpush1.bf16.msra.mxu0 0
  %4183 = vmatprep.subr.bf16.mxu0 0
  %4184 = vmatpush1.bf16.msra.mxu0 0
  %4185 = vmatprep.subr.bf16.mxu0 0
  %4186 = vmatpush1.bf16.msra.mxu0 0
  %4187 = vmatprep.subr.bf16.mxu0 0
  %4188 = vmatpush1.bf16.msra.mxu0 0
  %4189 = vmatprep.subr.bf16.mxu0 0
  %4190 = vmatpush1.bf16.msra.mxu0 0
  %4191 = vmatprep.subr.bf16.mxu0 0
  %4192 = vmatpush1.bf16.msra.mxu0 0
  %4193 = vmatprep.subr.bf16.mxu0 0
  %4194 = vmatpush1.bf16.msra.mxu0 0
  %4195 = vmatprep.mubr.bf16.mxu0 0
  %4196 = vmatmul.mubr.bf16.gmra.mrb[0].mxu0 %v4120
  %v4197 = vpop.f32.mrb[0].mxu0
  %v4198 = vadd.f32 %v4072, %v4197
  %v4199 = vpop.f32.mrb[0].mxu0
  %v4200 = vadd.f32 %v4074, %v4199
  %v4201 = vpop.f32.mrb[0].mxu0
  %v4202 = vpop.f32.mrb[0].mxu0
  %4203 = vdwg.mxu0
  %4204 = vmatprep.subr.bf16.mxu0 %v1260
  %4205 = vmatpush1.bf16.msra.mxu0 %v1257
  %4206 = vmatprep.subr.bf16.mxu0 0
  %4207 = vmatpush1.bf16.msra.mxu0 0
  %4208 = vmatprep.subr.bf16.mxu0 0
  %4209 = vmatpush1.bf16.msra.mxu0 0
  %4210 = vmatprep.subr.bf16.mxu0 0
  %4211 = vmatpush1.bf16.msra.mxu0 0
  %4212 = vmatprep.subr.bf16.mxu0 0
  %4213 = vmatpush1.bf16.msra.mxu0 0
  %4214 = vmatprep.subr.bf16.mxu0 0
  %4215 = vmatpush1.bf16.msra.mxu0 0
  %4216 = vmatprep.subr.bf16.mxu0 0
  %4217 = vmatpush1.bf16.msra.mxu0 0
  %4218 = vmatprep.subr.bf16.mxu0 0
  %4219 = vmatpush1.bf16.msra.mxu0 0
  %4220 = vmatprep.subr.bf16.mxu0 0
  %4221 = vmatpush1.bf16.msra.mxu0 0
  %4222 = vmatprep.subr.bf16.mxu0 0
  %4223 = vmatpush1.bf16.msra.mxu0 0
  %4224 = vmatprep.subr.bf16.mxu0 0
  %4225 = vmatpush1.bf16.msra.mxu0 0
  %4226 = vmatprep.subr.bf16.mxu0 0
  %4227 = vmatpush1.bf16.msra.mxu0 0
  %4228 = vmatprep.subr.bf16.mxu0 0
  %4229 = vmatpush1.bf16.msra.mxu0 0
  %4230 = vmatprep.subr.bf16.mxu0 0
  %4231 = vmatpush1.bf16.msra.mxu0 0
  %4232 = vmatprep.subr.bf16.mxu0 0
  %4233 = vmatpush1.bf16.msra.mxu0 0
  %4234 = vmatprep.subr.bf16.mxu0 0
  %4235 = vmatpush1.bf16.msra.mxu0 0
  %4236 = vmatprep.mubr.bf16.mxu0 0
  %4237 = vmatmul.mubr.bf16.gmra.mrb[0].mxu0 %v4120
  %v4238 = vpop.f32.mrb[0].mxu0
  %v4239 = vadd.f32 %v4113, %v4238
  %v4240 = vpop.f32.mrb[0].mxu0
  %v4241 = vadd.f32 %v4115, %v4240
  %v4242 = vpop.f32.mrb[0].mxu0
  %v4243 = vpop.f32.mrb[0].mxu0
  %4244 = vdwg.mxu0
  %v4245 = vld [vmem:[%s9] sm:$0xff]
  %4247 = vset.pattern.permute.xlu0 0
  %4248 = vperm.xlu0 %4247, %v4245
  %v4249 = vpop.permute.xlu0 %4248
  %v4251 = vadd.f32 %v4157, %v4249
  %v4252 = vadd.f32 %v4159, %v4249
  %v4253 = vadd.f32 %v4198, %v4249
  %v4254 = vadd.f32 %v4200, %v4249
  %v4255 = vadd.f32 %v4239, %v4249
  %v4256 = vadd.f32 %v4241, %v4249
  %vm4257 = vcmp.ge.f32.partialorder %v4251, 0.0
  %vm4258 = vcmp.ge.f32.partialorder %v4252, 0.0
  %vm4259 = vcmp.ge.f32.partialorder %v4253, 0.0
  %vm4260 = vcmp.ge.f32.partialorder %v4254, 0.0
  %vm4261 = vcmp.ge.f32.partialorder %v4255, 0.0
  %vm4262 = vcmp.ge.f32.partialorder %v4256, 0.0
  %v4263 = vmul.f32 %v4251, 0.25
  %v4264 = vmul.f32 %v4252, 0.25
  %v4265 = vmul.f32 %v4253, 0.25
  %v4266 = vmul.f32 %v4254, 0.25
  %v4267 = vmul.f32 %v4255, 0.25
  %v4268 = vmul.f32 %v4256, 0.25
  %v4269 = vsel %vm4257, %v4251, %v4263
  %v4270 = vsel %vm4258, %v4252, %v4264
  %v4271 = vsel %vm4259, %v4253, %v4265
  %v4272 = vsel %vm4260, %v4254, %v4266
  %v4273 = vsel %vm4261, %v4255, %v4267
  %v4274 = vsel %vm4262, %v4256, %v4268
  %v4275 = vmul.f32 %v4269, %v241
  %v4276 = vmul.f32 %v4270, %v245
  %v4277 = vmul.f32 %v4271, %v249
  %v4278 = vmul.f32 %v4272, %v253
  %v4279 = vmul.f32 %v4273, %v257
  %v4280 = vmul.f32 %v4274, %v261
  %4281 = vrot.lane.b32.xlu0 %v4275, 19
  %v4282 = vpop.permute.xlu0 %4281
  %4283 = vrot.lane.b32.xlu0 %v4276, 19
  %v4284 = vpop.permute.xlu0 %4283
  %4285 = vrot.lane.b32.xlu0 %v4277, 19
  %v4286 = vpop.permute.xlu0 %4285
  %4287 = vrot.lane.b32.xlu0 %v4278, 19
  %v4288 = vpop.permute.xlu0 %4287
  %4289 = vrot.lane.b32.xlu0 %v4279, 19
  %v4290 = vpop.permute.xlu0 %4289
  %4291 = vrot.lane.b32.xlu0 %v4280, 19
  %v4292 = vpop.permute.xlu0 %4291
  %v4293 = vsel %vm294, %v4290, %v4292
  %v4294 = vsel %vm294, %v4288, %v4290
  %v4295 = vsel %vm294, %v4286, %v4288
  %v4296 = vsel %vm294, %v4284, %v4286
  %v4297 = vsel %vm294, %v4282, %v4284
  %v4298 = vsel %vm294, %v4292, %v4282
  %s4299 = scalar_lea.vmem %s4, 144
  %v4300 = vld [vmem:[%s4299] sm:$0xf]
  %v4301 = vld [vmem:[%s4299 + $0x4] sm:$0xf]
  %v4302 = vld [vmem:[%s4299 + $0x8] sm:$0xf]
  %v4303 = vld [vmem:[%s4299 + $0xc] sm:$0xf]
  %v4304 = vpack.c.bf16 %v4298, %v4298
  %v4305 = vpack.c.bf16 %v4297, %v4297
  %v4306 = vpack.c.bf16 %v4296, %v4296
  %v4307 = vpack.c.bf16 %v4295, %v4295
  %v4308 = vpack.c.bf16 %v4294, %v4294
  %v4309 = vpack.c.bf16 %v4293, %v4293
  %4310 = vrot.lane.b32.xlu0 %v4275, 18
  %v4311 = vpop.permute.xlu0 %4310
  %4312 = vrot.lane.b32.xlu0 %v4276, 18
  %v4313 = vpop.permute.xlu0 %4312
  %4314 = vrot.lane.b32.xlu0 %v4277, 18
  %v4315 = vpop.permute.xlu0 %4314
  %4316 = vrot.lane.b32.xlu0 %v4278, 18
  %v4317 = vpop.permute.xlu0 %4316
  %4318 = vrot.lane.b32.xlu0 %v4279, 18
  %v4319 = vpop.permute.xlu0 %4318
  %4320 = vrot.lane.b32.xlu0 %v4280, 18
  %v4321 = vpop.permute.xlu0 %4320
  %v4322 = vsel %vm323, %v4319, %v4321
  %v4323 = vsel %vm323, %v4317, %v4319
  %v4324 = vsel %vm323, %v4315, %v4317
  %v4325 = vsel %vm323, %v4313, %v4315
  %v4326 = vsel %vm323, %v4311, %v4313
  %v4327 = vsel %vm323, %v4321, %v4311
  %s4328 = scalar_lea.vmem %s4, 160
  %v4329 = vld [vmem:[%s4328] sm:$0xf]
  %v4330 = vld [vmem:[%s4328 + $0x4] sm:$0xf]
  %v4331 = vld [vmem:[%s4328 + $0x8] sm:$0xf]
  %v4332 = vld [vmem:[%s4328 + $0xc] sm:$0xf]
  %v4333 = vpack.c.bf16 %v4327, %v4327
  %v4334 = vpack.c.bf16 %v4326, %v4326
  %v4335 = vpack.c.bf16 %v4325, %v4325
  %v4336 = vpack.c.bf16 %v4324, %v4324
  %v4337 = vpack.c.bf16 %v4323, %v4323
  %v4338 = vpack.c.bf16 %v4322, %v4322
  %v4343 = vunpack.c.l.b16 %v4329
  %v4344 = vunpack.c.l.b16 %v4330
  %v4345 = vunpack.c.l.b16 %v4331
  %v4346 = vunpack.c.l.b16 %v4332
  %v4347 = vpack.c.b16 %v4344, %v4343
  %v4348 = vpack.c.b16 %v4346, %v4345
  %v4350 = vsel %vm351, %v4347, 0
  %v4353 = vsel %vm351, %v4348, 0
  %v4356 = vsel %vm358, %v4333, 0
  %v4359 = vsel %vm358, %v4334, 0
  %v4362 = vsel %vm358, %v4335, 0
  %v4365 = vsel %vm358, %v4336, 0
  %v4368 = vsel %vm358, %v4337, 0
  %v4371 = vsel %vm358, %v4338, 0
  %4373 = vmatprep.subr.bf16.mxu0 %v4359
  %4374 = vmatpush1.bf16.msra.mxu0 %v4356
  %4375 = vmatprep.subr.bf16.mxu0 0
  %4376 = vmatpush1.bf16.msra.mxu0 0
  %4377 = vmatprep.subr.bf16.mxu0 0
  %4378 = vmatpush1.bf16.msra.mxu0 0
  %4379 = vmatprep.subr.bf16.mxu0 0
  %4380 = vmatpush1.bf16.msra.mxu0 0
  %4381 = vmatprep.subr.bf16.mxu0 0
  %4382 = vmatpush1.bf16.msra.mxu0 0
  %4383 = vmatprep.subr.bf16.mxu0 0
  %4384 = vmatpush1.bf16.msra.mxu0 0
  %4385 = vmatprep.subr.bf16.mxu0 0
  %4386 = vmatpush1.bf16.msra.mxu0 0
  %4387 = vmatprep.subr.bf16.mxu0 0
  %4388 = vmatpush1.bf16.msra.mxu0 0
  %4389 = vmatprep.subr.bf16.mxu0 0
  %4390 = vmatpush1.bf16.msra.mxu0 0
  %4391 = vmatprep.subr.bf16.mxu0 0
  %4392 = vmatpush1.bf16.msra.mxu0 0
  %4393 = vmatprep.subr.bf16.mxu0 0
  %4394 = vmatpush1.bf16.msra.mxu0 0
  %4395 = vmatprep.subr.bf16.mxu0 0
  %4396 = vmatpush1.bf16.msra.mxu0 0
  %4397 = vmatprep.subr.bf16.mxu0 0
  %4398 = vmatpush1.bf16.msra.mxu0 0
  %4399 = vmatprep.subr.bf16.mxu0 0
  %4400 = vmatpush1.bf16.msra.mxu0 0
  %4401 = vmatprep.subr.bf16.mxu0 0
  %4402 = vmatpush1.bf16.msra.mxu0 0
  %4403 = vmatprep.subr.bf16.mxu0 0
  %4404 = vmatpush1.bf16.msra.mxu0 0
  %4405 = vmatprep.mubr.bf16.mxu0 0
  %4406 = vmatmul.mubr.bf16.gmra.mrb[0].mxu0 %v4350
  %v4407 = vpop.f32.mrb[0].mxu0
  %v4408 = vadd.f32 0.0, %v4407
  %v4409 = vpop.f32.mrb[0].mxu0
  %v4410 = vadd.f32 0.0, %v4409
  %v4411 = vpop.f32.mrb[0].mxu0
  %v4412 = vadd.f32 0.0, %v4411
  %v4413 = vpop.f32.mrb[0].mxu0
  %v4414 = vadd.f32 0.0, %v4413
  %4415 = vmatprep.mubr.bf16.mxu0 0
  %4416 = vmatmul.mubr.bf16.gmra.mrb[0].mxu0 %v4353
  %v4417 = vpop.f32.mrb[0].mxu0
  %v4418 = vadd.f32 0.0, %v4417
  %v4419 = vpop.f32.mrb[0].mxu0
  %v4420 = vadd.f32 0.0, %v4419
  %v4421 = vpop.f32.mrb[0].mxu0
  %v4422 = vadd.f32 0.0, %v4421
  %v4423 = vpop.f32.mrb[0].mxu0
  %v4424 = vadd.f32 0.0, %v4423
  %4425 = vdwg.mxu0
  %4426 = vmatprep.subr.bf16.mxu0 %v4365
  %4427 = vmatpush1.bf16.msra.mxu0 %v4362
  %4428 = vmatprep.subr.bf16.mxu0 0
  %4429 = vmatpush1.bf16.msra.mxu0 0
  %4430 = vmatprep.subr.bf16.mxu0 0
  %4431 = vmatpush1.bf16.msra.mxu0 0
  %4432 = vmatprep.subr.bf16.mxu0 0
  %4433 = vmatpush1.bf16.msra.mxu0 0
  %4434 = vmatprep.subr.bf16.mxu0 0
  %4435 = vmatpush1.bf16.msra.mxu0 0
  %4436 = vmatprep.subr.bf16.mxu0 0
  %4437 = vmatpush1.bf16.msra.mxu0 0
  %4438 = vmatprep.subr.bf16.mxu0 0
  %4439 = vmatpush1.bf16.msra.mxu0 0
  %4440 = vmatprep.subr.bf16.mxu0 0
  %4441 = vmatpush1.bf16.msra.mxu0 0
  %4442 = vmatprep.subr.bf16.mxu0 0
  %4443 = vmatpush1.bf16.msra.mxu0 0
  %4444 = vmatprep.subr.bf16.mxu0 0
  %4445 = vmatpush1.bf16.msra.mxu0 0
  %4446 = vmatprep.subr.bf16.mxu0 0
  %4447 = vmatpush1.bf16.msra.mxu0 0
  %4448 = vmatprep.subr.bf16.mxu0 0
  %4449 = vmatpush1.bf16.msra.mxu0 0
  %4450 = vmatprep.subr.bf16.mxu0 0
  %4451 = vmatpush1.bf16.msra.mxu0 0
  %4452 = vmatprep.subr.bf16.mxu0 0
  %4453 = vmatpush1.bf16.msra.mxu0 0
  %4454 = vmatprep.subr.bf16.mxu0 0
  %4455 = vmatpush1.bf16.msra.mxu0 0
  %4456 = vmatprep.subr.bf16.mxu0 0
  %4457 = vmatpush1.bf16.msra.mxu0 0
  %4458 = vmatprep.mubr.bf16.mxu0 0
  %4459 = vmatmul.mubr.bf16.gmra.mrb[0].mxu0 %v4350
  %v4460 = vpop.f32.mrb[0].mxu0
  %v4461 = vadd.f32 0.0, %v4460
  %v4462 = vpop.f32.mrb[0].mxu0
  %v4463 = vadd.f32 0.0, %v4462
  %v4464 = vpop.f32.mrb[0].mxu0
  %v4465 = vadd.f32 0.0, %v4464
  %v4466 = vpop.f32.mrb[0].mxu0
  %v4467 = vadd.f32 0.0, %v4466
  %4468 = vmatprep.mubr.bf16.mxu0 0
  %4469 = vmatmul.mubr.bf16.gmra.mrb[0].mxu0 %v4353
  %v4470 = vpop.f32.mrb[0].mxu0
  %v4471 = vadd.f32 0.0, %v4470
  %v4472 = vpop.f32.mrb[0].mxu0
  %v4473 = vadd.f32 0.0, %v4472
  %v4474 = vpop.f32.mrb[0].mxu0
  %v4475 = vadd.f32 0.0, %v4474
  %v4476 = vpop.f32.mrb[0].mxu0
  %v4477 = vadd.f32 0.0, %v4476
  %4478 = vdwg.mxu0
  %4479 = vmatprep.subr.bf16.mxu0 %v4371
  %4480 = vmatpush1.bf16.msra.mxu0 %v4368
  %4481 = vmatprep.subr.bf16.mxu0 0
  %4482 = vmatpush1.bf16.msra.mxu0 0
  %4483 = vmatprep.subr.bf16.mxu0 0
  %4484 = vmatpush1.bf16.msra.mxu0 0
  %4485 = vmatprep.subr.bf16.mxu0 0
  %4486 = vmatpush1.bf16.msra.mxu0 0
  %4487 = vmatprep.subr.bf16.mxu0 0
  %4488 = vmatpush1.bf16.msra.mxu0 0
  %4489 = vmatprep.subr.bf16.mxu0 0
  %4490 = vmatpush1.bf16.msra.mxu0 0
  %4491 = vmatprep.subr.bf16.mxu0 0
  %4492 = vmatpush1.bf16.msra.mxu0 0
  %4493 = vmatprep.subr.bf16.mxu0 0
  %4494 = vmatpush1.bf16.msra.mxu0 0
  %4495 = vmatprep.subr.bf16.mxu0 0
  %4496 = vmatpush1.bf16.msra.mxu0 0
  %4497 = vmatprep.subr.bf16.mxu0 0
  %4498 = vmatpush1.bf16.msra.mxu0 0
  %4499 = vmatprep.subr.bf16.mxu0 0
  %4500 = vmatpush1.bf16.msra.mxu0 0
  %4501 = vmatprep.subr.bf16.mxu0 0
  %4502 = vmatpush1.bf16.msra.mxu0 0
  %4503 = vmatprep.subr.bf16.mxu0 0
  %4504 = vmatpush1.bf16.msra.mxu0 0
  %4505 = vmatprep.subr.bf16.mxu0 0
  %4506 = vmatpush1.bf16.msra.mxu0 0
  %4507 = vmatprep.subr.bf16.mxu0 0
  %4508 = vmatpush1.bf16.msra.mxu0 0
  %4509 = vmatprep.subr.bf16.mxu0 0
  %4510 = vmatpush1.bf16.msra.mxu0 0
  %4511 = vmatprep.mubr.bf16.mxu0 0
  %4512 = vmatmul.mubr.bf16.gmra.mrb[0].mxu0 %v4350
  %v4513 = vpop.f32.mrb[0].mxu0
  %v4514 = vadd.f32 0.0, %v4513
  %v4515 = vpop.f32.mrb[0].mxu0
  %v4516 = vadd.f32 0.0, %v4515
  %v4517 = vpop.f32.mrb[0].mxu0
  %v4518 = vadd.f32 0.0, %v4517
  %v4519 = vpop.f32.mrb[0].mxu0
  %v4520 = vadd.f32 0.0, %v4519
  %4521 = vmatprep.mubr.bf16.mxu0 0
  %4522 = vmatmul.mubr.bf16.gmra.mrb[0].mxu0 %v4353
  %v4523 = vpop.f32.mrb[0].mxu0
  %v4524 = vadd.f32 0.0, %v4523
  %v4525 = vpop.f32.mrb[0].mxu0
  %v4526 = vadd.f32 0.0, %v4525
  %v4527 = vpop.f32.mrb[0].mxu0
  %v4528 = vadd.f32 0.0, %v4527
  %v4529 = vpop.f32.mrb[0].mxu0
  %v4530 = vadd.f32 0.0, %v4529
  %4531 = vdwg.mxu0
  %v4536 = vunpack.c.l.b16 %v4300
  %v4537 = vunpack.c.l.b16 %v4301
  %v4538 = vunpack.c.l.b16 %v4302
  %v4539 = vunpack.c.l.b16 %v4303
  %v4540 = vpack.c.b16 %v4537, %v4536
  %v4541 = vpack.c.b16 %v4539, %v4538
  %v4543 = vsel %vm351, %v4540, 0
  %v4546 = vsel %vm351, %v4541, 0
  %v4549 = vsel %vm358, %v4304, 0
  %v4552 = vsel %vm358, %v4305, 0
  %v4555 = vsel %vm358, %v4306, 0
  %v4558 = vsel %vm358, %v4307, 0
  %v4561 = vsel %vm358, %v4308, 0
  %v4564 = vsel %vm358, %v4309, 0
  %4566 = vmatprep.subr.bf16.mxu0 %v4552
  %4567 = vmatpush1.bf16.msra.mxu0 %v4549
  %4568 = vmatprep.subr.bf16.mxu0 0
  %4569 = vmatpush1.bf16.msra.mxu0 0
  %4570 = vmatprep.subr.bf16.mxu0 0
  %4571 = vmatpush1.bf16.msra.mxu0 0
  %4572 = vmatprep.subr.bf16.mxu0 0
  %4573 = vmatpush1.bf16.msra.mxu0 0
  %4574 = vmatprep.subr.bf16.mxu0 0
  %4575 = vmatpush1.bf16.msra.mxu0 0
  %4576 = vmatprep.subr.bf16.mxu0 0
  %4577 = vmatpush1.bf16.msra.mxu0 0
  %4578 = vmatprep.subr.bf16.mxu0 0
  %4579 = vmatpush1.bf16.msra.mxu0 0
  %4580 = vmatprep.subr.bf16.mxu0 0
  %4581 = vmatpush1.bf16.msra.mxu0 0
  %4582 = vmatprep.subr.bf16.mxu0 0
  %4583 = vmatpush1.bf16.msra.mxu0 0
  %4584 = vmatprep.subr.bf16.mxu0 0
  %4585 = vmatpush1.bf16.msra.mxu0 0
  %4586 = vmatprep.subr.bf16.mxu0 0
  %4587 = vmatpush1.bf16.msra.mxu0 0
  %4588 = vmatprep.subr.bf16.mxu0 0
  %4589 = vmatpush1.bf16.msra.mxu0 0
  %4590 = vmatprep.subr.bf16.mxu0 0
  %4591 = vmatpush1.bf16.msra.mxu0 0
  %4592 = vmatprep.subr.bf16.mxu0 0
  %4593 = vmatpush1.bf16.msra.mxu0 0
  %4594 = vmatprep.subr.bf16.mxu0 0
  %4595 = vmatpush1.bf16.msra.mxu0 0
  %4596 = vmatprep.subr.bf16.mxu0 0
  %4597 = vmatpush1.bf16.msra.mxu0 0
  %4598 = vmatprep.mubr.bf16.mxu0 0
  %4599 = vmatmul.mubr.bf16.gmra.mrb[0].mxu0 %v4543
  %v4600 = vpop.f32.mrb[0].mxu0
  %v4601 = vadd.f32 %v4408, %v4600
  %v4602 = vpop.f32.mrb[0].mxu0
  %v4603 = vadd.f32 %v4410, %v4602
  %v4604 = vpop.f32.mrb[0].mxu0
  %v4605 = vadd.f32 %v4412, %v4604
  %v4606 = vpop.f32.mrb[0].mxu0
  %v4607 = vadd.f32 %v4414, %v4606
  %4608 = vmatprep.mubr.bf16.mxu0 0
  %4609 = vmatmul.mubr.bf16.gmra.mrb[0].mxu0 %v4546
  %v4610 = vpop.f32.mrb[0].mxu0
  %v4611 = vadd.f32 %v4418, %v4610
  %v4612 = vpop.f32.mrb[0].mxu0
  %v4613 = vadd.f32 %v4420, %v4612
  %v4614 = vpop.f32.mrb[0].mxu0
  %v4615 = vadd.f32 %v4422, %v4614
  %v4616 = vpop.f32.mrb[0].mxu0
  %v4617 = vadd.f32 %v4424, %v4616
  %4618 = vdwg.mxu0
  %4619 = vmatprep.subr.bf16.mxu0 %v4558
  %4620 = vmatpush1.bf16.msra.mxu0 %v4555
  %4621 = vmatprep.subr.bf16.mxu0 0
  %4622 = vmatpush1.bf16.msra.mxu0 0
  %4623 = vmatprep.subr.bf16.mxu0 0
  %4624 = vmatpush1.bf16.msra.mxu0 0
  %4625 = vmatprep.subr.bf16.mxu0 0
  %4626 = vmatpush1.bf16.msra.mxu0 0
  %4627 = vmatprep.subr.bf16.mxu0 0
  %4628 = vmatpush1.bf16.msra.mxu0 0
  %4629 = vmatprep.subr.bf16.mxu0 0
  %4630 = vmatpush1.bf16.msra.mxu0 0
  %4631 = vmatprep.subr.bf16.mxu0 0
  %4632 = vmatpush1.bf16.msra.mxu0 0
  %4633 = vmatprep.subr.bf16.mxu0 0
  %4634 = vmatpush1.bf16.msra.mxu0 0
  %4635 = vmatprep.subr.bf16.mxu0 0
  %4636 = vmatpush1.bf16.msra.mxu0 0
  %4637 = vmatprep.subr.bf16.mxu0 0
  %4638 = vmatpush1.bf16.msra.mxu0 0
  %4639 = vmatprep.subr.bf16.mxu0 0
  %4640 = vmatpush1.bf16.msra.mxu0 0
  %4641 = vmatprep.subr.bf16.mxu0 0
  %4642 = vmatpush1.bf16.msra.mxu0 0
  %4643 = vmatprep.subr.bf16.mxu0 0
  %4644 = vmatpush1.bf16.msra.mxu0 0
  %4645 = vmatprep.subr.bf16.mxu0 0
  %4646 = vmatpush1.bf16.msra.mxu0 0
  %4647 = vmatprep.subr.bf16.mxu0 0
  %4648 = vmatpush1.bf16.msra.mxu0 0
  %4649 = vmatprep.subr.bf16.mxu0 0
  %4650 = vmatpush1.bf16.msra.mxu0 0
  %4651 = vmatprep.mubr.bf16.mxu0 0
  %4652 = vmatmul.mubr.bf16.gmra.mrb[0].mxu0 %v4543
  %v4653 = vpop.f32.mrb[0].mxu0
  %v4654 = vadd.f32 %v4461, %v4653
  %v4655 = vpop.f32.mrb[0].mxu0
  %v4656 = vadd.f32 %v4463, %v4655
  %v4657 = vpop.f32.mrb[0].mxu0
  %v4658 = vadd.f32 %v4465, %v4657
  %v4659 = vpop.f32.mrb[0].mxu0
  %v4660 = vadd.f32 %v4467, %v4659
  %4661 = vmatprep.mubr.bf16.mxu0 0
  %4662 = vmatmul.mubr.bf16.gmra.mrb[0].mxu0 %v4546
  %v4663 = vpop.f32.mrb[0].mxu0
  %v4664 = vadd.f32 %v4471, %v4663
  %v4665 = vpop.f32.mrb[0].mxu0
  %v4666 = vadd.f32 %v4473, %v4665
  %v4667 = vpop.f32.mrb[0].mxu0
  %v4668 = vadd.f32 %v4475, %v4667
  %v4669 = vpop.f32.mrb[0].mxu0
  %v4670 = vadd.f32 %v4477, %v4669
  %4671 = vdwg.mxu0
  %4672 = vmatprep.subr.bf16.mxu0 %v4564
  %4673 = vmatpush1.bf16.msra.mxu0 %v4561
  %4674 = vmatprep.subr.bf16.mxu0 0
  %4675 = vmatpush1.bf16.msra.mxu0 0
  %4676 = vmatprep.subr.bf16.mxu0 0
  %4677 = vmatpush1.bf16.msra.mxu0 0
  %4678 = vmatprep.subr.bf16.mxu0 0
  %4679 = vmatpush1.bf16.msra.mxu0 0
  %4680 = vmatprep.subr.bf16.mxu0 0
  %4681 = vmatpush1.bf16.msra.mxu0 0
  %4682 = vmatprep.subr.bf16.mxu0 0
  %4683 = vmatpush1.bf16.msra.mxu0 0
  %4684 = vmatprep.subr.bf16.mxu0 0
  %4685 = vmatpush1.bf16.msra.mxu0 0
  %4686 = vmatprep.subr.bf16.mxu0 0
  %4687 = vmatpush1.bf16.msra.mxu0 0
  %4688 = vmatprep.subr.bf16.mxu0 0
  %4689 = vmatpush1.bf16.msra.mxu0 0
  %4690 = vmatprep.subr.bf16.mxu0 0
  %4691 = vmatpush1.bf16.msra.mxu0 0
  %4692 = vmatprep.subr.bf16.mxu0 0
  %4693 = vmatpush1.bf16.msra.mxu0 0
  %4694 = vmatprep.subr.bf16.mxu0 0
  %4695 = vmatpush1.bf16.msra.mxu0 0
  %4696 = vmatprep.subr.bf16.mxu0 0
  %4697 = vmatpush1.bf16.msra.mxu0 0
  %4698 = vmatprep.subr.bf16.mxu0 0
  %4699 = vmatpush1.bf16.msra.mxu0 0
  %4700 = vmatprep.subr.bf16.mxu0 0
  %4701 = vmatpush1.bf16.msra.mxu0 0
  %4702 = vmatprep.subr.bf16.mxu0 0
  %4703 = vmatpush1.bf16.msra.mxu0 0
  %4704 = vmatprep.mubr.bf16.mxu0 0
  %4705 = vmatmul.mubr.bf16.gmra.mrb[0].mxu0 %v4543
  %v4706 = vpop.f32.mrb[0].mxu0
  %v4707 = vadd.f32 %v4514, %v4706
  %v4708 = vpop.f32.mrb[0].mxu0
  %v4709 = vadd.f32 %v4516, %v4708
  %v4710 = vpop.f32.mrb[0].mxu0
  %v4711 = vadd.f32 %v4518, %v4710
  %v4712 = vpop.f32.mrb[0].mxu0
  %v4713 = vadd.f32 %v4520, %v4712
  %4714 = vmatprep.mubr.bf16.mxu0 0
  %4715 = vmatmul.mubr.bf16.gmra.mrb[0].mxu0 %v4546
  %v4716 = vpop.f32.mrb[0].mxu0
  %v4717 = vadd.f32 %v4524, %v4716
  %v4718 = vpop.f32.mrb[0].mxu0
  %v4719 = vadd.f32 %v4526, %v4718
  %v4720 = vpop.f32.mrb[0].mxu0
  %v4721 = vadd.f32 %v4528, %v4720
  %v4722 = vpop.f32.mrb[0].mxu0
  %v4723 = vadd.f32 %v4530, %v4722
  %4724 = vdwg.mxu0
  %4725 = vrot.lane.b32.xlu0 %v4275, 17
  %v4726 = vpop.permute.xlu0 %4725
  %4727 = vrot.lane.b32.xlu0 %v4276, 17
  %v4728 = vpop.permute.xlu0 %4727
  %4729 = vrot.lane.b32.xlu0 %v4277, 17
  %v4730 = vpop.permute.xlu0 %4729
  %4731 = vrot.lane.b32.xlu0 %v4278, 17
  %v4732 = vpop.permute.xlu0 %4731
  %4733 = vrot.lane.b32.xlu0 %v4279, 17
  %v4734 = vpop.permute.xlu0 %4733
  %4735 = vrot.lane.b32.xlu0 %v4280, 17
  %v4736 = vpop.permute.xlu0 %4735
  %v4737 = vsel %vm741, %v4734, %v4736
  %v4738 = vsel %vm741, %v4732, %v4734
  %v4739 = vsel %vm741, %v4730, %v4732
  %v4740 = vsel %vm741, %v4728, %v4730
  %v4741 = vsel %vm741, %v4726, %v4728
  %v4742 = vsel %vm741, %v4736, %v4726
  %s4743 = scalar_lea.vmem %s4, 176
  %v4744 = vld [vmem:[%s4743] sm:$0xf]
  %v4745 = vld [vmem:[%s4743 + $0x4] sm:$0xf]
  %v4746 = vld [vmem:[%s4743 + $0x8] sm:$0xf]
  %v4747 = vld [vmem:[%s4743 + $0xc] sm:$0xf]
  %v4748 = vpack.c.bf16 %v4742, %v4742
  %v4749 = vpack.c.bf16 %v4741, %v4741
  %v4750 = vpack.c.bf16 %v4740, %v4740
  %v4751 = vpack.c.bf16 %v4739, %v4739
  %v4752 = vpack.c.bf16 %v4738, %v4738
  %v4753 = vpack.c.bf16 %v4737, %v4737
  %v4758 = vunpack.c.l.b16 %v4744
  %v4759 = vunpack.c.l.b16 %v4745
  %v4760 = vunpack.c.l.b16 %v4746
  %v4761 = vunpack.c.l.b16 %v4747
  %v4762 = vpack.c.b16 %v4759, %v4758
  %v4763 = vpack.c.b16 %v4761, %v4760
  %v4765 = vsel %vm351, %v4762, 0
  %v4768 = vsel %vm351, %v4763, 0
  %v4771 = vsel %vm358, %v4748, 0
  %v4774 = vsel %vm358, %v4749, 0
  %v4777 = vsel %vm358, %v4750, 0
  %v4780 = vsel %vm358, %v4751, 0
  %v4783 = vsel %vm358, %v4752, 0
  %v4786 = vsel %vm358, %v4753, 0
  %4788 = vmatprep.subr.bf16.mxu0 %v4774
  %4789 = vmatpush1.bf16.msra.mxu0 %v4771
  %4790 = vmatprep.subr.bf16.mxu0 0
  %4791 = vmatpush1.bf16.msra.mxu0 0
  %4792 = vmatprep.subr.bf16.mxu0 0
  %4793 = vmatpush1.bf16.msra.mxu0 0
  %4794 = vmatprep.subr.bf16.mxu0 0
  %4795 = vmatpush1.bf16.msra.mxu0 0
  %4796 = vmatprep.subr.bf16.mxu0 0
  %4797 = vmatpush1.bf16.msra.mxu0 0
  %4798 = vmatprep.subr.bf16.mxu0 0
  %4799 = vmatpush1.bf16.msra.mxu0 0
  %4800 = vmatprep.subr.bf16.mxu0 0
  %4801 = vmatpush1.bf16.msra.mxu0 0
  %4802 = vmatprep.subr.bf16.mxu0 0
  %4803 = vmatpush1.bf16.msra.mxu0 0
  %4804 = vmatprep.subr.bf16.mxu0 0
  %4805 = vmatpush1.bf16.msra.mxu0 0
  %4806 = vmatprep.subr.bf16.mxu0 0
  %4807 = vmatpush1.bf16.msra.mxu0 0
  %4808 = vmatprep.subr.bf16.mxu0 0
  %4809 = vmatpush1.bf16.msra.mxu0 0
  %4810 = vmatprep.subr.bf16.mxu0 0
  %4811 = vmatpush1.bf16.msra.mxu0 0
  %4812 = vmatprep.subr.bf16.mxu0 0
  %4813 = vmatpush1.bf16.msra.mxu0 0
  %4814 = vmatprep.subr.bf16.mxu0 0
  %4815 = vmatpush1.bf16.msra.mxu0 0
  %4816 = vmatprep.subr.bf16.mxu0 0
  %4817 = vmatpush1.bf16.msra.mxu0 0
  %4818 = vmatprep.subr.bf16.mxu0 0
  %4819 = vmatpush1.bf16.msra.mxu0 0
  %4820 = vmatprep.mubr.bf16.mxu0 0
  %4821 = vmatmul.mubr.bf16.gmra.mrb[0].mxu0 %v4765
  %v4822 = vpop.f32.mrb[0].mxu0
  %v4823 = vadd.f32 0.0, %v4822
  %v4824 = vpop.f32.mrb[0].mxu0
  %v4825 = vadd.f32 0.0, %v4824
  %v4826 = vpop.f32.mrb[0].mxu0
  %v4827 = vadd.f32 0.0, %v4826
  %v4828 = vpop.f32.mrb[0].mxu0
  %v4829 = vadd.f32 0.0, %v4828
  %4830 = vmatprep.mubr.bf16.mxu0 0
  %4831 = vmatmul.mubr.bf16.gmra.mrb[0].mxu0 %v4768
  %v4832 = vpop.f32.mrb[0].mxu0
  %v4833 = vadd.f32 0.0, %v4832
  %v4834 = vpop.f32.mrb[0].mxu0
  %v4835 = vadd.f32 0.0, %v4834
  %v4836 = vpop.f32.mrb[0].mxu0
  %v4837 = vadd.f32 0.0, %v4836
  %v4838 = vpop.f32.mrb[0].mxu0
  %v4839 = vadd.f32 0.0, %v4838
  %4840 = vdwg.mxu0
  %4841 = vmatprep.subr.bf16.mxu0 %v4780
  %4842 = vmatpush1.bf16.msra.mxu0 %v4777
  %4843 = vmatprep.subr.bf16.mxu0 0
  %4844 = vmatpush1.bf16.msra.mxu0 0
  %4845 = vmatprep.subr.bf16.mxu0 0
  %4846 = vmatpush1.bf16.msra.mxu0 0
  %4847 = vmatprep.subr.bf16.mxu0 0
  %4848 = vmatpush1.bf16.msra.mxu0 0
  %4849 = vmatprep.subr.bf16.mxu0 0
  %4850 = vmatpush1.bf16.msra.mxu0 0
  %4851 = vmatprep.subr.bf16.mxu0 0
  %4852 = vmatpush1.bf16.msra.mxu0 0
  %4853 = vmatprep.subr.bf16.mxu0 0
  %4854 = vmatpush1.bf16.msra.mxu0 0
  %4855 = vmatprep.subr.bf16.mxu0 0
  %4856 = vmatpush1.bf16.msra.mxu0 0
  %4857 = vmatprep.subr.bf16.mxu0 0
  %4858 = vmatpush1.bf16.msra.mxu0 0
  %4859 = vmatprep.subr.bf16.mxu0 0
  %4860 = vmatpush1.bf16.msra.mxu0 0
  %4861 = vmatprep.subr.bf16.mxu0 0
  %4862 = vmatpush1.bf16.msra.mxu0 0
  %4863 = vmatprep.subr.bf16.mxu0 0
  %4864 = vmatpush1.bf16.msra.mxu0 0
  %4865 = vmatprep.subr.bf16.mxu0 0
  %4866 = vmatpush1.bf16.msra.mxu0 0
  %4867 = vmatprep.subr.bf16.mxu0 0
  %4868 = vmatpush1.bf16.msra.mxu0 0
  %4869 = vmatprep.subr.bf16.mxu0 0
  %4870 = vmatpush1.bf16.msra.mxu0 0
  %4871 = vmatprep.subr.bf16.mxu0 0
  %4872 = vmatpush1.bf16.msra.mxu0 0
  %4873 = vmatprep.mubr.bf16.mxu0 0
  %4874 = vmatmul.mubr.bf16.gmra.mrb[0].mxu0 %v4765
  %v4875 = vpop.f32.mrb[0].mxu0
  %v4876 = vadd.f32 0.0, %v4875
  %v4877 = vpop.f32.mrb[0].mxu0
  %v4878 = vadd.f32 0.0, %v4877
  %v4879 = vpop.f32.mrb[0].mxu0
  %v4880 = vadd.f32 0.0, %v4879
  %v4881 = vpop.f32.mrb[0].mxu0
  %v4882 = vadd.f32 0.0, %v4881
  %4883 = vmatprep.mubr.bf16.mxu0 0
  %4884 = vmatmul.mubr.bf16.gmra.mrb[0].mxu0 %v4768
  %v4885 = vpop.f32.mrb[0].mxu0
  %v4886 = vadd.f32 0.0, %v4885
  %v4887 = vpop.f32.mrb[0].mxu0
  %v4888 = vadd.f32 0.0, %v4887
  %v4889 = vpop.f32.mrb[0].mxu0
  %v4890 = vadd.f32 0.0, %v4889
  %v4891 = vpop.f32.mrb[0].mxu0
  %v4892 = vadd.f32 0.0, %v4891
  %4893 = vdwg.mxu0
  %4894 = vmatprep.subr.bf16.mxu0 %v4786
  %4895 = vmatpush1.bf16.msra.mxu0 %v4783
  %4896 = vmatprep.subr.bf16.mxu0 0
  %4897 = vmatpush1.bf16.msra.mxu0 0
  %4898 = vmatprep.subr.bf16.mxu0 0
  %4899 = vmatpush1.bf16.msra.mxu0 0
  %4900 = vmatprep.subr.bf16.mxu0 0
  %4901 = vmatpush1.bf16.msra.mxu0 0
  %4902 = vmatprep.subr.bf16.mxu0 0
  %4903 = vmatpush1.bf16.msra.mxu0 0
  %4904 = vmatprep.subr.bf16.mxu0 0
  %4905 = vmatpush1.bf16.msra.mxu0 0
  %4906 = vmatprep.subr.bf16.mxu0 0
  %4907 = vmatpush1.bf16.msra.mxu0 0
  %4908 = vmatprep.subr.bf16.mxu0 0
  %4909 = vmatpush1.bf16.msra.mxu0 0
  %4910 = vmatprep.subr.bf16.mxu0 0
  %4911 = vmatpush1.bf16.msra.mxu0 0
  %4912 = vmatprep.subr.bf16.mxu0 0
  %4913 = vmatpush1.bf16.msra.mxu0 0
  %4914 = vmatprep.subr.bf16.mxu0 0
  %4915 = vmatpush1.bf16.msra.mxu0 0
  %4916 = vmatprep.subr.bf16.mxu0 0
  %4917 = vmatpush1.bf16.msra.mxu0 0
  %4918 = vmatprep.subr.bf16.mxu0 0
  %4919 = vmatpush1.bf16.msra.mxu0 0
  %4920 = vmatprep.subr.bf16.mxu0 0
  %4921 = vmatpush1.bf16.msra.mxu0 0
  %4922 = vmatprep.subr.bf16.mxu0 0
  %4923 = vmatpush1.bf16.msra.mxu0 0
  %4924 = vmatprep.subr.bf16.mxu0 0
  %4925 = vmatpush1.bf16.msra.mxu0 0
  %4926 = vmatprep.mubr.bf16.mxu0 0
  %4927 = vmatmul.mubr.bf16.gmra.mrb[0].mxu0 %v4765
  %v4928 = vpop.f32.mrb[0].mxu0
  %v4929 = vadd.f32 0.0, %v4928
  %v4930 = vpop.f32.mrb[0].mxu0
  %v4931 = vadd.f32 0.0, %v4930
  %v4932 = vpop.f32.mrb[0].mxu0
  %v4933 = vadd.f32 0.0, %v4932
  %v4934 = vpop.f32.mrb[0].mxu0
  %v4935 = vadd.f32 0.0, %v4934
  %4936 = vmatprep.mubr.bf16.mxu0 0
  %4937 = vmatmul.mubr.bf16.gmra.mrb[0].mxu0 %v4768
  %v4938 = vpop.f32.mrb[0].mxu0
  %v4939 = vadd.f32 0.0, %v4938
  %v4940 = vpop.f32.mrb[0].mxu0
  %v4941 = vadd.f32 0.0, %v4940
  %v4942 = vpop.f32.mrb[0].mxu0
  %v4943 = vadd.f32 0.0, %v4942
  %v4944 = vpop.f32.mrb[0].mxu0
  %v4945 = vadd.f32 0.0, %v4944
  %4946 = vdwg.mxu0
  %v4947 = vadd.f32 %v4601, %v4823
  %v4948 = vadd.f32 %v4603, %v4825
  %v4949 = vadd.f32 %v4654, %v4876
  %v4950 = vadd.f32 %v4656, %v4878
  %v4951 = vadd.f32 %v4707, %v4929
  %v4952 = vadd.f32 %v4709, %v4931
  %v4953 = vadd.f32 %v4605, %v4827
  %v4954 = vadd.f32 %v4607, %v4829
  %v4955 = vadd.f32 %v4658, %v4880
  %v4956 = vadd.f32 %v4660, %v4882
  %v4957 = vadd.f32 %v4711, %v4933
  %v4958 = vadd.f32 %v4713, %v4935
  %v4959 = vadd.f32 %v4611, %v4833
  %v4960 = vadd.f32 %v4613, %v4835
  %v4961 = vadd.f32 %v4664, %v4886
  %v4962 = vadd.f32 %v4666, %v4888
  %v4963 = vadd.f32 %v4717, %v4939
  %v4964 = vadd.f32 %v4719, %v4941
  %v4965 = vadd.f32 %v4615, %v4837
  %v4966 = vadd.f32 %v4617, %v4839
  %v4967 = vadd.f32 %v4668, %v4890
  %v4968 = vadd.f32 %v4670, %v4892
  %v4969 = vadd.f32 %v4721, %v4943
  %v4970 = vadd.f32 %v4723, %v4945
  %4971 = vrot.lane.b32.xlu0 %v4275, 1
  %v4972 = vpop.permute.xlu0 %4971
  %4973 = vrot.lane.b32.xlu0 %v4276, 1
  %v4974 = vpop.permute.xlu0 %4973
  %4975 = vrot.lane.b32.xlu0 %v4277, 1
  %v4976 = vpop.permute.xlu0 %4975
  %4977 = vrot.lane.b32.xlu0 %v4278, 1
  %v4978 = vpop.permute.xlu0 %4977
  %4979 = vrot.lane.b32.xlu0 %v4279, 1
  %v4980 = vpop.permute.xlu0 %4979
  %4981 = vrot.lane.b32.xlu0 %v4280, 1
  %v4982 = vpop.permute.xlu0 %4981
  %v4983 = vsel %vm988, %v4980, %v4982
  %v4984 = vsel %vm988, %v4978, %v4980
  %v4985 = vsel %vm988, %v4976, %v4978
  %v4986 = vsel %vm988, %v4974, %v4976
  %v4987 = vsel %vm988, %v4972, %v4974
  %v4988 = vsel %vm988, %v4982, %v4972
  %s4989 = scalar_lea.vmem %s4, 192
  %v4990 = vld [vmem:[%s4989] sm:$0xf]
  %v4991 = vld [vmem:[%s4989 + $0x4] sm:$0xf]
  %v4992 = vld [vmem:[%s4989 + $0x8] sm:$0xf]
  %v4993 = vld [vmem:[%s4989 + $0xc] sm:$0xf]
  %v4994 = vpack.c.bf16 %v4988, %v4988
  %v4995 = vpack.c.bf16 %v4987, %v4987
  %v4996 = vpack.c.bf16 %v4986, %v4986
  %v4997 = vpack.c.bf16 %v4985, %v4985
  %v4998 = vpack.c.bf16 %v4984, %v4984
  %v4999 = vpack.c.bf16 %v4983, %v4983
  %v5004 = vunpack.c.l.b16 %v4990
  %v5005 = vunpack.c.l.b16 %v4991
  %v5006 = vunpack.c.l.b16 %v4992
  %v5007 = vunpack.c.l.b16 %v4993
  %v5008 = vpack.c.b16 %v5005, %v5004
  %v5009 = vpack.c.b16 %v5007, %v5006
  %v5011 = vsel %vm351, %v5008, 0
  %v5014 = vsel %vm351, %v5009, 0
  %v5017 = vsel %vm358, %v4994, 0
  %v5020 = vsel %vm358, %v4995, 0
  %v5023 = vsel %vm358, %v4996, 0
  %v5026 = vsel %vm358, %v4997, 0
  %v5029 = vsel %vm358, %v4998, 0
  %v5032 = vsel %vm358, %v4999, 0
  %5034 = vmatprep.subr.bf16.mxu0 %v5020
  %5035 = vmatpush1.bf16.msra.mxu0 %v5017
  %5036 = vmatprep.subr.bf16.mxu0 0
  %5037 = vmatpush1.bf16.msra.mxu0 0
  %5038 = vmatprep.subr.bf16.mxu0 0
  %5039 = vmatpush1.bf16.msra.mxu0 0
  %5040 = vmatprep.subr.bf16.mxu0 0
  %5041 = vmatpush1.bf16.msra.mxu0 0
  %5042 = vmatprep.subr.bf16.mxu0 0
  %5043 = vmatpush1.bf16.msra.mxu0 0
  %5044 = vmatprep.subr.bf16.mxu0 0
  %5045 = vmatpush1.bf16.msra.mxu0 0
  %5046 = vmatprep.subr.bf16.mxu0 0
  %5047 = vmatpush1.bf16.msra.mxu0 0
  %5048 = vmatprep.subr.bf16.mxu0 0
  %5049 = vmatpush1.bf16.msra.mxu0 0
  %5050 = vmatprep.subr.bf16.mxu0 0
  %5051 = vmatpush1.bf16.msra.mxu0 0
  %5052 = vmatprep.subr.bf16.mxu0 0
  %5053 = vmatpush1.bf16.msra.mxu0 0
  %5054 = vmatprep.subr.bf16.mxu0 0
  %5055 = vmatpush1.bf16.msra.mxu0 0
  %5056 = vmatprep.subr.bf16.mxu0 0
  %5057 = vmatpush1.bf16.msra.mxu0 0
  %5058 = vmatprep.subr.bf16.mxu0 0
  %5059 = vmatpush1.bf16.msra.mxu0 0
  %5060 = vmatprep.subr.bf16.mxu0 0
  %5061 = vmatpush1.bf16.msra.mxu0 0
  %5062 = vmatprep.subr.bf16.mxu0 0
  %5063 = vmatpush1.bf16.msra.mxu0 0
  %5064 = vmatprep.subr.bf16.mxu0 0
  %5065 = vmatpush1.bf16.msra.mxu0 0
  %5066 = vmatprep.mubr.bf16.mxu0 0
  %5067 = vmatmul.mubr.bf16.gmra.mrb[0].mxu0 %v5011
  %v5068 = vpop.f32.mrb[0].mxu0
  %v5069 = vadd.f32 0.0, %v5068
  %v5070 = vpop.f32.mrb[0].mxu0
  %v5071 = vadd.f32 0.0, %v5070
  %v5072 = vpop.f32.mrb[0].mxu0
  %v5073 = vadd.f32 0.0, %v5072
  %v5074 = vpop.f32.mrb[0].mxu0
  %v5075 = vadd.f32 0.0, %v5074
  %5076 = vmatprep.mubr.bf16.mxu0 0
  %5077 = vmatmul.mubr.bf16.gmra.mrb[0].mxu0 %v5014
  %v5078 = vpop.f32.mrb[0].mxu0
  %v5079 = vadd.f32 0.0, %v5078
  %v5080 = vpop.f32.mrb[0].mxu0
  %v5081 = vadd.f32 0.0, %v5080
  %v5082 = vpop.f32.mrb[0].mxu0
  %v5083 = vadd.f32 0.0, %v5082
  %v5084 = vpop.f32.mrb[0].mxu0
  %v5085 = vadd.f32 0.0, %v5084
  %5086 = vdwg.mxu0
  %5087 = vmatprep.subr.bf16.mxu0 %v5026
  %5088 = vmatpush1.bf16.msra.mxu0 %v5023
  %5089 = vmatprep.subr.bf16.mxu0 0
  %5090 = vmatpush1.bf16.msra.mxu0 0
  %5091 = vmatprep.subr.bf16.mxu0 0
  %5092 = vmatpush1.bf16.msra.mxu0 0
  %5093 = vmatprep.subr.bf16.mxu0 0
  %5094 = vmatpush1.bf16.msra.mxu0 0
  %5095 = vmatprep.subr.bf16.mxu0 0
  %5096 = vmatpush1.bf16.msra.mxu0 0
  %5097 = vmatprep.subr.bf16.mxu0 0
  %5098 = vmatpush1.bf16.msra.mxu0 0
  %5099 = vmatprep.subr.bf16.mxu0 0
  %5100 = vmatpush1.bf16.msra.mxu0 0
  %5101 = vmatprep.subr.bf16.mxu0 0
  %5102 = vmatpush1.bf16.msra.mxu0 0
  %5103 = vmatprep.subr.bf16.mxu0 0
  %5104 = vmatpush1.bf16.msra.mxu0 0
  %5105 = vmatprep.subr.bf16.mxu0 0
  %5106 = vmatpush1.bf16.msra.mxu0 0
  %5107 = vmatprep.subr.bf16.mxu0 0
  %5108 = vmatpush1.bf16.msra.mxu0 0
  %5109 = vmatprep.subr.bf16.mxu0 0
  %5110 = vmatpush1.bf16.msra.mxu0 0
  %5111 = vmatprep.subr.bf16.mxu0 0
  %5112 = vmatpush1.bf16.msra.mxu0 0
  %5113 = vmatprep.subr.bf16.mxu0 0
  %5114 = vmatpush1.bf16.msra.mxu0 0
  %5115 = vmatprep.subr.bf16.mxu0 0
  %5116 = vmatpush1.bf16.msra.mxu0 0
  %5117 = vmatprep.subr.bf16.mxu0 0
  %5118 = vmatpush1.bf16.msra.mxu0 0
  %5119 = vmatprep.mubr.bf16.mxu0 0
  %5120 = vmatmul.mubr.bf16.gmra.mrb[0].mxu0 %v5011
  %v5121 = vpop.f32.mrb[0].mxu0
  %v5122 = vadd.f32 0.0, %v5121
  %v5123 = vpop.f32.mrb[0].mxu0
  %v5124 = vadd.f32 0.0, %v5123
  %v5125 = vpop.f32.mrb[0].mxu0
  %v5126 = vadd.f32 0.0, %v5125
  %v5127 = vpop.f32.mrb[0].mxu0
  %v5128 = vadd.f32 0.0, %v5127
  %5129 = vmatprep.mubr.bf16.mxu0 0
  %5130 = vmatmul.mubr.bf16.gmra.mrb[0].mxu0 %v5014
  %v5131 = vpop.f32.mrb[0].mxu0
  %v5132 = vadd.f32 0.0, %v5131
  %v5133 = vpop.f32.mrb[0].mxu0
  %v5134 = vadd.f32 0.0, %v5133
  %v5135 = vpop.f32.mrb[0].mxu0
  %v5136 = vadd.f32 0.0, %v5135
  %v5137 = vpop.f32.mrb[0].mxu0
  %v5138 = vadd.f32 0.0, %v5137
  %5139 = vdwg.mxu0
  %5140 = vmatprep.subr.bf16.mxu0 %v5032
  %5141 = vmatpush1.bf16.msra.mxu0 %v5029
  %5142 = vmatprep.subr.bf16.mxu0 0
  %5143 = vmatpush1.bf16.msra.mxu0 0
  %5144 = vmatprep.subr.bf16.mxu0 0
  %5145 = vmatpush1.bf16.msra.mxu0 0
  %5146 = vmatprep.subr.bf16.mxu0 0
  %5147 = vmatpush1.bf16.msra.mxu0 0
  %5148 = vmatprep.subr.bf16.mxu0 0
  %5149 = vmatpush1.bf16.msra.mxu0 0
  %5150 = vmatprep.subr.bf16.mxu0 0
  %5151 = vmatpush1.bf16.msra.mxu0 0
  %5152 = vmatprep.subr.bf16.mxu0 0
  %5153 = vmatpush1.bf16.msra.mxu0 0
  %5154 = vmatprep.subr.bf16.mxu0 0
  %5155 = vmatpush1.bf16.msra.mxu0 0
  %5156 = vmatprep.subr.bf16.mxu0 0
  %5157 = vmatpush1.bf16.msra.mxu0 0
  %5158 = vmatprep.subr.bf16.mxu0 0
  %5159 = vmatpush1.bf16.msra.mxu0 0
  %5160 = vmatprep.subr.bf16.mxu0 0
  %5161 = vmatpush1.bf16.msra.mxu0 0
  %5162 = vmatprep.subr.bf16.mxu0 0
  %5163 = vmatpush1.bf16.msra.mxu0 0
  %5164 = vmatprep.subr.bf16.mxu0 0
  %5165 = vmatpush1.bf16.msra.mxu0 0
  %5166 = vmatprep.subr.bf16.mxu0 0
  %5167 = vmatpush1.bf16.msra.mxu0 0
  %5168 = vmatprep.subr.bf16.mxu0 0
  %5169 = vmatpush1.bf16.msra.mxu0 0
  %5170 = vmatprep.subr.bf16.mxu0 0
  %5171 = vmatpush1.bf16.msra.mxu0 0
  %5172 = vmatprep.mubr.bf16.mxu0 0
  %5173 = vmatmul.mubr.bf16.gmra.mrb[0].mxu0 %v5011
  %v5174 = vpop.f32.mrb[0].mxu0
  %v5175 = vadd.f32 0.0, %v5174
  %v5176 = vpop.f32.mrb[0].mxu0
  %v5177 = vadd.f32 0.0, %v5176
  %v5178 = vpop.f32.mrb[0].mxu0
  %v5179 = vadd.f32 0.0, %v5178
  %v5180 = vpop.f32.mrb[0].mxu0
  %v5181 = vadd.f32 0.0, %v5180
  %5182 = vmatprep.mubr.bf16.mxu0 0
  %5183 = vmatmul.mubr.bf16.gmra.mrb[0].mxu0 %v5014
  %v5184 = vpop.f32.mrb[0].mxu0
  %v5185 = vadd.f32 0.0, %v5184
  %v5186 = vpop.f32.mrb[0].mxu0
  %v5187 = vadd.f32 0.0, %v5186
  %v5188 = vpop.f32.mrb[0].mxu0
  %v5189 = vadd.f32 0.0, %v5188
  %v5190 = vpop.f32.mrb[0].mxu0
  %v5191 = vadd.f32 0.0, %v5190
  %5192 = vdwg.mxu0
  %v5193 = vadd.f32 %v4947, %v5069
  %v5194 = vadd.f32 %v4948, %v5071
  %v5195 = vadd.f32 %v4949, %v5122
  %v5196 = vadd.f32 %v4950, %v5124
  %v5197 = vadd.f32 %v4951, %v5175
  %v5198 = vadd.f32 %v4952, %v5177
  %v5199 = vadd.f32 %v4953, %v5073
  %v5200 = vadd.f32 %v4954, %v5075
  %v5201 = vadd.f32 %v4955, %v5126
  %v5202 = vadd.f32 %v4956, %v5128
  %v5203 = vadd.f32 %v4957, %v5179
  %v5204 = vadd.f32 %v4958, %v5181
  %v5205 = vadd.f32 %v4959, %v5079
  %v5206 = vadd.f32 %v4960, %v5081
  %v5207 = vadd.f32 %v4961, %v5132
  %v5208 = vadd.f32 %v4962, %v5134
  %v5209 = vadd.f32 %v4963, %v5185
  %v5210 = vadd.f32 %v4964, %v5187
  %v5211 = vadd.f32 %v4965, %v5083
  %v5212 = vadd.f32 %v4966, %v5085
  %v5213 = vadd.f32 %v4967, %v5136
  %v5214 = vadd.f32 %v4968, %v5138
  %v5215 = vadd.f32 %v4969, %v5189
  %v5216 = vadd.f32 %v4970, %v5191
  %s5217 = scalar_lea.vmem %s4, 208
  %v5218 = vld [vmem:[%s5217] sm:$0xf]
  %v5219 = vld [vmem:[%s5217 + $0x4] sm:$0xf]
  %v5220 = vld [vmem:[%s5217 + $0x8] sm:$0xf]
  %v5221 = vld [vmem:[%s5217 + $0xc] sm:$0xf]
  %v5222 = vpack.c.bf16 %v4275, %v4275
  %v5223 = vpack.c.bf16 %v4276, %v4276
  %v5224 = vpack.c.bf16 %v4277, %v4277
  %v5225 = vpack.c.bf16 %v4278, %v4278
  %v5226 = vpack.c.bf16 %v4279, %v4279
  %v5227 = vpack.c.bf16 %v4280, %v4280
  %v5232 = vunpack.c.l.b16 %v5218
  %v5233 = vunpack.c.l.b16 %v5219
  %v5234 = vunpack.c.l.b16 %v5220
  %v5235 = vunpack.c.l.b16 %v5221
  %v5236 = vpack.c.b16 %v5233, %v5232
  %v5237 = vpack.c.b16 %v5235, %v5234
  %v5239 = vsel %vm351, %v5236, 0
  %v5242 = vsel %vm351, %v5237, 0
  %v5245 = vsel %vm358, %v5222, 0
  %v5248 = vsel %vm358, %v5223, 0
  %v5251 = vsel %vm358, %v5224, 0
  %v5254 = vsel %vm358, %v5225, 0
  %v5257 = vsel %vm358, %v5226, 0
  %v5260 = vsel %vm358, %v5227, 0
  %5262 = vmatprep.subr.bf16.mxu0 %v5248
  %5263 = vmatpush1.bf16.msra.mxu0 %v5245
  %5264 = vmatprep.subr.bf16.mxu0 0
  %5265 = vmatpush1.bf16.msra.mxu0 0
  %5266 = vmatprep.subr.bf16.mxu0 0
  %5267 = vmatpush1.bf16.msra.mxu0 0
  %5268 = vmatprep.subr.bf16.mxu0 0
  %5269 = vmatpush1.bf16.msra.mxu0 0
  %5270 = vmatprep.subr.bf16.mxu0 0
  %5271 = vmatpush1.bf16.msra.mxu0 0
  %5272 = vmatprep.subr.bf16.mxu0 0
  %5273 = vmatpush1.bf16.msra.mxu0 0
  %5274 = vmatprep.subr.bf16.mxu0 0
  %5275 = vmatpush1.bf16.msra.mxu0 0
  %5276 = vmatprep.subr.bf16.mxu0 0
  %5277 = vmatpush1.bf16.msra.mxu0 0
  %5278 = vmatprep.subr.bf16.mxu0 0
  %5279 = vmatpush1.bf16.msra.mxu0 0
  %5280 = vmatprep.subr.bf16.mxu0 0
  %5281 = vmatpush1.bf16.msra.mxu0 0
  %5282 = vmatprep.subr.bf16.mxu0 0
  %5283 = vmatpush1.bf16.msra.mxu0 0
  %5284 = vmatprep.subr.bf16.mxu0 0
  %5285 = vmatpush1.bf16.msra.mxu0 0
  %5286 = vmatprep.subr.bf16.mxu0 0
  %5287 = vmatpush1.bf16.msra.mxu0 0
  %5288 = vmatprep.subr.bf16.mxu0 0
  %5289 = vmatpush1.bf16.msra.mxu0 0
  %5290 = vmatprep.subr.bf16.mxu0 0
  %5291 = vmatpush1.bf16.msra.mxu0 0
  %5292 = vmatprep.subr.bf16.mxu0 0
  %5293 = vmatpush1.bf16.msra.mxu0 0
  %5294 = vmatprep.mubr.bf16.mxu0 0
  %5295 = vmatmul.mubr.bf16.gmra.mrb[0].mxu0 %v5239
  %v5296 = vpop.f32.mrb[0].mxu0
  %v5297 = vadd.f32 0.0, %v5296
  %v5298 = vpop.f32.mrb[0].mxu0
  %v5299 = vadd.f32 0.0, %v5298
  %v5300 = vpop.f32.mrb[0].mxu0
  %v5301 = vadd.f32 0.0, %v5300
  %v5302 = vpop.f32.mrb[0].mxu0
  %v5303 = vadd.f32 0.0, %v5302
  %5304 = vmatprep.mubr.bf16.mxu0 0
  %5305 = vmatmul.mubr.bf16.gmra.mrb[0].mxu0 %v5242
  %v5306 = vpop.f32.mrb[0].mxu0
  %v5307 = vadd.f32 0.0, %v5306
  %v5308 = vpop.f32.mrb[0].mxu0
  %v5309 = vadd.f32 0.0, %v5308
  %v5310 = vpop.f32.mrb[0].mxu0
  %v5311 = vadd.f32 0.0, %v5310
  %v5312 = vpop.f32.mrb[0].mxu0
  %v5313 = vadd.f32 0.0, %v5312
  %5314 = vdwg.mxu0
  %5315 = vmatprep.subr.bf16.mxu0 %v5254
  %5316 = vmatpush1.bf16.msra.mxu0 %v5251
  %5317 = vmatprep.subr.bf16.mxu0 0
  %5318 = vmatpush1.bf16.msra.mxu0 0
  %5319 = vmatprep.subr.bf16.mxu0 0
  %5320 = vmatpush1.bf16.msra.mxu0 0
  %5321 = vmatprep.subr.bf16.mxu0 0
  %5322 = vmatpush1.bf16.msra.mxu0 0
  %5323 = vmatprep.subr.bf16.mxu0 0
  %5324 = vmatpush1.bf16.msra.mxu0 0
  %5325 = vmatprep.subr.bf16.mxu0 0
  %5326 = vmatpush1.bf16.msra.mxu0 0
  %5327 = vmatprep.subr.bf16.mxu0 0
  %5328 = vmatpush1.bf16.msra.mxu0 0
  %5329 = vmatprep.subr.bf16.mxu0 0
  %5330 = vmatpush1.bf16.msra.mxu0 0
  %5331 = vmatprep.subr.bf16.mxu0 0
  %5332 = vmatpush1.bf16.msra.mxu0 0
  %5333 = vmatprep.subr.bf16.mxu0 0
  %5334 = vmatpush1.bf16.msra.mxu0 0
  %5335 = vmatprep.subr.bf16.mxu0 0
  %5336 = vmatpush1.bf16.msra.mxu0 0
  %5337 = vmatprep.subr.bf16.mxu0 0
  %5338 = vmatpush1.bf16.msra.mxu0 0
  %5339 = vmatprep.subr.bf16.mxu0 0
  %5340 = vmatpush1.bf16.msra.mxu0 0
  %5341 = vmatprep.subr.bf16.mxu0 0
  %5342 = vmatpush1.bf16.msra.mxu0 0
  %5343 = vmatprep.subr.bf16.mxu0 0
  %5344 = vmatpush1.bf16.msra.mxu0 0
  %5345 = vmatprep.subr.bf16.mxu0 0
  %5346 = vmatpush1.bf16.msra.mxu0 0
  %5347 = vmatprep.mubr.bf16.mxu0 0
  %5348 = vmatmul.mubr.bf16.gmra.mrb[0].mxu0 %v5239
  %v5349 = vpop.f32.mrb[0].mxu0
  %v5350 = vadd.f32 0.0, %v5349
  %v5351 = vpop.f32.mrb[0].mxu0
  %v5352 = vadd.f32 0.0, %v5351
  %v5353 = vpop.f32.mrb[0].mxu0
  %v5354 = vadd.f32 0.0, %v5353
  %v5355 = vpop.f32.mrb[0].mxu0
  %v5356 = vadd.f32 0.0, %v5355
  %5357 = vmatprep.mubr.bf16.mxu0 0
  %5358 = vmatmul.mubr.bf16.gmra.mrb[0].mxu0 %v5242
  %v5359 = vpop.f32.mrb[0].mxu0
  %v5360 = vadd.f32 0.0, %v5359
  %v5361 = vpop.f32.mrb[0].mxu0
  %v5362 = vadd.f32 0.0, %v5361
  %v5363 = vpop.f32.mrb[0].mxu0
  %v5364 = vadd.f32 0.0, %v5363
  %v5365 = vpop.f32.mrb[0].mxu0
  %v5366 = vadd.f32 0.0, %v5365
  %5367 = vdwg.mxu0
  %5368 = vmatprep.subr.bf16.mxu0 %v5260
  %5369 = vmatpush1.bf16.msra.mxu0 %v5257
  %5370 = vmatprep.subr.bf16.mxu0 0
  %5371 = vmatpush1.bf16.msra.mxu0 0
  %5372 = vmatprep.subr.bf16.mxu0 0
  %5373 = vmatpush1.bf16.msra.mxu0 0
  %5374 = vmatprep.subr.bf16.mxu0 0
  %5375 = vmatpush1.bf16.msra.mxu0 0
  %5376 = vmatprep.subr.bf16.mxu0 0
  %5377 = vmatpush1.bf16.msra.mxu0 0
  %5378 = vmatprep.subr.bf16.mxu0 0
  %5379 = vmatpush1.bf16.msra.mxu0 0
  %5380 = vmatprep.subr.bf16.mxu0 0
  %5381 = vmatpush1.bf16.msra.mxu0 0
  %5382 = vmatprep.subr.bf16.mxu0 0
  %5383 = vmatpush1.bf16.msra.mxu0 0
  %5384 = vmatprep.subr.bf16.mxu0 0
  %5385 = vmatpush1.bf16.msra.mxu0 0
  %5386 = vmatprep.subr.bf16.mxu0 0
  %5387 = vmatpush1.bf16.msra.mxu0 0
  %5388 = vmatprep.subr.bf16.mxu0 0
  %5389 = vmatpush1.bf16.msra.mxu0 0
  %5390 = vmatprep.subr.bf16.mxu0 0
  %5391 = vmatpush1.bf16.msra.mxu0 0
  %5392 = vmatprep.subr.bf16.mxu0 0
  %5393 = vmatpush1.bf16.msra.mxu0 0
  %5394 = vmatprep.subr.bf16.mxu0 0
  %5395 = vmatpush1.bf16.msra.mxu0 0
  %5396 = vmatprep.subr.bf16.mxu0 0
  %5397 = vmatpush1.bf16.msra.mxu0 0
  %5398 = vmatprep.subr.bf16.mxu0 0
  %5399 = vmatpush1.bf16.msra.mxu0 0
  %5400 = vmatprep.mubr.bf16.mxu0 0
  %5401 = vmatmul.mubr.bf16.gmra.mrb[0].mxu0 %v5239
  %v5402 = vpop.f32.mrb[0].mxu0
  %v5403 = vadd.f32 0.0, %v5402
  %v5404 = vpop.f32.mrb[0].mxu0
  %v5405 = vadd.f32 0.0, %v5404
  %v5406 = vpop.f32.mrb[0].mxu0
  %v5407 = vadd.f32 0.0, %v5406
  %v5408 = vpop.f32.mrb[0].mxu0
  %v5409 = vadd.f32 0.0, %v5408
  %5410 = vmatprep.mubr.bf16.mxu0 0
  %5411 = vmatmul.mubr.bf16.gmra.mrb[0].mxu0 %v5242
  %v5412 = vpop.f32.mrb[0].mxu0
  %v5413 = vadd.f32 0.0, %v5412
  %v5414 = vpop.f32.mrb[0].mxu0
  %v5415 = vadd.f32 0.0, %v5414
  %v5416 = vpop.f32.mrb[0].mxu0
  %v5417 = vadd.f32 0.0, %v5416
  %v5418 = vpop.f32.mrb[0].mxu0
  %v5419 = vadd.f32 0.0, %v5418
  %5420 = vdwg.mxu0
  %v5421 = vadd.f32 %v5193, %v5297
  %v5422 = vadd.f32 %v5194, %v5299
  %v5423 = vadd.f32 %v5195, %v5350
  %v5424 = vadd.f32 %v5196, %v5352
  %v5425 = vadd.f32 %v5197, %v5403
  %v5426 = vadd.f32 %v5198, %v5405
  %v5427 = vadd.f32 %v5199, %v5301
  %v5428 = vadd.f32 %v5200, %v5303
  %v5429 = vadd.f32 %v5201, %v5354
  %v5430 = vadd.f32 %v5202, %v5356
  %v5431 = vadd.f32 %v5203, %v5407
  %v5432 = vadd.f32 %v5204, %v5409
  %v5433 = vadd.f32 %v5205, %v5307
  %v5434 = vadd.f32 %v5206, %v5309
  %v5435 = vadd.f32 %v5207, %v5360
  %v5436 = vadd.f32 %v5208, %v5362
  %v5437 = vadd.f32 %v5209, %v5413
  %v5438 = vadd.f32 %v5210, %v5415
  %v5439 = vadd.f32 %v5211, %v5311
  %v5440 = vadd.f32 %v5212, %v5313
  %v5441 = vadd.f32 %v5213, %v5364
  %v5442 = vadd.f32 %v5214, %v5366
  %v5443 = vadd.f32 %v5215, %v5417
  %v5444 = vadd.f32 %v5216, %v5419
  %5445 = vrot.lane.b32.xlu0 %v4275, 127
  %v5446 = vpop.permute.xlu0 %5445
  %5447 = vrot.lane.b32.xlu0 %v4276, 127
  %v5448 = vpop.permute.xlu0 %5447
  %5449 = vrot.lane.b32.xlu0 %v4277, 127
  %v5450 = vpop.permute.xlu0 %5449
  %5451 = vrot.lane.b32.xlu0 %v4278, 127
  %v5452 = vpop.permute.xlu0 %5451
  %5453 = vrot.lane.b32.xlu0 %v4279, 127
  %v5454 = vpop.permute.xlu0 %5453
  %5455 = vrot.lane.b32.xlu0 %v4280, 127
  %v5456 = vpop.permute.xlu0 %5455
  %v5457 = vsel %vm1457, %v5454, %v5456
  %v5458 = vsel %vm1457, %v5452, %v5454
  %v5459 = vsel %vm1457, %v5450, %v5452
  %v5460 = vsel %vm1457, %v5448, %v5450
  %v5461 = vsel %vm1457, %v5446, %v5448
  %v5462 = vsel %vm1457, %v5456, %v5446
  %s5463 = scalar_lea.vmem %s4, 224
  %v5464 = vld [vmem:[%s5463] sm:$0xf]
  %v5465 = vld [vmem:[%s5463 + $0x4] sm:$0xf]
  %v5466 = vld [vmem:[%s5463 + $0x8] sm:$0xf]
  %v5467 = vld [vmem:[%s5463 + $0xc] sm:$0xf]
  %v5468 = vpack.c.bf16 %v5461, %v5461
  %v5469 = vpack.c.bf16 %v5460, %v5460
  %v5470 = vpack.c.bf16 %v5459, %v5459
  %v5471 = vpack.c.bf16 %v5458, %v5458
  %v5472 = vpack.c.bf16 %v5457, %v5457
  %v5473 = vpack.c.bf16 %v5462, %v5462
  %v5478 = vunpack.c.l.b16 %v5464
  %v5479 = vunpack.c.l.b16 %v5465
  %v5480 = vunpack.c.l.b16 %v5466
  %v5481 = vunpack.c.l.b16 %v5467
  %v5482 = vpack.c.b16 %v5479, %v5478
  %v5483 = vpack.c.b16 %v5481, %v5480
  %v5485 = vsel %vm351, %v5482, 0
  %v5488 = vsel %vm351, %v5483, 0
  %v5491 = vsel %vm358, %v5468, 0
  %v5494 = vsel %vm358, %v5469, 0
  %v5497 = vsel %vm358, %v5470, 0
  %v5500 = vsel %vm358, %v5471, 0
  %v5503 = vsel %vm358, %v5472, 0
  %v5506 = vsel %vm358, %v5473, 0
  %5508 = vmatprep.subr.bf16.mxu0 %v5494
  %5509 = vmatpush1.bf16.msra.mxu0 %v5491
  %5510 = vmatprep.subr.bf16.mxu0 0
  %5511 = vmatpush1.bf16.msra.mxu0 0
  %5512 = vmatprep.subr.bf16.mxu0 0
  %5513 = vmatpush1.bf16.msra.mxu0 0
  %5514 = vmatprep.subr.bf16.mxu0 0
  %5515 = vmatpush1.bf16.msra.mxu0 0
  %5516 = vmatprep.subr.bf16.mxu0 0
  %5517 = vmatpush1.bf16.msra.mxu0 0
  %5518 = vmatprep.subr.bf16.mxu0 0
  %5519 = vmatpush1.bf16.msra.mxu0 0
  %5520 = vmatprep.subr.bf16.mxu0 0
  %5521 = vmatpush1.bf16.msra.mxu0 0
  %5522 = vmatprep.subr.bf16.mxu0 0
  %5523 = vmatpush1.bf16.msra.mxu0 0
  %5524 = vmatprep.subr.bf16.mxu0 0
  %5525 = vmatpush1.bf16.msra.mxu0 0
  %5526 = vmatprep.subr.bf16.mxu0 0
  %5527 = vmatpush1.bf16.msra.mxu0 0
  %5528 = vmatprep.subr.bf16.mxu0 0
  %5529 = vmatpush1.bf16.msra.mxu0 0
  %5530 = vmatprep.subr.bf16.mxu0 0
  %5531 = vmatpush1.bf16.msra.mxu0 0
  %5532 = vmatprep.subr.bf16.mxu0 0
  %5533 = vmatpush1.bf16.msra.mxu0 0
  %5534 = vmatprep.subr.bf16.mxu0 0
  %5535 = vmatpush1.bf16.msra.mxu0 0
  %5536 = vmatprep.subr.bf16.mxu0 0
  %5537 = vmatpush1.bf16.msra.mxu0 0
  %5538 = vmatprep.subr.bf16.mxu0 0
  %5539 = vmatpush1.bf16.msra.mxu0 0
  %5540 = vmatprep.mubr.bf16.mxu0 0
  %5541 = vmatmul.mubr.bf16.gmra.mrb[0].mxu0 %v5485
  %v5542 = vpop.f32.mrb[0].mxu0
  %v5543 = vadd.f32 0.0, %v5542
  %v5544 = vpop.f32.mrb[0].mxu0
  %v5545 = vadd.f32 0.0, %v5544
  %v5546 = vpop.f32.mrb[0].mxu0
  %v5547 = vadd.f32 0.0, %v5546
  %v5548 = vpop.f32.mrb[0].mxu0
  %v5549 = vadd.f32 0.0, %v5548
  %5550 = vmatprep.mubr.bf16.mxu0 0
  %5551 = vmatmul.mubr.bf16.gmra.mrb[0].mxu0 %v5488
  %v5552 = vpop.f32.mrb[0].mxu0
  %v5553 = vadd.f32 0.0, %v5552
  %v5554 = vpop.f32.mrb[0].mxu0
  %v5555 = vadd.f32 0.0, %v5554
  %v5556 = vpop.f32.mrb[0].mxu0
  %v5557 = vadd.f32 0.0, %v5556
  %v5558 = vpop.f32.mrb[0].mxu0
  %v5559 = vadd.f32 0.0, %v5558
  %5560 = vdwg.mxu0
  %5561 = vmatprep.subr.bf16.mxu0 %v5500
  %5562 = vmatpush1.bf16.msra.mxu0 %v5497
  %5563 = vmatprep.subr.bf16.mxu0 0
  %5564 = vmatpush1.bf16.msra.mxu0 0
  %5565 = vmatprep.subr.bf16.mxu0 0
  %5566 = vmatpush1.bf16.msra.mxu0 0
  %5567 = vmatprep.subr.bf16.mxu0 0
  %5568 = vmatpush1.bf16.msra.mxu0 0
  %5569 = vmatprep.subr.bf16.mxu0 0
  %5570 = vmatpush1.bf16.msra.mxu0 0
  %5571 = vmatprep.subr.bf16.mxu0 0
  %5572 = vmatpush1.bf16.msra.mxu0 0
  %5573 = vmatprep.subr.bf16.mxu0 0
  %5574 = vmatpush1.bf16.msra.mxu0 0
  %5575 = vmatprep.subr.bf16.mxu0 0
  %5576 = vmatpush1.bf16.msra.mxu0 0
  %5577 = vmatprep.subr.bf16.mxu0 0
  %5578 = vmatpush1.bf16.msra.mxu0 0
  %5579 = vmatprep.subr.bf16.mxu0 0
  %5580 = vmatpush1.bf16.msra.mxu0 0
  %5581 = vmatprep.subr.bf16.mxu0 0
  %5582 = vmatpush1.bf16.msra.mxu0 0
  %5583 = vmatprep.subr.bf16.mxu0 0
  %5584 = vmatpush1.bf16.msra.mxu0 0
  %5585 = vmatprep.subr.bf16.mxu0 0
  %5586 = vmatpush1.bf16.msra.mxu0 0
  %5587 = vmatprep.subr.bf16.mxu0 0
  %5588 = vmatpush1.bf16.msra.mxu0 0
  %5589 = vmatprep.subr.bf16.mxu0 0
  %5590 = vmatpush1.bf16.msra.mxu0 0
  %5591 = vmatprep.subr.bf16.mxu0 0
  %5592 = vmatpush1.bf16.msra.mxu0 0
  %5593 = vmatprep.mubr.bf16.mxu0 0
  %5594 = vmatmul.mubr.bf16.gmra.mrb[0].mxu0 %v5485
  %v5595 = vpop.f32.mrb[0].mxu0
  %v5596 = vadd.f32 0.0, %v5595
  %v5597 = vpop.f32.mrb[0].mxu0
  %v5598 = vadd.f32 0.0, %v5597
  %v5599 = vpop.f32.mrb[0].mxu0
  %v5600 = vadd.f32 0.0, %v5599
  %v5601 = vpop.f32.mrb[0].mxu0
  %v5602 = vadd.f32 0.0, %v5601
  %5603 = vmatprep.mubr.bf16.mxu0 0
  %5604 = vmatmul.mubr.bf16.gmra.mrb[0].mxu0 %v5488
  %v5605 = vpop.f32.mrb[0].mxu0
  %v5606 = vadd.f32 0.0, %v5605
  %v5607 = vpop.f32.mrb[0].mxu0
  %v5608 = vadd.f32 0.0, %v5607
  %v5609 = vpop.f32.mrb[0].mxu0
  %v5610 = vadd.f32 0.0, %v5609
  %v5611 = vpop.f32.mrb[0].mxu0
  %v5612 = vadd.f32 0.0, %v5611
  %5613 = vdwg.mxu0
  %5614 = vmatprep.subr.bf16.mxu0 %v5506
  %5615 = vmatpush1.bf16.msra.mxu0 %v5503
  %5616 = vmatprep.subr.bf16.mxu0 0
  %5617 = vmatpush1.bf16.msra.mxu0 0
  %5618 = vmatprep.subr.bf16.mxu0 0
  %5619 = vmatpush1.bf16.msra.mxu0 0
  %5620 = vmatprep.subr.bf16.mxu0 0
  %5621 = vmatpush1.bf16.msra.mxu0 0
  %5622 = vmatprep.subr.bf16.mxu0 0
  %5623 = vmatpush1.bf16.msra.mxu0 0
  %5624 = vmatprep.subr.bf16.mxu0 0
  %5625 = vmatpush1.bf16.msra.mxu0 0
  %5626 = vmatprep.subr.bf16.mxu0 0
  %5627 = vmatpush1.bf16.msra.mxu0 0
  %5628 = vmatprep.subr.bf16.mxu0 0
  %5629 = vmatpush1.bf16.msra.mxu0 0
  %5630 = vmatprep.subr.bf16.mxu0 0
  %5631 = vmatpush1.bf16.msra.mxu0 0
  %5632 = vmatprep.subr.bf16.mxu0 0
  %5633 = vmatpush1.bf16.msra.mxu0 0
  %5634 = vmatprep.subr.bf16.mxu0 0
  %5635 = vmatpush1.bf16.msra.mxu0 0
  %5636 = vmatprep.subr.bf16.mxu0 0
  %5637 = vmatpush1.bf16.msra.mxu0 0
  %5638 = vmatprep.subr.bf16.mxu0 0
  %5639 = vmatpush1.bf16.msra.mxu0 0
  %5640 = vmatprep.subr.bf16.mxu0 0
  %5641 = vmatpush1.bf16.msra.mxu0 0
  %5642 = vmatprep.subr.bf16.mxu0 0
  %5643 = vmatpush1.bf16.msra.mxu0 0
  %5644 = vmatprep.subr.bf16.mxu0 0
  %5645 = vmatpush1.bf16.msra.mxu0 0
  %5646 = vmatprep.mubr.bf16.mxu0 0
  %5647 = vmatmul.mubr.bf16.gmra.mrb[0].mxu0 %v5485
  %v5648 = vpop.f32.mrb[0].mxu0
  %v5649 = vadd.f32 0.0, %v5648
  %v5650 = vpop.f32.mrb[0].mxu0
  %v5651 = vadd.f32 0.0, %v5650
  %v5652 = vpop.f32.mrb[0].mxu0
  %v5653 = vadd.f32 0.0, %v5652
  %v5654 = vpop.f32.mrb[0].mxu0
  %v5655 = vadd.f32 0.0, %v5654
  %5656 = vmatprep.mubr.bf16.mxu0 0
  %5657 = vmatmul.mubr.bf16.gmra.mrb[0].mxu0 %v5488
  %v5658 = vpop.f32.mrb[0].mxu0
  %v5659 = vadd.f32 0.0, %v5658
  %v5660 = vpop.f32.mrb[0].mxu0
  %v5661 = vadd.f32 0.0, %v5660
  %v5662 = vpop.f32.mrb[0].mxu0
  %v5663 = vadd.f32 0.0, %v5662
  %v5664 = vpop.f32.mrb[0].mxu0
  %v5665 = vadd.f32 0.0, %v5664
  %5666 = vdwg.mxu0
  %v5667 = vadd.f32 %v5421, %v5543
  %v5668 = vadd.f32 %v5422, %v5545
  %v5669 = vadd.f32 %v5423, %v5596
  %v5670 = vadd.f32 %v5424, %v5598
  %v5671 = vadd.f32 %v5425, %v5649
  %v5672 = vadd.f32 %v5426, %v5651
  %v5673 = vadd.f32 %v5427, %v5547
  %v5674 = vadd.f32 %v5428, %v5549
  %v5675 = vadd.f32 %v5429, %v5600
  %v5676 = vadd.f32 %v5430, %v5602
  %v5677 = vadd.f32 %v5431, %v5653
  %v5678 = vadd.f32 %v5432, %v5655
  %v5679 = vadd.f32 %v5433, %v5553
  %v5680 = vadd.f32 %v5434, %v5555
  %v5681 = vadd.f32 %v5435, %v5606
  %v5682 = vadd.f32 %v5436, %v5608
  %v5683 = vadd.f32 %v5437, %v5659
  %v5684 = vadd.f32 %v5438, %v5661
  %v5685 = vadd.f32 %v5439, %v5557
  %v5686 = vadd.f32 %v5440, %v5559
  %v5687 = vadd.f32 %v5441, %v5610
  %v5688 = vadd.f32 %v5442, %v5612
  %v5689 = vadd.f32 %v5443, %v5663
  %v5690 = vadd.f32 %v5444, %v5665
  %5691 = vrot.lane.b32.xlu0 %v4275, 111
  %v5692 = vpop.permute.xlu0 %5691
  %5693 = vrot.lane.b32.xlu0 %v4276, 111
  %v5694 = vpop.permute.xlu0 %5693
  %5695 = vrot.lane.b32.xlu0 %v4277, 111
  %v5696 = vpop.permute.xlu0 %5695
  %5697 = vrot.lane.b32.xlu0 %v4278, 111
  %v5698 = vpop.permute.xlu0 %5697
  %5699 = vrot.lane.b32.xlu0 %v4279, 111
  %v5700 = vpop.permute.xlu0 %5699
  %5701 = vrot.lane.b32.xlu0 %v4280, 111
  %v5702 = vpop.permute.xlu0 %5701
  %v5703 = vsel %vm1704, %v5700, %v5702
  %v5704 = vsel %vm1704, %v5698, %v5700
  %v5705 = vsel %vm1704, %v5696, %v5698
  %v5706 = vsel %vm1704, %v5694, %v5696
  %v5707 = vsel %vm1704, %v5692, %v5694
  %v5708 = vsel %vm1704, %v5702, %v5692
  %s5709 = scalar_lea.vmem %s4, 240
  %v5710 = vld [vmem:[%s5709] sm:$0xf]
  %v5711 = vld [vmem:[%s5709 + $0x4] sm:$0xf]
  %v5712 = vld [vmem:[%s5709 + $0x8] sm:$0xf]
  %v5713 = vld [vmem:[%s5709 + $0xc] sm:$0xf]
  %v5714 = vpack.c.bf16 %v5707, %v5707
  %v5715 = vpack.c.bf16 %v5706, %v5706
  %v5716 = vpack.c.bf16 %v5705, %v5705
  %v5717 = vpack.c.bf16 %v5704, %v5704
  %v5718 = vpack.c.bf16 %v5703, %v5703
  %v5719 = vpack.c.bf16 %v5708, %v5708
  %v5724 = vunpack.c.l.b16 %v5710
  %v5725 = vunpack.c.l.b16 %v5711
  %v5726 = vunpack.c.l.b16 %v5712
  %v5727 = vunpack.c.l.b16 %v5713
  %v5728 = vpack.c.b16 %v5725, %v5724
  %v5729 = vpack.c.b16 %v5727, %v5726
  %v5731 = vsel %vm351, %v5728, 0
  %v5734 = vsel %vm351, %v5729, 0
  %v5737 = vsel %vm358, %v5714, 0
  %v5740 = vsel %vm358, %v5715, 0
  %v5743 = vsel %vm358, %v5716, 0
  %v5746 = vsel %vm358, %v5717, 0
  %v5749 = vsel %vm358, %v5718, 0
  %v5752 = vsel %vm358, %v5719, 0
  %5754 = vmatprep.subr.bf16.mxu0 %v5740
  %5755 = vmatpush1.bf16.msra.mxu0 %v5737
  %5756 = vmatprep.subr.bf16.mxu0 0
  %5757 = vmatpush1.bf16.msra.mxu0 0
  %5758 = vmatprep.subr.bf16.mxu0 0
  %5759 = vmatpush1.bf16.msra.mxu0 0
  %5760 = vmatprep.subr.bf16.mxu0 0
  %5761 = vmatpush1.bf16.msra.mxu0 0
  %5762 = vmatprep.subr.bf16.mxu0 0
  %5763 = vmatpush1.bf16.msra.mxu0 0
  %5764 = vmatprep.subr.bf16.mxu0 0
  %5765 = vmatpush1.bf16.msra.mxu0 0
  %5766 = vmatprep.subr.bf16.mxu0 0
  %5767 = vmatpush1.bf16.msra.mxu0 0
  %5768 = vmatprep.subr.bf16.mxu0 0
  %5769 = vmatpush1.bf16.msra.mxu0 0
  %5770 = vmatprep.subr.bf16.mxu0 0
  %5771 = vmatpush1.bf16.msra.mxu0 0
  %5772 = vmatprep.subr.bf16.mxu0 0
  %5773 = vmatpush1.bf16.msra.mxu0 0
  %5774 = vmatprep.subr.bf16.mxu0 0
  %5775 = vmatpush1.bf16.msra.mxu0 0
  %5776 = vmatprep.subr.bf16.mxu0 0
  %5777 = vmatpush1.bf16.msra.mxu0 0
  %5778 = vmatprep.subr.bf16.mxu0 0
  %5779 = vmatpush1.bf16.msra.mxu0 0
  %5780 = vmatprep.subr.bf16.mxu0 0
  %5781 = vmatpush1.bf16.msra.mxu0 0
  %5782 = vmatprep.subr.bf16.mxu0 0
  %5783 = vmatpush1.bf16.msra.mxu0 0
  %5784 = vmatprep.subr.bf16.mxu0 0
  %5785 = vmatpush1.bf16.msra.mxu0 0
  %5786 = vmatprep.mubr.bf16.mxu0 0
  %5787 = vmatmul.mubr.bf16.gmra.mrb[0].mxu0 %v5731
  %v5788 = vpop.f32.mrb[0].mxu0
  %v5789 = vadd.f32 0.0, %v5788
  %v5790 = vpop.f32.mrb[0].mxu0
  %v5791 = vadd.f32 0.0, %v5790
  %v5792 = vpop.f32.mrb[0].mxu0
  %v5793 = vadd.f32 0.0, %v5792
  %v5794 = vpop.f32.mrb[0].mxu0
  %v5795 = vadd.f32 0.0, %v5794
  %5796 = vmatprep.mubr.bf16.mxu0 0
  %5797 = vmatmul.mubr.bf16.gmra.mrb[0].mxu0 %v5734
  %v5798 = vpop.f32.mrb[0].mxu0
  %v5799 = vadd.f32 0.0, %v5798
  %v5800 = vpop.f32.mrb[0].mxu0
  %v5801 = vadd.f32 0.0, %v5800
  %v5802 = vpop.f32.mrb[0].mxu0
  %v5803 = vadd.f32 0.0, %v5802
  %v5804 = vpop.f32.mrb[0].mxu0
  %v5805 = vadd.f32 0.0, %v5804
  %5806 = vdwg.mxu0
  %5807 = vmatprep.subr.bf16.mxu0 %v5746
  %5808 = vmatpush1.bf16.msra.mxu0 %v5743
  %5809 = vmatprep.subr.bf16.mxu0 0
  %5810 = vmatpush1.bf16.msra.mxu0 0
  %5811 = vmatprep.subr.bf16.mxu0 0
  %5812 = vmatpush1.bf16.msra.mxu0 0
  %5813 = vmatprep.subr.bf16.mxu0 0
  %5814 = vmatpush1.bf16.msra.mxu0 0
  %5815 = vmatprep.subr.bf16.mxu0 0
  %5816 = vmatpush1.bf16.msra.mxu0 0
  %5817 = vmatprep.subr.bf16.mxu0 0
  %5818 = vmatpush1.bf16.msra.mxu0 0
  %5819 = vmatprep.subr.bf16.mxu0 0
  %5820 = vmatpush1.bf16.msra.mxu0 0
  %5821 = vmatprep.subr.bf16.mxu0 0
  %5822 = vmatpush1.bf16.msra.mxu0 0
  %5823 = vmatprep.subr.bf16.mxu0 0
  %5824 = vmatpush1.bf16.msra.mxu0 0
  %5825 = vmatprep.subr.bf16.mxu0 0
  %5826 = vmatpush1.bf16.msra.mxu0 0
  %5827 = vmatprep.subr.bf16.mxu0 0
  %5828 = vmatpush1.bf16.msra.mxu0 0
  %5829 = vmatprep.subr.bf16.mxu0 0
  %5830 = vmatpush1.bf16.msra.mxu0 0
  %5831 = vmatprep.subr.bf16.mxu0 0
  %5832 = vmatpush1.bf16.msra.mxu0 0
  %5833 = vmatprep.subr.bf16.mxu0 0
  %5834 = vmatpush1.bf16.msra.mxu0 0
  %5835 = vmatprep.subr.bf16.mxu0 0
  %5836 = vmatpush1.bf16.msra.mxu0 0
  %5837 = vmatprep.subr.bf16.mxu0 0
  %5838 = vmatpush1.bf16.msra.mxu0 0
  %5839 = vmatprep.mubr.bf16.mxu0 0
  %5840 = vmatmul.mubr.bf16.gmra.mrb[0].mxu0 %v5731
  %v5841 = vpop.f32.mrb[0].mxu0
  %v5842 = vadd.f32 0.0, %v5841
  %v5843 = vpop.f32.mrb[0].mxu0
  %v5844 = vadd.f32 0.0, %v5843
  %v5845 = vpop.f32.mrb[0].mxu0
  %v5846 = vadd.f32 0.0, %v5845
  %v5847 = vpop.f32.mrb[0].mxu0
  %v5848 = vadd.f32 0.0, %v5847
  %5849 = vmatprep.mubr.bf16.mxu0 0
  %5850 = vmatmul.mubr.bf16.gmra.mrb[0].mxu0 %v5734
  %v5851 = vpop.f32.mrb[0].mxu0
  %v5852 = vadd.f32 0.0, %v5851
  %v5853 = vpop.f32.mrb[0].mxu0
  %v5854 = vadd.f32 0.0, %v5853
  %v5855 = vpop.f32.mrb[0].mxu0
  %v5856 = vadd.f32 0.0, %v5855
  %v5857 = vpop.f32.mrb[0].mxu0
  %v5858 = vadd.f32 0.0, %v5857
  %5859 = vdwg.mxu0
  %5860 = vmatprep.subr.bf16.mxu0 %v5752
  %5861 = vmatpush1.bf16.msra.mxu0 %v5749
  %5862 = vmatprep.subr.bf16.mxu0 0
  %5863 = vmatpush1.bf16.msra.mxu0 0
  %5864 = vmatprep.subr.bf16.mxu0 0
  %5865 = vmatpush1.bf16.msra.mxu0 0
  %5866 = vmatprep.subr.bf16.mxu0 0
  %5867 = vmatpush1.bf16.msra.mxu0 0
  %5868 = vmatprep.subr.bf16.mxu0 0
  %5869 = vmatpush1.bf16.msra.mxu0 0
  %5870 = vmatprep.subr.bf16.mxu0 0
  %5871 = vmatpush1.bf16.msra.mxu0 0
  %5872 = vmatprep.subr.bf16.mxu0 0
  %5873 = vmatpush1.bf16.msra.mxu0 0
  %5874 = vmatprep.subr.bf16.mxu0 0
  %5875 = vmatpush1.bf16.msra.mxu0 0
  %5876 = vmatprep.subr.bf16.mxu0 0
  %5877 = vmatpush1.bf16.msra.mxu0 0
  %5878 = vmatprep.subr.bf16.mxu0 0
  %5879 = vmatpush1.bf16.msra.mxu0 0
  %5880 = vmatprep.subr.bf16.mxu0 0
  %5881 = vmatpush1.bf16.msra.mxu0 0
  %5882 = vmatprep.subr.bf16.mxu0 0
  %5883 = vmatpush1.bf16.msra.mxu0 0
  %5884 = vmatprep.subr.bf16.mxu0 0
  %5885 = vmatpush1.bf16.msra.mxu0 0
  %5886 = vmatprep.subr.bf16.mxu0 0
  %5887 = vmatpush1.bf16.msra.mxu0 0
  %5888 = vmatprep.subr.bf16.mxu0 0
  %5889 = vmatpush1.bf16.msra.mxu0 0
  %5890 = vmatprep.subr.bf16.mxu0 0
  %5891 = vmatpush1.bf16.msra.mxu0 0
  %5892 = vmatprep.mubr.bf16.mxu0 0
  %5893 = vmatmul.mubr.bf16.gmra.mrb[0].mxu0 %v5731
  %v5894 = vpop.f32.mrb[0].mxu0
  %v5895 = vadd.f32 0.0, %v5894
  %v5896 = vpop.f32.mrb[0].mxu0
  %v5897 = vadd.f32 0.0, %v5896
  %v5898 = vpop.f32.mrb[0].mxu0
  %v5899 = vadd.f32 0.0, %v5898
  %v5900 = vpop.f32.mrb[0].mxu0
  %v5901 = vadd.f32 0.0, %v5900
  %5902 = vmatprep.mubr.bf16.mxu0 0
  %5903 = vmatmul.mubr.bf16.gmra.mrb[0].mxu0 %v5734
  %v5904 = vpop.f32.mrb[0].mxu0
  %v5905 = vadd.f32 0.0, %v5904
  %v5906 = vpop.f32.mrb[0].mxu0
  %v5907 = vadd.f32 0.0, %v5906
  %v5908 = vpop.f32.mrb[0].mxu0
  %v5909 = vadd.f32 0.0, %v5908
  %v5910 = vpop.f32.mrb[0].mxu0
  %v5911 = vadd.f32 0.0, %v5910
  %5912 = vdwg.mxu0
  %v5913 = vadd.f32 %v5667, %v5789
  %v5914 = vadd.f32 %v5668, %v5791
  %v5915 = vadd.f32 %v5669, %v5842
  %v5916 = vadd.f32 %v5670, %v5844
  %v5917 = vadd.f32 %v5671, %v5895
  %v5918 = vadd.f32 %v5672, %v5897
  %v5919 = vadd.f32 %v5673, %v5793
  %v5920 = vadd.f32 %v5674, %v5795
  %v5921 = vadd.f32 %v5675, %v5846
  %v5922 = vadd.f32 %v5676, %v5848
  %v5923 = vadd.f32 %v5677, %v5899
  %v5924 = vadd.f32 %v5678, %v5901
  %v5925 = vadd.f32 %v5679, %v5799
  %v5926 = vadd.f32 %v5680, %v5801
  %v5927 = vadd.f32 %v5681, %v5852
  %v5928 = vadd.f32 %v5682, %v5854
  %v5929 = vadd.f32 %v5683, %v5905
  %v5930 = vadd.f32 %v5684, %v5907
  %v5931 = vadd.f32 %v5685, %v5803
  %v5932 = vadd.f32 %v5686, %v5805
  %v5933 = vadd.f32 %v5687, %v5856
  %v5934 = vadd.f32 %v5688, %v5858
  %v5935 = vadd.f32 %v5689, %v5909
  %v5936 = vadd.f32 %v5690, %v5911
  %5937 = vrot.lane.b32.xlu0 %v4275, 110
  %v5938 = vpop.permute.xlu0 %5937
  %5939 = vrot.lane.b32.xlu0 %v4276, 110
  %v5940 = vpop.permute.xlu0 %5939
  %5941 = vrot.lane.b32.xlu0 %v4277, 110
  %v5942 = vpop.permute.xlu0 %5941
  %5943 = vrot.lane.b32.xlu0 %v4278, 110
  %v5944 = vpop.permute.xlu0 %5943
  %5945 = vrot.lane.b32.xlu0 %v4279, 110
  %v5946 = vpop.permute.xlu0 %5945
  %5947 = vrot.lane.b32.xlu0 %v4280, 110
  %v5948 = vpop.permute.xlu0 %5947
  %v5949 = vsel %vm1951, %v5946, %v5948
  %v5950 = vsel %vm1951, %v5944, %v5946
  %v5951 = vsel %vm1951, %v5942, %v5944
  %v5952 = vsel %vm1951, %v5940, %v5942
  %v5953 = vsel %vm1951, %v5938, %v5940
  %v5954 = vsel %vm1951, %v5948, %v5938
  %s5955 = scalar_lea.vmem %s4, 256
  %v5956 = vld [vmem:[%s5955] sm:$0xf]
  %v5957 = vld [vmem:[%s5955 + $0x4] sm:$0xf]
  %v5958 = vld [vmem:[%s5955 + $0x8] sm:$0xf]
  %v5959 = vld [vmem:[%s5955 + $0xc] sm:$0xf]
  %v5960 = vpack.c.bf16 %v5953, %v5953
  %v5961 = vpack.c.bf16 %v5952, %v5952
  %v5962 = vpack.c.bf16 %v5951, %v5951
  %v5963 = vpack.c.bf16 %v5950, %v5950
  %v5964 = vpack.c.bf16 %v5949, %v5949
  %v5965 = vpack.c.bf16 %v5954, %v5954
  %v5970 = vunpack.c.l.b16 %v5956
  %v5971 = vunpack.c.l.b16 %v5957
  %v5972 = vunpack.c.l.b16 %v5958
  %v5973 = vunpack.c.l.b16 %v5959
  %v5974 = vpack.c.b16 %v5971, %v5970
  %v5975 = vpack.c.b16 %v5973, %v5972
  %v5977 = vsel %vm351, %v5974, 0
  %v5980 = vsel %vm351, %v5975, 0
  %v5983 = vsel %vm358, %v5960, 0
  %v5986 = vsel %vm358, %v5961, 0
  %v5989 = vsel %vm358, %v5962, 0
  %v5992 = vsel %vm358, %v5963, 0
  %v5995 = vsel %vm358, %v5964, 0
  %v5998 = vsel %vm358, %v5965, 0
  %6000 = vmatprep.subr.bf16.mxu0 %v5986
  %6001 = vmatpush1.bf16.msra.mxu0 %v5983
  %6002 = vmatprep.subr.bf16.mxu0 0
  %6003 = vmatpush1.bf16.msra.mxu0 0
  %6004 = vmatprep.subr.bf16.mxu0 0
  %6005 = vmatpush1.bf16.msra.mxu0 0
  %6006 = vmatprep.subr.bf16.mxu0 0
  %6007 = vmatpush1.bf16.msra.mxu0 0
  %6008 = vmatprep.subr.bf16.mxu0 0
  %6009 = vmatpush1.bf16.msra.mxu0 0
  %6010 = vmatprep.subr.bf16.mxu0 0
  %6011 = vmatpush1.bf16.msra.mxu0 0
  %6012 = vmatprep.subr.bf16.mxu0 0
  %6013 = vmatpush1.bf16.msra.mxu0 0
  %6014 = vmatprep.subr.bf16.mxu0 0
  %6015 = vmatpush1.bf16.msra.mxu0 0
  %6016 = vmatprep.subr.bf16.mxu0 0
  %6017 = vmatpush1.bf16.msra.mxu0 0
  %6018 = vmatprep.subr.bf16.mxu0 0
  %6019 = vmatpush1.bf16.msra.mxu0 0
  %6020 = vmatprep.subr.bf16.mxu0 0
  %6021 = vmatpush1.bf16.msra.mxu0 0
  %6022 = vmatprep.subr.bf16.mxu0 0
  %6023 = vmatpush1.bf16.msra.mxu0 0
  %6024 = vmatprep.subr.bf16.mxu0 0
  %6025 = vmatpush1.bf16.msra.mxu0 0
  %6026 = vmatprep.subr.bf16.mxu0 0
  %6027 = vmatpush1.bf16.msra.mxu0 0
  %6028 = vmatprep.subr.bf16.mxu0 0
  %6029 = vmatpush1.bf16.msra.mxu0 0
  %6030 = vmatprep.subr.bf16.mxu0 0
  %6031 = vmatpush1.bf16.msra.mxu0 0
  %6032 = vmatprep.mubr.bf16.mxu0 0
  %6033 = vmatmul.mubr.bf16.gmra.mrb[0].mxu0 %v5977
  %v6034 = vpop.f32.mrb[0].mxu0
  %v6035 = vadd.f32 0.0, %v6034
  %v6036 = vpop.f32.mrb[0].mxu0
  %v6037 = vadd.f32 0.0, %v6036
  %v6038 = vpop.f32.mrb[0].mxu0
  %v6039 = vadd.f32 0.0, %v6038
  %v6040 = vpop.f32.mrb[0].mxu0
  %v6041 = vadd.f32 0.0, %v6040
  %6042 = vmatprep.mubr.bf16.mxu0 0
  %6043 = vmatmul.mubr.bf16.gmra.mrb[0].mxu0 %v5980
  %v6044 = vpop.f32.mrb[0].mxu0
  %v6045 = vadd.f32 0.0, %v6044
  %v6046 = vpop.f32.mrb[0].mxu0
  %v6047 = vadd.f32 0.0, %v6046
  %v6048 = vpop.f32.mrb[0].mxu0
  %v6049 = vadd.f32 0.0, %v6048
  %v6050 = vpop.f32.mrb[0].mxu0
  %v6051 = vadd.f32 0.0, %v6050
  %6052 = vdwg.mxu0
  %6053 = vmatprep.subr.bf16.mxu0 %v5992
  %6054 = vmatpush1.bf16.msra.mxu0 %v5989
  %6055 = vmatprep.subr.bf16.mxu0 0
  %6056 = vmatpush1.bf16.msra.mxu0 0
  %6057 = vmatprep.subr.bf16.mxu0 0
  %6058 = vmatpush1.bf16.msra.mxu0 0
  %6059 = vmatprep.subr.bf16.mxu0 0
  %6060 = vmatpush1.bf16.msra.mxu0 0
  %6061 = vmatprep.subr.bf16.mxu0 0
  %6062 = vmatpush1.bf16.msra.mxu0 0
  %6063 = vmatprep.subr.bf16.mxu0 0
  %6064 = vmatpush1.bf16.msra.mxu0 0
  %6065 = vmatprep.subr.bf16.mxu0 0
  %6066 = vmatpush1.bf16.msra.mxu0 0
  %6067 = vmatprep.subr.bf16.mxu0 0
  %6068 = vmatpush1.bf16.msra.mxu0 0
  %6069 = vmatprep.subr.bf16.mxu0 0
  %6070 = vmatpush1.bf16.msra.mxu0 0
  %6071 = vmatprep.subr.bf16.mxu0 0
  %6072 = vmatpush1.bf16.msra.mxu0 0
  %6073 = vmatprep.subr.bf16.mxu0 0
  %6074 = vmatpush1.bf16.msra.mxu0 0
  %6075 = vmatprep.subr.bf16.mxu0 0
  %6076 = vmatpush1.bf16.msra.mxu0 0
  %6077 = vmatprep.subr.bf16.mxu0 0
  %6078 = vmatpush1.bf16.msra.mxu0 0
  %6079 = vmatprep.subr.bf16.mxu0 0
  %6080 = vmatpush1.bf16.msra.mxu0 0
  %6081 = vmatprep.subr.bf16.mxu0 0
  %6082 = vmatpush1.bf16.msra.mxu0 0
  %6083 = vmatprep.subr.bf16.mxu0 0
  %6084 = vmatpush1.bf16.msra.mxu0 0
  %6085 = vmatprep.mubr.bf16.mxu0 0
  %6086 = vmatmul.mubr.bf16.gmra.mrb[0].mxu0 %v5977
  %v6087 = vpop.f32.mrb[0].mxu0
  %v6088 = vadd.f32 0.0, %v6087
  %v6089 = vpop.f32.mrb[0].mxu0
  %v6090 = vadd.f32 0.0, %v6089
  %v6091 = vpop.f32.mrb[0].mxu0
  %v6092 = vadd.f32 0.0, %v6091
  %v6093 = vpop.f32.mrb[0].mxu0
  %v6094 = vadd.f32 0.0, %v6093
  %6095 = vmatprep.mubr.bf16.mxu0 0
  %6096 = vmatmul.mubr.bf16.gmra.mrb[0].mxu0 %v5980
  %v6097 = vpop.f32.mrb[0].mxu0
  %v6098 = vadd.f32 0.0, %v6097
  %v6099 = vpop.f32.mrb[0].mxu0
  %v6100 = vadd.f32 0.0, %v6099
  %v6101 = vpop.f32.mrb[0].mxu0
  %v6102 = vadd.f32 0.0, %v6101
  %v6103 = vpop.f32.mrb[0].mxu0
  %v6104 = vadd.f32 0.0, %v6103
  %6105 = vdwg.mxu0
  %6106 = vmatprep.subr.bf16.mxu0 %v5998
  %6107 = vmatpush1.bf16.msra.mxu0 %v5995
  %6108 = vmatprep.subr.bf16.mxu0 0
  %6109 = vmatpush1.bf16.msra.mxu0 0
  %6110 = vmatprep.subr.bf16.mxu0 0
  %6111 = vmatpush1.bf16.msra.mxu0 0
  %6112 = vmatprep.subr.bf16.mxu0 0
  %6113 = vmatpush1.bf16.msra.mxu0 0
  %6114 = vmatprep.subr.bf16.mxu0 0
  %6115 = vmatpush1.bf16.msra.mxu0 0
  %6116 = vmatprep.subr.bf16.mxu0 0
  %6117 = vmatpush1.bf16.msra.mxu0 0
  %6118 = vmatprep.subr.bf16.mxu0 0
  %6119 = vmatpush1.bf16.msra.mxu0 0
  %6120 = vmatprep.subr.bf16.mxu0 0
  %6121 = vmatpush1.bf16.msra.mxu0 0
  %6122 = vmatprep.subr.bf16.mxu0 0
  %6123 = vmatpush1.bf16.msra.mxu0 0
  %6124 = vmatprep.subr.bf16.mxu0 0
  %6125 = vmatpush1.bf16.msra.mxu0 0
  %6126 = vmatprep.subr.bf16.mxu0 0
  %6127 = vmatpush1.bf16.msra.mxu0 0
  %6128 = vmatprep.subr.bf16.mxu0 0
  %6129 = vmatpush1.bf16.msra.mxu0 0
  %6130 = vmatprep.subr.bf16.mxu0 0
  %6131 = vmatpush1.bf16.msra.mxu0 0
  %6132 = vmatprep.subr.bf16.mxu0 0
  %6133 = vmatpush1.bf16.msra.mxu0 0
  %6134 = vmatprep.subr.bf16.mxu0 0
  %6135 = vmatpush1.bf16.msra.mxu0 0
  %6136 = vmatprep.subr.bf16.mxu0 0
  %6137 = vmatpush1.bf16.msra.mxu0 0
  %6138 = vmatprep.mubr.bf16.mxu0 0
  %6139 = vmatmul.mubr.bf16.gmra.mrb[0].mxu0 %v5977
  %v6140 = vpop.f32.mrb[0].mxu0
  %v6141 = vadd.f32 0.0, %v6140
  %v6142 = vpop.f32.mrb[0].mxu0
  %v6143 = vadd.f32 0.0, %v6142
  %v6144 = vpop.f32.mrb[0].mxu0
  %v6145 = vadd.f32 0.0, %v6144
  %v6146 = vpop.f32.mrb[0].mxu0
  %v6147 = vadd.f32 0.0, %v6146
  %6148 = vmatprep.mubr.bf16.mxu0 0
  %6149 = vmatmul.mubr.bf16.gmra.mrb[0].mxu0 %v5980
  %v6150 = vpop.f32.mrb[0].mxu0
  %v6151 = vadd.f32 0.0, %v6150
  %v6152 = vpop.f32.mrb[0].mxu0
  %v6153 = vadd.f32 0.0, %v6152
  %v6154 = vpop.f32.mrb[0].mxu0
  %v6155 = vadd.f32 0.0, %v6154
  %v6156 = vpop.f32.mrb[0].mxu0
  %v6157 = vadd.f32 0.0, %v6156
  %6158 = vdwg.mxu0
  %v6159 = vadd.f32 %v5913, %v6035
  %v6160 = vadd.f32 %v5914, %v6037
  %v6161 = vadd.f32 %v5915, %v6088
  %v6162 = vadd.f32 %v5916, %v6090
  %v6163 = vadd.f32 %v5917, %v6141
  %v6164 = vadd.f32 %v5918, %v6143
  %v6165 = vadd.f32 %v5919, %v6039
  %v6166 = vadd.f32 %v5920, %v6041
  %v6167 = vadd.f32 %v5921, %v6092
  %v6168 = vadd.f32 %v5922, %v6094
  %v6169 = vadd.f32 %v5923, %v6145
  %v6170 = vadd.f32 %v5924, %v6147
  %v6171 = vadd.f32 %v5925, %v6045
  %v6172 = vadd.f32 %v5926, %v6047
  %v6173 = vadd.f32 %v5927, %v6098
  %v6174 = vadd.f32 %v5928, %v6100
  %v6175 = vadd.f32 %v5929, %v6151
  %v6176 = vadd.f32 %v5930, %v6153
  %v6177 = vadd.f32 %v5931, %v6049
  %v6178 = vadd.f32 %v5932, %v6051
  %v6179 = vadd.f32 %v5933, %v6102
  %v6180 = vadd.f32 %v5934, %v6104
  %v6181 = vadd.f32 %v5935, %v6155
  %v6182 = vadd.f32 %v5936, %v6157
  %6183 = vrot.lane.b32.xlu0 %v4275, 109
  %v6184 = vpop.permute.xlu0 %6183
  %6185 = vrot.lane.b32.xlu0 %v4276, 109
  %v6186 = vpop.permute.xlu0 %6185
  %6187 = vrot.lane.b32.xlu0 %v4277, 109
  %v6188 = vpop.permute.xlu0 %6187
  %6189 = vrot.lane.b32.xlu0 %v4278, 109
  %v6190 = vpop.permute.xlu0 %6189
  %6191 = vrot.lane.b32.xlu0 %v4279, 109
  %v6192 = vpop.permute.xlu0 %6191
  %6193 = vrot.lane.b32.xlu0 %v4280, 109
  %v6194 = vpop.permute.xlu0 %6193
  %v6195 = vsel %vm2198, %v6192, %v6194
  %v6196 = vsel %vm2198, %v6190, %v6192
  %v6197 = vsel %vm2198, %v6188, %v6190
  %v6198 = vsel %vm2198, %v6186, %v6188
  %v6199 = vsel %vm2198, %v6184, %v6186
  %v6200 = vsel %vm2198, %v6194, %v6184
  %s6201 = scalar_lea.vmem %s4, 272
  %v6202 = vld [vmem:[%s6201] sm:$0xf]
  %v6203 = vld [vmem:[%s6201 + $0x4] sm:$0xf]
  %v6204 = vld [vmem:[%s6201 + $0x8] sm:$0xf]
  %v6205 = vld [vmem:[%s6201 + $0xc] sm:$0xf]
  %v6206 = vpack.c.bf16 %v6199, %v6199
  %v6207 = vpack.c.bf16 %v6198, %v6198
  %v6208 = vpack.c.bf16 %v6197, %v6197
  %v6209 = vpack.c.bf16 %v6196, %v6196
  %v6210 = vpack.c.bf16 %v6195, %v6195
  %v6211 = vpack.c.bf16 %v6200, %v6200
  %v6216 = vunpack.c.l.b16 %v6202
  %v6217 = vunpack.c.l.b16 %v6203
  %v6218 = vunpack.c.l.b16 %v6204
  %v6219 = vunpack.c.l.b16 %v6205
  %v6220 = vpack.c.b16 %v6217, %v6216
  %v6221 = vpack.c.b16 %v6219, %v6218
  %v6223 = vsel %vm351, %v6220, 0
  %v6226 = vsel %vm351, %v6221, 0
  %v6229 = vsel %vm358, %v6206, 0
  %v6232 = vsel %vm358, %v6207, 0
  %v6235 = vsel %vm358, %v6208, 0
  %v6238 = vsel %vm358, %v6209, 0
  %v6241 = vsel %vm358, %v6210, 0
  %v6244 = vsel %vm358, %v6211, 0
  %6246 = vmatprep.subr.bf16.mxu0 %v6232
  %6247 = vmatpush1.bf16.msra.mxu0 %v6229
  %6248 = vmatprep.subr.bf16.mxu0 0
  %6249 = vmatpush1.bf16.msra.mxu0 0
  %6250 = vmatprep.subr.bf16.mxu0 0
  %6251 = vmatpush1.bf16.msra.mxu0 0
  %6252 = vmatprep.subr.bf16.mxu0 0
  %6253 = vmatpush1.bf16.msra.mxu0 0
  %6254 = vmatprep.subr.bf16.mxu0 0
  %6255 = vmatpush1.bf16.msra.mxu0 0
  %6256 = vmatprep.subr.bf16.mxu0 0
  %6257 = vmatpush1.bf16.msra.mxu0 0
  %6258 = vmatprep.subr.bf16.mxu0 0
  %6259 = vmatpush1.bf16.msra.mxu0 0
  %6260 = vmatprep.subr.bf16.mxu0 0
  %6261 = vmatpush1.bf16.msra.mxu0 0
  %6262 = vmatprep.subr.bf16.mxu0 0
  %6263 = vmatpush1.bf16.msra.mxu0 0
  %6264 = vmatprep.subr.bf16.mxu0 0
  %6265 = vmatpush1.bf16.msra.mxu0 0
  %6266 = vmatprep.subr.bf16.mxu0 0
  %6267 = vmatpush1.bf16.msra.mxu0 0
  %6268 = vmatprep.subr.bf16.mxu0 0
  %6269 = vmatpush1.bf16.msra.mxu0 0
  %6270 = vmatprep.subr.bf16.mxu0 0
  %6271 = vmatpush1.bf16.msra.mxu0 0
  %6272 = vmatprep.subr.bf16.mxu0 0
  %6273 = vmatpush1.bf16.msra.mxu0 0
  %6274 = vmatprep.subr.bf16.mxu0 0
  %6275 = vmatpush1.bf16.msra.mxu0 0
  %6276 = vmatprep.subr.bf16.mxu0 0
  %6277 = vmatpush1.bf16.msra.mxu0 0
  %6278 = vmatprep.mubr.bf16.mxu0 0
  %6279 = vmatmul.mubr.bf16.gmra.mrb[0].mxu0 %v6223
  %v6280 = vpop.f32.mrb[0].mxu0
  %v6281 = vadd.f32 0.0, %v6280
  %v6282 = vpop.f32.mrb[0].mxu0
  %v6283 = vadd.f32 0.0, %v6282
  %v6284 = vpop.f32.mrb[0].mxu0
  %v6285 = vadd.f32 0.0, %v6284
  %v6286 = vpop.f32.mrb[0].mxu0
  %v6287 = vadd.f32 0.0, %v6286
  %6288 = vmatprep.mubr.bf16.mxu0 0
  %6289 = vmatmul.mubr.bf16.gmra.mrb[0].mxu0 %v6226
  %v6290 = vpop.f32.mrb[0].mxu0
  %v6291 = vadd.f32 0.0, %v6290
  %v6292 = vpop.f32.mrb[0].mxu0
  %v6293 = vadd.f32 0.0, %v6292
  %v6294 = vpop.f32.mrb[0].mxu0
  %v6295 = vadd.f32 0.0, %v6294
  %v6296 = vpop.f32.mrb[0].mxu0
  %v6297 = vadd.f32 0.0, %v6296
  %6298 = vdwg.mxu0
  %6299 = vmatprep.subr.bf16.mxu0 %v6238
  %6300 = vmatpush1.bf16.msra.mxu0 %v6235
  %6301 = vmatprep.subr.bf16.mxu0 0
  %6302 = vmatpush1.bf16.msra.mxu0 0
  %6303 = vmatprep.subr.bf16.mxu0 0
  %6304 = vmatpush1.bf16.msra.mxu0 0
  %6305 = vmatprep.subr.bf16.mxu0 0
  %6306 = vmatpush1.bf16.msra.mxu0 0
  %6307 = vmatprep.subr.bf16.mxu0 0
  %6308 = vmatpush1.bf16.msra.mxu0 0
  %6309 = vmatprep.subr.bf16.mxu0 0
  %6310 = vmatpush1.bf16.msra.mxu0 0
  %6311 = vmatprep.subr.bf16.mxu0 0
  %6312 = vmatpush1.bf16.msra.mxu0 0
  %6313 = vmatprep.subr.bf16.mxu0 0
  %6314 = vmatpush1.bf16.msra.mxu0 0
  %6315 = vmatprep.subr.bf16.mxu0 0
  %6316 = vmatpush1.bf16.msra.mxu0 0
  %6317 = vmatprep.subr.bf16.mxu0 0
  %6318 = vmatpush1.bf16.msra.mxu0 0
  %6319 = vmatprep.subr.bf16.mxu0 0
  %6320 = vmatpush1.bf16.msra.mxu0 0
  %6321 = vmatprep.subr.bf16.mxu0 0
  %6322 = vmatpush1.bf16.msra.mxu0 0
  %6323 = vmatprep.subr.bf16.mxu0 0
  %6324 = vmatpush1.bf16.msra.mxu0 0
  %6325 = vmatprep.subr.bf16.mxu0 0
  %6326 = vmatpush1.bf16.msra.mxu0 0
  %6327 = vmatprep.subr.bf16.mxu0 0
  %6328 = vmatpush1.bf16.msra.mxu0 0
  %6329 = vmatprep.subr.bf16.mxu0 0
  %6330 = vmatpush1.bf16.msra.mxu0 0
  %6331 = vmatprep.mubr.bf16.mxu0 0
  %6332 = vmatmul.mubr.bf16.gmra.mrb[0].mxu0 %v6223
  %v6333 = vpop.f32.mrb[0].mxu0
  %v6334 = vadd.f32 0.0, %v6333
  %v6335 = vpop.f32.mrb[0].mxu0
  %v6336 = vadd.f32 0.0, %v6335
  %v6337 = vpop.f32.mrb[0].mxu0
  %v6338 = vadd.f32 0.0, %v6337
  %v6339 = vpop.f32.mrb[0].mxu0
  %v6340 = vadd.f32 0.0, %v6339
  %6341 = vmatprep.mubr.bf16.mxu0 0
  %6342 = vmatmul.mubr.bf16.gmra.mrb[0].mxu0 %v6226
  %v6343 = vpop.f32.mrb[0].mxu0
  %v6344 = vadd.f32 0.0, %v6343
  %v6345 = vpop.f32.mrb[0].mxu0
  %v6346 = vadd.f32 0.0, %v6345
  %v6347 = vpop.f32.mrb[0].mxu0
  %v6348 = vadd.f32 0.0, %v6347
  %v6349 = vpop.f32.mrb[0].mxu0
  %v6350 = vadd.f32 0.0, %v6349
  %6351 = vdwg.mxu0
  %6352 = vmatprep.subr.bf16.mxu0 %v6244
  %6353 = vmatpush1.bf16.msra.mxu0 %v6241
  %6354 = vmatprep.subr.bf16.mxu0 0
  %6355 = vmatpush1.bf16.msra.mxu0 0
  %6356 = vmatprep.subr.bf16.mxu0 0
  %6357 = vmatpush1.bf16.msra.mxu0 0
  %6358 = vmatprep.subr.bf16.mxu0 0
  %6359 = vmatpush1.bf16.msra.mxu0 0
  %6360 = vmatprep.subr.bf16.mxu0 0
  %6361 = vmatpush1.bf16.msra.mxu0 0
  %6362 = vmatprep.subr.bf16.mxu0 0
  %6363 = vmatpush1.bf16.msra.mxu0 0
  %6364 = vmatprep.subr.bf16.mxu0 0
  %6365 = vmatpush1.bf16.msra.mxu0 0
  %6366 = vmatprep.subr.bf16.mxu0 0
  %6367 = vmatpush1.bf16.msra.mxu0 0
  %6368 = vmatprep.subr.bf16.mxu0 0
  %6369 = vmatpush1.bf16.msra.mxu0 0
  %6370 = vmatprep.subr.bf16.mxu0 0
  %6371 = vmatpush1.bf16.msra.mxu0 0
  %6372 = vmatprep.subr.bf16.mxu0 0
  %6373 = vmatpush1.bf16.msra.mxu0 0
  %6374 = vmatprep.subr.bf16.mxu0 0
  %6375 = vmatpush1.bf16.msra.mxu0 0
  %6376 = vmatprep.subr.bf16.mxu0 0
  %6377 = vmatpush1.bf16.msra.mxu0 0
  %6378 = vmatprep.subr.bf16.mxu0 0
  %6379 = vmatpush1.bf16.msra.mxu0 0
  %6380 = vmatprep.subr.bf16.mxu0 0
  %6381 = vmatpush1.bf16.msra.mxu0 0
  %6382 = vmatprep.subr.bf16.mxu0 0
  %6383 = vmatpush1.bf16.msra.mxu0 0
  %6384 = vmatprep.mubr.bf16.mxu0 0
  %6385 = vmatmul.mubr.bf16.gmra.mrb[0].mxu0 %v6223
  %v6386 = vpop.f32.mrb[0].mxu0
  %v6387 = vadd.f32 0.0, %v6386
  %v6388 = vpop.f32.mrb[0].mxu0
  %v6389 = vadd.f32 0.0, %v6388
  %v6390 = vpop.f32.mrb[0].mxu0
  %v6391 = vadd.f32 0.0, %v6390
  %v6392 = vpop.f32.mrb[0].mxu0
  %v6393 = vadd.f32 0.0, %v6392
  %6394 = vmatprep.mubr.bf16.mxu0 0
  %6395 = vmatmul.mubr.bf16.gmra.mrb[0].mxu0 %v6226
  %v6396 = vpop.f32.mrb[0].mxu0
  %v6397 = vadd.f32 0.0, %v6396
  %v6398 = vpop.f32.mrb[0].mxu0
  %v6399 = vadd.f32 0.0, %v6398
  %v6400 = vpop.f32.mrb[0].mxu0
  %v6401 = vadd.f32 0.0, %v6400
  %v6402 = vpop.f32.mrb[0].mxu0
  %v6403 = vadd.f32 0.0, %v6402
  %6404 = vdwg.mxu0
  %v6405 = vadd.f32 %v6159, %v6281
  %v6406 = vadd.f32 %v6160, %v6283
  %v6407 = vadd.f32 %v6161, %v6334
  %v6408 = vadd.f32 %v6162, %v6336
  %v6409 = vadd.f32 %v6163, %v6387
  %v6410 = vadd.f32 %v6164, %v6389
  %v6411 = vadd.f32 %v6165, %v6285
  %v6412 = vadd.f32 %v6166, %v6287
  %v6413 = vadd.f32 %v6167, %v6338
  %v6414 = vadd.f32 %v6168, %v6340
  %v6415 = vadd.f32 %v6169, %v6391
  %v6416 = vadd.f32 %v6170, %v6393
  %v6417 = vadd.f32 %v6171, %v6291
  %v6418 = vadd.f32 %v6172, %v6293
  %v6419 = vadd.f32 %v6173, %v6344
  %v6420 = vadd.f32 %v6174, %v6346
  %v6421 = vadd.f32 %v6175, %v6397
  %v6422 = vadd.f32 %v6176, %v6399
  %v6423 = vadd.f32 %v6177, %v6295
  %v6424 = vadd.f32 %v6178, %v6297
  %v6425 = vadd.f32 %v6179, %v6348
  %v6426 = vadd.f32 %v6180, %v6350
  %v6427 = vadd.f32 %v6181, %v6401
  %v6428 = vadd.f32 %v6182, %v6403
  %s6429 = scalar_lea.vmem %s5, 32
  %v6430 = vld [vmem:[%s6429] sm:$0xff]
  %v6431 = vld [vmem:[%s6429 + $0x8] sm:$0xff]
  %v6432 = vld [vmem:[%s6429 + $0x10] sm:$0xff]
  %v6433 = vld [vmem:[%s6429 + $0x18] sm:$0xff]
  %6435 = vset.pattern.permute.xlu0 0
  %6436 = vperm.xlu0 %6435, %v6430
  %v6437 = vpop.permute.xlu0 %6436
  %6440 = vset.pattern.permute.xlu0 0
  %6441 = vperm.xlu0 %6440, %v6431
  %v6442 = vpop.permute.xlu0 %6441
  %6445 = vset.pattern.permute.xlu0 0
  %6446 = vperm.xlu0 %6445, %v6432
  %v6447 = vpop.permute.xlu0 %6446
  %6450 = vset.pattern.permute.xlu0 0
  %6451 = vperm.xlu0 %6450, %v6433
  %v6452 = vpop.permute.xlu0 %6451
  %v6454 = vadd.f32 %v6405, %v6437
  %v6455 = vadd.f32 %v6406, %v6437
  %v6456 = vadd.f32 %v6407, %v6437
  %v6457 = vadd.f32 %v6408, %v6437
  %v6458 = vadd.f32 %v6409, %v6437
  %v6459 = vadd.f32 %v6410, %v6437
  %v6460 = vadd.f32 %v6411, %v6442
  %v6461 = vadd.f32 %v6412, %v6442
  %v6462 = vadd.f32 %v6413, %v6442
  %v6463 = vadd.f32 %v6414, %v6442
  %v6464 = vadd.f32 %v6415, %v6442
  %v6465 = vadd.f32 %v6416, %v6442
  %v6466 = vadd.f32 %v6417, %v6447
  %v6467 = vadd.f32 %v6418, %v6447
  %v6468 = vadd.f32 %v6419, %v6447
  %v6469 = vadd.f32 %v6420, %v6447
  %v6470 = vadd.f32 %v6421, %v6447
  %v6471 = vadd.f32 %v6422, %v6447
  %v6472 = vadd.f32 %v6423, %v6452
  %v6473 = vadd.f32 %v6424, %v6452
  %v6474 = vadd.f32 %v6425, %v6452
  %v6475 = vadd.f32 %v6426, %v6452
  %v6476 = vadd.f32 %v6427, %v6452
  %v6477 = vadd.f32 %v6428, %v6452
  %vm6478 = vcmp.ge.f32.partialorder %v6454, 0.0
  %vm6479 = vcmp.ge.f32.partialorder %v6455, 0.0
  %vm6480 = vcmp.ge.f32.partialorder %v6456, 0.0
  %vm6481 = vcmp.ge.f32.partialorder %v6457, 0.0
  %vm6482 = vcmp.ge.f32.partialorder %v6458, 0.0
  %vm6483 = vcmp.ge.f32.partialorder %v6459, 0.0
  %vm6484 = vcmp.ge.f32.partialorder %v6460, 0.0
  %vm6485 = vcmp.ge.f32.partialorder %v6461, 0.0
  %vm6486 = vcmp.ge.f32.partialorder %v6462, 0.0
  %vm6487 = vcmp.ge.f32.partialorder %v6463, 0.0
  %vm6488 = vcmp.ge.f32.partialorder %v6464, 0.0
  %vm6489 = vcmp.ge.f32.partialorder %v6465, 0.0
  %vm6490 = vcmp.ge.f32.partialorder %v6466, 0.0
  %vm6491 = vcmp.ge.f32.partialorder %v6467, 0.0
  %vm6492 = vcmp.ge.f32.partialorder %v6468, 0.0
  %vm6493 = vcmp.ge.f32.partialorder %v6469, 0.0
  %vm6494 = vcmp.ge.f32.partialorder %v6470, 0.0
  %vm6495 = vcmp.ge.f32.partialorder %v6471, 0.0
  %vm6496 = vcmp.ge.f32.partialorder %v6472, 0.0
  %vm6497 = vcmp.ge.f32.partialorder %v6473, 0.0
  %vm6498 = vcmp.ge.f32.partialorder %v6474, 0.0
  %vm6499 = vcmp.ge.f32.partialorder %v6475, 0.0
  %vm6500 = vcmp.ge.f32.partialorder %v6476, 0.0
  %vm6501 = vcmp.ge.f32.partialorder %v6477, 0.0
  %v6502 = vmul.f32 %v6454, 0.25
  %v6503 = vmul.f32 %v6455, 0.25
  %v6504 = vmul.f32 %v6456, 0.25
  %v6505 = vmul.f32 %v6457, 0.25
  %v6506 = vmul.f32 %v6458, 0.25
  %v6507 = vmul.f32 %v6459, 0.25
  %v6508 = vmul.f32 %v6460, 0.25
  %v6509 = vmul.f32 %v6461, 0.25
  %v6510 = vmul.f32 %v6462, 0.25
  %v6511 = vmul.f32 %v6463, 0.25
  %v6512 = vmul.f32 %v6464, 0.25
  %v6513 = vmul.f32 %v6465, 0.25
  %v6514 = vmul.f32 %v6466, 0.25
  %v6515 = vmul.f32 %v6467, 0.25
  %v6516 = vmul.f32 %v6468, 0.25
  %v6517 = vmul.f32 %v6469, 0.25
  %v6518 = vmul.f32 %v6470, 0.25
  %v6519 = vmul.f32 %v6471, 0.25
  %v6520 = vmul.f32 %v6472, 0.25
  %v6521 = vmul.f32 %v6473, 0.25
  %v6522 = vmul.f32 %v6474, 0.25
  %v6523 = vmul.f32 %v6475, 0.25
  %v6524 = vmul.f32 %v6476, 0.25
  %v6525 = vmul.f32 %v6477, 0.25
  %v6526 = vsel %vm6478, %v6454, %v6502
  %v6527 = vsel %vm6479, %v6455, %v6503
  %v6528 = vsel %vm6480, %v6456, %v6504
  %v6529 = vsel %vm6481, %v6457, %v6505
  %v6530 = vsel %vm6482, %v6458, %v6506
  %v6531 = vsel %vm6483, %v6459, %v6507
  %v6532 = vsel %vm6484, %v6460, %v6508
  %v6533 = vsel %vm6485, %v6461, %v6509
  %v6534 = vsel %vm6486, %v6462, %v6510
  %v6535 = vsel %vm6487, %v6463, %v6511
  %v6536 = vsel %vm6488, %v6464, %v6512
  %v6537 = vsel %vm6489, %v6465, %v6513
  %v6538 = vsel %vm6490, %v6466, %v6514
  %v6539 = vsel %vm6491, %v6467, %v6515
  %v6540 = vsel %vm6492, %v6468, %v6516
  %v6541 = vsel %vm6493, %v6469, %v6517
  %v6542 = vsel %vm6494, %v6470, %v6518
  %v6543 = vsel %vm6495, %v6471, %v6519
  %v6544 = vsel %vm6496, %v6472, %v6520
  %v6545 = vsel %vm6497, %v6473, %v6521
  %v6546 = vsel %vm6498, %v6474, %v6522
  %v6547 = vsel %vm6499, %v6475, %v6523
  %v6548 = vsel %vm6500, %v6476, %v6524
  %v6549 = vsel %vm6501, %v6477, %v6525
  %v6550 = vld [vmem:[%s10] sm:$0xf]
  %v6551 = vld [vmem:[%s10 + $0x4] sm:$0xf]
  %v6552 = vld [vmem:[%s10 + $0x8] sm:$0xf]
  %v6553 = vld [vmem:[%s10 + $0xc] sm:$0xf]
  %s6554 = scalar_lea.vmem %s10, 16
  %v6555 = vld [vmem:[%s6554] sm:$0xf]
  %v6556 = vld [vmem:[%s6554 + $0x4] sm:$0xf]
  %v6557 = vld [vmem:[%s6554 + $0x8] sm:$0xf]
  %v6558 = vld [vmem:[%s6554 + $0xc] sm:$0xf]
  %v6559 = vpack.c.bf16 %v6532, %v6526
  %v6560 = vpack.c.bf16 %v6533, %v6527
  %v6561 = vpack.c.bf16 %v6534, %v6528
  %v6562 = vpack.c.bf16 %v6535, %v6529
  %v6563 = vpack.c.bf16 %v6536, %v6530
  %v6564 = vpack.c.bf16 %v6537, %v6531
  %v6565 = vpack.c.bf16 %v6544, %v6538
  %v6566 = vpack.c.bf16 %v6545, %v6539
  %v6567 = vpack.c.bf16 %v6546, %v6540
  %v6568 = vpack.c.bf16 %v6547, %v6541
  %v6569 = vpack.c.bf16 %v6548, %v6542
  %v6570 = vpack.c.bf16 %v6549, %v6543
  %v6575 = vunpack.c.l.b16 %v6555
  %v6576 = vunpack.c.l.b16 %v6556
  %v6577 = vunpack.c.l.b16 %v6557
  %v6578 = vunpack.c.l.b16 %v6558
  %v6579 = vpack.c.b16 %v6576, %v6575
  %v6580 = vpack.c.b16 %v6578, %v6577
  %v6582 = vsel %vm2590, %v6579, 0
  %v6585 = vsel %vm2590, %v6580, 0
  %6587 = vmatprep.subr.bf16.mxu0 %v6560
  %6588 = vmatpush1.bf16.msra.mxu0 %v6559
  %6589 = vmatprep.subr.bf16.mxu0 %v6566
  %6590 = vmatpush1.bf16.msra.mxu0 %v6565
  %6591 = vmatprep.subr.bf16.mxu0 0
  %6592 = vmatpush1.bf16.msra.mxu0 0
  %6593 = vmatprep.subr.bf16.mxu0 0
  %6594 = vmatpush1.bf16.msra.mxu0 0
  %6595 = vmatprep.subr.bf16.mxu0 0
  %6596 = vmatpush1.bf16.msra.mxu0 0
  %6597 = vmatprep.subr.bf16.mxu0 0
  %6598 = vmatpush1.bf16.msra.mxu0 0
  %6599 = vmatprep.subr.bf16.mxu0 0
  %6600 = vmatpush1.bf16.msra.mxu0 0
  %6601 = vmatprep.subr.bf16.mxu0 0
  %6602 = vmatpush1.bf16.msra.mxu0 0
  %6603 = vmatprep.subr.bf16.mxu0 0
  %6604 = vmatpush1.bf16.msra.mxu0 0
  %6605 = vmatprep.subr.bf16.mxu0 0
  %6606 = vmatpush1.bf16.msra.mxu0 0
  %6607 = vmatprep.subr.bf16.mxu0 0
  %6608 = vmatpush1.bf16.msra.mxu0 0
  %6609 = vmatprep.subr.bf16.mxu0 0
  %6610 = vmatpush1.bf16.msra.mxu0 0
  %6611 = vmatprep.subr.bf16.mxu0 0
  %6612 = vmatpush1.bf16.msra.mxu0 0
  %6613 = vmatprep.subr.bf16.mxu0 0
  %6614 = vmatpush1.bf16.msra.mxu0 0
  %6615 = vmatprep.subr.bf16.mxu0 0
  %6616 = vmatpush1.bf16.msra.mxu0 0
  %6617 = vmatprep.subr.bf16.mxu0 0
  %6618 = vmatpush1.bf16.msra.mxu0 0
  %6619 = vmatprep.mubr.bf16.mxu0 0
  %6620 = vmatmul.mubr.bf16.gmra.mrb[0].mxu0 %v6582
  %v6621 = vpop.f32.mrb[0].mxu0
  %v6622 = vadd.f32 0.0, %v6621
  %v6623 = vpop.f32.mrb[0].mxu0
  %v6624 = vadd.f32 0.0, %v6623
  %v6625 = vpop.f32.mrb[0].mxu0
  %v6626 = vadd.f32 0.0, %v6625
  %v6627 = vpop.f32.mrb[0].mxu0
  %v6628 = vadd.f32 0.0, %v6627
  %6629 = vmatprep.mubr.bf16.mxu0 0
  %6630 = vmatmul.mubr.bf16.gmra.mrb[0].mxu0 %v6585
  %v6631 = vpop.f32.mrb[0].mxu0
  %v6632 = vadd.f32 0.0, %v6631
  %v6633 = vpop.f32.mrb[0].mxu0
  %v6634 = vadd.f32 0.0, %v6633
  %v6635 = vpop.f32.mrb[0].mxu0
  %v6636 = vadd.f32 0.0, %v6635
  %v6637 = vpop.f32.mrb[0].mxu0
  %v6638 = vadd.f32 0.0, %v6637
  %6639 = vdwg.mxu0
  %6640 = vmatprep.subr.bf16.mxu0 %v6562
  %6641 = vmatpush1.bf16.msra.mxu0 %v6561
  %6642 = vmatprep.subr.bf16.mxu0 %v6568
  %6643 = vmatpush1.bf16.msra.mxu0 %v6567
  %6644 = vmatprep.subr.bf16.mxu0 0
  %6645 = vmatpush1.bf16.msra.mxu0 0
  %6646 = vmatprep.subr.bf16.mxu0 0
  %6647 = vmatpush1.bf16.msra.mxu0 0
  %6648 = vmatprep.subr.bf16.mxu0 0
  %6649 = vmatpush1.bf16.msra.mxu0 0
  %6650 = vmatprep.subr.bf16.mxu0 0
  %6651 = vmatpush1.bf16.msra.mxu0 0
  %6652 = vmatprep.subr.bf16.mxu0 0
  %6653 = vmatpush1.bf16.msra.mxu0 0
  %6654 = vmatprep.subr.bf16.mxu0 0
  %6655 = vmatpush1.bf16.msra.mxu0 0
  %6656 = vmatprep.subr.bf16.mxu0 0
  %6657 = vmatpush1.bf16.msra.mxu0 0
  %6658 = vmatprep.subr.bf16.mxu0 0
  %6659 = vmatpush1.bf16.msra.mxu0 0
  %6660 = vmatprep.subr.bf16.mxu0 0
  %6661 = vmatpush1.bf16.msra.mxu0 0
  %6662 = vmatprep.subr.bf16.mxu0 0
  %6663 = vmatpush1.bf16.msra.mxu0 0
  %6664 = vmatprep.subr.bf16.mxu0 0
  %6665 = vmatpush1.bf16.msra.mxu0 0
  %6666 = vmatprep.subr.bf16.mxu0 0
  %6667 = vmatpush1.bf16.msra.mxu0 0
  %6668 = vmatprep.subr.bf16.mxu0 0
  %6669 = vmatpush1.bf16.msra.mxu0 0
  %6670 = vmatprep.subr.bf16.mxu0 0
  %6671 = vmatpush1.bf16.msra.mxu0 0
  %6672 = vmatprep.mubr.bf16.mxu0 0
  %6673 = vmatmul.mubr.bf16.gmra.mrb[0].mxu0 %v6582
  %v6674 = vpop.f32.mrb[0].mxu0
  %v6675 = vadd.f32 0.0, %v6674
  %v6676 = vpop.f32.mrb[0].mxu0
  %v6677 = vadd.f32 0.0, %v6676
  %v6678 = vpop.f32.mrb[0].mxu0
  %v6679 = vadd.f32 0.0, %v6678
  %v6680 = vpop.f32.mrb[0].mxu0
  %v6681 = vadd.f32 0.0, %v6680
  %6682 = vmatprep.mubr.bf16.mxu0 0
  %6683 = vmatmul.mubr.bf16.gmra.mrb[0].mxu0 %v6585
  %v6684 = vpop.f32.mrb[0].mxu0
  %v6685 = vadd.f32 0.0, %v6684
  %v6686 = vpop.f32.mrb[0].mxu0
  %v6687 = vadd.f32 0.0, %v6686
  %v6688 = vpop.f32.mrb[0].mxu0
  %v6689 = vadd.f32 0.0, %v6688
  %v6690 = vpop.f32.mrb[0].mxu0
  %v6691 = vadd.f32 0.0, %v6690
  %6692 = vdwg.mxu0
  %6693 = vmatprep.subr.bf16.mxu0 %v6564
  %6694 = vmatpush1.bf16.msra.mxu0 %v6563
  %6695 = vmatprep.subr.bf16.mxu0 %v6570
  %6696 = vmatpush1.bf16.msra.mxu0 %v6569
  %6697 = vmatprep.subr.bf16.mxu0 0
  %6698 = vmatpush1.bf16.msra.mxu0 0
  %6699 = vmatprep.subr.bf16.mxu0 0
  %6700 = vmatpush1.bf16.msra.mxu0 0
  %6701 = vmatprep.subr.bf16.mxu0 0
  %6702 = vmatpush1.bf16.msra.mxu0 0
  %6703 = vmatprep.subr.bf16.mxu0 0
  %6704 = vmatpush1.bf16.msra.mxu0 0
  %6705 = vmatprep.subr.bf16.mxu0 0
  %6706 = vmatpush1.bf16.msra.mxu0 0
  %6707 = vmatprep.subr.bf16.mxu0 0
  %6708 = vmatpush1.bf16.msra.mxu0 0
  %6709 = vmatprep.subr.bf16.mxu0 0
  %6710 = vmatpush1.bf16.msra.mxu0 0
  %6711 = vmatprep.subr.bf16.mxu0 0
  %6712 = vmatpush1.bf16.msra.mxu0 0
  %6713 = vmatprep.subr.bf16.mxu0 0
  %6714 = vmatpush1.bf16.msra.mxu0 0
  %6715 = vmatprep.subr.bf16.mxu0 0
  %6716 = vmatpush1.bf16.msra.mxu0 0
  %6717 = vmatprep.subr.bf16.mxu0 0
  %6718 = vmatpush1.bf16.msra.mxu0 0
  %6719 = vmatprep.subr.bf16.mxu0 0
  %6720 = vmatpush1.bf16.msra.mxu0 0
  %6721 = vmatprep.subr.bf16.mxu0 0
  %6722 = vmatpush1.bf16.msra.mxu0 0
  %6723 = vmatprep.subr.bf16.mxu0 0
  %6724 = vmatpush1.bf16.msra.mxu0 0
  %6725 = vmatprep.mubr.bf16.mxu0 0
  %6726 = vmatmul.mubr.bf16.gmra.mrb[0].mxu0 %v6582
  %v6727 = vpop.f32.mrb[0].mxu0
  %v6728 = vadd.f32 0.0, %v6727
  %v6729 = vpop.f32.mrb[0].mxu0
  %v6730 = vadd.f32 0.0, %v6729
  %v6731 = vpop.f32.mrb[0].mxu0
  %v6732 = vadd.f32 0.0, %v6731
  %v6733 = vpop.f32.mrb[0].mxu0
  %v6734 = vadd.f32 0.0, %v6733
  %6735 = vmatprep.mubr.bf16.mxu0 0
  %6736 = vmatmul.mubr.bf16.gmra.mrb[0].mxu0 %v6585
  %v6737 = vpop.f32.mrb[0].mxu0
  %v6738 = vadd.f32 0.0, %v6737
  %v6739 = vpop.f32.mrb[0].mxu0
  %v6740 = vadd.f32 0.0, %v6739
  %v6741 = vpop.f32.mrb[0].mxu0
  %v6742 = vadd.f32 0.0, %v6741
  %v6743 = vpop.f32.mrb[0].mxu0
  %v6744 = vadd.f32 0.0, %v6743
  %6745 = vdwg.mxu0
  %v6750 = vunpack.c.l.b16 %v6550
  %v6751 = vunpack.c.l.b16 %v6551
  %v6752 = vunpack.c.l.b16 %v6552
  %v6753 = vunpack.c.l.b16 %v6553
  %v6754 = vpack.c.b16 %v6751, %v6750
  %v6755 = vpack.c.b16 %v6753, %v6752
  %v6757 = vsel %vm2590, %v6754, 0
  %v6760 = vsel %vm2590, %v6755, 0
  %6762 = vmatprep.subr.bf16.mxu0 %v2578
  %6763 = vmatpush1.bf16.msra.mxu0 %v2577
  %6764 = vmatprep.subr.bf16.mxu0 %v2584
  %6765 = vmatpush1.bf16.msra.mxu0 %v2583
  %6766 = vmatprep.subr.bf16.mxu0 0
  %6767 = vmatpush1.bf16.msra.mxu0 0
  %6768 = vmatprep.subr.bf16.mxu0 0
  %6769 = vmatpush1.bf16.msra.mxu0 0
  %6770 = vmatprep.subr.bf16.mxu0 0
  %6771 = vmatpush1.bf16.msra.mxu0 0
  %6772 = vmatprep.subr.bf16.mxu0 0
  %6773 = vmatpush1.bf16.msra.mxu0 0
  %6774 = vmatprep.subr.bf16.mxu0 0
  %6775 = vmatpush1.bf16.msra.mxu0 0
  %6776 = vmatprep.subr.bf16.mxu0 0
  %6777 = vmatpush1.bf16.msra.mxu0 0
  %6778 = vmatprep.subr.bf16.mxu0 0
  %6779 = vmatpush1.bf16.msra.mxu0 0
  %6780 = vmatprep.subr.bf16.mxu0 0
  %6781 = vmatpush1.bf16.msra.mxu0 0
  %6782 = vmatprep.subr.bf16.mxu0 0
  %6783 = vmatpush1.bf16.msra.mxu0 0
  %6784 = vmatprep.subr.bf16.mxu0 0
  %6785 = vmatpush1.bf16.msra.mxu0 0
  %6786 = vmatprep.subr.bf16.mxu0 0
  %6787 = vmatpush1.bf16.msra.mxu0 0
  %6788 = vmatprep.subr.bf16.mxu0 0
  %6789 = vmatpush1.bf16.msra.mxu0 0
  %6790 = vmatprep.subr.bf16.mxu0 0
  %6791 = vmatpush1.bf16.msra.mxu0 0
  %6792 = vmatprep.subr.bf16.mxu0 0
  %6793 = vmatpush1.bf16.msra.mxu0 0
  %6794 = vmatprep.mubr.bf16.mxu0 0
  %6795 = vmatmul.mubr.bf16.gmra.mrb[0].mxu0 %v6757
  %v6796 = vpop.f32.mrb[0].mxu0
  %v6797 = vadd.f32 %v6622, %v6796
  %v6798 = vpop.f32.mrb[0].mxu0
  %v6799 = vadd.f32 %v6624, %v6798
  %v6800 = vpop.f32.mrb[0].mxu0
  %v6801 = vadd.f32 %v6626, %v6800
  %v6802 = vpop.f32.mrb[0].mxu0
  %v6803 = vadd.f32 %v6628, %v6802
  %6804 = vmatprep.mubr.bf16.mxu0 0
  %6805 = vmatmul.mubr.bf16.gmra.mrb[0].mxu0 %v6760
  %v6806 = vpop.f32.mrb[0].mxu0
  %v6807 = vadd.f32 %v6632, %v6806
  %v6808 = vpop.f32.mrb[0].mxu0
  %v6809 = vadd.f32 %v6634, %v6808
  %v6810 = vpop.f32.mrb[0].mxu0
  %v6811 = vadd.f32 %v6636, %v6810
  %v6812 = vpop.f32.mrb[0].mxu0
  %v6813 = vadd.f32 %v6638, %v6812
  %6814 = vdwg.mxu0
  %6815 = vmatprep.subr.bf16.mxu0 %v2580
  %6816 = vmatpush1.bf16.msra.mxu0 %v2579
  %6817 = vmatprep.subr.bf16.mxu0 %v2586
  %6818 = vmatpush1.bf16.msra.mxu0 %v2585
  %6819 = vmatprep.subr.bf16.mxu0 0
  %6820 = vmatpush1.bf16.msra.mxu0 0
  %6821 = vmatprep.subr.bf16.mxu0 0
  %6822 = vmatpush1.bf16.msra.mxu0 0
  %6823 = vmatprep.subr.bf16.mxu0 0
  %6824 = vmatpush1.bf16.msra.mxu0 0
  %6825 = vmatprep.subr.bf16.mxu0 0
  %6826 = vmatpush1.bf16.msra.mxu0 0
  %6827 = vmatprep.subr.bf16.mxu0 0
  %6828 = vmatpush1.bf16.msra.mxu0 0
  %6829 = vmatprep.subr.bf16.mxu0 0
  %6830 = vmatpush1.bf16.msra.mxu0 0
  %6831 = vmatprep.subr.bf16.mxu0 0
  %6832 = vmatpush1.bf16.msra.mxu0 0
  %6833 = vmatprep.subr.bf16.mxu0 0
  %6834 = vmatpush1.bf16.msra.mxu0 0
  %6835 = vmatprep.subr.bf16.mxu0 0
  %6836 = vmatpush1.bf16.msra.mxu0 0
  %6837 = vmatprep.subr.bf16.mxu0 0
  %6838 = vmatpush1.bf16.msra.mxu0 0
  %6839 = vmatprep.subr.bf16.mxu0 0
  %6840 = vmatpush1.bf16.msra.mxu0 0
  %6841 = vmatprep.subr.bf16.mxu0 0
  %6842 = vmatpush1.bf16.msra.mxu0 0
  %6843 = vmatprep.subr.bf16.mxu0 0
  %6844 = vmatpush1.bf16.msra.mxu0 0
  %6845 = vmatprep.subr.bf16.mxu0 0
  %6846 = vmatpush1.bf16.msra.mxu0 0
  %6847 = vmatprep.mubr.bf16.mxu0 0
  %6848 = vmatmul.mubr.bf16.gmra.mrb[0].mxu0 %v6757
  %v6849 = vpop.f32.mrb[0].mxu0
  %v6850 = vadd.f32 %v6675, %v6849
  %v6851 = vpop.f32.mrb[0].mxu0
  %v6852 = vadd.f32 %v6677, %v6851
  %v6853 = vpop.f32.mrb[0].mxu0
  %v6854 = vadd.f32 %v6679, %v6853
  %v6855 = vpop.f32.mrb[0].mxu0
  %v6856 = vadd.f32 %v6681, %v6855
  %6857 = vmatprep.mubr.bf16.mxu0 0
  %6858 = vmatmul.mubr.bf16.gmra.mrb[0].mxu0 %v6760
  %v6859 = vpop.f32.mrb[0].mxu0
  %v6860 = vadd.f32 %v6685, %v6859
  %v6861 = vpop.f32.mrb[0].mxu0
  %v6862 = vadd.f32 %v6687, %v6861
  %v6863 = vpop.f32.mrb[0].mxu0
  %v6864 = vadd.f32 %v6689, %v6863
  %v6865 = vpop.f32.mrb[0].mxu0
  %v6866 = vadd.f32 %v6691, %v6865
  %6867 = vdwg.mxu0
  %6868 = vmatprep.subr.bf16.mxu0 %v2582
  %6869 = vmatpush1.bf16.msra.mxu0 %v2581
  %6870 = vmatprep.subr.bf16.mxu0 %v2588
  %6871 = vmatpush1.bf16.msra.mxu0 %v2587
  %6872 = vmatprep.subr.bf16.mxu0 0
  %6873 = vmatpush1.bf16.msra.mxu0 0
  %6874 = vmatprep.subr.bf16.mxu0 0
  %6875 = vmatpush1.bf16.msra.mxu0 0
  %6876 = vmatprep.subr.bf16.mxu0 0
  %6877 = vmatpush1.bf16.msra.mxu0 0
  %6878 = vmatprep.subr.bf16.mxu0 0
  %6879 = vmatpush1.bf16.msra.mxu0 0
  %6880 = vmatprep.subr.bf16.mxu0 0
  %6881 = vmatpush1.bf16.msra.mxu0 0
  %6882 = vmatprep.subr.bf16.mxu0 0
  %6883 = vmatpush1.bf16.msra.mxu0 0
  %6884 = vmatprep.subr.bf16.mxu0 0
  %6885 = vmatpush1.bf16.msra.mxu0 0
  %6886 = vmatprep.subr.bf16.mxu0 0
  %6887 = vmatpush1.bf16.msra.mxu0 0
  %6888 = vmatprep.subr.bf16.mxu0 0
  %6889 = vmatpush1.bf16.msra.mxu0 0
  %6890 = vmatprep.subr.bf16.mxu0 0
  %6891 = vmatpush1.bf16.msra.mxu0 0
  %6892 = vmatprep.subr.bf16.mxu0 0
  %6893 = vmatpush1.bf16.msra.mxu0 0
  %6894 = vmatprep.subr.bf16.mxu0 0
  %6895 = vmatpush1.bf16.msra.mxu0 0
  %6896 = vmatprep.subr.bf16.mxu0 0
  %6897 = vmatpush1.bf16.msra.mxu0 0
  %6898 = vmatprep.subr.bf16.mxu0 0
  %6899 = vmatpush1.bf16.msra.mxu0 0
  %6900 = vmatprep.mubr.bf16.mxu0 0
  %6901 = vmatmul.mubr.bf16.gmra.mrb[0].mxu0 %v6757
  %v6902 = vpop.f32.mrb[0].mxu0
  %v6903 = vadd.f32 %v6728, %v6902
  %v6904 = vpop.f32.mrb[0].mxu0
  %v6905 = vadd.f32 %v6730, %v6904
  %v6906 = vpop.f32.mrb[0].mxu0
  %v6907 = vadd.f32 %v6732, %v6906
  %v6908 = vpop.f32.mrb[0].mxu0
  %v6909 = vadd.f32 %v6734, %v6908
  %6910 = vmatprep.mubr.bf16.mxu0 0
  %6911 = vmatmul.mubr.bf16.gmra.mrb[0].mxu0 %v6760
  %v6912 = vpop.f32.mrb[0].mxu0
  %v6913 = vadd.f32 %v6738, %v6912
  %v6914 = vpop.f32.mrb[0].mxu0
  %v6915 = vadd.f32 %v6740, %v6914
  %v6916 = vpop.f32.mrb[0].mxu0
  %v6917 = vadd.f32 %v6742, %v6916
  %v6918 = vpop.f32.mrb[0].mxu0
  %v6919 = vadd.f32 %v6744, %v6918
  %6920 = vdwg.mxu0
  %v6921 = vld [vmem:[%s11] sm:$0xff]
  %v6922 = vld [vmem:[%s11 + $0x8] sm:$0xff]
  %v6923 = vld [vmem:[%s11 + $0x10] sm:$0xff]
  %v6924 = vld [vmem:[%s11 + $0x18] sm:$0xff]
  %6926 = vset.pattern.permute.xlu0 0
  %6927 = vperm.xlu0 %6926, %v6921
  %v6928 = vpop.permute.xlu0 %6927
  %6931 = vset.pattern.permute.xlu0 0
  %6932 = vperm.xlu0 %6931, %v6922
  %v6933 = vpop.permute.xlu0 %6932
  %6936 = vset.pattern.permute.xlu0 0
  %6937 = vperm.xlu0 %6936, %v6923
  %v6938 = vpop.permute.xlu0 %6937
  %6941 = vset.pattern.permute.xlu0 0
  %6942 = vperm.xlu0 %6941, %v6924
  %v6943 = vpop.permute.xlu0 %6942
  %v6945 = vadd.f32 %v6797, %v6928
  %v6946 = vadd.f32 %v6799, %v6928
  %v6947 = vadd.f32 %v6850, %v6928
  %v6948 = vadd.f32 %v6852, %v6928
  %v6949 = vadd.f32 %v6903, %v6928
  %v6950 = vadd.f32 %v6905, %v6928
  %v6951 = vadd.f32 %v6801, %v6933
  %v6952 = vadd.f32 %v6803, %v6933
  %v6953 = vadd.f32 %v6854, %v6933
  %v6954 = vadd.f32 %v6856, %v6933
  %v6955 = vadd.f32 %v6907, %v6933
  %v6956 = vadd.f32 %v6909, %v6933
  %v6957 = vadd.f32 %v6807, %v6938
  %v6958 = vadd.f32 %v6809, %v6938
  %v6959 = vadd.f32 %v6860, %v6938
  %v6960 = vadd.f32 %v6862, %v6938
  %v6961 = vadd.f32 %v6913, %v6938
  %v6962 = vadd.f32 %v6915, %v6938
  %v6963 = vadd.f32 %v6811, %v6943
  %v6964 = vadd.f32 %v6813, %v6943
  %v6965 = vadd.f32 %v6864, %v6943
  %v6966 = vadd.f32 %v6866, %v6943
  %v6967 = vadd.f32 %v6917, %v6943
  %v6968 = vadd.f32 %v6919, %v6943
  %vm6969 = vcmp.ge.f32.partialorder %v6945, 0.0
  %vm6970 = vcmp.ge.f32.partialorder %v6946, 0.0
  %vm6971 = vcmp.ge.f32.partialorder %v6947, 0.0
  %vm6972 = vcmp.ge.f32.partialorder %v6948, 0.0
  %vm6973 = vcmp.ge.f32.partialorder %v6949, 0.0
  %vm6974 = vcmp.ge.f32.partialorder %v6950, 0.0
  %vm6975 = vcmp.ge.f32.partialorder %v6951, 0.0
  %vm6976 = vcmp.ge.f32.partialorder %v6952, 0.0
  %vm6977 = vcmp.ge.f32.partialorder %v6953, 0.0
  %vm6978 = vcmp.ge.f32.partialorder %v6954, 0.0
  %vm6979 = vcmp.ge.f32.partialorder %v6955, 0.0
  %vm6980 = vcmp.ge.f32.partialorder %v6956, 0.0
  %vm6981 = vcmp.ge.f32.partialorder %v6957, 0.0
  %vm6982 = vcmp.ge.f32.partialorder %v6958, 0.0
  %vm6983 = vcmp.ge.f32.partialorder %v6959, 0.0
  %vm6984 = vcmp.ge.f32.partialorder %v6960, 0.0
  %vm6985 = vcmp.ge.f32.partialorder %v6961, 0.0
  %vm6986 = vcmp.ge.f32.partialorder %v6962, 0.0
  %vm6987 = vcmp.ge.f32.partialorder %v6963, 0.0
  %vm6988 = vcmp.ge.f32.partialorder %v6964, 0.0
  %vm6989 = vcmp.ge.f32.partialorder %v6965, 0.0
  %vm6990 = vcmp.ge.f32.partialorder %v6966, 0.0
  %vm6991 = vcmp.ge.f32.partialorder %v6967, 0.0
  %vm6992 = vcmp.ge.f32.partialorder %v6968, 0.0
  %v6993 = vmul.f32 %v6945, 0.25
  %v6994 = vmul.f32 %v6946, 0.25
  %v6995 = vmul.f32 %v6947, 0.25
  %v6996 = vmul.f32 %v6948, 0.25
  %v6997 = vmul.f32 %v6949, 0.25
  %v6998 = vmul.f32 %v6950, 0.25
  %v6999 = vmul.f32 %v6951, 0.25
  %v7000 = vmul.f32 %v6952, 0.25
  %v7001 = vmul.f32 %v6953, 0.25
  %v7002 = vmul.f32 %v6954, 0.25
  %v7003 = vmul.f32 %v6955, 0.25
  %v7004 = vmul.f32 %v6956, 0.25
  %v7005 = vmul.f32 %v6957, 0.25
  %v7006 = vmul.f32 %v6958, 0.25
  %v7007 = vmul.f32 %v6959, 0.25
  %v7008 = vmul.f32 %v6960, 0.25
  %v7009 = vmul.f32 %v6961, 0.25
  %v7010 = vmul.f32 %v6962, 0.25
  %v7011 = vmul.f32 %v6963, 0.25
  %v7012 = vmul.f32 %v6964, 0.25
  %v7013 = vmul.f32 %v6965, 0.25
  %v7014 = vmul.f32 %v6966, 0.25
  %v7015 = vmul.f32 %v6967, 0.25
  %v7016 = vmul.f32 %v6968, 0.25
  %v7017 = vsel %vm6969, %v6945, %v6993
  %v7018 = vsel %vm6970, %v6946, %v6994
  %v7019 = vsel %vm6971, %v6947, %v6995
  %v7020 = vsel %vm6972, %v6948, %v6996
  %v7021 = vsel %vm6973, %v6949, %v6997
  %v7022 = vsel %vm6974, %v6950, %v6998
  %v7023 = vsel %vm6975, %v6951, %v6999
  %v7024 = vsel %vm6976, %v6952, %v7000
  %v7025 = vsel %vm6977, %v6953, %v7001
  %v7026 = vsel %vm6978, %v6954, %v7002
  %v7027 = vsel %vm6979, %v6955, %v7003
  %v7028 = vsel %vm6980, %v6956, %v7004
  %v7029 = vsel %vm6981, %v6957, %v7005
  %v7030 = vsel %vm6982, %v6958, %v7006
  %v7031 = vsel %vm6983, %v6959, %v7007
  %v7032 = vsel %vm6984, %v6960, %v7008
  %v7033 = vsel %vm6985, %v6961, %v7009
  %v7034 = vsel %vm6986, %v6962, %v7010
  %v7035 = vsel %vm6987, %v6963, %v7011
  %v7036 = vsel %vm6988, %v6964, %v7012
  %v7037 = vsel %vm6989, %v6965, %v7013
  %v7038 = vsel %vm6990, %v6966, %v7014
  %v7039 = vsel %vm6991, %v6967, %v7015
  %v7040 = vsel %vm6992, %v6968, %v7016
  %v7041 = vmul.f32 %v7017, %v241
  %v7042 = vmul.f32 %v7018, %v245
  %v7043 = vmul.f32 %v7019, %v249
  %v7044 = vmul.f32 %v7020, %v253
  %v7045 = vmul.f32 %v7021, %v257
  %v7046 = vmul.f32 %v7022, %v261
  %v7047 = vmul.f32 %v7023, %v241
  %v7048 = vmul.f32 %v7024, %v245
  %v7049 = vmul.f32 %v7025, %v249
  %v7050 = vmul.f32 %v7026, %v253
  %v7051 = vmul.f32 %v7027, %v257
  %v7052 = vmul.f32 %v7028, %v261
  %v7053 = vmul.f32 %v7029, %v241
  %v7054 = vmul.f32 %v7030, %v245
  %v7055 = vmul.f32 %v7031, %v249
  %v7056 = vmul.f32 %v7032, %v253
  %v7057 = vmul.f32 %v7033, %v257
  %v7058 = vmul.f32 %v7034, %v261
  %v7059 = vmul.f32 %v7035, %v241
  %v7060 = vmul.f32 %v7036, %v245
  %v7061 = vmul.f32 %v7037, %v249
  %v7062 = vmul.f32 %v7038, %v253
  %v7063 = vmul.f32 %v7039, %v257
  %v7064 = vmul.f32 %v7040, %v261
  %v7065 = vpack.c.bf16 %v7047, %v7041
  %v7066 = vpack.c.bf16 %v7048, %v7042
  %v7067 = vpack.c.bf16 %v7049, %v7043
  %v7068 = vpack.c.bf16 %v7050, %v7044
  %v7069 = vpack.c.bf16 %v7051, %v7045
  %v7070 = vpack.c.bf16 %v7052, %v7046
  %v7071 = vpack.c.bf16 %v7059, %v7053
  %v7072 = vpack.c.bf16 %v7060, %v7054
  %v7073 = vpack.c.bf16 %v7061, %v7055
  %v7074 = vpack.c.bf16 %v7062, %v7056
  %v7075 = vpack.c.bf16 %v7063, %v7057
  %v7076 = vpack.c.bf16 %v7064, %v7058
  %s7077 = scalar_lea.vmem %s6, 36
  %v7078 = vld [vmem:[%s7077] sm:$0xf]
  %v7080 = vsel %vm2590, %v7078, 0
  %7082 = vmatprep.subr.bf16.mxu0 %v7066
  %7083 = vmatpush1.bf16.msra.mxu0 %v7065
  %7084 = vmatprep.subr.bf16.mxu0 %v7072
  %7085 = vmatpush1.bf16.msra.mxu0 %v7071
  %7086 = vmatprep.subr.bf16.mxu0 0
  %7087 = vmatpush1.bf16.msra.mxu0 0
  %7088 = vmatprep.subr.bf16.mxu0 0
  %7089 = vmatpush1.bf16.msra.mxu0 0
  %7090 = vmatprep.subr.bf16.mxu0 0
  %7091 = vmatpush1.bf16.msra.mxu0 0
  %7092 = vmatprep.subr.bf16.mxu0 0
  %7093 = vmatpush1.bf16.msra.mxu0 0
  %7094 = vmatprep.subr.bf16.mxu0 0
  %7095 = vmatpush1.bf16.msra.mxu0 0
  %7096 = vmatprep.subr.bf16.mxu0 0
  %7097 = vmatpush1.bf16.msra.mxu0 0
  %7098 = vmatprep.subr.bf16.mxu0 0
  %7099 = vmatpush1.bf16.msra.mxu0 0
  %7100 = vmatprep.subr.bf16.mxu0 0
  %7101 = vmatpush1.bf16.msra.mxu0 0
  %7102 = vmatprep.subr.bf16.mxu0 0
  %7103 = vmatpush1.bf16.msra.mxu0 0
  %7104 = vmatprep.subr.bf16.mxu0 0
  %7105 = vmatpush1.bf16.msra.mxu0 0
  %7106 = vmatprep.subr.bf16.mxu0 0
  %7107 = vmatpush1.bf16.msra.mxu0 0
  %7108 = vmatprep.subr.bf16.mxu0 0
  %7109 = vmatpush1.bf16.msra.mxu0 0
  %7110 = vmatprep.subr.bf16.mxu0 0
  %7111 = vmatpush1.bf16.msra.mxu0 0
  %7112 = vmatprep.subr.bf16.mxu0 0
  %7113 = vmatpush1.bf16.msra.mxu0 0
  %7114 = vmatprep.mubr.bf16.mxu0 0
  %7115 = vmatmul.mubr.bf16.gmra.mrb[0].mxu0 %v7080
  %v7116 = vpop.f32.mrb[0].mxu0
  %v7117 = vadd.f32 0.0, %v7116
  %v7118 = vpop.f32.mrb[0].mxu0
  %v7119 = vadd.f32 0.0, %v7118
  %v7120 = vpop.f32.mrb[0].mxu0
  %v7121 = vpop.f32.mrb[0].mxu0
  %7122 = vdwg.mxu0
  %7123 = vmatprep.subr.bf16.mxu0 %v7068
  %7124 = vmatpush1.bf16.msra.mxu0 %v7067
  %7125 = vmatprep.subr.bf16.mxu0 %v7074
  %7126 = vmatpush1.bf16.msra.mxu0 %v7073
  %7127 = vmatprep.subr.bf16.mxu0 0
  %7128 = vmatpush1.bf16.msra.mxu0 0
  %7129 = vmatprep.subr.bf16.mxu0 0
  %7130 = vmatpush1.bf16.msra.mxu0 0
  %7131 = vmatprep.subr.bf16.mxu0 0
  %7132 = vmatpush1.bf16.msra.mxu0 0
  %7133 = vmatprep.subr.bf16.mxu0 0
  %7134 = vmatpush1.bf16.msra.mxu0 0
  %7135 = vmatprep.subr.bf16.mxu0 0
  %7136 = vmatpush1.bf16.msra.mxu0 0
  %7137 = vmatprep.subr.bf16.mxu0 0
  %7138 = vmatpush1.bf16.msra.mxu0 0
  %7139 = vmatprep.subr.bf16.mxu0 0
  %7140 = vmatpush1.bf16.msra.mxu0 0
  %7141 = vmatprep.subr.bf16.mxu0 0
  %7142 = vmatpush1.bf16.msra.mxu0 0
  %7143 = vmatprep.subr.bf16.mxu0 0
  %7144 = vmatpush1.bf16.msra.mxu0 0
  %7145 = vmatprep.subr.bf16.mxu0 0
  %7146 = vmatpush1.bf16.msra.mxu0 0
  %7147 = vmatprep.subr.bf16.mxu0 0
  %7148 = vmatpush1.bf16.msra.mxu0 0
  %7149 = vmatprep.subr.bf16.mxu0 0
  %7150 = vmatpush1.bf16.msra.mxu0 0
  %7151 = vmatprep.subr.bf16.mxu0 0
  %7152 = vmatpush1.bf16.msra.mxu0 0
  %7153 = vmatprep.subr.bf16.mxu0 0
  %7154 = vmatpush1.bf16.msra.mxu0 0
  %7155 = vmatprep.mubr.bf16.mxu0 0
  %7156 = vmatmul.mubr.bf16.gmra.mrb[0].mxu0 %v7080
  %v7157 = vpop.f32.mrb[0].mxu0
  %v7158 = vadd.f32 0.0, %v7157
  %v7159 = vpop.f32.mrb[0].mxu0
  %v7160 = vadd.f32 0.0, %v7159
  %v7161 = vpop.f32.mrb[0].mxu0
  %v7162 = vpop.f32.mrb[0].mxu0
  %7163 = vdwg.mxu0
  %7164 = vmatprep.subr.bf16.mxu0 %v7070
  %7165 = vmatpush1.bf16.msra.mxu0 %v7069
  %7166 = vmatprep.subr.bf16.mxu0 %v7076
  %7167 = vmatpush1.bf16.msra.mxu0 %v7075
  %7168 = vmatprep.subr.bf16.mxu0 0
  %7169 = vmatpush1.bf16.msra.mxu0 0
  %7170 = vmatprep.subr.bf16.mxu0 0
  %7171 = vmatpush1.bf16.msra.mxu0 0
  %7172 = vmatprep.subr.bf16.mxu0 0
  %7173 = vmatpush1.bf16.msra.mxu0 0
  %7174 = vmatprep.subr.bf16.mxu0 0
  %7175 = vmatpush1.bf16.msra.mxu0 0
  %7176 = vmatprep.subr.bf16.mxu0 0
  %7177 = vmatpush1.bf16.msra.mxu0 0
  %7178 = vmatprep.subr.bf16.mxu0 0
  %7179 = vmatpush1.bf16.msra.mxu0 0
  %7180 = vmatprep.subr.bf16.mxu0 0
  %7181 = vmatpush1.bf16.msra.mxu0 0
  %7182 = vmatprep.subr.bf16.mxu0 0
  %7183 = vmatpush1.bf16.msra.mxu0 0
  %7184 = vmatprep.subr.bf16.mxu0 0
  %7185 = vmatpush1.bf16.msra.mxu0 0
  %7186 = vmatprep.subr.bf16.mxu0 0
  %7187 = vmatpush1.bf16.msra.mxu0 0
  %7188 = vmatprep.subr.bf16.mxu0 0
  %7189 = vmatpush1.bf16.msra.mxu0 0
  %7190 = vmatprep.subr.bf16.mxu0 0
  %7191 = vmatpush1.bf16.msra.mxu0 0
  %7192 = vmatprep.subr.bf16.mxu0 0
  %7193 = vmatpush1.bf16.msra.mxu0 0
  %7194 = vmatprep.subr.bf16.mxu0 0
  %7195 = vmatpush1.bf16.msra.mxu0 0
  %7196 = vmatprep.mubr.bf16.mxu0 0
  %7197 = vmatmul.mubr.bf16.gmra.mrb[0].mxu0 %v7080
  %v7198 = vpop.f32.mrb[0].mxu0
  %v7199 = vadd.f32 0.0, %v7198
  %v7200 = vpop.f32.mrb[0].mxu0
  %v7201 = vadd.f32 0.0, %v7200
  %v7202 = vpop.f32.mrb[0].mxu0
  %v7203 = vpop.f32.mrb[0].mxu0
  %7204 = vdwg.mxu0
  %7205 = vrot.lane.b32.xlu0 %v7117, 19
  %v7206 = vpop.permute.xlu0 %7205
  %7207 = vrot.lane.b32.xlu0 %v7119, 19
  %v7208 = vpop.permute.xlu0 %7207
  %7209 = vrot.lane.b32.xlu0 %v7158, 19
  %v7210 = vpop.permute.xlu0 %7209
  %7211 = vrot.lane.b32.xlu0 %v7160, 19
  %v7212 = vpop.permute.xlu0 %7211
  %7213 = vrot.lane.b32.xlu0 %v7199, 19
  %v7214 = vpop.permute.xlu0 %7213
  %7215 = vrot.lane.b32.xlu0 %v7201, 19
  %v7216 = vpop.permute.xlu0 %7215
  %v7217 = vsel %vm294, %v7214, %v7216
  %v7218 = vsel %vm294, %v7212, %v7214
  %v7219 = vsel %vm294, %v7210, %v7212
  %v7220 = vsel %vm294, %v7208, %v7210
  %v7221 = vsel %vm294, %v7206, %v7208
  %v7222 = vsel %vm294, %v7216, %v7206
  %s7223 = scalar_lea.vmem %s6, 40
  %v7224 = vld [vmem:[%s7223] sm:$0xf]
  %v7226 = vsel %vm2590, %v7224, 0
  %7228 = vmatprep.subr.bf16.mxu0 %v7066
  %7229 = vmatpush1.bf16.msra.mxu0 %v7065
  %7230 = vmatprep.subr.bf16.mxu0 %v7072
  %7231 = vmatpush1.bf16.msra.mxu0 %v7071
  %7232 = vmatprep.subr.bf16.mxu0 0
  %7233 = vmatpush1.bf16.msra.mxu0 0
  %7234 = vmatprep.subr.bf16.mxu0 0
  %7235 = vmatpush1.bf16.msra.mxu0 0
  %7236 = vmatprep.subr.bf16.mxu0 0
  %7237 = vmatpush1.bf16.msra.mxu0 0
  %7238 = vmatprep.subr.bf16.mxu0 0
  %7239 = vmatpush1.bf16.msra.mxu0 0
  %7240 = vmatprep.subr.bf16.mxu0 0
  %7241 = vmatpush1.bf16.msra.mxu0 0
  %7242 = vmatprep.subr.bf16.mxu0 0
  %7243 = vmatpush1.bf16.msra.mxu0 0
  %7244 = vmatprep.subr.bf16.mxu0 0
  %7245 = vmatpush1.bf16.msra.mxu0 0
  %7246 = vmatprep.subr.bf16.mxu0 0
  %7247 = vmatpush1.bf16.msra.mxu0 0
  %7248 = vmatprep.subr.bf16.mxu0 0
  %7249 = vmatpush1.bf16.msra.mxu0 0
  %7250 = vmatprep.subr.bf16.mxu0 0
  %7251 = vmatpush1.bf16.msra.mxu0 0
  %7252 = vmatprep.subr.bf16.mxu0 0
  %7253 = vmatpush1.bf16.msra.mxu0 0
  %7254 = vmatprep.subr.bf16.mxu0 0
  %7255 = vmatpush1.bf16.msra.mxu0 0
  %7256 = vmatprep.subr.bf16.mxu0 0
  %7257 = vmatpush1.bf16.msra.mxu0 0
  %7258 = vmatprep.subr.bf16.mxu0 0
  %7259 = vmatpush1.bf16.msra.mxu0 0
  %7260 = vmatprep.mubr.bf16.mxu0 0
  %7261 = vmatmul.mubr.bf16.gmra.mrb[0].mxu0 %v7226
  %v7262 = vpop.f32.mrb[0].mxu0
  %v7263 = vadd.f32 0.0, %v7262
  %v7264 = vpop.f32.mrb[0].mxu0
  %v7265 = vadd.f32 0.0, %v7264
  %v7266 = vpop.f32.mrb[0].mxu0
  %v7267 = vpop.f32.mrb[0].mxu0
  %7268 = vdwg.mxu0
  %7269 = vmatprep.subr.bf16.mxu0 %v7068
  %7270 = vmatpush1.bf16.msra.mxu0 %v7067
  %7271 = vmatprep.subr.bf16.mxu0 %v7074
  %7272 = vmatpush1.bf16.msra.mxu0 %v7073
  %7273 = vmatprep.subr.bf16.mxu0 0
  %7274 = vmatpush1.bf16.msra.mxu0 0
  %7275 = vmatprep.subr.bf16.mxu0 0
  %7276 = vmatpush1.bf16.msra.mxu0 0
  %7277 = vmatprep.subr.bf16.mxu0 0
  %7278 = vmatpush1.bf16.msra.mxu0 0
  %7279 = vmatprep.subr.bf16.mxu0 0
  %7280 = vmatpush1.bf16.msra.mxu0 0
  %7281 = vmatprep.subr.bf16.mxu0 0
  %7282 = vmatpush1.bf16.msra.mxu0 0
  %7283 = vmatprep.subr.bf16.mxu0 0
  %7284 = vmatpush1.bf16.msra.mxu0 0
  %7285 = vmatprep.subr.bf16.mxu0 0
  %7286 = vmatpush1.bf16.msra.mxu0 0
  %7287 = vmatprep.subr.bf16.mxu0 0
  %7288 = vmatpush1.bf16.msra.mxu0 0
  %7289 = vmatprep.subr.bf16.mxu0 0
  %7290 = vmatpush1.bf16.msra.mxu0 0
  %7291 = vmatprep.subr.bf16.mxu0 0
  %7292 = vmatpush1.bf16.msra.mxu0 0
  %7293 = vmatprep.subr.bf16.mxu0 0
  %7294 = vmatpush1.bf16.msra.mxu0 0
  %7295 = vmatprep.subr.bf16.mxu0 0
  %7296 = vmatpush1.bf16.msra.mxu0 0
  %7297 = vmatprep.subr.bf16.mxu0 0
  %7298 = vmatpush1.bf16.msra.mxu0 0
  %7299 = vmatprep.subr.bf16.mxu0 0
  %7300 = vmatpush1.bf16.msra.mxu0 0
  %7301 = vmatprep.mubr.bf16.mxu0 0
  %7302 = vmatmul.mubr.bf16.gmra.mrb[0].mxu0 %v7226
  %v7303 = vpop.f32.mrb[0].mxu0
  %v7304 = vadd.f32 0.0, %v7303
  %v7305 = vpop.f32.mrb[0].mxu0
  %v7306 = vadd.f32 0.0, %v7305
  %v7307 = vpop.f32.mrb[0].mxu0
  %v7308 = vpop.f32.mrb[0].mxu0
  %7309 = vdwg.mxu0
  %7310 = vmatprep.subr.bf16.mxu0 %v7070
  %7311 = vmatpush1.bf16.msra.mxu0 %v7069
  %7312 = vmatprep.subr.bf16.mxu0 %v7076
  %7313 = vmatpush1.bf16.msra.mxu0 %v7075
  %7314 = vmatprep.subr.bf16.mxu0 0
  %7315 = vmatpush1.bf16.msra.mxu0 0
  %7316 = vmatprep.subr.bf16.mxu0 0
  %7317 = vmatpush1.bf16.msra.mxu0 0
  %7318 = vmatprep.subr.bf16.mxu0 0
  %7319 = vmatpush1.bf16.msra.mxu0 0
  %7320 = vmatprep.subr.bf16.mxu0 0
  %7321 = vmatpush1.bf16.msra.mxu0 0
  %7322 = vmatprep.subr.bf16.mxu0 0
  %7323 = vmatpush1.bf16.msra.mxu0 0
  %7324 = vmatprep.subr.bf16.mxu0 0
  %7325 = vmatpush1.bf16.msra.mxu0 0
  %7326 = vmatprep.subr.bf16.mxu0 0
  %7327 = vmatpush1.bf16.msra.mxu0 0
  %7328 = vmatprep.subr.bf16.mxu0 0
  %7329 = vmatpush1.bf16.msra.mxu0 0
  %7330 = vmatprep.subr.bf16.mxu0 0
  %7331 = vmatpush1.bf16.msra.mxu0 0
  %7332 = vmatprep.subr.bf16.mxu0 0
  %7333 = vmatpush1.bf16.msra.mxu0 0
  %7334 = vmatprep.subr.bf16.mxu0 0
  %7335 = vmatpush1.bf16.msra.mxu0 0
  %7336 = vmatprep.subr.bf16.mxu0 0
  %7337 = vmatpush1.bf16.msra.mxu0 0
  %7338 = vmatprep.subr.bf16.mxu0 0
  %7339 = vmatpush1.bf16.msra.mxu0 0
  %7340 = vmatprep.subr.bf16.mxu0 0
  %7341 = vmatpush1.bf16.msra.mxu0 0
  %7342 = vmatprep.mubr.bf16.mxu0 0
  %7343 = vmatmul.mubr.bf16.gmra.mrb[0].mxu0 %v7226
  %v7344 = vpop.f32.mrb[0].mxu0
  %v7345 = vadd.f32 0.0, %v7344
  %v7346 = vpop.f32.mrb[0].mxu0
  %v7347 = vadd.f32 0.0, %v7346
  %v7348 = vpop.f32.mrb[0].mxu0
  %v7349 = vpop.f32.mrb[0].mxu0
  %7350 = vdwg.mxu0
  %7351 = vrot.lane.b32.xlu0 %v7263, 18
  %v7352 = vpop.permute.xlu0 %7351
  %7353 = vrot.lane.b32.xlu0 %v7265, 18
  %v7354 = vpop.permute.xlu0 %7353
  %7355 = vrot.lane.b32.xlu0 %v7304, 18
  %v7356 = vpop.permute.xlu0 %7355
  %7357 = vrot.lane.b32.xlu0 %v7306, 18
  %v7358 = vpop.permute.xlu0 %7357
  %7359 = vrot.lane.b32.xlu0 %v7345, 18
  %v7360 = vpop.permute.xlu0 %7359
  %7361 = vrot.lane.b32.xlu0 %v7347, 18
  %v7362 = vpop.permute.xlu0 %7361
  %v7363 = vsel %vm323, %v7360, %v7362
  %v7364 = vsel %vm323, %v7358, %v7360
  %v7365 = vsel %vm323, %v7356, %v7358
  %v7366 = vsel %vm323, %v7354, %v7356
  %v7367 = vsel %vm323, %v7352, %v7354
  %v7368 = vsel %vm323, %v7362, %v7352
  %v7369 = vadd.f32 %v7222, %v7368
  %v7370 = vadd.f32 %v7221, %v7367
  %v7371 = vadd.f32 %v7220, %v7366
  %v7372 = vadd.f32 %v7219, %v7365
  %v7373 = vadd.f32 %v7218, %v7364
  %v7374 = vadd.f32 %v7217, %v7363
  %s7375 = scalar_lea.vmem %s6, 44
  %v7376 = vld [vmem:[%s7375] sm:$0xf]
  %v7378 = vsel %vm2590, %v7376, 0
  %7380 = vmatprep.subr.bf16.mxu0 %v7066
  %7381 = vmatpush1.bf16.msra.mxu0 %v7065
  %7382 = vmatprep.subr.bf16.mxu0 %v7072
  %7383 = vmatpush1.bf16.msra.mxu0 %v7071
  %7384 = vmatprep.subr.bf16.mxu0 0
  %7385 = vmatpush1.bf16.msra.mxu0 0
  %7386 = vmatprep.subr.bf16.mxu0 0
  %7387 = vmatpush1.bf16.msra.mxu0 0
  %7388 = vmatprep.subr.bf16.mxu0 0
  %7389 = vmatpush1.bf16.msra.mxu0 0
  %7390 = vmatprep.subr.bf16.mxu0 0
  %7391 = vmatpush1.bf16.msra.mxu0 0
  %7392 = vmatprep.subr.bf16.mxu0 0
  %7393 = vmatpush1.bf16.msra.mxu0 0
  %7394 = vmatprep.subr.bf16.mxu0 0
  %7395 = vmatpush1.bf16.msra.mxu0 0
  %7396 = vmatprep.subr.bf16.mxu0 0
  %7397 = vmatpush1.bf16.msra.mxu0 0
  %7398 = vmatprep.subr.bf16.mxu0 0
  %7399 = vmatpush1.bf16.msra.mxu0 0
  %7400 = vmatprep.subr.bf16.mxu0 0
  %7401 = vmatpush1.bf16.msra.mxu0 0
  %7402 = vmatprep.subr.bf16.mxu0 0
  %7403 = vmatpush1.bf16.msra.mxu0 0
  %7404 = vmatprep.subr.bf16.mxu0 0
  %7405 = vmatpush1.bf16.msra.mxu0 0
  %7406 = vmatprep.subr.bf16.mxu0 0
  %7407 = vmatpush1.bf16.msra.mxu0 0
  %7408 = vmatprep.subr.bf16.mxu0 0
  %7409 = vmatpush1.bf16.msra.mxu0 0
  %7410 = vmatprep.subr.bf16.mxu0 0
  %7411 = vmatpush1.bf16.msra.mxu0 0
  %7412 = vmatprep.mubr.bf16.mxu0 0
  %7413 = vmatmul.mubr.bf16.gmra.mrb[0].mxu0 %v7378
  %v7414 = vpop.f32.mrb[0].mxu0
  %v7415 = vadd.f32 0.0, %v7414
  %v7416 = vpop.f32.mrb[0].mxu0
  %v7417 = vadd.f32 0.0, %v7416
  %v7418 = vpop.f32.mrb[0].mxu0
  %v7419 = vpop.f32.mrb[0].mxu0
  %7420 = vdwg.mxu0
  %7421 = vmatprep.subr.bf16.mxu0 %v7068
  %7422 = vmatpush1.bf16.msra.mxu0 %v7067
  %7423 = vmatprep.subr.bf16.mxu0 %v7074
  %7424 = vmatpush1.bf16.msra.mxu0 %v7073
  %7425 = vmatprep.subr.bf16.mxu0 0
  %7426 = vmatpush1.bf16.msra.mxu0 0
  %7427 = vmatprep.subr.bf16.mxu0 0
  %7428 = vmatpush1.bf16.msra.mxu0 0
  %7429 = vmatprep.subr.bf16.mxu0 0
  %7430 = vmatpush1.bf16.msra.mxu0 0
  %7431 = vmatprep.subr.bf16.mxu0 0
  %7432 = vmatpush1.bf16.msra.mxu0 0
  %7433 = vmatprep.subr.bf16.mxu0 0
  %7434 = vmatpush1.bf16.msra.mxu0 0
  %7435 = vmatprep.subr.bf16.mxu0 0
  %7436 = vmatpush1.bf16.msra.mxu0 0
  %7437 = vmatprep.subr.bf16.mxu0 0
  %7438 = vmatpush1.bf16.msra.mxu0 0
  %7439 = vmatprep.subr.bf16.mxu0 0
  %7440 = vmatpush1.bf16.msra.mxu0 0
  %7441 = vmatprep.subr.bf16.mxu0 0
  %7442 = vmatpush1.bf16.msra.mxu0 0
  %7443 = vmatprep.subr.bf16.mxu0 0
  %7444 = vmatpush1.bf16.msra.mxu0 0
  %7445 = vmatprep.subr.bf16.mxu0 0
  %7446 = vmatpush1.bf16.msra.mxu0 0
  %7447 = vmatprep.subr.bf16.mxu0 0
  %7448 = vmatpush1.bf16.msra.mxu0 0
  %7449 = vmatprep.subr.bf16.mxu0 0
  %7450 = vmatpush1.bf16.msra.mxu0 0
  %7451 = vmatprep.subr.bf16.mxu0 0
  %7452 = vmatpush1.bf16.msra.mxu0 0
  %7453 = vmatprep.mubr.bf16.mxu0 0
  %7454 = vmatmul.mubr.bf16.gmra.mrb[0].mxu0 %v7378
  %v7455 = vpop.f32.mrb[0].mxu0
  %v7456 = vadd.f32 0.0, %v7455
  %v7457 = vpop.f32.mrb[0].mxu0
  %v7458 = vadd.f32 0.0, %v7457
  %v7459 = vpop.f32.mrb[0].mxu0
  %v7460 = vpop.f32.mrb[0].mxu0
  %7461 = vdwg.mxu0
  %7462 = vmatprep.subr.bf16.mxu0 %v7070
  %7463 = vmatpush1.bf16.msra.mxu0 %v7069
  %7464 = vmatprep.subr.bf16.mxu0 %v7076
  %7465 = vmatpush1.bf16.msra.mxu0 %v7075
  %7466 = vmatprep.subr.bf16.mxu0 0
  %7467 = vmatpush1.bf16.msra.mxu0 0
  %7468 = vmatprep.subr.bf16.mxu0 0
  %7469 = vmatpush1.bf16.msra.mxu0 0
  %7470 = vmatprep.subr.bf16.mxu0 0
  %7471 = vmatpush1.bf16.msra.mxu0 0
  %7472 = vmatprep.subr.bf16.mxu0 0
  %7473 = vmatpush1.bf16.msra.mxu0 0
  %7474 = vmatprep.subr.bf16.mxu0 0
  %7475 = vmatpush1.bf16.msra.mxu0 0
  %7476 = vmatprep.subr.bf16.mxu0 0
  %7477 = vmatpush1.bf16.msra.mxu0 0
  %7478 = vmatprep.subr.bf16.mxu0 0
  %7479 = vmatpush1.bf16.msra.mxu0 0
  %7480 = vmatprep.subr.bf16.mxu0 0
  %7481 = vmatpush1.bf16.msra.mxu0 0
  %7482 = vmatprep.subr.bf16.mxu0 0
  %7483 = vmatpush1.bf16.msra.mxu0 0
  %7484 = vmatprep.subr.bf16.mxu0 0
  %7485 = vmatpush1.bf16.msra.mxu0 0
  %7486 = vmatprep.subr.bf16.mxu0 0
  %7487 = vmatpush1.bf16.msra.mxu0 0
  %7488 = vmatprep.subr.bf16.mxu0 0
  %7489 = vmatpush1.bf16.msra.mxu0 0
  %7490 = vmatprep.subr.bf16.mxu0 0
  %7491 = vmatpush1.bf16.msra.mxu0 0
  %7492 = vmatprep.subr.bf16.mxu0 0
  %7493 = vmatpush1.bf16.msra.mxu0 0
  %7494 = vmatprep.mubr.bf16.mxu0 0
  %7495 = vmatmul.mubr.bf16.gmra.mrb[0].mxu0 %v7378
  %v7496 = vpop.f32.mrb[0].mxu0
  %v7497 = vadd.f32 0.0, %v7496
  %v7498 = vpop.f32.mrb[0].mxu0
  %v7499 = vadd.f32 0.0, %v7498
  %v7500 = vpop.f32.mrb[0].mxu0
  %v7501 = vpop.f32.mrb[0].mxu0
  %7502 = vdwg.mxu0
  %7503 = vrot.lane.b32.xlu0 %v7415, 17
  %v7504 = vpop.permute.xlu0 %7503
  %7505 = vrot.lane.b32.xlu0 %v7417, 17
  %v7506 = vpop.permute.xlu0 %7505
  %7507 = vrot.lane.b32.xlu0 %v7456, 17
  %v7508 = vpop.permute.xlu0 %7507
  %7509 = vrot.lane.b32.xlu0 %v7458, 17
  %v7510 = vpop.permute.xlu0 %7509
  %7511 = vrot.lane.b32.xlu0 %v7497, 17
  %v7512 = vpop.permute.xlu0 %7511
  %7513 = vrot.lane.b32.xlu0 %v7499, 17
  %v7514 = vpop.permute.xlu0 %7513
  %v7515 = vsel %vm741, %v7512, %v7514
  %v7516 = vsel %vm741, %v7510, %v7512
  %v7517 = vsel %vm741, %v7508, %v7510
  %v7518 = vsel %vm741, %v7506, %v7508
  %v7519 = vsel %vm741, %v7504, %v7506
  %v7520 = vsel %vm741, %v7514, %v7504
  %v7521 = vadd.f32 %v7369, %v7520
  %v7522 = vadd.f32 %v7370, %v7519
  %v7523 = vadd.f32 %v7371, %v7518
  %v7524 = vadd.f32 %v7372, %v7517
  %v7525 = vadd.f32 %v7373, %v7516
  %v7526 = vadd.f32 %v7374, %v7515
  %s7527 = scalar_lea.vmem %s6, 48
  %v7528 = vld [vmem:[%s7527] sm:$0xf]
  %v7530 = vsel %vm2590, %v7528, 0
  %7532 = vmatprep.subr.bf16.mxu0 %v7066
  %7533 = vmatpush1.bf16.msra.mxu0 %v7065
  %7534 = vmatprep.subr.bf16.mxu0 %v7072
  %7535 = vmatpush1.bf16.msra.mxu0 %v7071
  %7536 = vmatprep.subr.bf16.mxu0 0
  %7537 = vmatpush1.bf16.msra.mxu0 0
  %7538 = vmatprep.subr.bf16.mxu0 0
  %7539 = vmatpush1.bf16.msra.mxu0 0
  %7540 = vmatprep.subr.bf16.mxu0 0
  %7541 = vmatpush1.bf16.msra.mxu0 0
  %7542 = vmatprep.subr.bf16.mxu0 0
  %7543 = vmatpush1.bf16.msra.mxu0 0
  %7544 = vmatprep.subr.bf16.mxu0 0
  %7545 = vmatpush1.bf16.msra.mxu0 0
  %7546 = vmatprep.subr.bf16.mxu0 0
  %7547 = vmatpush1.bf16.msra.mxu0 0
  %7548 = vmatprep.subr.bf16.mxu0 0
  %7549 = vmatpush1.bf16.msra.mxu0 0
  %7550 = vmatprep.subr.bf16.mxu0 0
  %7551 = vmatpush1.bf16.msra.mxu0 0
  %7552 = vmatprep.subr.bf16.mxu0 0
  %7553 = vmatpush1.bf16.msra.mxu0 0
  %7554 = vmatprep.subr.bf16.mxu0 0
  %7555 = vmatpush1.bf16.msra.mxu0 0
  %7556 = vmatprep.subr.bf16.mxu0 0
  %7557 = vmatpush1.bf16.msra.mxu0 0
  %7558 = vmatprep.subr.bf16.mxu0 0
  %7559 = vmatpush1.bf16.msra.mxu0 0
  %7560 = vmatprep.subr.bf16.mxu0 0
  %7561 = vmatpush1.bf16.msra.mxu0 0
  %7562 = vmatprep.subr.bf16.mxu0 0
  %7563 = vmatpush1.bf16.msra.mxu0 0
  %7564 = vmatprep.mubr.bf16.mxu0 0
  %7565 = vmatmul.mubr.bf16.gmra.mrb[0].mxu0 %v7530
  %v7566 = vpop.f32.mrb[0].mxu0
  %v7567 = vadd.f32 0.0, %v7566
  %v7568 = vpop.f32.mrb[0].mxu0
  %v7569 = vadd.f32 0.0, %v7568
  %v7570 = vpop.f32.mrb[0].mxu0
  %v7571 = vpop.f32.mrb[0].mxu0
  %7572 = vdwg.mxu0
  %7573 = vmatprep.subr.bf16.mxu0 %v7068
  %7574 = vmatpush1.bf16.msra.mxu0 %v7067
  %7575 = vmatprep.subr.bf16.mxu0 %v7074
  %7576 = vmatpush1.bf16.msra.mxu0 %v7073
  %7577 = vmatprep.subr.bf16.mxu0 0
  %7578 = vmatpush1.bf16.msra.mxu0 0
  %7579 = vmatprep.subr.bf16.mxu0 0
  %7580 = vmatpush1.bf16.msra.mxu0 0
  %7581 = vmatprep.subr.bf16.mxu0 0
  %7582 = vmatpush1.bf16.msra.mxu0 0
  %7583 = vmatprep.subr.bf16.mxu0 0
  %7584 = vmatpush1.bf16.msra.mxu0 0
  %7585 = vmatprep.subr.bf16.mxu0 0
  %7586 = vmatpush1.bf16.msra.mxu0 0
  %7587 = vmatprep.subr.bf16.mxu0 0
  %7588 = vmatpush1.bf16.msra.mxu0 0
  %7589 = vmatprep.subr.bf16.mxu0 0
  %7590 = vmatpush1.bf16.msra.mxu0 0
  %7591 = vmatprep.subr.bf16.mxu0 0
  %7592 = vmatpush1.bf16.msra.mxu0 0
  %7593 = vmatprep.subr.bf16.mxu0 0
  %7594 = vmatpush1.bf16.msra.mxu0 0
  %7595 = vmatprep.subr.bf16.mxu0 0
  %7596 = vmatpush1.bf16.msra.mxu0 0
  %7597 = vmatprep.subr.bf16.mxu0 0
  %7598 = vmatpush1.bf16.msra.mxu0 0
  %7599 = vmatprep.subr.bf16.mxu0 0
  %7600 = vmatpush1.bf16.msra.mxu0 0
  %7601 = vmatprep.subr.bf16.mxu0 0
  %7602 = vmatpush1.bf16.msra.mxu0 0
  %7603 = vmatprep.subr.bf16.mxu0 0
  %7604 = vmatpush1.bf16.msra.mxu0 0
  %7605 = vmatprep.mubr.bf16.mxu0 0
  %7606 = vmatmul.mubr.bf16.gmra.mrb[0].mxu0 %v7530
  %v7607 = vpop.f32.mrb[0].mxu0
  %v7608 = vadd.f32 0.0, %v7607
  %v7609 = vpop.f32.mrb[0].mxu0
  %v7610 = vadd.f32 0.0, %v7609
  %v7611 = vpop.f32.mrb[0].mxu0
  %v7612 = vpop.f32.mrb[0].mxu0
  %7613 = vdwg.mxu0
  %7614 = vmatprep.subr.bf16.mxu0 %v7070
  %7615 = vmatpush1.bf16.msra.mxu0 %v7069
  %7616 = vmatprep.subr.bf16.mxu0 %v7076
  %7617 = vmatpush1.bf16.msra.mxu0 %v7075
  %7618 = vmatprep.subr.bf16.mxu0 0
  %7619 = vmatpush1.bf16.msra.mxu0 0
  %7620 = vmatprep.subr.bf16.mxu0 0
  %7621 = vmatpush1.bf16.msra.mxu0 0
  %7622 = vmatprep.subr.bf16.mxu0 0
  %7623 = vmatpush1.bf16.msra.mxu0 0
  %7624 = vmatprep.subr.bf16.mxu0 0
  %7625 = vmatpush1.bf16.msra.mxu0 0
  %7626 = vmatprep.subr.bf16.mxu0 0
  %7627 = vmatpush1.bf16.msra.mxu0 0
  %7628 = vmatprep.subr.bf16.mxu0 0
  %7629 = vmatpush1.bf16.msra.mxu0 0
  %7630 = vmatprep.subr.bf16.mxu0 0
  %7631 = vmatpush1.bf16.msra.mxu0 0
  %7632 = vmatprep.subr.bf16.mxu0 0
  %7633 = vmatpush1.bf16.msra.mxu0 0
  %7634 = vmatprep.subr.bf16.mxu0 0
  %7635 = vmatpush1.bf16.msra.mxu0 0
  %7636 = vmatprep.subr.bf16.mxu0 0
  %7637 = vmatpush1.bf16.msra.mxu0 0
  %7638 = vmatprep.subr.bf16.mxu0 0
  %7639 = vmatpush1.bf16.msra.mxu0 0
  %7640 = vmatprep.subr.bf16.mxu0 0
  %7641 = vmatpush1.bf16.msra.mxu0 0
  %7642 = vmatprep.subr.bf16.mxu0 0
  %7643 = vmatpush1.bf16.msra.mxu0 0
  %7644 = vmatprep.subr.bf16.mxu0 0
  %7645 = vmatpush1.bf16.msra.mxu0 0
  %7646 = vmatprep.mubr.bf16.mxu0 0
  %7647 = vmatmul.mubr.bf16.gmra.mrb[0].mxu0 %v7530
  %v7648 = vpop.f32.mrb[0].mxu0
  %v7649 = vadd.f32 0.0, %v7648
  %v7650 = vpop.f32.mrb[0].mxu0
  %v7651 = vadd.f32 0.0, %v7650
  %v7652 = vpop.f32.mrb[0].mxu0
  %v7653 = vpop.f32.mrb[0].mxu0
  %7654 = vdwg.mxu0
  %7655 = vrot.lane.b32.xlu0 %v7567, 1
  %v7656 = vpop.permute.xlu0 %7655
  %7657 = vrot.lane.b32.xlu0 %v7569, 1
  %v7658 = vpop.permute.xlu0 %7657
  %7659 = vrot.lane.b32.xlu0 %v7608, 1
  %v7660 = vpop.permute.xlu0 %7659
  %7661 = vrot.lane.b32.xlu0 %v7610, 1
  %v7662 = vpop.permute.xlu0 %7661
  %7663 = vrot.lane.b32.xlu0 %v7649, 1
  %v7664 = vpop.permute.xlu0 %7663
  %7665 = vrot.lane.b32.xlu0 %v7651, 1
  %v7666 = vpop.permute.xlu0 %7665
  %v7667 = vsel %vm988, %v7664, %v7666
  %v7668 = vsel %vm988, %v7662, %v7664
  %v7669 = vsel %vm988, %v7660, %v7662
  %v7670 = vsel %vm988, %v7658, %v7660
  %v7671 = vsel %vm988, %v7656, %v7658
  %v7672 = vsel %vm988, %v7666, %v7656
  %v7673 = vadd.f32 %v7521, %v7672
  %v7674 = vadd.f32 %v7522, %v7671
  %v7675 = vadd.f32 %v7523, %v7670
  %v7676 = vadd.f32 %v7524, %v7669
  %v7677 = vadd.f32 %v7525, %v7668
  %v7678 = vadd.f32 %v7526, %v7667
  %s7679 = scalar_lea.vmem %s6, 52
  %v7680 = vld [vmem:[%s7679] sm:$0xf]
  %v7682 = vsel %vm2590, %v7680, 0
  %7684 = vmatprep.subr.bf16.mxu0 %v7066
  %7685 = vmatpush1.bf16.msra.mxu0 %v7065
  %7686 = vmatprep.subr.bf16.mxu0 %v7072
  %7687 = vmatpush1.bf16.msra.mxu0 %v7071
  %7688 = vmatprep.subr.bf16.mxu0 0
  %7689 = vmatpush1.bf16.msra.mxu0 0
  %7690 = vmatprep.subr.bf16.mxu0 0
  %7691 = vmatpush1.bf16.msra.mxu0 0
  %7692 = vmatprep.subr.bf16.mxu0 0
  %7693 = vmatpush1.bf16.msra.mxu0 0
  %7694 = vmatprep.subr.bf16.mxu0 0
  %7695 = vmatpush1.bf16.msra.mxu0 0
  %7696 = vmatprep.subr.bf16.mxu0 0
  %7697 = vmatpush1.bf16.msra.mxu0 0
  %7698 = vmatprep.subr.bf16.mxu0 0
  %7699 = vmatpush1.bf16.msra.mxu0 0
  %7700 = vmatprep.subr.bf16.mxu0 0
  %7701 = vmatpush1.bf16.msra.mxu0 0
  %7702 = vmatprep.subr.bf16.mxu0 0
  %7703 = vmatpush1.bf16.msra.mxu0 0
  %7704 = vmatprep.subr.bf16.mxu0 0
  %7705 = vmatpush1.bf16.msra.mxu0 0
  %7706 = vmatprep.subr.bf16.mxu0 0
  %7707 = vmatpush1.bf16.msra.mxu0 0
  %7708 = vmatprep.subr.bf16.mxu0 0
  %7709 = vmatpush1.bf16.msra.mxu0 0
  %7710 = vmatprep.subr.bf16.mxu0 0
  %7711 = vmatpush1.bf16.msra.mxu0 0
  %7712 = vmatprep.subr.bf16.mxu0 0
  %7713 = vmatpush1.bf16.msra.mxu0 0
  %7714 = vmatprep.subr.bf16.mxu0 0
  %7715 = vmatpush1.bf16.msra.mxu0 0
  %7716 = vmatprep.mubr.bf16.mxu0 0
  %7717 = vmatmul.mubr.bf16.gmra.mrb[0].mxu0 %v7682
  %v7718 = vpop.f32.mrb[0].mxu0
  %v7719 = vadd.f32 0.0, %v7718
  %v7720 = vpop.f32.mrb[0].mxu0
  %v7721 = vadd.f32 0.0, %v7720
  %v7722 = vpop.f32.mrb[0].mxu0
  %v7723 = vpop.f32.mrb[0].mxu0
  %7724 = vdwg.mxu0
  %7725 = vmatprep.subr.bf16.mxu0 %v7068
  %7726 = vmatpush1.bf16.msra.mxu0 %v7067
  %7727 = vmatprep.subr.bf16.mxu0 %v7074
  %7728 = vmatpush1.bf16.msra.mxu0 %v7073
  %7729 = vmatprep.subr.bf16.mxu0 0
  %7730 = vmatpush1.bf16.msra.mxu0 0
  %7731 = vmatprep.subr.bf16.mxu0 0
  %7732 = vmatpush1.bf16.msra.mxu0 0
  %7733 = vmatprep.subr.bf16.mxu0 0
  %7734 = vmatpush1.bf16.msra.mxu0 0
  %7735 = vmatprep.subr.bf16.mxu0 0
  %7736 = vmatpush1.bf16.msra.mxu0 0
  %7737 = vmatprep.subr.bf16.mxu0 0
  %7738 = vmatpush1.bf16.msra.mxu0 0
  %7739 = vmatprep.subr.bf16.mxu0 0
  %7740 = vmatpush1.bf16.msra.mxu0 0
  %7741 = vmatprep.subr.bf16.mxu0 0
  %7742 = vmatpush1.bf16.msra.mxu0 0
  %7743 = vmatprep.subr.bf16.mxu0 0
  %7744 = vmatpush1.bf16.msra.mxu0 0
  %7745 = vmatprep.subr.bf16.mxu0 0
  %7746 = vmatpush1.bf16.msra.mxu0 0
  %7747 = vmatprep.subr.bf16.mxu0 0
  %7748 = vmatpush1.bf16.msra.mxu0 0
  %7749 = vmatprep.subr.bf16.mxu0 0
  %7750 = vmatpush1.bf16.msra.mxu0 0
  %7751 = vmatprep.subr.bf16.mxu0 0
  %7752 = vmatpush1.bf16.msra.mxu0 0
  %7753 = vmatprep.subr.bf16.mxu0 0
  %7754 = vmatpush1.bf16.msra.mxu0 0
  %7755 = vmatprep.subr.bf16.mxu0 0
  %7756 = vmatpush1.bf16.msra.mxu0 0
  %7757 = vmatprep.mubr.bf16.mxu0 0
  %7758 = vmatmul.mubr.bf16.gmra.mrb[0].mxu0 %v7682
  %v7759 = vpop.f32.mrb[0].mxu0
  %v7760 = vadd.f32 0.0, %v7759
  %v7761 = vpop.f32.mrb[0].mxu0
  %v7762 = vadd.f32 0.0, %v7761
  %v7763 = vpop.f32.mrb[0].mxu0
  %v7764 = vpop.f32.mrb[0].mxu0
  %7765 = vdwg.mxu0
  %7766 = vmatprep.subr.bf16.mxu0 %v7070
  %7767 = vmatpush1.bf16.msra.mxu0 %v7069
  %7768 = vmatprep.subr.bf16.mxu0 %v7076
  %7769 = vmatpush1.bf16.msra.mxu0 %v7075
  %7770 = vmatprep.subr.bf16.mxu0 0
  %7771 = vmatpush1.bf16.msra.mxu0 0
  %7772 = vmatprep.subr.bf16.mxu0 0
  %7773 = vmatpush1.bf16.msra.mxu0 0
  %7774 = vmatprep.subr.bf16.mxu0 0
  %7775 = vmatpush1.bf16.msra.mxu0 0
  %7776 = vmatprep.subr.bf16.mxu0 0
  %7777 = vmatpush1.bf16.msra.mxu0 0
  %7778 = vmatprep.subr.bf16.mxu0 0
  %7779 = vmatpush1.bf16.msra.mxu0 0
  %7780 = vmatprep.subr.bf16.mxu0 0
  %7781 = vmatpush1.bf16.msra.mxu0 0
  %7782 = vmatprep.subr.bf16.mxu0 0
  %7783 = vmatpush1.bf16.msra.mxu0 0
  %7784 = vmatprep.subr.bf16.mxu0 0
  %7785 = vmatpush1.bf16.msra.mxu0 0
  %7786 = vmatprep.subr.bf16.mxu0 0
  %7787 = vmatpush1.bf16.msra.mxu0 0
  %7788 = vmatprep.subr.bf16.mxu0 0
  %7789 = vmatpush1.bf16.msra.mxu0 0
  %7790 = vmatprep.subr.bf16.mxu0 0
  %7791 = vmatpush1.bf16.msra.mxu0 0
  %7792 = vmatprep.subr.bf16.mxu0 0
  %7793 = vmatpush1.bf16.msra.mxu0 0
  %7794 = vmatprep.subr.bf16.mxu0 0
  %7795 = vmatpush1.bf16.msra.mxu0 0
  %7796 = vmatprep.subr.bf16.mxu0 0
  %7797 = vmatpush1.bf16.msra.mxu0 0
  %7798 = vmatprep.mubr.bf16.mxu0 0
  %7799 = vmatmul.mubr.bf16.gmra.mrb[0].mxu0 %v7682
  %v7800 = vpop.f32.mrb[0].mxu0
  %v7801 = vadd.f32 0.0, %v7800
  %v7802 = vpop.f32.mrb[0].mxu0
  %v7803 = vadd.f32 0.0, %v7802
  %v7804 = vpop.f32.mrb[0].mxu0
  %v7805 = vpop.f32.mrb[0].mxu0
  %7806 = vdwg.mxu0
  %v7807 = vadd.f32 %v7673, %v7719
  %v7808 = vadd.f32 %v7674, %v7721
  %v7809 = vadd.f32 %v7675, %v7760
  %v7810 = vadd.f32 %v7676, %v7762
  %v7811 = vadd.f32 %v7677, %v7801
  %v7812 = vadd.f32 %v7678, %v7803
  %s7813 = scalar_lea.vmem %s6, 56
  %v7814 = vld [vmem:[%s7813] sm:$0xf]
  %v7816 = vsel %vm2590, %v7814, 0
  %7818 = vmatprep.subr.bf16.mxu0 %v7066
  %7819 = vmatpush1.bf16.msra.mxu0 %v7065
  %7820 = vmatprep.subr.bf16.mxu0 %v7072
  %7821 = vmatpush1.bf16.msra.mxu0 %v7071
  %7822 = vmatprep.subr.bf16.mxu0 0
  %7823 = vmatpush1.bf16.msra.mxu0 0
  %7824 = vmatprep.subr.bf16.mxu0 0
  %7825 = vmatpush1.bf16.msra.mxu0 0
  %7826 = vmatprep.subr.bf16.mxu0 0
  %7827 = vmatpush1.bf16.msra.mxu0 0
  %7828 = vmatprep.subr.bf16.mxu0 0
  %7829 = vmatpush1.bf16.msra.mxu0 0
  %7830 = vmatprep.subr.bf16.mxu0 0
  %7831 = vmatpush1.bf16.msra.mxu0 0
  %7832 = vmatprep.subr.bf16.mxu0 0
  %7833 = vmatpush1.bf16.msra.mxu0 0
  %7834 = vmatprep.subr.bf16.mxu0 0
  %7835 = vmatpush1.bf16.msra.mxu0 0
  %7836 = vmatprep.subr.bf16.mxu0 0
  %7837 = vmatpush1.bf16.msra.mxu0 0
  %7838 = vmatprep.subr.bf16.mxu0 0
  %7839 = vmatpush1.bf16.msra.mxu0 0
  %7840 = vmatprep.subr.bf16.mxu0 0
  %7841 = vmatpush1.bf16.msra.mxu0 0
  %7842 = vmatprep.subr.bf16.mxu0 0
  %7843 = vmatpush1.bf16.msra.mxu0 0
  %7844 = vmatprep.subr.bf16.mxu0 0
  %7845 = vmatpush1.bf16.msra.mxu0 0
  %7846 = vmatprep.subr.bf16.mxu0 0
  %7847 = vmatpush1.bf16.msra.mxu0 0
  %7848 = vmatprep.subr.bf16.mxu0 0
  %7849 = vmatpush1.bf16.msra.mxu0 0
  %7850 = vmatprep.mubr.bf16.mxu0 0
  %7851 = vmatmul.mubr.bf16.gmra.mrb[0].mxu0 %v7816
  %v7852 = vpop.f32.mrb[0].mxu0
  %v7853 = vadd.f32 0.0, %v7852
  %v7854 = vpop.f32.mrb[0].mxu0
  %v7855 = vadd.f32 0.0, %v7854
  %v7856 = vpop.f32.mrb[0].mxu0
  %v7857 = vpop.f32.mrb[0].mxu0
  %7858 = vdwg.mxu0
  %7859 = vmatprep.subr.bf16.mxu0 %v7068
  %7860 = vmatpush1.bf16.msra.mxu0 %v7067
  %7861 = vmatprep.subr.bf16.mxu0 %v7074
  %7862 = vmatpush1.bf16.msra.mxu0 %v7073
  %7863 = vmatprep.subr.bf16.mxu0 0
  %7864 = vmatpush1.bf16.msra.mxu0 0
  %7865 = vmatprep.subr.bf16.mxu0 0
  %7866 = vmatpush1.bf16.msra.mxu0 0
  %7867 = vmatprep.subr.bf16.mxu0 0
  %7868 = vmatpush1.bf16.msra.mxu0 0
  %7869 = vmatprep.subr.bf16.mxu0 0
  %7870 = vmatpush1.bf16.msra.mxu0 0
  %7871 = vmatprep.subr.bf16.mxu0 0
  %7872 = vmatpush1.bf16.msra.mxu0 0
  %7873 = vmatprep.subr.bf16.mxu0 0
  %7874 = vmatpush1.bf16.msra.mxu0 0
  %7875 = vmatprep.subr.bf16.mxu0 0
  %7876 = vmatpush1.bf16.msra.mxu0 0
  %7877 = vmatprep.subr.bf16.mxu0 0
  %7878 = vmatpush1.bf16.msra.mxu0 0
  %7879 = vmatprep.subr.bf16.mxu0 0
  %7880 = vmatpush1.bf16.msra.mxu0 0
  %7881 = vmatprep.subr.bf16.mxu0 0
  %7882 = vmatpush1.bf16.msra.mxu0 0
  %7883 = vmatprep.subr.bf16.mxu0 0
  %7884 = vmatpush1.bf16.msra.mxu0 0
  %7885 = vmatprep.subr.bf16.mxu0 0
  %7886 = vmatpush1.bf16.msra.mxu0 0
  %7887 = vmatprep.subr.bf16.mxu0 0
  %7888 = vmatpush1.bf16.msra.mxu0 0
  %7889 = vmatprep.subr.bf16.mxu0 0
  %7890 = vmatpush1.bf16.msra.mxu0 0
  %7891 = vmatprep.mubr.bf16.mxu0 0
  %7892 = vmatmul.mubr.bf16.gmra.mrb[0].mxu0 %v7816
  %v7893 = vpop.f32.mrb[0].mxu0
  %v7894 = vadd.f32 0.0, %v7893
  %v7895 = vpop.f32.mrb[0].mxu0
  %v7896 = vadd.f32 0.0, %v7895
  %v7897 = vpop.f32.mrb[0].mxu0
  %v7898 = vpop.f32.mrb[0].mxu0
  %7899 = vdwg.mxu0
  %7900 = vmatprep.subr.bf16.mxu0 %v7070
  %7901 = vmatpush1.bf16.msra.mxu0 %v7069
  %7902 = vmatprep.subr.bf16.mxu0 %v7076
  %7903 = vmatpush1.bf16.msra.mxu0 %v7075
  %7904 = vmatprep.subr.bf16.mxu0 0
  %7905 = vmatpush1.bf16.msra.mxu0 0
  %7906 = vmatprep.subr.bf16.mxu0 0
  %7907 = vmatpush1.bf16.msra.mxu0 0
  %7908 = vmatprep.subr.bf16.mxu0 0
  %7909 = vmatpush1.bf16.msra.mxu0 0
  %7910 = vmatprep.subr.bf16.mxu0 0
  %7911 = vmatpush1.bf16.msra.mxu0 0
  %7912 = vmatprep.subr.bf16.mxu0 0
  %7913 = vmatpush1.bf16.msra.mxu0 0
  %7914 = vmatprep.subr.bf16.mxu0 0
  %7915 = vmatpush1.bf16.msra.mxu0 0
  %7916 = vmatprep.subr.bf16.mxu0 0
  %7917 = vmatpush1.bf16.msra.mxu0 0
  %7918 = vmatprep.subr.bf16.mxu0 0
  %7919 = vmatpush1.bf16.msra.mxu0 0
  %7920 = vmatprep.subr.bf16.mxu0 0
  %7921 = vmatpush1.bf16.msra.mxu0 0
  %7922 = vmatprep.subr.bf16.mxu0 0
  %7923 = vmatpush1.bf16.msra.mxu0 0
  %7924 = vmatprep.subr.bf16.mxu0 0
  %7925 = vmatpush1.bf16.msra.mxu0 0
  %7926 = vmatprep.subr.bf16.mxu0 0
  %7927 = vmatpush1.bf16.msra.mxu0 0
  %7928 = vmatprep.subr.bf16.mxu0 0
  %7929 = vmatpush1.bf16.msra.mxu0 0
  %7930 = vmatprep.subr.bf16.mxu0 0
  %7931 = vmatpush1.bf16.msra.mxu0 0
  %7932 = vmatprep.mubr.bf16.mxu0 0
  %7933 = vmatmul.mubr.bf16.gmra.mrb[0].mxu0 %v7816
  %v7934 = vpop.f32.mrb[0].mxu0
  %v7935 = vadd.f32 0.0, %v7934
  %v7936 = vpop.f32.mrb[0].mxu0
  %v7937 = vadd.f32 0.0, %v7936
  %v7938 = vpop.f32.mrb[0].mxu0
  %v7939 = vpop.f32.mrb[0].mxu0
  %7940 = vdwg.mxu0
  %7941 = vrot.lane.b32.xlu0 %v7853, 127
  %v7942 = vpop.permute.xlu0 %7941
  %7943 = vrot.lane.b32.xlu0 %v7855, 127
  %v7944 = vpop.permute.xlu0 %7943
  %7945 = vrot.lane.b32.xlu0 %v7894, 127
  %v7946 = vpop.permute.xlu0 %7945
  %7947 = vrot.lane.b32.xlu0 %v7896, 127
  %v7948 = vpop.permute.xlu0 %7947
  %7949 = vrot.lane.b32.xlu0 %v7935, 127
  %v7950 = vpop.permute.xlu0 %7949
  %7951 = vrot.lane.b32.xlu0 %v7937, 127
  %v7952 = vpop.permute.xlu0 %7951
  %v7953 = vsel %vm1457, %v7950, %v7952
  %v7954 = vsel %vm1457, %v7948, %v7950
  %v7955 = vsel %vm1457, %v7946, %v7948
  %v7956 = vsel %vm1457, %v7944, %v7946
  %v7957 = vsel %vm1457, %v7942, %v7944
  %v7958 = vsel %vm1457, %v7952, %v7942
  %v7959 = vadd.f32 %v7807, %v7957
  %v7960 = vadd.f32 %v7808, %v7956
  %v7961 = vadd.f32 %v7809, %v7955
  %v7962 = vadd.f32 %v7810, %v7954
  %v7963 = vadd.f32 %v7811, %v7953
  %v7964 = vadd.f32 %v7812, %v7958
  %s7965 = scalar_lea.vmem %s6, 60
  %v7966 = vld [vmem:[%s7965] sm:$0xf]
  %v7968 = vsel %vm2590, %v7966, 0
  %7970 = vmatprep.subr.bf16.mxu0 %v7066
  %7971 = vmatpush1.bf16.msra.mxu0 %v7065
  %7972 = vmatprep.subr.bf16.mxu0 %v7072
  %7973 = vmatpush1.bf16.msra.mxu0 %v7071
  %7974 = vmatprep.subr.bf16.mxu0 0
  %7975 = vmatpush1.bf16.msra.mxu0 0
  %7976 = vmatprep.subr.bf16.mxu0 0
  %7977 = vmatpush1.bf16.msra.mxu0 0
  %7978 = vmatprep.subr.bf16.mxu0 0
  %7979 = vmatpush1.bf16.msra.mxu0 0
  %7980 = vmatprep.subr.bf16.mxu0 0
  %7981 = vmatpush1.bf16.msra.mxu0 0
  %7982 = vmatprep.subr.bf16.mxu0 0
  %7983 = vmatpush1.bf16.msra.mxu0 0
  %7984 = vmatprep.subr.bf16.mxu0 0
  %7985 = vmatpush1.bf16.msra.mxu0 0
  %7986 = vmatprep.subr.bf16.mxu0 0
  %7987 = vmatpush1.bf16.msra.mxu0 0
  %7988 = vmatprep.subr.bf16.mxu0 0
  %7989 = vmatpush1.bf16.msra.mxu0 0
  %7990 = vmatprep.subr.bf16.mxu0 0
  %7991 = vmatpush1.bf16.msra.mxu0 0
  %7992 = vmatprep.subr.bf16.mxu0 0
  %7993 = vmatpush1.bf16.msra.mxu0 0
  %7994 = vmatprep.subr.bf16.mxu0 0
  %7995 = vmatpush1.bf16.msra.mxu0 0
  %7996 = vmatprep.subr.bf16.mxu0 0
  %7997 = vmatpush1.bf16.msra.mxu0 0
  %7998 = vmatprep.subr.bf16.mxu0 0
  %7999 = vmatpush1.bf16.msra.mxu0 0
  %8000 = vmatprep.subr.bf16.mxu0 0
  %8001 = vmatpush1.bf16.msra.mxu0 0
  %8002 = vmatprep.mubr.bf16.mxu0 0
  %8003 = vmatmul.mubr.bf16.gmra.mrb[0].mxu0 %v7968
  %v8004 = vpop.f32.mrb[0].mxu0
  %v8005 = vadd.f32 0.0, %v8004
  %v8006 = vpop.f32.mrb[0].mxu0
  %v8007 = vadd.f32 0.0, %v8006
  %v8008 = vpop.f32.mrb[0].mxu0
  %v8009 = vpop.f32.mrb[0].mxu0
  %8010 = vdwg.mxu0
  %8011 = vmatprep.subr.bf16.mxu0 %v7068
  %8012 = vmatpush1.bf16.msra.mxu0 %v7067
  %8013 = vmatprep.subr.bf16.mxu0 %v7074
  %8014 = vmatpush1.bf16.msra.mxu0 %v7073
  %8015 = vmatprep.subr.bf16.mxu0 0
  %8016 = vmatpush1.bf16.msra.mxu0 0
  %8017 = vmatprep.subr.bf16.mxu0 0
  %8018 = vmatpush1.bf16.msra.mxu0 0
  %8019 = vmatprep.subr.bf16.mxu0 0
  %8020 = vmatpush1.bf16.msra.mxu0 0
  %8021 = vmatprep.subr.bf16.mxu0 0
  %8022 = vmatpush1.bf16.msra.mxu0 0
  %8023 = vmatprep.subr.bf16.mxu0 0
  %8024 = vmatpush1.bf16.msra.mxu0 0
  %8025 = vmatprep.subr.bf16.mxu0 0
  %8026 = vmatpush1.bf16.msra.mxu0 0
  %8027 = vmatprep.subr.bf16.mxu0 0
  %8028 = vmatpush1.bf16.msra.mxu0 0
  %8029 = vmatprep.subr.bf16.mxu0 0
  %8030 = vmatpush1.bf16.msra.mxu0 0
  %8031 = vmatprep.subr.bf16.mxu0 0
  %8032 = vmatpush1.bf16.msra.mxu0 0
  %8033 = vmatprep.subr.bf16.mxu0 0
  %8034 = vmatpush1.bf16.msra.mxu0 0
  %8035 = vmatprep.subr.bf16.mxu0 0
  %8036 = vmatpush1.bf16.msra.mxu0 0
  %8037 = vmatprep.subr.bf16.mxu0 0
  %8038 = vmatpush1.bf16.msra.mxu0 0
  %8039 = vmatprep.subr.bf16.mxu0 0
  %8040 = vmatpush1.bf16.msra.mxu0 0
  %8041 = vmatprep.subr.bf16.mxu0 0
  %8042 = vmatpush1.bf16.msra.mxu0 0
  %8043 = vmatprep.mubr.bf16.mxu0 0
  %8044 = vmatmul.mubr.bf16.gmra.mrb[0].mxu0 %v7968
  %v8045 = vpop.f32.mrb[0].mxu0
  %v8046 = vadd.f32 0.0, %v8045
  %v8047 = vpop.f32.mrb[0].mxu0
  %v8048 = vadd.f32 0.0, %v8047
  %v8049 = vpop.f32.mrb[0].mxu0
  %v8050 = vpop.f32.mrb[0].mxu0
  %8051 = vdwg.mxu0
  %8052 = vmatprep.subr.bf16.mxu0 %v7070
  %8053 = vmatpush1.bf16.msra.mxu0 %v7069
  %8054 = vmatprep.subr.bf16.mxu0 %v7076
  %8055 = vmatpush1.bf16.msra.mxu0 %v7075
  %8056 = vmatprep.subr.bf16.mxu0 0
  %8057 = vmatpush1.bf16.msra.mxu0 0
  %8058 = vmatprep.subr.bf16.mxu0 0
  %8059 = vmatpush1.bf16.msra.mxu0 0
  %8060 = vmatprep.subr.bf16.mxu0 0
  %8061 = vmatpush1.bf16.msra.mxu0 0
  %8062 = vmatprep.subr.bf16.mxu0 0
  %8063 = vmatpush1.bf16.msra.mxu0 0
  %8064 = vmatprep.subr.bf16.mxu0 0
  %8065 = vmatpush1.bf16.msra.mxu0 0
  %8066 = vmatprep.subr.bf16.mxu0 0
  %8067 = vmatpush1.bf16.msra.mxu0 0
  %8068 = vmatprep.subr.bf16.mxu0 0
  %8069 = vmatpush1.bf16.msra.mxu0 0
  %8070 = vmatprep.subr.bf16.mxu0 0
  %8071 = vmatpush1.bf16.msra.mxu0 0
  %8072 = vmatprep.subr.bf16.mxu0 0
  %8073 = vmatpush1.bf16.msra.mxu0 0
  %8074 = vmatprep.subr.bf16.mxu0 0
  %8075 = vmatpush1.bf16.msra.mxu0 0
  %8076 = vmatprep.subr.bf16.mxu0 0
  %8077 = vmatpush1.bf16.msra.mxu0 0
  %8078 = vmatprep.subr.bf16.mxu0 0
  %8079 = vmatpush1.bf16.msra.mxu0 0
  %8080 = vmatprep.subr.bf16.mxu0 0
  %8081 = vmatpush1.bf16.msra.mxu0 0
  %8082 = vmatprep.subr.bf16.mxu0 0
  %8083 = vmatpush1.bf16.msra.mxu0 0
  %8084 = vmatprep.mubr.bf16.mxu0 0
  %8085 = vmatmul.mubr.bf16.gmra.mrb[0].mxu0 %v7968
  %v8086 = vpop.f32.mrb[0].mxu0
  %v8087 = vadd.f32 0.0, %v8086
  %v8088 = vpop.f32.mrb[0].mxu0
  %v8089 = vadd.f32 0.0, %v8088
  %v8090 = vpop.f32.mrb[0].mxu0
  %v8091 = vpop.f32.mrb[0].mxu0
  %8092 = vdwg.mxu0
  %8093 = vrot.lane.b32.xlu0 %v8005, 111
  %v8094 = vpop.permute.xlu0 %8093
  %8095 = vrot.lane.b32.xlu0 %v8007, 111
  %v8096 = vpop.permute.xlu0 %8095
  %8097 = vrot.lane.b32.xlu0 %v8046, 111
  %v8098 = vpop.permute.xlu0 %8097
  %8099 = vrot.lane.b32.xlu0 %v8048, 111
  %v8100 = vpop.permute.xlu0 %8099
  %8101 = vrot.lane.b32.xlu0 %v8087, 111
  %v8102 = vpop.permute.xlu0 %8101
  %8103 = vrot.lane.b32.xlu0 %v8089, 111
  %v8104 = vpop.permute.xlu0 %8103
  %v8105 = vsel %vm1704, %v8102, %v8104
  %v8106 = vsel %vm1704, %v8100, %v8102
  %v8107 = vsel %vm1704, %v8098, %v8100
  %v8108 = vsel %vm1704, %v8096, %v8098
  %v8109 = vsel %vm1704, %v8094, %v8096
  %v8110 = vsel %vm1704, %v8104, %v8094
  %v8111 = vadd.f32 %v7959, %v8109
  %v8112 = vadd.f32 %v7960, %v8108
  %v8113 = vadd.f32 %v7961, %v8107
  %v8114 = vadd.f32 %v7962, %v8106
  %v8115 = vadd.f32 %v7963, %v8105
  %v8116 = vadd.f32 %v7964, %v8110
  %s8117 = scalar_lea.vmem %s6, 64
  %v8118 = vld [vmem:[%s8117] sm:$0xf]
  %v8120 = vsel %vm2590, %v8118, 0
  %8122 = vmatprep.subr.bf16.mxu0 %v7066
  %8123 = vmatpush1.bf16.msra.mxu0 %v7065
  %8124 = vmatprep.subr.bf16.mxu0 %v7072
  %8125 = vmatpush1.bf16.msra.mxu0 %v7071
  %8126 = vmatprep.subr.bf16.mxu0 0
  %8127 = vmatpush1.bf16.msra.mxu0 0
  %8128 = vmatprep.subr.bf16.mxu0 0
  %8129 = vmatpush1.bf16.msra.mxu0 0
  %8130 = vmatprep.subr.bf16.mxu0 0
  %8131 = vmatpush1.bf16.msra.mxu0 0
  %8132 = vmatprep.subr.bf16.mxu0 0
  %8133 = vmatpush1.bf16.msra.mxu0 0
  %8134 = vmatprep.subr.bf16.mxu0 0
  %8135 = vmatpush1.bf16.msra.mxu0 0
  %8136 = vmatprep.subr.bf16.mxu0 0
  %8137 = vmatpush1.bf16.msra.mxu0 0
  %8138 = vmatprep.subr.bf16.mxu0 0
  %8139 = vmatpush1.bf16.msra.mxu0 0
  %8140 = vmatprep.subr.bf16.mxu0 0
  %8141 = vmatpush1.bf16.msra.mxu0 0
  %8142 = vmatprep.subr.bf16.mxu0 0
  %8143 = vmatpush1.bf16.msra.mxu0 0
  %8144 = vmatprep.subr.bf16.mxu0 0
  %8145 = vmatpush1.bf16.msra.mxu0 0
  %8146 = vmatprep.subr.bf16.mxu0 0
  %8147 = vmatpush1.bf16.msra.mxu0 0
  %8148 = vmatprep.subr.bf16.mxu0 0
  %8149 = vmatpush1.bf16.msra.mxu0 0
  %8150 = vmatprep.subr.bf16.mxu0 0
  %8151 = vmatpush1.bf16.msra.mxu0 0
  %8152 = vmatprep.subr.bf16.mxu0 0
  %8153 = vmatpush1.bf16.msra.mxu0 0
  %8154 = vmatprep.mubr.bf16.mxu0 0
  %8155 = vmatmul.mubr.bf16.gmra.mrb[0].mxu0 %v8120
  %v8156 = vpop.f32.mrb[0].mxu0
  %v8157 = vadd.f32 0.0, %v8156
  %v8158 = vpop.f32.mrb[0].mxu0
  %v8159 = vadd.f32 0.0, %v8158
  %v8160 = vpop.f32.mrb[0].mxu0
  %v8161 = vpop.f32.mrb[0].mxu0
  %8162 = vdwg.mxu0
  %8163 = vmatprep.subr.bf16.mxu0 %v7068
  %8164 = vmatpush1.bf16.msra.mxu0 %v7067
  %8165 = vmatprep.subr.bf16.mxu0 %v7074
  %8166 = vmatpush1.bf16.msra.mxu0 %v7073
  %8167 = vmatprep.subr.bf16.mxu0 0
  %8168 = vmatpush1.bf16.msra.mxu0 0
  %8169 = vmatprep.subr.bf16.mxu0 0
  %8170 = vmatpush1.bf16.msra.mxu0 0
  %8171 = vmatprep.subr.bf16.mxu0 0
  %8172 = vmatpush1.bf16.msra.mxu0 0
  %8173 = vmatprep.subr.bf16.mxu0 0
  %8174 = vmatpush1.bf16.msra.mxu0 0
  %8175 = vmatprep.subr.bf16.mxu0 0
  %8176 = vmatpush1.bf16.msra.mxu0 0
  %8177 = vmatprep.subr.bf16.mxu0 0
  %8178 = vmatpush1.bf16.msra.mxu0 0
  %8179 = vmatprep.subr.bf16.mxu0 0
  %8180 = vmatpush1.bf16.msra.mxu0 0
  %8181 = vmatprep.subr.bf16.mxu0 0
  %8182 = vmatpush1.bf16.msra.mxu0 0
  %8183 = vmatprep.subr.bf16.mxu0 0
  %8184 = vmatpush1.bf16.msra.mxu0 0
  %8185 = vmatprep.subr.bf16.mxu0 0
  %8186 = vmatpush1.bf16.msra.mxu0 0
  %8187 = vmatprep.subr.bf16.mxu0 0
  %8188 = vmatpush1.bf16.msra.mxu0 0
  %8189 = vmatprep.subr.bf16.mxu0 0
  %8190 = vmatpush1.bf16.msra.mxu0 0
  %8191 = vmatprep.subr.bf16.mxu0 0
  %8192 = vmatpush1.bf16.msra.mxu0 0
  %8193 = vmatprep.subr.bf16.mxu0 0
  %8194 = vmatpush1.bf16.msra.mxu0 0
  %8195 = vmatprep.mubr.bf16.mxu0 0
  %8196 = vmatmul.mubr.bf16.gmra.mrb[0].mxu0 %v8120
  %v8197 = vpop.f32.mrb[0].mxu0
  %v8198 = vadd.f32 0.0, %v8197
  %v8199 = vpop.f32.mrb[0].mxu0
  %v8200 = vadd.f32 0.0, %v8199
  %v8201 = vpop.f32.mrb[0].mxu0
  %v8202 = vpop.f32.mrb[0].mxu0
  %8203 = vdwg.mxu0
  %8204 = vmatprep.subr.bf16.mxu0 %v7070
  %8205 = vmatpush1.bf16.msra.mxu0 %v7069
  %8206 = vmatprep.subr.bf16.mxu0 %v7076
  %8207 = vmatpush1.bf16.msra.mxu0 %v7075
  %8208 = vmatprep.subr.bf16.mxu0 0
  %8209 = vmatpush1.bf16.msra.mxu0 0
  %8210 = vmatprep.subr.bf16.mxu0 0
  %8211 = vmatpush1.bf16.msra.mxu0 0
  %8212 = vmatprep.subr.bf16.mxu0 0
  %8213 = vmatpush1.bf16.msra.mxu0 0
  %8214 = vmatprep.subr.bf16.mxu0 0
  %8215 = vmatpush1.bf16.msra.mxu0 0
  %8216 = vmatprep.subr.bf16.mxu0 0
  %8217 = vmatpush1.bf16.msra.mxu0 0
  %8218 = vmatprep.subr.bf16.mxu0 0
  %8219 = vmatpush1.bf16.msra.mxu0 0
  %8220 = vmatprep.subr.bf16.mxu0 0
  %8221 = vmatpush1.bf16.msra.mxu0 0
  %8222 = vmatprep.subr.bf16.mxu0 0
  %8223 = vmatpush1.bf16.msra.mxu0 0
  %8224 = vmatprep.subr.bf16.mxu0 0
  %8225 = vmatpush1.bf16.msra.mxu0 0
  %8226 = vmatprep.subr.bf16.mxu0 0
  %8227 = vmatpush1.bf16.msra.mxu0 0
  %8228 = vmatprep.subr.bf16.mxu0 0
  %8229 = vmatpush1.bf16.msra.mxu0 0
  %8230 = vmatprep.subr.bf16.mxu0 0
  %8231 = vmatpush1.bf16.msra.mxu0 0
  %8232 = vmatprep.subr.bf16.mxu0 0
  %8233 = vmatpush1.bf16.msra.mxu0 0
  %8234 = vmatprep.subr.bf16.mxu0 0
  %8235 = vmatpush1.bf16.msra.mxu0 0
  %8236 = vmatprep.mubr.bf16.mxu0 0
  %8237 = vmatmul.mubr.bf16.gmra.mrb[0].mxu0 %v8120
  %v8238 = vpop.f32.mrb[0].mxu0
  %v8239 = vadd.f32 0.0, %v8238
  %v8240 = vpop.f32.mrb[0].mxu0
  %v8241 = vadd.f32 0.0, %v8240
  %v8242 = vpop.f32.mrb[0].mxu0
  %v8243 = vpop.f32.mrb[0].mxu0
  %8244 = vdwg.mxu0
  %8245 = vrot.lane.b32.xlu0 %v8157, 110
  %v8246 = vpop.permute.xlu0 %8245
  %8247 = vrot.lane.b32.xlu0 %v8159, 110
  %v8248 = vpop.permute.xlu0 %8247
  %8249 = vrot.lane.b32.xlu0 %v8198, 110
  %v8250 = vpop.permute.xlu0 %8249
  %8251 = vrot.lane.b32.xlu0 %v8200, 110
  %v8252 = vpop.permute.xlu0 %8251
  %8253 = vrot.lane.b32.xlu0 %v8239, 110
  %v8254 = vpop.permute.xlu0 %8253
  %8255 = vrot.lane.b32.xlu0 %v8241, 110
  %v8256 = vpop.permute.xlu0 %8255
  %v8257 = vsel %vm1951, %v8254, %v8256
  %v8258 = vsel %vm1951, %v8252, %v8254
  %v8259 = vsel %vm1951, %v8250, %v8252
  %v8260 = vsel %vm1951, %v8248, %v8250
  %v8261 = vsel %vm1951, %v8246, %v8248
  %v8262 = vsel %vm1951, %v8256, %v8246
  %v8263 = vadd.f32 %v8111, %v8261
  %v8264 = vadd.f32 %v8112, %v8260
  %v8265 = vadd.f32 %v8113, %v8259
  %v8266 = vadd.f32 %v8114, %v8258
  %v8267 = vadd.f32 %v8115, %v8257
  %v8268 = vadd.f32 %v8116, %v8262
  %s8269 = scalar_lea.vmem %s6, 68
  %v8270 = vld [vmem:[%s8269] sm:$0xf]
  %v8272 = vsel %vm2590, %v8270, 0
  %8274 = vmatprep.subr.bf16.mxu0 %v7066
  %8275 = vmatpush1.bf16.msra.mxu0 %v7065
  %8276 = vmatprep.subr.bf16.mxu0 %v7072
  %8277 = vmatpush1.bf16.msra.mxu0 %v7071
  %8278 = vmatprep.subr.bf16.mxu0 0
  %8279 = vmatpush1.bf16.msra.mxu0 0
  %8280 = vmatprep.subr.bf16.mxu0 0
  %8281 = vmatpush1.bf16.msra.mxu0 0
  %8282 = vmatprep.subr.bf16.mxu0 0
  %8283 = vmatpush1.bf16.msra.mxu0 0
  %8284 = vmatprep.subr.bf16.mxu0 0
  %8285 = vmatpush1.bf16.msra.mxu0 0
  %8286 = vmatprep.subr.bf16.mxu0 0
  %8287 = vmatpush1.bf16.msra.mxu0 0
  %8288 = vmatprep.subr.bf16.mxu0 0
  %8289 = vmatpush1.bf16.msra.mxu0 0
  %8290 = vmatprep.subr.bf16.mxu0 0
  %8291 = vmatpush1.bf16.msra.mxu0 0
  %8292 = vmatprep.subr.bf16.mxu0 0
  %8293 = vmatpush1.bf16.msra.mxu0 0
  %8294 = vmatprep.subr.bf16.mxu0 0
  %8295 = vmatpush1.bf16.msra.mxu0 0
  %8296 = vmatprep.subr.bf16.mxu0 0
  %8297 = vmatpush1.bf16.msra.mxu0 0
  %8298 = vmatprep.subr.bf16.mxu0 0
  %8299 = vmatpush1.bf16.msra.mxu0 0
  %8300 = vmatprep.subr.bf16.mxu0 0
  %8301 = vmatpush1.bf16.msra.mxu0 0
  %8302 = vmatprep.subr.bf16.mxu0 0
  %8303 = vmatpush1.bf16.msra.mxu0 0
  %8304 = vmatprep.subr.bf16.mxu0 0
  %8305 = vmatpush1.bf16.msra.mxu0 0
  %8306 = vmatprep.mubr.bf16.mxu0 0
  %8307 = vmatmul.mubr.bf16.gmra.mrb[0].mxu0 %v8272
  %v8308 = vpop.f32.mrb[0].mxu0
  %v8309 = vadd.f32 0.0, %v8308
  %v8310 = vpop.f32.mrb[0].mxu0
  %v8311 = vadd.f32 0.0, %v8310
  %v8312 = vpop.f32.mrb[0].mxu0
  %v8313 = vpop.f32.mrb[0].mxu0
  %8314 = vdwg.mxu0
  %8315 = vmatprep.subr.bf16.mxu0 %v7068
  %8316 = vmatpush1.bf16.msra.mxu0 %v7067
  %8317 = vmatprep.subr.bf16.mxu0 %v7074
  %8318 = vmatpush1.bf16.msra.mxu0 %v7073
  %8319 = vmatprep.subr.bf16.mxu0 0
  %8320 = vmatpush1.bf16.msra.mxu0 0
  %8321 = vmatprep.subr.bf16.mxu0 0
  %8322 = vmatpush1.bf16.msra.mxu0 0
  %8323 = vmatprep.subr.bf16.mxu0 0
  %8324 = vmatpush1.bf16.msra.mxu0 0
  %8325 = vmatprep.subr.bf16.mxu0 0
  %8326 = vmatpush1.bf16.msra.mxu0 0
  %8327 = vmatprep.subr.bf16.mxu0 0
  %8328 = vmatpush1.bf16.msra.mxu0 0
  %8329 = vmatprep.subr.bf16.mxu0 0
  %8330 = vmatpush1.bf16.msra.mxu0 0
  %8331 = vmatprep.subr.bf16.mxu0 0
  %8332 = vmatpush1.bf16.msra.mxu0 0
  %8333 = vmatprep.subr.bf16.mxu0 0
  %8334 = vmatpush1.bf16.msra.mxu0 0
  %8335 = vmatprep.subr.bf16.mxu0 0
  %8336 = vmatpush1.bf16.msra.mxu0 0
  %8337 = vmatprep.subr.bf16.mxu0 0
  %8338 = vmatpush1.bf16.msra.mxu0 0
  %8339 = vmatprep.subr.bf16.mxu0 0
  %8340 = vmatpush1.bf16.msra.mxu0 0
  %8341 = vmatprep.subr.bf16.mxu0 0
  %8342 = vmatpush1.bf16.msra.mxu0 0
  %8343 = vmatprep.subr.bf16.mxu0 0
  %8344 = vmatpush1.bf16.msra.mxu0 0
  %8345 = vmatprep.subr.bf16.mxu0 0
  %8346 = vmatpush1.bf16.msra.mxu0 0
  %8347 = vmatprep.mubr.bf16.mxu0 0
  %8348 = vmatmul.mubr.bf16.gmra.mrb[0].mxu0 %v8272
  %v8349 = vpop.f32.mrb[0].mxu0
  %v8350 = vadd.f32 0.0, %v8349
  %v8351 = vpop.f32.mrb[0].mxu0
  %v8352 = vadd.f32 0.0, %v8351
  %v8353 = vpop.f32.mrb[0].mxu0
  %v8354 = vpop.f32.mrb[0].mxu0
  %8355 = vdwg.mxu0
  %8356 = vmatprep.subr.bf16.mxu0 %v7070
  %8357 = vmatpush1.bf16.msra.mxu0 %v7069
  %8358 = vmatprep.subr.bf16.mxu0 %v7076
  %8359 = vmatpush1.bf16.msra.mxu0 %v7075
  %8360 = vmatprep.subr.bf16.mxu0 0
  %8361 = vmatpush1.bf16.msra.mxu0 0
  %8362 = vmatprep.subr.bf16.mxu0 0
  %8363 = vmatpush1.bf16.msra.mxu0 0
  %8364 = vmatprep.subr.bf16.mxu0 0
  %8365 = vmatpush1.bf16.msra.mxu0 0
  %8366 = vmatprep.subr.bf16.mxu0 0
  %8367 = vmatpush1.bf16.msra.mxu0 0
  %8368 = vmatprep.subr.bf16.mxu0 0
  %8369 = vmatpush1.bf16.msra.mxu0 0
  %8370 = vmatprep.subr.bf16.mxu0 0
  %8371 = vmatpush1.bf16.msra.mxu0 0
  %8372 = vmatprep.subr.bf16.mxu0 0
  %8373 = vmatpush1.bf16.msra.mxu0 0
  %8374 = vmatprep.subr.bf16.mxu0 0
  %8375 = vmatpush1.bf16.msra.mxu0 0
  %8376 = vmatprep.subr.bf16.mxu0 0
  %8377 = vmatpush1.bf16.msra.mxu0 0
  %8378 = vmatprep.subr.bf16.mxu0 0
  %8379 = vmatpush1.bf16.msra.mxu0 0
  %8380 = vmatprep.subr.bf16.mxu0 0
  %8381 = vmatpush1.bf16.msra.mxu0 0
  %8382 = vmatprep.subr.bf16.mxu0 0
  %8383 = vmatpush1.bf16.msra.mxu0 0
  %8384 = vmatprep.subr.bf16.mxu0 0
  %8385 = vmatpush1.bf16.msra.mxu0 0
  %8386 = vmatprep.subr.bf16.mxu0 0
  %8387 = vmatpush1.bf16.msra.mxu0 0
  %8388 = vmatprep.mubr.bf16.mxu0 0
  %8389 = vmatmul.mubr.bf16.gmra.mrb[0].mxu0 %v8272
  %v8390 = vpop.f32.mrb[0].mxu0
  %v8391 = vadd.f32 0.0, %v8390
  %v8392 = vpop.f32.mrb[0].mxu0
  %v8393 = vadd.f32 0.0, %v8392
  %v8394 = vpop.f32.mrb[0].mxu0
  %v8395 = vpop.f32.mrb[0].mxu0
  %8396 = vdwg.mxu0
  %8397 = vrot.lane.b32.xlu0 %v8309, 109
  %v8398 = vpop.permute.xlu0 %8397
  %8399 = vrot.lane.b32.xlu0 %v8311, 109
  %v8400 = vpop.permute.xlu0 %8399
  %8401 = vrot.lane.b32.xlu0 %v8350, 109
  %v8402 = vpop.permute.xlu0 %8401
  %8403 = vrot.lane.b32.xlu0 %v8352, 109
  %v8404 = vpop.permute.xlu0 %8403
  %8405 = vrot.lane.b32.xlu0 %v8391, 109
  %v8406 = vpop.permute.xlu0 %8405
  %8407 = vrot.lane.b32.xlu0 %v8393, 109
  %v8408 = vpop.permute.xlu0 %8407
  %v8409 = vsel %vm2198, %v8406, %v8408
  %v8410 = vsel %vm2198, %v8404, %v8406
  %v8411 = vsel %vm2198, %v8402, %v8404
  %v8412 = vsel %vm2198, %v8400, %v8402
  %v8413 = vsel %vm2198, %v8398, %v8400
  %v8414 = vsel %vm2198, %v8408, %v8398
  %v8415 = vadd.f32 %v8263, %v8413
  %v8416 = vadd.f32 %v8264, %v8412
  %v8417 = vadd.f32 %v8265, %v8411
  %v8418 = vadd.f32 %v8266, %v8410
  %v8419 = vadd.f32 %v8267, %v8409
  %v8420 = vadd.f32 %v8268, %v8414
  %s8421 = scalar_lea.vmem %s7, 8
  %v8422 = vld [vmem:[%s8421] sm:$0xff]
  %8424 = vset.pattern.permute.xlu0 0
  %8425 = vperm.xlu0 %8424, %v8422
  %v8426 = vpop.permute.xlu0 %8425
  %v8428 = vadd.f32 %v8415, %v8426
  %v8429 = vadd.f32 %v8416, %v8426
  %v8430 = vadd.f32 %v8417, %v8426
  %v8431 = vadd.f32 %v8418, %v8426
  %v8432 = vadd.f32 %v8419, %v8426
  %v8433 = vadd.f32 %v8420, %v8426
  %vm8434 = vcmp.ge.f32.partialorder %v8428, 0.0
  %vm8435 = vcmp.ge.f32.partialorder %v8429, 0.0
  %vm8436 = vcmp.ge.f32.partialorder %v8430, 0.0
  %vm8437 = vcmp.ge.f32.partialorder %v8431, 0.0
  %vm8438 = vcmp.ge.f32.partialorder %v8432, 0.0
  %vm8439 = vcmp.ge.f32.partialorder %v8433, 0.0
  %v8440 = vmul.f32 %v8428, 0.25
  %v8441 = vmul.f32 %v8429, 0.25
  %v8442 = vmul.f32 %v8430, 0.25
  %v8443 = vmul.f32 %v8431, 0.25
  %v8444 = vmul.f32 %v8432, 0.25
  %v8445 = vmul.f32 %v8433, 0.25
  %v8446 = vsel %vm8434, %v8428, %v8440
  %v8447 = vsel %vm8435, %v8429, %v8441
  %v8448 = vsel %vm8436, %v8430, %v8442
  %v8449 = vsel %vm8437, %v8431, %v8443
  %v8450 = vsel %vm8438, %v8432, %v8444
  %v8451 = vsel %vm8439, %v8433, %v8445
  %v8452 = vld [vmem:[%s12] sm:$0xf]
  %v8453 = vpack.c.bf16 %v8446, %v8446
  %v8454 = vpack.c.bf16 %v8447, %v8447
  %v8455 = vpack.c.bf16 %v8448, %v8448
  %v8456 = vpack.c.bf16 %v8449, %v8449
  %v8457 = vpack.c.bf16 %v8450, %v8450
  %v8458 = vpack.c.bf16 %v8451, %v8451
  %v8460 = vunpack.c.l.b16 %v8452
  %v8461 = vpack.c.b16 %v8460, %v8460
  %8462 = vrot.lane.b32.xlu0 %v8461, 120
  %v8463 = vpop.permute.xlu0 %8462
  %v8465 = vsel %vm351, %v8463, 0
  %v8468 = vsel %vm358, %v8453, 0
  %v8471 = vsel %vm358, %v8454, 0
  %v8474 = vsel %vm358, %v8455, 0
  %v8477 = vsel %vm358, %v8456, 0
  %v8480 = vsel %vm358, %v8457, 0
  %v8483 = vsel %vm358, %v8458, 0
  %8485 = vmatprep.subr.bf16.mxu0 %v8471
  %8486 = vmatpush1.bf16.msra.mxu0 %v8468
  %8487 = vmatprep.subr.bf16.mxu0 0
  %8488 = vmatpush1.bf16.msra.mxu0 0
  %8489 = vmatprep.subr.bf16.mxu0 0
  %8490 = vmatpush1.bf16.msra.mxu0 0
  %8491 = vmatprep.subr.bf16.mxu0 0
  %8492 = vmatpush1.bf16.msra.mxu0 0
  %8493 = vmatprep.subr.bf16.mxu0 0
  %8494 = vmatpush1.bf16.msra.mxu0 0
  %8495 = vmatprep.subr.bf16.mxu0 0
  %8496 = vmatpush1.bf16.msra.mxu0 0
  %8497 = vmatprep.subr.bf16.mxu0 0
  %8498 = vmatpush1.bf16.msra.mxu0 0
  %8499 = vmatprep.subr.bf16.mxu0 0
  %8500 = vmatpush1.bf16.msra.mxu0 0
  %8501 = vmatprep.subr.bf16.mxu0 0
  %8502 = vmatpush1.bf16.msra.mxu0 0
  %8503 = vmatprep.subr.bf16.mxu0 0
  %8504 = vmatpush1.bf16.msra.mxu0 0
  %8505 = vmatprep.subr.bf16.mxu0 0
  %8506 = vmatpush1.bf16.msra.mxu0 0
  %8507 = vmatprep.subr.bf16.mxu0 0
  %8508 = vmatpush1.bf16.msra.mxu0 0
  %8509 = vmatprep.subr.bf16.mxu0 0
  %8510 = vmatpush1.bf16.msra.mxu0 0
  %8511 = vmatprep.subr.bf16.mxu0 0
  %8512 = vmatpush1.bf16.msra.mxu0 0
  %8513 = vmatprep.subr.bf16.mxu0 0
  %8514 = vmatpush1.bf16.msra.mxu0 0
  %8515 = vmatprep.subr.bf16.mxu0 0
  %8516 = vmatpush1.bf16.msra.mxu0 0
  %8517 = vmatprep.mubr.bf16.mxu0 0
  %8518 = vmatmul.mubr.bf16.gmra.mrb[0].mxu0 %v8465
  %v8519 = vpop.f32.mrb[0].mxu0
  %v8520 = vadd.f32 0.0, %v8519
  %v8521 = vpop.f32.mrb[0].mxu0
  %v8522 = vadd.f32 0.0, %v8521
  %v8523 = vpop.f32.mrb[0].mxu0
  %v8524 = vpop.f32.mrb[0].mxu0
  %8525 = vdwg.mxu0
  %8526 = vmatprep.subr.bf16.mxu0 %v8477
  %8527 = vmatpush1.bf16.msra.mxu0 %v8474
  %8528 = vmatprep.subr.bf16.mxu0 0
  %8529 = vmatpush1.bf16.msra.mxu0 0
  %8530 = vmatprep.subr.bf16.mxu0 0
  %8531 = vmatpush1.bf16.msra.mxu0 0
  %8532 = vmatprep.subr.bf16.mxu0 0
  %8533 = vmatpush1.bf16.msra.mxu0 0
  %8534 = vmatprep.subr.bf16.mxu0 0
  %8535 = vmatpush1.bf16.msra.mxu0 0
  %8536 = vmatprep.subr.bf16.mxu0 0
  %8537 = vmatpush1.bf16.msra.mxu0 0
  %8538 = vmatprep.subr.bf16.mxu0 0
  %8539 = vmatpush1.bf16.msra.mxu0 0
  %8540 = vmatprep.subr.bf16.mxu0 0
  %8541 = vmatpush1.bf16.msra.mxu0 0
  %8542 = vmatprep.subr.bf16.mxu0 0
  %8543 = vmatpush1.bf16.msra.mxu0 0
  %8544 = vmatprep.subr.bf16.mxu0 0
  %8545 = vmatpush1.bf16.msra.mxu0 0
  %8546 = vmatprep.subr.bf16.mxu0 0
  %8547 = vmatpush1.bf16.msra.mxu0 0
  %8548 = vmatprep.subr.bf16.mxu0 0
  %8549 = vmatpush1.bf16.msra.mxu0 0
  %8550 = vmatprep.subr.bf16.mxu0 0
  %8551 = vmatpush1.bf16.msra.mxu0 0
  %8552 = vmatprep.subr.bf16.mxu0 0
  %8553 = vmatpush1.bf16.msra.mxu0 0
  %8554 = vmatprep.subr.bf16.mxu0 0
  %8555 = vmatpush1.bf16.msra.mxu0 0
  %8556 = vmatprep.subr.bf16.mxu0 0
  %8557 = vmatpush1.bf16.msra.mxu0 0
  %8558 = vmatprep.mubr.bf16.mxu0 0
  %8559 = vmatmul.mubr.bf16.gmra.mrb[0].mxu0 %v8465
  %v8560 = vpop.f32.mrb[0].mxu0
  %v8561 = vadd.f32 0.0, %v8560
  %v8562 = vpop.f32.mrb[0].mxu0
  %v8563 = vadd.f32 0.0, %v8562
  %v8564 = vpop.f32.mrb[0].mxu0
  %v8565 = vpop.f32.mrb[0].mxu0
  %8566 = vdwg.mxu0
  %8567 = vmatprep.subr.bf16.mxu0 %v8483
  %8568 = vmatpush1.bf16.msra.mxu0 %v8480
  %8569 = vmatprep.subr.bf16.mxu0 0
  %8570 = vmatpush1.bf16.msra.mxu0 0
  %8571 = vmatprep.subr.bf16.mxu0 0
  %8572 = vmatpush1.bf16.msra.mxu0 0
  %8573 = vmatprep.subr.bf16.mxu0 0
  %8574 = vmatpush1.bf16.msra.mxu0 0
  %8575 = vmatprep.subr.bf16.mxu0 0
  %8576 = vmatpush1.bf16.msra.mxu0 0
  %8577 = vmatprep.subr.bf16.mxu0 0
  %8578 = vmatpush1.bf16.msra.mxu0 0
  %8579 = vmatprep.subr.bf16.mxu0 0
  %8580 = vmatpush1.bf16.msra.mxu0 0
  %8581 = vmatprep.subr.bf16.mxu0 0
  %8582 = vmatpush1.bf16.msra.mxu0 0
  %8583 = vmatprep.subr.bf16.mxu0 0
  %8584 = vmatpush1.bf16.msra.mxu0 0
  %8585 = vmatprep.subr.bf16.mxu0 0
  %8586 = vmatpush1.bf16.msra.mxu0 0
  %8587 = vmatprep.subr.bf16.mxu0 0
  %8588 = vmatpush1.bf16.msra.mxu0 0
  %8589 = vmatprep.subr.bf16.mxu0 0
  %8590 = vmatpush1.bf16.msra.mxu0 0
  %8591 = vmatprep.subr.bf16.mxu0 0
  %8592 = vmatpush1.bf16.msra.mxu0 0
  %8593 = vmatprep.subr.bf16.mxu0 0
  %8594 = vmatpush1.bf16.msra.mxu0 0
  %8595 = vmatprep.subr.bf16.mxu0 0
  %8596 = vmatpush1.bf16.msra.mxu0 0
  %8597 = vmatprep.subr.bf16.mxu0 0
  %8598 = vmatpush1.bf16.msra.mxu0 0
  %8599 = vmatprep.mubr.bf16.mxu0 0
  %8600 = vmatmul.mubr.bf16.gmra.mrb[0].mxu0 %v8465
  %v8601 = vpop.f32.mrb[0].mxu0
  %v8602 = vadd.f32 0.0, %v8601
  %v8603 = vpop.f32.mrb[0].mxu0
  %v8604 = vadd.f32 0.0, %v8603
  %v8605 = vpop.f32.mrb[0].mxu0
  %v8606 = vpop.f32.mrb[0].mxu0
  %8607 = vdwg.mxu0
  %v8609 = vsel %vm351, %v8452, 0
  %8611 = vmatprep.subr.bf16.mxu0 %v3982
  %8612 = vmatpush1.bf16.msra.mxu0 %v3979
  %8613 = vmatprep.subr.bf16.mxu0 0
  %8614 = vmatpush1.bf16.msra.mxu0 0
  %8615 = vmatprep.subr.bf16.mxu0 0
  %8616 = vmatpush1.bf16.msra.mxu0 0
  %8617 = vmatprep.subr.bf16.mxu0 0
  %8618 = vmatpush1.bf16.msra.mxu0 0
  %8619 = vmatprep.subr.bf16.mxu0 0
  %8620 = vmatpush1.bf16.msra.mxu0 0
  %8621 = vmatprep.subr.bf16.mxu0 0
  %8622 = vmatpush1.bf16.msra.mxu0 0
  %8623 = vmatprep.subr.bf16.mxu0 0
  %8624 = vmatpush1.bf16.msra.mxu0 0
  %8625 = vmatprep.subr.bf16.mxu0 0
  %8626 = vmatpush1.bf16.msra.mxu0 0
  %8627 = vmatprep.subr.bf16.mxu0 0
  %8628 = vmatpush1.bf16.msra.mxu0 0
  %8629 = vmatprep.subr.bf16.mxu0 0
  %8630 = vmatpush1.bf16.msra.mxu0 0
  %8631 = vmatprep.subr.bf16.mxu0 0
  %8632 = vmatpush1.bf16.msra.mxu0 0
  %8633 = vmatprep.subr.bf16.mxu0 0
  %8634 = vmatpush1.bf16.msra.mxu0 0
  %8635 = vmatprep.subr.bf16.mxu0 0
  %8636 = vmatpush1.bf16.msra.mxu0 0
  %8637 = vmatprep.subr.bf16.mxu0 0
  %8638 = vmatpush1.bf16.msra.mxu0 0
  %8639 = vmatprep.subr.bf16.mxu0 0
  %8640 = vmatpush1.bf16.msra.mxu0 0
  %8641 = vmatprep.subr.bf16.mxu0 0
  %8642 = vmatpush1.bf16.msra.mxu0 0
  %8643 = vmatprep.mubr.bf16.mxu0 0
  %8644 = vmatmul.mubr.bf16.gmra.mrb[0].mxu0 %v8609
  %v8645 = vpop.f32.mrb[0].mxu0
  %v8646 = vadd.f32 %v8520, %v8645
  %v8647 = vpop.f32.mrb[0].mxu0
  %v8648 = vadd.f32 %v8522, %v8647
  %v8649 = vpop.f32.mrb[0].mxu0
  %v8650 = vpop.f32.mrb[0].mxu0
  %8651 = vdwg.mxu0
  %8652 = vmatprep.subr.bf16.mxu0 %v3988
  %8653 = vmatpush1.bf16.msra.mxu0 %v3985
  %8654 = vmatprep.subr.bf16.mxu0 0
  %8655 = vmatpush1.bf16.msra.mxu0 0
  %8656 = vmatprep.subr.bf16.mxu0 0
  %8657 = vmatpush1.bf16.msra.mxu0 0
  %8658 = vmatprep.subr.bf16.mxu0 0
  %8659 = vmatpush1.bf16.msra.mxu0 0
  %8660 = vmatprep.subr.bf16.mxu0 0
  %8661 = vmatpush1.bf16.msra.mxu0 0
  %8662 = vmatprep.subr.bf16.mxu0 0
  %8663 = vmatpush1.bf16.msra.mxu0 0
  %8664 = vmatprep.subr.bf16.mxu0 0
  %8665 = vmatpush1.bf16.msra.mxu0 0
  %8666 = vmatprep.subr.bf16.mxu0 0
  %8667 = vmatpush1.bf16.msra.mxu0 0
  %8668 = vmatprep.subr.bf16.mxu0 0
  %8669 = vmatpush1.bf16.msra.mxu0 0
  %8670 = vmatprep.subr.bf16.mxu0 0
  %8671 = vmatpush1.bf16.msra.mxu0 0
  %8672 = vmatprep.subr.bf16.mxu0 0
  %8673 = vmatpush1.bf16.msra.mxu0 0
  %8674 = vmatprep.subr.bf16.mxu0 0
  %8675 = vmatpush1.bf16.msra.mxu0 0
  %8676 = vmatprep.subr.bf16.mxu0 0
  %8677 = vmatpush1.bf16.msra.mxu0 0
  %8678 = vmatprep.subr.bf16.mxu0 0
  %8679 = vmatpush1.bf16.msra.mxu0 0
  %8680 = vmatprep.subr.bf16.mxu0 0
  %8681 = vmatpush1.bf16.msra.mxu0 0
  %8682 = vmatprep.subr.bf16.mxu0 0
  %8683 = vmatpush1.bf16.msra.mxu0 0
  %8684 = vmatprep.mubr.bf16.mxu0 0
  %8685 = vmatmul.mubr.bf16.gmra.mrb[0].mxu0 %v8609
  %v8686 = vpop.f32.mrb[0].mxu0
  %v8687 = vadd.f32 %v8561, %v8686
  %v8688 = vpop.f32.mrb[0].mxu0
  %v8689 = vadd.f32 %v8563, %v8688
  %v8690 = vpop.f32.mrb[0].mxu0
  %v8691 = vpop.f32.mrb[0].mxu0
  %8692 = vdwg.mxu0
  %8693 = vmatprep.subr.bf16.mxu0 %v3994
  %8694 = vmatpush1.bf16.msra.mxu0 %v3991
  %8695 = vmatprep.subr.bf16.mxu0 0
  %8696 = vmatpush1.bf16.msra.mxu0 0
  %8697 = vmatprep.subr.bf16.mxu0 0
  %8698 = vmatpush1.bf16.msra.mxu0 0
  %8699 = vmatprep.subr.bf16.mxu0 0
  %8700 = vmatpush1.bf16.msra.mxu0 0
  %8701 = vmatprep.subr.bf16.mxu0 0
  %8702 = vmatpush1.bf16.msra.mxu0 0
  %8703 = vmatprep.subr.bf16.mxu0 0
  %8704 = vmatpush1.bf16.msra.mxu0 0
  %8705 = vmatprep.subr.bf16.mxu0 0
  %8706 = vmatpush1.bf16.msra.mxu0 0
  %8707 = vmatprep.subr.bf16.mxu0 0
  %8708 = vmatpush1.bf16.msra.mxu0 0
  %8709 = vmatprep.subr.bf16.mxu0 0
  %8710 = vmatpush1.bf16.msra.mxu0 0
  %8711 = vmatprep.subr.bf16.mxu0 0
  %8712 = vmatpush1.bf16.msra.mxu0 0
  %8713 = vmatprep.subr.bf16.mxu0 0
  %8714 = vmatpush1.bf16.msra.mxu0 0
  %8715 = vmatprep.subr.bf16.mxu0 0
  %8716 = vmatpush1.bf16.msra.mxu0 0
  %8717 = vmatprep.subr.bf16.mxu0 0
  %8718 = vmatpush1.bf16.msra.mxu0 0
  %8719 = vmatprep.subr.bf16.mxu0 0
  %8720 = vmatpush1.bf16.msra.mxu0 0
  %8721 = vmatprep.subr.bf16.mxu0 0
  %8722 = vmatpush1.bf16.msra.mxu0 0
  %8723 = vmatprep.subr.bf16.mxu0 0
  %8724 = vmatpush1.bf16.msra.mxu0 0
  %8725 = vmatprep.mubr.bf16.mxu0 0
  %8726 = vmatmul.mubr.bf16.gmra.mrb[0].mxu0 %v8609
  %v8727 = vpop.f32.mrb[0].mxu0
  %v8728 = vadd.f32 %v8602, %v8727
  %v8729 = vpop.f32.mrb[0].mxu0
  %v8730 = vadd.f32 %v8604, %v8729
  %v8731 = vpop.f32.mrb[0].mxu0
  %v8732 = vpop.f32.mrb[0].mxu0
  %8733 = vdwg.mxu0
  %v8734 = vld [vmem:[%s13] sm:$0xff]
  %8736 = vset.pattern.permute.xlu0 0
  %8737 = vperm.xlu0 %8736, %v8734
  %v8738 = vpop.permute.xlu0 %8737
  %v8740 = vadd.f32 %v8646, %v8738
  %v8741 = vadd.f32 %v8648, %v8738
  %v8742 = vadd.f32 %v8687, %v8738
  %v8743 = vadd.f32 %v8689, %v8738
  %v8744 = vadd.f32 %v8728, %v8738
  %v8745 = vadd.f32 %v8730, %v8738
  %vm8746 = vcmp.ge.f32.partialorder %v8740, 0.0
  %vm8747 = vcmp.ge.f32.partialorder %v8741, 0.0
  %vm8748 = vcmp.ge.f32.partialorder %v8742, 0.0
  %vm8749 = vcmp.ge.f32.partialorder %v8743, 0.0
  %vm8750 = vcmp.ge.f32.partialorder %v8744, 0.0
  %vm8751 = vcmp.ge.f32.partialorder %v8745, 0.0
  %v8752 = vmul.f32 %v8740, 0.25
  %v8753 = vmul.f32 %v8741, 0.25
  %v8754 = vmul.f32 %v8742, 0.25
  %v8755 = vmul.f32 %v8743, 0.25
  %v8756 = vmul.f32 %v8744, 0.25
  %v8757 = vmul.f32 %v8745, 0.25
  %v8758 = vsel %vm8746, %v8740, %v8752
  %v8759 = vsel %vm8747, %v8741, %v8753
  %v8760 = vsel %vm8748, %v8742, %v8754
  %v8761 = vsel %vm8749, %v8743, %v8755
  %v8762 = vsel %vm8750, %v8744, %v8756
  %v8763 = vsel %vm8751, %v8745, %v8757
  %8764 = vst [vmem:[%s14] sm:$0xff] %v8758
  %8765 = vst [vmem:[%s14 + $0x8] sm:$0xff] %v8759
  %8766 = vst [vmem:[%s14 + $0x10] sm:$0xff] %v8760
  %8767 = vst [vmem:[%s14 + $0x18] sm:$0xff] %v8761
  %8768 = vst [vmem:[%s14 + $0x20] sm:$0xff] %v8762
  %8769 = vst [vmem:[%s14 + $0x28] sm:$0xff] %v8763
  // Predicated region
  $region58: #{feedback_block_pallas.1} parent=0 // pred_check
    _
  $region59: #{feedback_block_pallas.1} parent=0 // pred_check_branch
    %8771 = sbr.rel (0) target = $region61
  $region60: #{feedback_block_pallas.1} parent=0 // pred_region
    _
  $region61: #{feedback_block_pallas.1} parent=0 // pred_fallthru
    _
  // Predicated region
  $region62: #{feedback_block_pallas.1} parent=0 // pred_check
    _
  $region63: #{feedback_block_pallas.1} parent=0 // pred_check_branch
    %8773 = sbr.rel (0) target = $region65
  $region64: #{feedback_block_pallas.1} parent=0 // pred_region
    _
  $region65: #{feedback_block_pallas.1} parent=0 // pred_fallthru
    _

</llo_original>
